<compile_context>
chip_gen: v7x
topology: tpu7x:2x2x1
jax: 0.10.0
libtpu: 0.0.40
codegen_flags: <defaults>
</compile_context>

<pallas_src>
import functools

import numpy as np

import jax
import jax.numpy as jnp
from jax import lax
from jax.experimental import pallas as pl
from jax.experimental.pallas import tpu as pltpu


LANE = 128  # lane width / channel padding granularity on every TPU generation


def _round_up(n, m):
    return ((n + m - 1) // m) * m


@functools.lru_cache(maxsize=None)
def _mxu_is_256_wide():
    """True on 256-wide-MXU generations (v6e / v7x); False on v5e and older."""
    try:
        info = pltpu.get_tpu_info()
        for attr in ("mxu_contracting_size", "mxu_column_count"):
            v = getattr(info, attr, None)
            if isinstance(v, int):
                return v >= 256
    except Exception:
        pass
    try:
        kind = jax.devices()[0].device_kind.lower()
        return not any(t in kind for t in ("v2", "v3", "v4", "v5"))
    except Exception:
        return False


def _pick_tf(fp):
    """F-tile width: 256 on v6e/v7x (256-wide MXU) when it divides Fp, else 128."""
    if _mxu_is_256_wide() and fp % 256 == 0:
        return 256
    return 128


# ----------------------------------------------------------------------------
# Pallas kernels
# ----------------------------------------------------------------------------
def _conv_tap_kernel(x_ref, w_ref, scale_ref, shift_ref, o_ref, acc_ref, *,
                     k, stride, oh, ow, leaky):
    """In-kernel im2col conv: one (padded) image + one F-tile of weights
    resident in VMEM; accumulate the k*k shifted bf16 matmuls into an f32
    VMEM accumulator, then fused BN scale/shift (+ leaky ReLU) epilogue and a
    single lane-dense bf16 store."""
    cin = x_ref.shape[-1]
    m = oh * ow
    first = True
    for kh in range(k):
        for kw in range(k):
            t = kh * k + kw
            tap = x_ref[0,
                        kh:kh + (oh - 1) * stride + 1,
                        kw:kw + (ow - 1) * stride + 1, :]
            if stride > 1:
                # TODO(synk): untested path, no stride>1 conv in this cfg.
                tap = tap[::stride, ::stride, :]
            contrib = jnp.dot(tap.reshape(m, cin), w_ref[t],
                              preferred_element_type=jnp.float32)
            if first:
                acc_ref[...] = contrib
                first = False
            else:
                acc_ref[...] += contrib
    y = acc_ref[...] * scale_ref[...] + shift_ref[...]
    if leaky:
        y = jnp.where(y > 0, y, 0.1 * y)
    o_ref[...] = y[None].astype(o_ref.dtype)


def _pool_s2_kernel(in_ref, out_ref):
    """Fused 2x2/s2 max pool.  Input block (1, toh, 2, OW, 2*C): the H window
    is an outer dim (pure elementwise max) and the W window sits as two
    128-aligned halves of the lane dim (cheap lane-slice max)."""
    c = out_ref.shape[-1]
    v = in_ref[...]                                   # (1, toh, 2, OW, 2c)
    vh = jnp.maximum(v[:, :, 0], v[:, :, 1])          # (1, toh, OW, 2c)
    out_ref[...] = jnp.maximum(vh[..., :c], vh[..., c:])


def _pool_s1_kernel(in_ref, out_ref):
    """Fused MaxPoolStride (2x2, stride 1) on the replicate-padded map: both
    overlapping maxes in one kernel (no HBM intermediate)."""
    h = out_ref.shape[1]
    w = out_ref.shape[2]
    v = in_ref[...]                                   # (1, H+1, W+1, C)
    vw = jnp.maximum(v[:, :, :w, :], v[:, :, 1:w + 1, :])
    out_ref[...] = jnp.maximum(vw[:, :h], vw[:, 1:h + 1])


# ----------------------------------------------------------------------------
# Pallas wrappers
# ----------------------------------------------------------------------------
def conv2d_fused(x, wfull, scale_p, shift_p, *, k, stride, pad, leaky):
    """Conv2d on channel-padded NHWC bf16 input + folded-BN scale/shift +
    optional leaky ReLU.  Output is bf16 NHWC with channels padded to Fp.

    wfull   : (k*k, Cin_p, Fp) bf16 -- per-tap weights; zero rows for padded
              cin, zero cols for padded F (preprocessed once at init).
    scale_p : (1, Fp) f32           -- folded BN scale (0 on padded F)
    shift_p : (1, Fp) f32           -- folded BN shift / bias (0 on padded F)
    """
    B, H, W, Cin = x.shape
    kk, cin_p, Fp = wfull.shape
    assert kk == k * k and cin_p == Cin, (wfull.shape, x.shape, k)
    OH = (H + 2 * pad - k) // stride + 1
    OW = (W + 2 * pad - k) // stride + 1
    M1 = OH * OW

    xb = x.astype(jnp.bfloat16)
    if pad:
        xb = jnp.pad(xb, ((0, 0), (pad, pad), (pad, pad), (0, 0)))
    Hp, Wp = H + 2 * pad, W + 2 * pad

    TF = _pick_tf(Fp)
    # Grid (F-tiles, B): >= 2 "parallel" steps (B=2) so both v7x cores get
    # work; the weight tile index only depends on f, so it stays resident
    # across the inner B steps.
    grid = (Fp // TF, B)

    flops = 2 * B * M1 * (k * k * Cin) * Fp
    bytes_accessed = (B * Hp * Wp * Cin * 2 * (Fp // TF)   # input (per F pass)
                      + k * k * Cin * Fp * 2               # weights
                      + B * M1 * Fp * 2                    # bf16 output
                      + 2 * Fp * 4)                        # scale/shift

    out = pl.pallas_call(
        functools.partial(_conv_tap_kernel, k=k, stride=stride,
                          oh=OH, ow=OW, leaky=leaky),
        out_shape=jax.ShapeDtypeStruct((B, M1, Fp), jnp.bfloat16),
        grid=grid,
        in_specs=[
            pl.BlockSpec((1, Hp, Wp, Cin), lambda f, b: (b, 0, 0, 0)),   # image
            pl.BlockSpec((k * k, Cin, TF), lambda f, b: (0, 0, f)),      # weights
            pl.BlockSpec((1, TF), lambda f, b: (0, f)),                  # scale
            pl.BlockSpec((1, TF), lambda f, b: (0, f)),                  # shift
        ],
        out_specs=pl.BlockSpec((1, M1, TF), lambda f, b: (b, 0, f)),
        scratch_shapes=[pltpu.VMEM((M1, TF), jnp.float32)],
        compiler_params=pltpu.CompilerParams(
            dimension_semantics=("parallel", "parallel"),
            # ~1 MiB/step here; 32 MiB stays within the scoped limit on every
            # generation (v7x scoped default is 32 MiB of 64 MiB physical).
            vmem_limit_bytes=32 * 1024 * 1024),
        cost_estimate=pl.CostEstimate(flops=flops, transcendentals=0,
                                      bytes_accessed=bytes_accessed),
    )(xb, wfull, scale_p, shift_p)

    return out.reshape(B, OH, OW, Fp)


def maxpool_2x2_s2(x):
    """nn.MaxPool2d(2, 2) on NHWC (single fused kernel, lane-dense I/O)."""
    B, H, W, C = x.shape
    OH, OW = H // 2, W // 2
    if H != 2 * OH or W != 2 * OW:
        x = x[:, :2 * OH, :2 * OW, :]
    # Free reshape: H -> (OH, 2) and (2, C) -> 2C; both maxes run in-kernel.
    xr = x.reshape(B, OH, 2, OW, 2 * C)
    toh = max(d for d in range(1, min(OH, 128) + 1) if OH % d == 0)
    return pl.pallas_call(
        _pool_s2_kernel,
        out_shape=jax.ShapeDtypeStruct((B, OH, OW, C), x.dtype),
        grid=(B, OH // toh),
        in_specs=[pl.BlockSpec((1, toh, 2, OW, 2 * C),
                               lambda b, t: (b, t, 0, 0, 0))],
        out_specs=pl.BlockSpec((1, toh, OW, C), lambda b, t: (b, t, 0, 0)),
        compiler_params=pltpu.CompilerParams(
            dimension_semantics=("parallel", "parallel")),
    )(xr)


def maxpool_stride1(x):
    """MaxPoolStride: replicate-pad (right/bottom) then 2x2 pool, stride 1
    (NHWC).  Both overlapping maxes run in one kernel; only the (tiny)
    replicate pad stays in XLA."""
    B, H, W, C = x.shape
    xp = jnp.pad(x, ((0, 0), (0, 1), (0, 1), (0, 0)), mode="edge")
    # TODO(synk): halo-tile H for large maps; Darknet only runs this on small
    #             (e.g. 13x13) feature maps.
    return pl.pallas_call(
        _pool_s1_kernel,
        out_shape=jax.ShapeDtypeStruct((B, H, W, C), x.dtype),
        grid=(B,),
        in_specs=[pl.BlockSpec((1, H + 1, W + 1, C), lambda b: (b, 0, 0, 0))],
        out_specs=pl.BlockSpec((1, H, W, C), lambda b: (b, 0, 0, 0)),
        compiler_params=pltpu.CompilerParams(dimension_semantics=("parallel",)),
    )(xp)


# ----------------------------------------------------------------------------
# Parameter preprocessing
# ----------------------------------------------------------------------------
def _prep_conv_params(weight, scale, shift, cin_layout, k, fp):
    """Kernel-side conv parameters, preprocessed once at init.

    wfull[t, ci, f] = weight[f, cin_layout[ci], kh, kw]   (t = kh*k + kw)
    with zero rows for padded cin positions and zero columns for padded F, so
    padded channels never leak into the reduction; scale/shift are zero-padded
    on F so padded output channels stay exactly 0 through leaky/pool/route.
    """
    filters = weight.shape[0]
    cin_p = len(cin_layout)
    w_np = np.asarray(weight, np.float32)                 # (F, Cin_real, k, k)
    wfull = np.zeros((k * k, cin_p, fp), np.float32)
    for ci, orig in enumerate(cin_layout):
        if orig >= 0:
            wfull[:, ci, :filters] = w_np[:, orig, :, :].reshape(filters, k * k).T
    scale_p = np.zeros((1, fp), np.float32)
    shift_p = np.zeros((1, fp), np.float32)
    scale_p[0, :filters] = np.asarray(scale, np.float32)
    shift_p[0, :filters] = np.asarray(shift, np.float32)
    return (jnp.asarray(wfull, dtype=jnp.bfloat16),
            jnp.asarray(scale_p), jnp.asarray(shift_p))


# ----------------------------------------------------------------------------
# Network definition (mirrors deformDarknet.create_network / forward)
# ----------------------------------------------------------------------------
def synthetic_blocks():
    """Equivalent of parse_cfg() on a small synthetic darknet cfg."""
    return [
        {"type": "net", "channels": "4", "width": "16", "height": "16"},
        {"type": "convolutional", "batch_normalize": "1", "filters": "8",
         "size": "3", "stride": "1", "pad": "1", "activation": "leaky"},
        {"type": "maxpool", "size": "2", "stride": "2"},
        {"type": "convolutional", "batch_normalize": "1", "filters": "16",
         "size": "3", "stride": "1", "pad": "1", "activation": "leaky"},
        {"type": "maxpool", "size": "2", "stride": "1"},
        {"type": "route", "layers": "-1,-3"},
        {"type": "convolutional", "batch_normalize": "0", "filters": "8",
         "size": "1", "stride": "1", "pad": "1", "activation": "linear"},
        {"type": "region", "anchors": "1.0,1.0,2.0,2.0", "classes": "4",
         "num": "2", "object_scale": "5", "noobject_scale": "1",
         "class_scale": "1", "coord_scale": "1"},
    ]


class DeformDarknetPallas:
    def __init__(self, blocks, key):
        self.blocks = blocks
        self.width = int(blocks[0]["width"])
        self.height = int(blocks[0]["height"])
        self.params = self._create_params(key)

    def _create_params(self, key):
        params = []
        out_filters = []      # real (unpadded) channel counts, per block
        layouts = []          # padded channel layout of each block's output
        cin0 = int(self.blocks[0]["channels"])
        self._cin_pad = _round_up(cin0, LANE)
        cur_layout = list(range(cin0)) + [-1] * (self._cin_pad - cin0)
        prev_filters = cin0
        for block in self.blocks:
            btype = block["type"]
            if btype == "net":
                continue
            if btype == "convolutional":
                bn = int(block["batch_normalize"])
                filters = int(block["filters"])
                k = int(block["size"])
                stride = int(block["stride"])
                pad = (k - 1) // 2 if int(block["pad"]) else 0
                key, kw_, kb, kg, kbt, km, kv = jax.random.split(key, 7)
                weight = 0.1 * jax.random.normal(
                    kw_, (filters, prev_filters, k, k), jnp.float32)
                eps = 1e-5
                if bn:
                    gamma = 1.0 + 0.1 * jax.random.normal(kg, (filters,), jnp.float32)
                    beta = 0.1 * jax.random.normal(kbt, (filters,), jnp.float32)
                    mean = 0.1 * jax.random.normal(km, (filters,), jnp.float32)
                    var = 1.0 + 0.1 * jax.random.uniform(kv, (filters,), jnp.float32)
                    scale = gamma / jnp.sqrt(var + eps)
                    shift = beta - mean * scale
                else:
                    bias = 0.1 * jax.random.normal(kb, (filters,), jnp.float32)
                    scale = jnp.ones((filters,), jnp.float32)
                    shift = bias
                fp = _round_up(filters, LANE)
                wfull, scale_p, shift_p = _prep_conv_params(
                    weight, scale, shift, cur_layout, k, fp)
                params.append(dict(kind="conv", weight=weight, scale=scale,
                                   shift=shift, wfull=wfull, scale_p=scale_p,
                                   shift_p=shift_p, k=k, stride=stride, pad=pad,
                                   filters=filters,
                                   leaky=(block["activation"] == "leaky")))
                prev_filters = filters
                cur_layout = list(range(filters)) + [-1] * (fp - filters)
            elif btype == "maxpool":
                params.append(dict(kind="maxpool", size=int(block["size"]),
                                   stride=int(block["stride"])))
                # channel layout unchanged
            elif btype == "route":
                lids = [int(i) for i in block["layers"].split(",")]
                ind = len(params)
                lids = [l if l > 0 else l + ind for l in lids]
                new_layout, off = [], 0
                for l in lids:
                    new_layout += [off + c if c >= 0 else -1 for c in layouts[l]]
                    off += out_filters[l]
                cur_layout = new_layout
                prev_filters = off
                params.append(dict(kind="route"))
            elif btype == "region":
                params.append(dict(kind="region"))
            else:
                params.append(dict(kind="empty"))
            out_filters.append(prev_filters)
            layouts.append(list(cur_layout))
        # Positions (in the padded layout) of the real channels of the final
        # tensor, ordered by their original channel index.
        self._final_real_idx = [
            i for _, i in sorted((c, i) for i, c in enumerate(cur_layout) if c >= 0)]
        return params

    def forward(self, x):
        """x: NCHW float32 (PyTorch convention).  Internally the network runs
        channels-last bf16 with channels padded to a lane multiple; exactly one
        transpose in and one transpose (+ channel gather) out."""
        x = x.transpose(0, 2, 3, 1).astype(jnp.bfloat16)
        cin = x.shape[-1]
        if self._cin_pad > cin:
            x = jnp.pad(x, ((0, 0), (0, 0), (0, 0), (0, self._cin_pad - cin)))
        ind = -2
        outputs = {}
        for block in self.blocks:
            ind += 1
            btype = block["type"]
            if btype == "net":
                continue
            elif btype == "convolutional":
                p = self.params[ind]
                x = conv2d_fused(x, p["wfull"], p["scale_p"], p["shift_p"],
                                 k=p["k"], stride=p["stride"], pad=p["pad"],
                                 leaky=p["leaky"])
                outputs[ind] = x
            elif btype == "maxpool":
                p = self.params[ind]
                x = maxpool_2x2_s2(x) if p["stride"] > 1 else maxpool_stride1(x)
                outputs[ind] = x
            elif btype == "route":
                layers = [int(i) for i in block["layers"].split(",")]
                layers = [l if l > 0 else l + ind for l in layers]
                x = jnp.concatenate([outputs[l] for l in layers], axis=-1)
                outputs[ind] = x
            elif btype == "region":
                continue
            else:
                print("unknown type %s" % btype)
        # Drop the zero padding channels once, at the network output.
        idx = jnp.asarray(self._final_real_idx, jnp.int32)
        x = jnp.take(x, idx, axis=-1).astype(jnp.float32)
        return x.transpose(0, 3, 1, 2)


# ----------------------------------------------------------------------------
# Pure-JAX reference (correctness check only, NCHW / f32 throughout)
# ----------------------------------------------------------------------------
def _ref_forward(model, x):
    ind = -2
    outputs = {}
    for block in model.blocks:
        ind += 1
        btype = block["type"]
        if btype == "net":
            continue
        elif btype == "convolutional":
            p = model.params[ind]
            y = lax.conv_general_dilated(
                x, p["weight"], window_strides=(p["stride"], p["stride"]),
                padding=[(p["pad"], p["pad"])] * 2,
                dimension_numbers=("NCHW", "OIHW", "NCHW"))
            y = y * p["scale"][None, :, None, None] + p["shift"][None, :, None, None]
            if p["leaky"]:
                y = jnp.where(y > 0, y, 0.1 * y)
            x = y
            outputs[ind] = x
        elif btype == "maxpool":
            p = model.params[ind]
            if p["stride"] > 1:
                x = lax.reduce_window(x, -jnp.inf, lax.max,
                                      (1, 1, 2, 2), (1, 1, 2, 2), "VALID")
            else:
                xp = jnp.pad(x, ((0, 0), (0, 0), (0, 1), (0, 1)), mode="edge")
                x = lax.reduce_window(xp, -jnp.inf, lax.max,
                                      (1, 1, 2, 2), (1, 1, 1, 1), "VALID")
            outputs[ind] = x
        elif btype == "route":
            layers = [int(i) for i in block["layers"].split(",")]
            layers = [l if l > 0 else l + ind for l in layers]
            x = jnp.concatenate([outputs[l] for l in layers], axis=1)
            outputs[ind] = x
        elif btype == "region":
            continue
    return x


# ----------------------------------------------------------------------------
if __name__ == "__main__":
    key = jax.random.PRNGKey(0)
    key, kx, kp = jax.random.split(key, 3)

    blocks = synthetic_blocks()
    model = DeformDarknetPallas(blocks, kp)

    x = jax.random.normal(kx, (2, 4, 16, 16), jnp.float32)  # NCHW

    fwd = jax.jit(model.forward)
    out = jax.block_until_ready(fwd(x))

    ref = jax.block_until_ready(_ref_forward(model, x))
    assert out.shape == ref.shape == (2, 8, 8, 8), (out.shape, ref.shape)
    err = float(jnp.max(jnp.abs(out - ref)))
    # bf16 matmul inputs, bf16-rounded weights and bf16 inter-layer
    # activations vs the all-f32 reference.
    assert err < 1e-1, err

    print("KERNEL_OK")
</pallas_src>

<mosaic_0001>
module attributes {stable_mosaic.version = 11 : i64} {
  func.func @_conv_tap_kernel(%arg0: i32, %arg1: i32, %arg2: memref<1x18x18x128xbf16, #tpu.memory_space<vmem>>, %arg3: memref<9x128x128xbf16, #tpu.memory_space<vmem>>, %arg4: memref<1x128xf32, #tpu.memory_space<vmem>>, %arg5: memref<1x128xf32, #tpu.memory_space<vmem>>, %arg6: memref<1x256x128xbf16, #tpu.memory_space<vmem>>, %arg7: memref<256x128xf32, #tpu.memory_space<vmem>>) attributes {dimension_semantics = [#tpu.dimension_semantics<parallel>, #tpu.dimension_semantics<parallel>], iteration_bounds = array<i64: 1, 2>, scalar_prefetch = 0 : i64, scratch_operands = 1 : i64, tpu.core_type = #tpu.core_type<tc>, window_params = [{transform_indices = @transform_0, window_bounds = array<i64: 1, 18, 18, 128>}, {transform_indices = @transform_1, window_bounds = array<i64: 9, 128, 128>}, {transform_indices = @transform_2, window_bounds = array<i64: 1, 128>}, {transform_indices = @transform_3, window_bounds = array<i64: 1, 128>}, {transform_indices = @transform_4, window_bounds = array<i64: 1, 256, 128>}]} {
    %c0 = arith.constant 0 : index
    %c0_0 = arith.constant 0 : index
    %c0_1 = arith.constant 0 : index
    %c0_2 = arith.constant 0 : index
    %0 = vector.load %arg2[%c0, %c0_0, %c0_1, %c0_2] : memref<1x18x18x128xbf16, #tpu.memory_space<vmem>>, vector<1x16x16x128xbf16>
    %1 = vector.shape_cast %0 : vector<1x16x16x128xbf16> to vector<16x16x128xbf16>
    %2 = vector.shape_cast %1 : vector<16x16x128xbf16> to vector<256x128xbf16>
    %c0_3 = arith.constant 0 : index
    %c0_4 = arith.constant 0 : index
    %c0_5 = arith.constant 0 : index
    %3 = vector.load %arg3[%c0_3, %c0_4, %c0_5] : memref<9x128x128xbf16, #tpu.memory_space<vmem>>, vector<1x128x128xbf16>
    %4 = vector.shape_cast %3 : vector<1x128x128xbf16> to vector<128x128xbf16>
    %cst = arith.constant dense<0.000000e+00> : vector<256x128xf32>
    %5 = tpu.matmul %2, %4, %cst {dimension_numbers = #tpu.dot_dimension_numbers<[1], [0], [0], [1], [0, 0, 1, 1], [], []>} : vector<256x128xbf16>, vector<128x128xbf16>, vector<256x128xf32> -> vector<256x128xf32>
    %c0_6 = arith.constant 0 : index
    %c0_7 = arith.constant 0 : index
    %6 = vector.load %arg7[%c0_6, %c0_7] : memref<256x128xf32, #tpu.memory_space<vmem>>, vector<256x128xf32>
    tpu.vector_store %arg7[%c0_6, %c0_7], %5 {strides = array<i32>} : memref<256x128xf32, #tpu.memory_space<vmem>>, vector<256x128xf32>,
    %c0_8 = arith.constant 0 : index
    %c0_9 = arith.constant 0 : index
    %c1 = arith.constant 1 : index
    %c0_10 = arith.constant 0 : index
    %7 = vector.load %arg2[%c0_8, %c0_9, %c1, %c0_10] : memref<1x18x18x128xbf16, #tpu.memory_space<vmem>>, vector<1x16x16x128xbf16>
    %8 = vector.shape_cast %7 : vector<1x16x16x128xbf16> to vector<16x16x128xbf16>
    %9 = vector.shape_cast %8 : vector<16x16x128xbf16> to vector<256x128xbf16>
    %c1_11 = arith.constant 1 : index
    %c0_12 = arith.constant 0 : index
    %c0_13 = arith.constant 0 : index
    %10 = vector.load %arg3[%c1_11, %c0_12, %c0_13] : memref<9x128x128xbf16, #tpu.memory_space<vmem>>, vector<1x128x128xbf16>
    %11 = vector.shape_cast %10 : vector<1x128x128xbf16> to vector<128x128xbf16>
    %cst_14 = arith.constant dense<0.000000e+00> : vector<256x128xf32>
    %12 = tpu.matmul %9, %11, %cst_14 {dimension_numbers = #tpu.dot_dimension_numbers<[1], [0], [0], [1], [0, 0, 1, 1], [], []>} : vector<256x128xbf16>, vector<128x128xbf16>, vector<256x128xf32> -> vector<256x128xf32>
    %c0_15 = arith.constant 0 : index
    %c0_16 = arith.constant 0 : index
    %13 = vector.load %arg7[%c0_15, %c0_16] : memref<256x128xf32, #tpu.memory_space<vmem>>, vector<256x128xf32>
    %14 = arith.addf %13, %12 : vector<256x128xf32>
    %c0_17 = arith.constant 0 : index
    %c0_18 = arith.constant 0 : index
    %15 = vector.load %arg7[%c0_17, %c0_18] : memref<256x128xf32, #tpu.memory_space<vmem>>, vector<256x128xf32>
    tpu.vector_store %arg7[%c0_17, %c0_18], %14 {strides = array<i32>} : memref<256x128xf32, #tpu.memory_space<vmem>>, vector<256x128xf32>,
    %c0_19 = arith.constant 0 : index
    %c0_20 = arith.constant 0 : index
    %c2 = arith.constant 2 : index
    %c0_21 = arith.constant 0 : index
    %16 = vector.load %arg2[%c0_19, %c0_20, %c2, %c0_21] : memref<1x18x18x128xbf16, #tpu.memory_space<vmem>>, vector<1x16x16x128xbf16>
    %17 = vector.shape_cast %16 : vector<1x16x16x128xbf16> to vector<16x16x128xbf16>
    %18 = vector.shape_cast %17 : vector<16x16x128xbf16> to vector<256x128xbf16>
    %c2_22 = arith.constant 2 : index
    %c0_23 = arith.constant 0 : index
    %c0_24 = arith.constant 0 : index
    %19 = vector.load %arg3[%c2_22, %c0_23, %c0_24] : memref<9x128x128xbf16, #tpu.memory_space<vmem>>, vector<1x128x128xbf16>
    %20 = vector.shape_cast %19 : vector<1x128x128xbf16> to vector<128x128xbf16>
    %cst_25 = arith.constant dense<0.000000e+00> : vector<256x128xf32>
    %21 = tpu.matmul %18, %20, %cst_25 {dimension_numbers = #tpu.dot_dimension_numbers<[1], [0], [0], [1], [0, 0, 1, 1], [], []>} : vector<256x128xbf16>, vector<128x128xbf16>, vector<256x128xf32> -> vector<256x128xf32>
    %c0_26 = arith.constant 0 : index
    %c0_27 = arith.constant 0 : index
    %22 = vector.load %arg7[%c0_26, %c0_27] : memref<256x128xf32, #tpu.memory_space<vmem>>, vector<256x128xf32>
    %23 = arith.addf %22, %21 : vector<256x128xf32>
    %c0_28 = arith.constant 0 : index
    %c0_29 = arith.constant 0 : index
    %24 = vector.load %arg7[%c0_28, %c0_29] : memref<256x128xf32, #tpu.memory_space<vmem>>, vector<256x128xf32>
    tpu.vector_store %arg7[%c0_28, %c0_29], %23 {strides = array<i32>} : memref<256x128xf32, #tpu.memory_space<vmem>>, vector<256x128xf32>,
    %c0_30 = arith.constant 0 : index
    %c1_31 = arith.constant 1 : index
    %c0_32 = arith.constant 0 : index
    %c0_33 = arith.constant 0 : index
    %25 = vector.load %arg2[%c0_30, %c1_31, %c0_32, %c0_33] : memref<1x18x18x128xbf16, #tpu.memory_space<vmem>>, vector<1x16x16x128xbf16>
    %26 = vector.shape_cast %25 : vector<1x16x16x128xbf16> to vector<16x16x128xbf16>
    %27 = vector.shape_cast %26 : vector<16x16x128xbf16> to vector<256x128xbf16>
    %c3 = arith.constant 3 : index
    %c0_34 = arith.constant 0 : index
    %c0_35 = arith.constant 0 : index
    %28 = vector.load %arg3[%c3, %c0_34, %c0_35] : memref<9x128x128xbf16, #tpu.memory_space<vmem>>, vector<1x128x128xbf16>
    %29 = vector.shape_cast %28 : vector<1x128x128xbf16> to vector<128x128xbf16>
    %cst_36 = arith.constant dense<0.000000e+00> : vector<256x128xf32>
    %30 = tpu.matmul %27, %29, %cst_36 {dimension_numbers = #tpu.dot_dimension_numbers<[1], [0], [0], [1], [0, 0, 1, 1], [], []>} : vector<256x128xbf16>, vector<128x128xbf16>, vector<256x128xf32> -> vector<256x128xf32>
    %c0_37 = arith.constant 0 : index
    %c0_38 = arith.constant 0 : index
    %31 = vector.load %arg7[%c0_37, %c0_38] : memref<256x128xf32, #tpu.memory_space<vmem>>, vector<256x128xf32>
    %32 = arith.addf %31, %30 : vector<256x128xf32>
    %c0_39 = arith.constant 0 : index
    %c0_40 = arith.constant 0 : index
    %33 = vector.load %arg7[%c0_39, %c0_40] : memref<256x128xf32, #tpu.memory_space<vmem>>, vector<256x128xf32>
    tpu.vector_store %arg7[%c0_39, %c0_40], %32 {strides = array<i32>} : memref<256x128xf32, #tpu.memory_space<vmem>>, vector<256x128xf32>,
    %c0_41 = arith.constant 0 : index
    %c1_42 = arith.constant 1 : index
    %c1_43 = arith.constant 1 : index
    %c0_44 = arith.constant 0 : index
    %34 = vector.load %arg2[%c0_41, %c1_42, %c1_43, %c0_44] : memref<1x18x18x128xbf16, #tpu.memory_space<vmem>>, vector<1x16x16x128xbf16>
    %35 = vector.shape_cast %34 : vector<1x16x16x128xbf16> to vector<16x16x128xbf16>
    %36 = vector.shape_cast %35 : vector<16x16x128xbf16> to vector<256x128xbf16>
    %c4 = arith.constant 4 : index
    %c0_45 = arith.constant 0 : index
    %c0_46 = arith.constant 0 : index
    %37 = vector.load %arg3[%c4, %c0_45, %c0_46] : memref<9x128x128xbf16, #tpu.memory_space<vmem>>, vector<1x128x128xbf16>
    %38 = vector.shape_cast %37 : vector<1x128x128xbf16> to vector<128x128xbf16>
    %cst_47 = arith.constant dense<0.000000e+00> : vector<256x128xf32>
    %39 = tpu.matmul %36, %38, %cst_47 {dimension_numbers = #tpu.dot_dimension_numbers<[1], [0], [0], [1], [0, 0, 1, 1], [], []>} : vector<256x128xbf16>, vector<128x128xbf16>, vector<256x128xf32> -> vector<256x128xf32>
    %c0_48 = arith.constant 0 : index
    %c0_49 = arith.constant 0 : index
    %40 = vector.load %arg7[%c0_48, %c0_49] : memref<256x128xf32, #tpu.memory_space<vmem>>, vector<256x128xf32>
    %41 = arith.addf %40, %39 : vector<256x128xf32>
    %c0_50 = arith.constant 0 : index
    %c0_51 = arith.constant 0 : index
    %42 = vector.load %arg7[%c0_50, %c0_51] : memref<256x128xf32, #tpu.memory_space<vmem>>, vector<256x128xf32>
    tpu.vector_store %arg7[%c0_50, %c0_51], %41 {strides = array<i32>} : memref<256x128xf32, #tpu.memory_space<vmem>>, vector<256x128xf32>,
    %c0_52 = arith.constant 0 : index
    %c1_53 = arith.constant 1 : index
    %c2_54 = arith.constant 2 : index
    %c0_55 = arith.constant 0 : index
    %43 = vector.load %arg2[%c0_52, %c1_53, %c2_54, %c0_55] : memref<1x18x18x128xbf16, #tpu.memory_space<vmem>>, vector<1x16x16x128xbf16>
    %44 = vector.shape_cast %43 : vector<1x16x16x128xbf16> to vector<16x16x128xbf16>
    %45 = vector.shape_cast %44 : vector<16x16x128xbf16> to vector<256x128xbf16>
    %c5 = arith.constant 5 : index
    %c0_56 = arith.constant 0 : index
    %c0_57 = arith.constant 0 : index
    %46 = vector.load %arg3[%c5, %c0_56, %c0_57] : memref<9x128x128xbf16, #tpu.memory_space<vmem>>, vector<1x128x128xbf16>
    %47 = vector.shape_cast %46 : vector<1x128x128xbf16> to vector<128x128xbf16>
    %cst_58 = arith.constant dense<0.000000e+00> : vector<256x128xf32>
    %48 = tpu.matmul %45, %47, %cst_58 {dimension_numbers = #tpu.dot_dimension_numbers<[1], [0], [0], [1], [0, 0, 1, 1], [], []>} : vector<256x128xbf16>, vector<128x128xbf16>, vector<256x128xf32> -> vector<256x128xf32>
    %c0_59 = arith.constant 0 : index
    %c0_60 = arith.constant 0 : index
    %49 = vector.load %arg7[%c0_59, %c0_60] : memref<256x128xf32, #tpu.memory_space<vmem>>, vector<256x128xf32>
    %50 = arith.addf %49, %48 : vector<256x128xf32>
    %c0_61 = arith.constant 0 : index
    %c0_62 = arith.constant 0 : index
    %51 = vector.load %arg7[%c0_61, %c0_62] : memref<256x128xf32, #tpu.memory_space<vmem>>, vector<256x128xf32>
    tpu.vector_store %arg7[%c0_61, %c0_62], %50 {strides = array<i32>} : memref<256x128xf32, #tpu.memory_space<vmem>>, vector<256x128xf32>,
    %c0_63 = arith.constant 0 : index
    %c2_64 = arith.constant 2 : index
    %c0_65 = arith.constant 0 : index
    %c0_66 = arith.constant 0 : index
    %52 = vector.load %arg2[%c0_63, %c2_64, %c0_65, %c0_66] : memref<1x18x18x128xbf16, #tpu.memory_space<vmem>>, vector<1x16x16x128xbf16>
    %53 = vector.shape_cast %52 : vector<1x16x16x128xbf16> to vector<16x16x128xbf16>
    %54 = vector.shape_cast %53 : vector<16x16x128xbf16> to vector<256x128xbf16>
    %c6 = arith.constant 6 : index
    %c0_67 = arith.constant 0 : index
    %c0_68 = arith.constant 0 : index
    %55 = vector.load %arg3[%c6, %c0_67, %c0_68] : memref<9x128x128xbf16, #tpu.memory_space<vmem>>, vector<1x128x128xbf16>
    %56 = vector.shape_cast %55 : vector<1x128x128xbf16> to vector<128x128xbf16>
    %cst_69 = arith.constant dense<0.000000e+00> : vector<256x128xf32>
    %57 = tpu.matmul %54, %56, %cst_69 {dimension_numbers = #tpu.dot_dimension_numbers<[1], [0], [0], [1], [0, 0, 1, 1], [], []>} : vector<256x128xbf16>, vector<128x128xbf16>, vector<256x128xf32> -> vector<256x128xf32>
    %c0_70 = arith.constant 0 : index
    %c0_71 = arith.constant 0 : index
    %58 = vector.load %arg7[%c0_70, %c0_71] : memref<256x128xf32, #tpu.memory_space<vmem>>, vector<256x128xf32>
    %59 = arith.addf %58, %57 : vector<256x128xf32>
    %c0_72 = arith.constant 0 : index
    %c0_73 = arith.constant 0 : index
    %60 = vector.load %arg7[%c0_72, %c0_73] : memref<256x128xf32, #tpu.memory_space<vmem>>, vector<256x128xf32>
    tpu.vector_store %arg7[%c0_72, %c0_73], %59 {strides = array<i32>} : memref<256x128xf32, #tpu.memory_space<vmem>>, vector<256x128xf32>,
    %c0_74 = arith.constant 0 : index
    %c2_75 = arith.constant 2 : index
    %c1_76 = arith.constant 1 : index
    %c0_77 = arith.constant 0 : index
    %61 = vector.load %arg2[%c0_74, %c2_75, %c1_76, %c0_77] : memref<1x18x18x128xbf16, #tpu.memory_space<vmem>>, vector<1x16x16x128xbf16>
    %62 = vector.shape_cast %61 : vector<1x16x16x128xbf16> to vector<16x16x128xbf16>
    %63 = vector.shape_cast %62 : vector<16x16x128xbf16> to vector<256x128xbf16>
    %c7 = arith.constant 7 : index
    %c0_78 = arith.constant 0 : index
    %c0_79 = arith.constant 0 : index
    %64 = vector.load %arg3[%c7, %c0_78, %c0_79] : memref<9x128x128xbf16, #tpu.memory_space<vmem>>, vector<1x128x128xbf16>
    %65 = vector.shape_cast %64 : vector<1x128x128xbf16> to vector<128x128xbf16>
    %cst_80 = arith.constant dense<0.000000e+00> : vector<256x128xf32>
    %66 = tpu.matmul %63, %65, %cst_80 {dimension_numbers = #tpu.dot_dimension_numbers<[1], [0], [0], [1], [0, 0, 1, 1], [], []>} : vector<256x128xbf16>, vector<128x128xbf16>, vector<256x128xf32> -> vector<256x128xf32>
    %c0_81 = arith.constant 0 : index
    %c0_82 = arith.constant 0 : index
    %67 = vector.load %arg7[%c0_81, %c0_82] : memref<256x128xf32, #tpu.memory_space<vmem>>, vector<256x128xf32>
    %68 = arith.addf %67, %66 : vector<256x128xf32>
    %c0_83 = arith.constant 0 : index
    %c0_84 = arith.constant 0 : index
    %69 = vector.load %arg7[%c0_83, %c0_84] : memref<256x128xf32, #tpu.memory_space<vmem>>, vector<256x128xf32>
    tpu.vector_store %arg7[%c0_83, %c0_84], %68 {strides = array<i32>} : memref<256x128xf32, #tpu.memory_space<vmem>>, vector<256x128xf32>,
    %c0_85 = arith.constant 0 : index
    %c2_86 = arith.constant 2 : index
    %c2_87 = arith.constant 2 : index
    %c0_88 = arith.constant 0 : index
    %70 = vector.load %arg2[%c0_85, %c2_86, %c2_87, %c0_88] : memref<1x18x18x128xbf16, #tpu.memory_space<vmem>>, vector<1x16x16x128xbf16>
    %71 = vector.shape_cast %70 : vector<1x16x16x128xbf16> to vector<16x16x128xbf16>
    %72 = vector.shape_cast %71 : vector<16x16x128xbf16> to vector<256x128xbf16>
    %c8 = arith.constant 8 : index
    %c0_89 = arith.constant 0 : index
    %c0_90 = arith.constant 0 : index
    %73 = vector.load %arg3[%c8, %c0_89, %c0_90] : memref<9x128x128xbf16, #tpu.memory_space<vmem>>, vector<1x128x128xbf16>
    %74 = vector.shape_cast %73 : vector<1x128x128xbf16> to vector<128x128xbf16>
    %cst_91 = arith.constant dense<0.000000e+00> : vector<256x128xf32>
    %75 = tpu.matmul %72, %74, %cst_91 {dimension_numbers = #tpu.dot_dimension_numbers<[1], [0], [0], [1], [0, 0, 1, 1], [], []>} : vector<256x128xbf16>, vector<128x128xbf16>, vector<256x128xf32> -> vector<256x128xf32>
    %c0_92 = arith.constant 0 : index
    %c0_93 = arith.constant 0 : index
    %76 = vector.load %arg7[%c0_92, %c0_93] : memref<256x128xf32, #tpu.memory_space<vmem>>, vector<256x128xf32>
    %77 = arith.addf %76, %75 : vector<256x128xf32>
    %c0_94 = arith.constant 0 : index
    %c0_95 = arith.constant 0 : index
    %78 = vector.load %arg7[%c0_94, %c0_95] : memref<256x128xf32, #tpu.memory_space<vmem>>, vector<256x128xf32>
    tpu.vector_store %arg7[%c0_94, %c0_95], %77 {strides = array<i32>} : memref<256x128xf32, #tpu.memory_space<vmem>>, vector<256x128xf32>,
    %c0_96 = arith.constant 0 : index
    %c0_97 = arith.constant 0 : index
    %79 = vector.load %arg7[%c0_96, %c0_97] : memref<256x128xf32, #tpu.memory_space<vmem>>, vector<256x128xf32>
    %c0_98 = arith.constant 0 : index
    %c0_99 = arith.constant 0 : index
    %80 = vector.load %arg4[%c0_98, %c0_99] : memref<1x128xf32, #tpu.memory_space<vmem>>, vector<1x128xf32>
    %81 = vector.broadcast %80 : vector<1x128xf32> to vector<256x128xf32>
    %82 = arith.mulf %79, %81 : vector<256x128xf32>
    %c0_100 = arith.constant 0 : index
    %c0_101 = arith.constant 0 : index
    %83 = vector.load %arg5[%c0_100, %c0_101] : memref<1x128xf32, #tpu.memory_space<vmem>>, vector<1x128xf32>
    %84 = vector.broadcast %83 : vector<1x128xf32> to vector<256x128xf32>
    %85 = arith.addf %82, %84 : vector<256x128xf32>
    %cst_102 = arith.constant 0.000000e+00 : f32
    %86 = vector.broadcast %cst_102 : f32 to vector<256x128xf32>
    %87 = arith.cmpf ogt, %85, %86 : vector<256x128xf32>
    %cst_103 = arith.constant 1.000000e-01 : f32
    %88 = vector.broadcast %cst_103 : f32 to vector<256x128xf32>
    %89 = arith.mulf %88, %85 : vector<256x128xf32>
    %90 = arith.select %87, %85, %89 : vector<256x128xi1>, vector<256x128xf32>
    %91 = vector.shape_cast %90 : vector<256x128xf32> to vector<1x256x128xf32>
    %92 = arith.truncf %91 : vector<1x256x128xf32> to vector<1x256x128xbf16>
    %c0_104 = arith.constant 0 : index
    %c0_105 = arith.constant 0 : index
    %c0_106 = arith.constant 0 : index
    %93 = vector.load %arg6[%c0_104, %c0_105, %c0_106] : memref<1x256x128xbf16, #tpu.memory_space<vmem>>, vector<1x256x128xbf16>
    tpu.vector_store %arg6[%c0_104, %c0_105, %c0_106], %92 {strides = array<i32>} : memref<1x256x128xbf16, #tpu.memory_space<vmem>>, vector<1x256x128xbf16>,
    return
  }
  func.func @transform_0(%arg0: i32, %arg1: i32) -> (i32, i32, i32, i32) {
    %c0_i32 = arith.constant 0 : i32
    %c0_i32_0 = arith.constant 0 : i32
    %c0_i32_1 = arith.constant 0 : i32
    %c0_i32_2 = arith.constant 0 : i32
    return %arg1, %c0_i32, %c0_i32_0, %c0_i32_1 : i32, i32, i32, i32
  }
  func.func @transform_1(%arg0: i32, %arg1: i32) -> (i32, i32, i32) {
    %c0_i32 = arith.constant 0 : i32
    %c0_i32_0 = arith.constant 0 : i32
    %c0_i32_1 = arith.constant 0 : i32
    return %c0_i32, %c0_i32_0, %arg0 : i32, i32, i32
  }
  func.func @transform_2(%arg0: i32, %arg1: i32) -> (i32, i32) {
    %c0_i32 = arith.constant 0 : i32
    %c0_i32_0 = arith.constant 0 : i32
    return %c0_i32, %arg0 : i32, i32
  }
  func.func @transform_3(%arg0: i32, %arg1: i32) -> (i32, i32) {
    %c0_i32 = arith.constant 0 : i32
    %c0_i32_0 = arith.constant 0 : i32
    return %c0_i32, %arg0 : i32, i32
  }
  func.func @transform_4(%arg0: i32, %arg1: i32) -> (i32, i32, i32) {
    %c0_i32 = arith.constant 0 : i32
    %c0_i32_0 = arith.constant 0 : i32
    return %arg1, %c0_i32, %arg0 : i32, i32, i32
  }
}

module attributes {stable_mosaic.version = 11 : i64} {
  func.func @_pool_s2_kernel(%arg0: i32, %arg1: i32, %arg2: memref<1x8x2x8x256xbf16, #tpu.memory_space<vmem>>, %arg3: memref<1x8x8x128xbf16, #tpu.memory_space<vmem>>) attributes {dimension_semantics = [#tpu.dimension_semantics<parallel>, #tpu.dimension_semantics<parallel>], iteration_bounds = array<i64: 2, 1>, scalar_prefetch = 0 : i64, scratch_operands = 0 : i64, tpu.core_type = #tpu.core_type<tc>, window_params = [{transform_indices = @transform_0, window_bounds = array<i64: 1, 8, 2, 8, 256>}, {transform_indices = @transform_1, window_bounds = array<i64: 1, 8, 8, 128>}]} {
    %c0 = arith.constant 0 : index
    %c0_0 = arith.constant 0 : index
    %c0_1 = arith.constant 0 : index
    %c0_2 = arith.constant 0 : index
    %c0_3 = arith.constant 0 : index
    %0 = vector.load %arg2[%c0, %c0_0, %c0_1, %c0_2, %c0_3] : memref<1x8x2x8x256xbf16, #tpu.memory_space<vmem>>, vector<1x8x2x8x256xbf16>
    %1 = vector.extract_strided_slice %0 {offsets = [0, 0, 0, 0, 0], sizes = [1, 8, 1, 8, 256], strides = [1, 1, 1, 1, 1]} : vector<1x8x2x8x256xbf16> to vector<1x8x1x8x256xbf16>
    %2 = vector.shape_cast %1 : vector<1x8x1x8x256xbf16> to vector<1x8x8x256xbf16>
    %3 = vector.extract_strided_slice %0 {offsets = [0, 0, 1, 0, 0], sizes = [1, 8, 1, 8, 256], strides = [1, 1, 1, 1, 1]} : vector<1x8x2x8x256xbf16> to vector<1x8x1x8x256xbf16>
    %4 = vector.shape_cast %3 : vector<1x8x1x8x256xbf16> to vector<1x8x8x256xbf16>
    %5 = arith.maximumf %2, %4 : vector<1x8x8x256xbf16>
    %6 = vector.extract_strided_slice %5 {offsets = [0, 0, 0, 0], sizes = [1, 8, 8, 128], strides = [1, 1, 1, 1]} : vector<1x8x8x256xbf16> to vector<1x8x8x128xbf16>
    %7 = vector.extract_strided_slice %5 {offsets = [0, 0, 0, 128], sizes = [1, 8, 8, 128], strides = [1, 1, 1, 1]} : vector<1x8x8x256xbf16> to vector<1x8x8x128xbf16>
    %8 = arith.maximumf %6, %7 : vector<1x8x8x128xbf16>
    %c0_4 = arith.constant 0 : index
    %c0_5 = arith.constant 0 : index
    %c0_6 = arith.constant 0 : index
    %c0_7 = arith.constant 0 : index
    %9 = vector.load %arg3[%c0_4, %c0_5, %c0_6, %c0_7] : memref<1x8x8x128xbf16, #tpu.memory_space<vmem>>, vector<1x8x8x128xbf16>
    tpu.vector_store %arg3[%c0_4, %c0_5, %c0_6, %c0_7], %8 {strides = array<i32>} : memref<1x8x8x128xbf16, #tpu.memory_space<vmem>>, vector<1x8x8x128xbf16>,
    return
  }
  func.func @transform_0(%arg0: i32, %arg1: i32) -> (i32, i32, i32, i32, i32) {
    %c0_i32 = arith.constant 0 : i32
    %c0_i32_0 = arith.constant 0 : i32
    %c0_i32_1 = arith.constant 0 : i32
    %c0_i32_2 = arith.constant 0 : i32
    return %arg0, %arg1, %c0_i32, %c0_i32_0, %c0_i32_1 : i32, i32, i32, i32, i32
  }
  func.func @transform_1(%arg0: i32, %arg1: i32) -> (i32, i32, i32, i32) {
    %c0_i32 = arith.constant 0 : i32
    %c0_i32_0 = arith.constant 0 : i32
    %c0_i32_1 = arith.constant 0 : i32
    return %arg0, %arg1, %c0_i32, %c0_i32_0 : i32, i32, i32, i32
  }
}

module attributes {stable_mosaic.version = 11 : i64} {
  func.func @_conv_tap_kernel(%arg0: i32, %arg1: i32, %arg2: memref<1x10x10x128xbf16, #tpu.memory_space<vmem>>, %arg3: memref<9x128x128xbf16, #tpu.memory_space<vmem>>, %arg4: memref<1x128xf32, #tpu.memory_space<vmem>>, %arg5: memref<1x128xf32, #tpu.memory_space<vmem>>, %arg6: memref<1x64x128xbf16, #tpu.memory_space<vmem>>, %arg7: memref<64x128xf32, #tpu.memory_space<vmem>>) attributes {dimension_semantics = [#tpu.dimension_semantics<parallel>, #tpu.dimension_semantics<parallel>], iteration_bounds = array<i64: 1, 2>, scalar_prefetch = 0 : i64, scratch_operands = 1 : i64, tpu.core_type = #tpu.core_type<tc>, window_params = [{transform_indices = @transform_0, window_bounds = array<i64: 1, 10, 10, 128>}, {transform_indices = @transform_1, window_bounds = array<i64: 9, 128, 128>}, {transform_indices = @transform_2, window_bounds = array<i64: 1, 128>}, {transform_indices = @transform_3, window_bounds = array<i64: 1, 128>}, {transform_indices = @transform_4, window_bounds = array<i64: 1, 64, 128>}]} {
    %c0 = arith.constant 0 : index
    %c0_0 = arith.constant 0 : index
    %c0_1 = arith.constant 0 : index
    %c0_2 = arith.constant 0 : index
    %0 = vector.load %arg2[%c0, %c0_0, %c0_1, %c0_2] : memref<1x10x10x128xbf16, #tpu.memory_space<vmem>>, vector<1x8x8x128xbf16>
    %1 = vector.shape_cast %0 : vector<1x8x8x128xbf16> to vector<8x8x128xbf16>
    %2 = vector.shape_cast %1 : vector<8x8x128xbf16> to vector<64x128xbf16>
    %c0_3 = arith.constant 0 : index
    %c0_4 = arith.constant 0 : index
    %c0_5 = arith.constant 0 : index
    %3 = vector.load %arg3[%c0_3, %c0_4, %c0_5] : memref<9x128x128xbf16, #tpu.memory_space<vmem>>, vector<1x128x128xbf16>
    %4 = vector.shape_cast %3 : vector<1x128x128xbf16> to vector<128x128xbf16>
    %cst = arith.constant dense<0.000000e+00> : vector<64x128xf32>
    %5 = tpu.matmul %2, %4, %cst {dimension_numbers = #tpu.dot_dimension_numbers<[1], [0], [0], [1], [0, 0, 1, 1], [], []>} : vector<64x128xbf16>, vector<128x128xbf16>, vector<64x128xf32> -> vector<64x128xf32>
    %c0_6 = arith.constant 0 : index
    %c0_7 = arith.constant 0 : index
    %6 = vector.load %arg7[%c0_6, %c0_7] : memref<64x128xf32, #tpu.memory_space<vmem>>, vector<64x128xf32>
    tpu.vector_store %arg7[%c0_6, %c0_7], %5 {strides = array<i32>} : memref<64x128xf32, #tpu.memory_space<vmem>>, vector<64x128xf32>,
    %c0_8 = arith.constant 0 : index
    %c0_9 = arith.constant 0 : index
    %c1 = arith.constant 1 : index
    %c0_10 = arith.constant 0 : index
    %7 = vector.load %arg2[%c0_8, %c0_9, %c1, %c0_10] : memref<1x10x10x128xbf16, #tpu.memory_space<vmem>>, vector<1x8x8x128xbf16>
    %8 = vector.shape_cast %7 : vector<1x8x8x128xbf16> to vector<8x8x128xbf16>
    %9 = vector.shape_cast %8 : vector<8x8x128xbf16> to vector<64x128xbf16>
    %c1_11 = arith.constant 1 : index
    %c0_12 = arith.constant 0 : index
    %c0_13 = arith.constant 0 : index
    %10 = vector.load %arg3[%c1_11, %c0_12, %c0_13] : memref<9x128x128xbf16, #tpu.memory_space<vmem>>, vector<1x128x128xbf16>
    %11 = vector.shape_cast %10 : vector<1x128x128xbf16> to vector<128x128xbf16>
    %cst_14 = arith.constant dense<0.000000e+00> : vector<64x128xf32>
    %12 = tpu.matmul %9, %11, %cst_14 {dimension_numbers = #tpu.dot_dimension_numbers<[1], [0], [0], [1], [0, 0, 1, 1], [], []>} : vector<64x128xbf16>, vector<128x128xbf16>, vector<64x128xf32> -> vector<64x128xf32>
    %c0_15 = arith.constant 0 : index
    %c0_16 = arith.constant 0 : index
    %13 = vector.load %arg7[%c0_15, %c0_16] : memref<64x128xf32, #tpu.memory_space<vmem>>, vector<64x128xf32>
    %14 = arith.addf %13, %12 : vector<64x128xf32>
    %c0_17 = arith.constant 0 : index
    %c0_18 = arith.constant 0 : index
    %15 = vector.load %arg7[%c0_17, %c0_18] : memref<64x128xf32, #tpu.memory_space<vmem>>, vector<64x128xf32>
    tpu.vector_store %arg7[%c0_17, %c0_18], %14 {strides = array<i32>} : memref<64x128xf32, #tpu.memory_space<vmem>>, vector<64x128xf32>,
    %c0_19 = arith.constant 0 : index
    %c0_20 = arith.constant 0 : index
    %c2 = arith.constant 2 : index
    %c0_21 = arith.constant 0 : index
    %16 = vector.load %arg2[%c0_19, %c0_20, %c2, %c0_21] : memref<1x10x10x128xbf16, #tpu.memory_space<vmem>>, vector<1x8x8x128xbf16>
    %17 = vector.shape_cast %16 : vector<1x8x8x128xbf16> to vector<8x8x128xbf16>
    %18 = vector.shape_cast %17 : vector<8x8x128xbf16> to vector<64x128xbf16>
    %c2_22 = arith.constant 2 : index
    %c0_23 = arith.constant 0 : index
    %c0_24 = arith.constant 0 : index
    %19 = vector.load %arg3[%c2_22, %c0_23, %c0_24] : memref<9x128x128xbf16, #tpu.memory_space<vmem>>, vector<1x128x128xbf16>
    %20 = vector.shape_cast %19 : vector<1x128x128xbf16> to vector<128x128xbf16>
    %cst_25 = arith.constant dense<0.000000e+00> : vector<64x128xf32>
    %21 = tpu.matmul %18, %20, %cst_25 {dimension_numbers = #tpu.dot_dimension_numbers<[1], [0], [0], [1], [0, 0, 1, 1], [], []>} : vector<64x128xbf16>, vector<128x128xbf16>, vector<64x128xf32> -> vector<64x128xf32>
    %c0_26 = arith.constant 0 : index
    %c0_27 = arith.constant 0 : index
    %22 = vector.load %arg7[%c0_26, %c0_27] : memref<64x128xf32, #tpu.memory_space<vmem>>, vector<64x128xf32>
    %23 = arith.addf %22, %21 : vector<64x128xf32>
    %c0_28 = arith.constant 0 : index
    %c0_29 = arith.constant 0 : index
    %24 = vector.load %arg7[%c0_28, %c0_29] : memref<64x128xf32, #tpu.memory_space<vmem>>, vector<64x128xf32>
    tpu.vector_store %arg7[%c0_28, %c0_29], %23 {strides = array<i32>} : memref<64x128xf32, #tpu.memory_space<vmem>>, vector<64x128xf32>,
    %c0_30 = arith.constant 0 : index
    %c1_31 = arith.constant 1 : index
    %c0_32 = arith.constant 0 : index
    %c0_33 = arith.constant 0 : index
    %25 = vector.load %arg2[%c0_30, %c1_31, %c0_32, %c0_33] : memref<1x10x10x128xbf16, #tpu.memory_space<vmem>>, vector<1x8x8x128xbf16>
    %26 = vector.shape_cast %25 : vector<1x8x8x128xbf16> to vector<8x8x128xbf16>
    %27 = vector.shape_cast %26 : vector<8x8x128xbf16> to vector<64x128xbf16>
    %c3 = arith.constant 3 : index
    %c0_34 = arith.constant 0 : index
    %c0_35 = arith.constant 0 : index
    %28 = vector.load %arg3[%c3, %c0_34, %c0_35] : memref<9x128x128xbf16, #tpu.memory_space<vmem>>, vector<1x128x128xbf16>
    %29 = vector.shape_cast %28 : vector<1x128x128xbf16> to vector<128x128xbf16>
    %cst_36 = arith.constant dense<0.000000e+00> : vector<64x128xf32>
    %30 = tpu.matmul %27, %29, %cst_36 {dimension_numbers = #tpu.dot_dimension_numbers<[1], [0], [0], [1], [0, 0, 1, 1], [], []>} : vector<64x128xbf16>, vector<128x128xbf16>, vector<64x128xf32> -> vector<64x128xf32>
    %c0_37 = arith.constant 0 : index
    %c0_38 = arith.constant 0 : index
    %31 = vector.load %arg7[%c0_37, %c0_38] : memref<64x128xf32, #tpu.memory_space<vmem>>, vector<64x128xf32>
    %32 = arith.addf %31, %30 : vector<64x128xf32>
    %c0_39 = arith.constant 0 : index
    %c0_40 = arith.constant 0 : index
    %33 = vector.load %arg7[%c0_39, %c0_40] : memref<64x128xf32, #tpu.memory_space<vmem>>, vector<64x128xf32>
    tpu.vector_store %arg7[%c0_39, %c0_40], %32 {strides = array<i32>} : memref<64x128xf32, #tpu.memory_space<vmem>>, vector<64x128xf32>,
    %c0_41 = arith.constant 0 : index
    %c1_42 = arith.constant 1 : index
    %c1_43 = arith.constant 1 : index
    %c0_44 = arith.constant 0 : index
    %34 = vector.load %arg2[%c0_41, %c1_42, %c1_43, %c0_44] : memref<1x10x10x128xbf16, #tpu.memory_space<vmem>>, vector<1x8x8x128xbf16>
    %35 = vector.shape_cast %34 : vector<1x8x8x128xbf16> to vector<8x8x128xbf16>
    %36 = vector.shape_cast %35 : vector<8x8x128xbf16> to vector<64x128xbf16>
    %c4 = arith.constant 4 : index
    %c0_45 = arith.constant 0 : index
    %c0_46 = arith.constant 0 : index
    %37 = vector.load %arg3[%c4, %c0_45, %c0_46] : memref<9x128x128xbf16, #tpu.memory_space<vmem>>, vector<1x128x128xbf16>
    %38 = vector.shape_cast %37 : vector<1x128x128xbf16> to vector<128x128xbf16>
    %cst_47 = arith.constant dense<0.000000e+00> : vector<64x128xf32>
    %39 = tpu.matmul %36, %38, %cst_47 {dimension_numbers = #tpu.dot_dimension_numbers<[1], [0], [0], [1], [0, 0, 1, 1], [], []>} : vector<64x128xbf16>, vector<128x128xbf16>, vector<64x128xf32> -> vector<64x128xf32>
    %c0_48 = arith.constant 0 : index
    %c0_49 = arith.constant 0 : index
    %40 = vector.load %arg7[%c0_48, %c0_49] : memref<64x128xf32, #tpu.memory_space<vmem>>, vector<64x128xf32>
    %41 = arith.addf %40, %39 : vector<64x128xf32>
    %c0_50 = arith.constant 0 : index
    %c0_51 = arith.constant 0 : index
    %42 = vector.load %arg7[%c0_50, %c0_51] : memref<64x128xf32, #tpu.memory_space<vmem>>, vector<64x128xf32>
    tpu.vector_store %arg7[%c0_50, %c0_51], %41 {strides = array<i32>} : memref<64x128xf32, #tpu.memory_space<vmem>>, vector<64x128xf32>,
    %c0_52 = arith.constant 0 : index
    %c1_53 = arith.constant 1 : index
    %c2_54 = arith.constant 2 : index
    %c0_55 = arith.constant 0 : index
    %43 = vector.load %arg2[%c0_52, %c1_53, %c2_54, %c0_55] : memref<1x10x10x128xbf16, #tpu.memory_space<vmem>>, vector<1x8x8x128xbf16>
    %44 = vector.shape_cast %43 : vector<1x8x8x128xbf16> to vector<8x8x128xbf16>
    %45 = vector.shape_cast %44 : vector<8x8x128xbf16> to vector<64x128xbf16>
    %c5 = arith.constant 5 : index
    %c0_56 = arith.constant 0 : index
    %c0_57 = arith.constant 0 : index
    %46 = vector.load %arg3[%c5, %c0_56, %c0_57] : memref<9x128x128xbf16, #tpu.memory_space<vmem>>, vector<1x128x128xbf16>
    %47 = vector.shape_cast %46 : vector<1x128x128xbf16> to vector<128x128xbf16>
    %cst_58 = arith.constant dense<0.000000e+00> : vector<64x128xf32>
    %48 = tpu.matmul %45, %47, %cst_58 {dimension_numbers = #tpu.dot_dimension_numbers<[1], [0], [0], [1], [0, 0, 1, 1], [], []>} : vector<64x128xbf16>, vector<128x128xbf16>, vector<64x128xf32> -> vector<64x128xf32>
    %c0_59 = arith.constant 0 : index
    %c0_60 = arith.constant 0 : index
    %49 = vector.load %arg7[%c0_59, %c0_60] : memref<64x128xf32, #tpu.memory_space<vmem>>, vector<64x128xf32>
    %50 = arith.addf %49, %48 : vector<64x128xf32>
    %c0_61 = arith.constant 0 : index
    %c0_62 = arith.constant 0 : index
    %51 = vector.load %arg7[%c0_61, %c0_62] : memref<64x128xf32, #tpu.memory_space<vmem>>, vector<64x128xf32>
    tpu.vector_store %arg7[%c0_61, %c0_62], %50 {strides = array<i32>} : memref<64x128xf32, #tpu.memory_space<vmem>>, vector<64x128xf32>,
    %c0_63 = arith.constant 0 : index
    %c2_64 = arith.constant 2 : index
    %c0_65 = arith.constant 0 : index
    %c0_66 = arith.constant 0 : index
    %52 = vector.load %arg2[%c0_63, %c2_64, %c0_65, %c0_66] : memref<1x10x10x128xbf16, #tpu.memory_space<vmem>>, vector<1x8x8x128xbf16>
    %53 = vector.shape_cast %52 : vector<1x8x8x128xbf16> to vector<8x8x128xbf16>
    %54 = vector.shape_cast %53 : vector<8x8x128xbf16> to vector<64x128xbf16>
    %c6 = arith.constant 6 : index
    %c0_67 = arith.constant 0 : index
    %c0_68 = arith.constant 0 : index
    %55 = vector.load %arg3[%c6, %c0_67, %c0_68] : memref<9x128x128xbf16, #tpu.memory_space<vmem>>, vector<1x128x128xbf16>
    %56 = vector.shape_cast %55 : vector<1x128x128xbf16> to vector<128x128xbf16>
    %cst_69 = arith.constant dense<0.000000e+00> : vector<64x128xf32>
    %57 = tpu.matmul %54, %56, %cst_69 {dimension_numbers = #tpu.dot_dimension_numbers<[1], [0], [0], [1], [0, 0, 1, 1], [], []>} : vector<64x128xbf16>, vector<128x128xbf16>, vector<64x128xf32> -> vector<64x128xf32>
    %c0_70 = arith.constant 0 : index
    %c0_71 = arith.constant 0 : index
    %58 = vector.load %arg7[%c0_70, %c0_71] : memref<64x128xf32, #tpu.memory_space<vmem>>, vector<64x128xf32>
    %59 = arith.addf %58, %57 : vector<64x128xf32>
    %c0_72 = arith.constant 0 : index
    %c0_73 = arith.constant 0 : index
    %60 = vector.load %arg7[%c0_72, %c0_73] : memref<64x128xf32, #tpu.memory_space<vmem>>, vector<64x128xf32>
    tpu.vector_store %arg7[%c0_72, %c0_73], %59 {strides = array<i32>} : memref<64x128xf32, #tpu.memory_space<vmem>>, vector<64x128xf32>,
    %c0_74 = arith.constant 0 : index
    %c2_75 = arith.constant 2 : index
    %c1_76 = arith.constant 1 : index
    %c0_77 = arith.constant 0 : index
    %61 = vector.load %arg2[%c0_74, %c2_75, %c1_76, %c0_77] : memref<1x10x10x128xbf16, #tpu.memory_space<vmem>>, vector<1x8x8x128xbf16>
    %62 = vector.shape_cast %61 : vector<1x8x8x128xbf16> to vector<8x8x128xbf16>
    %63 = vector.shape_cast %62 : vector<8x8x128xbf16> to vector<64x128xbf16>
    %c7 = arith.constant 7 : index
    %c0_78 = arith.constant 0 : index
    %c0_79 = arith.constant 0 : index
    %64 = vector.load %arg3[%c7, %c0_78, %c0_79] : memref<9x128x128xbf16, #tpu.memory_space<vmem>>, vector<1x128x128xbf16>
    %65 = vector.shape_cast %64 : vector<1x128x128xbf16> to vector<128x128xbf16>
    %cst_80 = arith.constant dense<0.000000e+00> : vector<64x128xf32>
    %66 = tpu.matmul %63, %65, %cst_80 {dimension_numbers = #tpu.dot_dimension_numbers<[1], [0], [0], [1], [0, 0, 1, 1], [], []>} : vector<64x128xbf16>, vector<128x128xbf16>, vector<64x128xf32> -> vector<64x128xf32>
    %c0_81 = arith.constant 0 : index
    %c0_82 = arith.constant 0 : index
    %67 = vector.load %arg7[%c0_81, %c0_82] : memref<64x128xf32, #tpu.memory_space<vmem>>, vector<64x128xf32>
    %68 = arith.addf %67, %66 : vector<64x128xf32>
    %c0_83 = arith.constant 0 : index
    %c0_84 = arith.constant 0 : index
    %69 = vector.load %arg7[%c0_83, %c0_84] : memref<64x128xf32, #tpu.memory_space<vmem>>, vector<64x128xf32>
    tpu.vector_store %arg7[%c0_83, %c0_84], %68 {strides = array<i32>} : memref<64x128xf32, #tpu.memory_space<vmem>>, vector<64x128xf32>,
    %c0_85 = arith.constant 0 : index
    %c2_86 = arith.constant 2 : index
    %c2_87 = arith.constant 2 : index
    %c0_88 = arith.constant 0 : index
    %70 = vector.load %arg2[%c0_85, %c2_86, %c2_87, %c0_88] : memref<1x10x10x128xbf16, #tpu.memory_space<vmem>>, vector<1x8x8x128xbf16>
    %71 = vector.shape_cast %70 : vector<1x8x8x128xbf16> to vector<8x8x128xbf16>
    %72 = vector.shape_cast %71 : vector<8x8x128xbf16> to vector<64x128xbf16>
    %c8 = arith.constant 8 : index
    %c0_89 = arith.constant 0 : index
    %c0_90 = arith.constant 0 : index
    %73 = vector.load %arg3[%c8, %c0_89, %c0_90] : memref<9x128x128xbf16, #tpu.memory_space<vmem>>, vector<1x128x128xbf16>
    %74 = vector.shape_cast %73 : vector<1x128x128xbf16> to vector<128x128xbf16>
    %cst_91 = arith.constant dense<0.000000e+00> : vector<64x128xf32>
    %75 = tpu.matmul %72, %74, %cst_91 {dimension_numbers = #tpu.dot_dimension_numbers<[1], [0], [0], [1], [0, 0, 1, 1], [], []>} : vector<64x128xbf16>, vector<128x128xbf16>, vector<64x128xf32> -> vector<64x128xf32>
    %c0_92 = arith.constant 0 : index
    %c0_93 = arith.constant 0 : index
    %76 = vector.load %arg7[%c0_92, %c0_93] : memref<64x128xf32, #tpu.memory_space<vmem>>, vector<64x128xf32>
    %77 = arith.addf %76, %75 : vector<64x128xf32>
    %c0_94 = arith.constant 0 : index
    %c0_95 = arith.constant 0 : index
    %78 = vector.load %arg7[%c0_94, %c0_95] : memref<64x128xf32, #tpu.memory_space<vmem>>, vector<64x128xf32>
    tpu.vector_store %arg7[%c0_94, %c0_95], %77 {strides = array<i32>} : memref<64x128xf32, #tpu.memory_space<vmem>>, vector<64x128xf32>,
    %c0_96 = arith.constant 0 : index
    %c0_97 = arith.constant 0 : index
    %79 = vector.load %arg7[%c0_96, %c0_97] : memref<64x128xf32, #tpu.memory_space<vmem>>, vector<64x128xf32>
    %c0_98 = arith.constant 0 : index
    %c0_99 = arith.constant 0 : index
    %80 = vector.load %arg4[%c0_98, %c0_99] : memref<1x128xf32, #tpu.memory_space<vmem>>, vector<1x128xf32>
    %81 = vector.broadcast %80 : vector<1x128xf32> to vector<64x128xf32>
    %82 = arith.mulf %79, %81 : vector<64x128xf32>
    %c0_100 = arith.constant 0 : index
    %c0_101 = arith.constant 0 : index
    %83 = vector.load %arg5[%c0_100, %c0_101] : memref<1x128xf32, #tpu.memory_space<vmem>>, vector<1x128xf32>
    %84 = vector.broadcast %83 : vector<1x128xf32> to vector<64x128xf32>
    %85 = arith.addf %82, %84 : vector<64x128xf32>
    %cst_102 = arith.constant 0.000000e+00 : f32
    %86 = vector.broadcast %cst_102 : f32 to vector<64x128xf32>
    %87 = arith.cmpf ogt, %85, %86 : vector<64x128xf32>
    %cst_103 = arith.constant 1.000000e-01 : f32
    %88 = vector.broadcast %cst_103 : f32 to vector<64x128xf32>
    %89 = arith.mulf %88, %85 : vector<64x128xf32>
    %90 = arith.select %87, %85, %89 : vector<64x128xi1>, vector<64x128xf32>
    %91 = vector.shape_cast %90 : vector<64x128xf32> to vector<1x64x128xf32>
    %92 = arith.truncf %91 : vector<1x64x128xf32> to vector<1x64x128xbf16>
    %c0_104 = arith.constant 0 : index
    %c0_105 = arith.constant 0 : index
    %c0_106 = arith.constant 0 : index
    %93 = vector.load %arg6[%c0_104, %c0_105, %c0_106] : memref<1x64x128xbf16, #tpu.memory_space<vmem>>, vector<1x64x128xbf16>
    tpu.vector_store %arg6[%c0_104, %c0_105, %c0_106], %92 {strides = array<i32>} : memref<1x64x128xbf16, #tpu.memory_space<vmem>>, vector<1x64x128xbf16>,
    return
  }
  func.func @transform_0(%arg0: i32, %arg1: i32) -> (i32, i32, i32, i32) {
    %c0_i32 = arith.constant 0 : i32
    %c0_i32_0 = arith.constant 0 : i32
    %c0_i32_1 = arith.constant 0 : i32
    %c0_i32_2 = arith.constant 0 : i32
    return %arg1, %c0_i32, %c0_i32_0, %c0_i32_1 : i32, i32, i32, i32
  }
  func.func @transform_1(%arg0: i32, %arg1: i32) -> (i32, i32, i32) {
    %c0_i32 = arith.constant 0 : i32
    %c0_i32_0 = arith.constant 0 : i32
    %c0_i32_1 = arith.constant 0 : i32
    return %c0_i32, %c0_i32_0, %arg0 : i32, i32, i32
  }
  func.func @transform_2(%arg0: i32, %arg1: i32) -> (i32, i32) {
    %c0_i32 = arith.constant 0 : i32
    %c0_i32_0 = arith.constant 0 : i32
    return %c0_i32, %arg0 : i32, i32
  }
  func.func @transform_3(%arg0: i32, %arg1: i32) -> (i32, i32) {
    %c0_i32 = arith.constant 0 : i32
    %c0_i32_0 = arith.constant 0 : i32
    return %c0_i32, %arg0 : i32, i32
  }
  func.func @transform_4(%arg0: i32, %arg1: i32) -> (i32, i32, i32) {
    %c0_i32 = arith.constant 0 : i32
    %c0_i32_0 = arith.constant 0 : i32
    return %arg1, %c0_i32, %arg0 : i32, i32, i32
  }
}

module attributes {stable_mosaic.version = 11 : i64} {
  func.func @_pool_s1_kernel(%arg0: i32, %arg1: memref<1x9x9x128xbf16, #tpu.memory_space<vmem>>, %arg2: memref<1x8x8x128xbf16, #tpu.memory_space<vmem>>) attributes {dimension_semantics = [#tpu.dimension_semantics<parallel>], iteration_bounds = array<i64: 2>, scalar_prefetch = 0 : i64, scratch_operands = 0 : i64, tpu.core_type = #tpu.core_type<tc>, window_params = [{transform_indices = @transform_0, window_bounds = array<i64: 1, 9, 9, 128>}, {transform_indices = @transform_1, window_bounds = array<i64: 1, 8, 8, 128>}]} {
    %c0 = arith.constant 0 : index
    %c0_0 = arith.constant 0 : index
    %c0_1 = arith.constant 0 : index
    %c0_2 = arith.constant 0 : index
    %0 = vector.load %arg1[%c0, %c0_0, %c0_1, %c0_2] : memref<1x9x9x128xbf16, #tpu.memory_space<vmem>>, vector<1x9x9x128xbf16>
    %1 = vector.extract_strided_slice %0 {offsets = [0, 0, 0, 0], sizes = [1, 9, 8, 128], strides = [1, 1, 1, 1]} : vector<1x9x9x128xbf16> to vector<1x9x8x128xbf16>
    %2 = vector.extract_strided_slice %0 {offsets = [0, 0, 1, 0], sizes = [1, 9, 8, 128], strides = [1, 1, 1, 1]} : vector<1x9x9x128xbf16> to vector<1x9x8x128xbf16>
    %3 = arith.maximumf %1, %2 : vector<1x9x8x128xbf16>
    %4 = vector.extract_strided_slice %3 {offsets = [0, 0, 0, 0], sizes = [1, 8, 8, 128], strides = [1, 1, 1, 1]} : vector<1x9x8x128xbf16> to vector<1x8x8x128xbf16>
    %5 = vector.extract_strided_slice %3 {offsets = [0, 1, 0, 0], sizes = [1, 8, 8, 128], strides = [1, 1, 1, 1]} : vector<1x9x8x128xbf16> to vector<1x8x8x128xbf16>
    %6 = arith.maximumf %4, %5 : vector<1x8x8x128xbf16>
    %c0_3 = arith.constant 0 : index
    %c0_4 = arith.constant 0 : index
    %c0_5 = arith.constant 0 : index
    %c0_6 = arith.constant 0 : index
    %7 = vector.load %arg2[%c0_3, %c0_4, %c0_5, %c0_6] : memref<1x8x8x128xbf16, #tpu.memory_space<vmem>>, vector<1x8x8x128xbf16>
    tpu.vector_store %arg2[%c0_3, %c0_4, %c0_5, %c0_6], %6 {strides = array<i32>} : memref<1x8x8x128xbf16, #tpu.memory_space<vmem>>, vector<1x8x8x128xbf16>,
    return
  }
  func.func @transform_0(%arg0: i32) -> (i32, i32, i32, i32) {
    %c0_i32 = arith.constant 0 : i32
    %c0_i32_0 = arith.constant 0 : i32
    %c0_i32_1 = arith.constant 0 : i32
    %c0_i32_2 = arith.constant 0 : i32
    return %arg0, %c0_i32, %c0_i32_0, %c0_i32_1 : i32, i32, i32, i32
  }
  func.func @transform_1(%arg0: i32) -> (i32, i32, i32, i32) {
    %c0_i32 = arith.constant 0 : i32
    %c0_i32_0 = arith.constant 0 : i32
    %c0_i32_1 = arith.constant 0 : i32
    %c0_i32_2 = arith.constant 0 : i32
    return %arg0, %c0_i32, %c0_i32_0, %c0_i32_1 : i32, i32, i32, i32
  }
}

module attributes {stable_mosaic.version = 11 : i64} {
  func.func @_conv_tap_kernel(%arg0: i32, %arg1: i32, %arg2: memref<1x8x8x256xbf16, #tpu.memory_space<vmem>>, %arg3: memref<1x256x128xbf16, #tpu.memory_space<vmem>>, %arg4: memref<1x128xf32, #tpu.memory_space<vmem>>, %arg5: memref<1x128xf32, #tpu.memory_space<vmem>>, %arg6: memref<1x64x128xbf16, #tpu.memory_space<vmem>>, %arg7: memref<64x128xf32, #tpu.memory_space<vmem>>) attributes {dimension_semantics = [#tpu.dimension_semantics<parallel>, #tpu.dimension_semantics<parallel>], iteration_bounds = array<i64: 1, 2>, scalar_prefetch = 0 : i64, scratch_operands = 1 : i64, tpu.core_type = #tpu.core_type<tc>, window_params = [{transform_indices = @transform_0, window_bounds = array<i64: 1, 8, 8, 256>}, {transform_indices = @transform_1, window_bounds = array<i64: 1, 256, 128>}, {transform_indices = @transform_2, window_bounds = array<i64: 1, 128>}, {transform_indices = @transform_3, window_bounds = array<i64: 1, 128>}, {transform_indices = @transform_4, window_bounds = array<i64: 1, 64, 128>}]} {
    %c0 = arith.constant 0 : index
    %c0_0 = arith.constant 0 : index
    %c0_1 = arith.constant 0 : index
    %c0_2 = arith.constant 0 : index
    %0 = vector.load %arg2[%c0, %c0_0, %c0_1, %c0_2] : memref<1x8x8x256xbf16, #tpu.memory_space<vmem>>, vector<1x8x8x256xbf16>
    %1 = vector.shape_cast %0 : vector<1x8x8x256xbf16> to vector<8x8x256xbf16>
    %2 = vector.shape_cast %1 : vector<8x8x256xbf16> to vector<64x256xbf16>
    %c0_3 = arith.constant 0 : index
    %c0_4 = arith.constant 0 : index
    %c0_5 = arith.constant 0 : index
    %3 = vector.load %arg3[%c0_3, %c0_4, %c0_5] : memref<1x256x128xbf16, #tpu.memory_space<vmem>>, vector<1x256x128xbf16>
    %4 = vector.shape_cast %3 : vector<1x256x128xbf16> to vector<256x128xbf16>
    %cst = arith.constant dense<0.000000e+00> : vector<64x128xf32>
    %5 = tpu.matmul %2, %4, %cst {dimension_numbers = #tpu.dot_dimension_numbers<[1], [0], [0], [1], [0, 0, 1, 1], [], []>} : vector<64x256xbf16>, vector<256x128xbf16>, vector<64x128xf32> -> vector<64x128xf32>
    %c0_6 = arith.constant 0 : index
    %c0_7 = arith.constant 0 : index
    %6 = vector.load %arg7[%c0_6, %c0_7] : memref<64x128xf32, #tpu.memory_space<vmem>>, vector<64x128xf32>
    tpu.vector_store %arg7[%c0_6, %c0_7], %5 {strides = array<i32>} : memref<64x128xf32, #tpu.memory_space<vmem>>, vector<64x128xf32>,
    %c0_8 = arith.constant 0 : index
    %c0_9 = arith.constant 0 : index
    %7 = vector.load %arg7[%c0_8, %c0_9] : memref<64x128xf32, #tpu.memory_space<vmem>>, vector<64x128xf32>
    %c0_10 = arith.constant 0 : index
    %c0_11 = arith.constant 0 : index
    %8 = vector.load %arg4[%c0_10, %c0_11] : memref<1x128xf32, #tpu.memory_space<vmem>>, vector<1x128xf32>
    %9 = vector.broadcast %8 : vector<1x128xf32> to vector<64x128xf32>
    %10 = arith.mulf %7, %9 : vector<64x128xf32>
    %c0_12 = arith.constant 0 : index
    %c0_13 = arith.constant 0 : index
    %11 = vector.load %arg5[%c0_12, %c0_13] : memref<1x128xf32, #tpu.memory_space<vmem>>, vector<1x128xf32>
    %12 = vector.broadcast %11 : vector<1x128xf32> to vector<64x128xf32>
    %13 = arith.addf %10, %12 : vector<64x128xf32>
    %14 = vector.shape_cast %13 : vector<64x128xf32> to vector<1x64x128xf32>
    %15 = arith.truncf %14 : vector<1x64x128xf32> to vector<1x64x128xbf16>
    %c0_14 = arith.constant 0 : index
    %c0_15 = arith.constant 0 : index
    %c0_16 = arith.constant 0 : index
    %16 = vector.load %arg6[%c0_14, %c0_15, %c0_16] : memref<1x64x128xbf16, #tpu.memory_space<vmem>>, vector<1x64x128xbf16>
    tpu.vector_store %arg6[%c0_14, %c0_15, %c0_16], %15 {strides = array<i32>} : memref<1x64x128xbf16, #tpu.memory_space<vmem>>, vector<1x64x128xbf16>,
    return
  }
  func.func @transform_0(%arg0: i32, %arg1: i32) -> (i32, i32, i32, i32) {
    %c0_i32 = arith.constant 0 : i32
    %c0_i32_0 = arith.constant 0 : i32
    %c0_i32_1 = arith.constant 0 : i32
    %c0_i32_2 = arith.constant 0 : i32
    return %arg1, %c0_i32, %c0_i32_0, %c0_i32_1 : i32, i32, i32, i32
  }
  func.func @transform_1(%arg0: i32, %arg1: i32) -> (i32, i32, i32) {
    %c0_i32 = arith.constant 0 : i32
    %c0_i32_0 = arith.constant 0 : i32
    %c0_i32_1 = arith.constant 0 : i32
    return %c0_i32, %c0_i32_0, %arg0 : i32, i32, i32
  }
  func.func @transform_2(%arg0: i32, %arg1: i32) -> (i32, i32) {
    %c0_i32 = arith.constant 0 : i32
    %c0_i32_0 = arith.constant 0 : i32
    return %c0_i32, %arg0 : i32, i32
  }
  func.func @transform_3(%arg0: i32, %arg1: i32) -> (i32, i32) {
    %c0_i32 = arith.constant 0 : i32
    %c0_i32_0 = arith.constant 0 : i32
    return %c0_i32, %arg0 : i32, i32
  }
  func.func @transform_4(%arg0: i32, %arg1: i32) -> (i32, i32, i32) {
    %c0_i32 = arith.constant 0 : i32
    %c0_i32_0 = arith.constant 0 : i32
    return %arg1, %c0_i32, %arg0 : i32, i32, i32
  }
}

</mosaic_0001>

<llo_original>
// kernel: forward.6
$region0: #{forward.6}
  #allocation0 [shape = 'u32[]', space=smem, size = 0x4, offset = 0x4, fixed_abs, tag = 'smem constant byte address 0x4 - core index']
  #allocation1 [shape = 'u32[144,128]{1,0:T(1,128)}', space=vmem, size = 0x12000, scoped, tag = 'internal scratch']
  %s0 = inlined_call_operand.vmem [shape: bf16[2,8,2,8,256], index: 0, kind: input, shape index: {}]
  %s1 = inlined_call_operand.vmem [shape: bf16[2,8,8,128], index: 1, kind: output, shape index: {}]
  %s2 = sld [smem:[#allocation0]]
  $region37: #{forward.6} parent=0
    _
  %s4 = ssub.s32 1, %s2
  %s5 = scalar_select 0, %s4, %s2
  loop: start=0, step=1, limit=4
  $region2: #{forward.6} parent=0 // loop_pre_header
    _
  $region3: #{forward.6} parent=0 // loop_header
    %s7 = sphi 0, %s11
    %p8 = scmp.ge.s32.totalorder %s7, 4
    %s14 = sphi 0, %s26
    %s15 = sphi 0, %s22
    %s16 = sphi 0, %s14
    %s17 = sphi 0, %s15
    %s18 = sphi 0, %s16
    %s19 = sphi 0, %s17
    %s31 = sphi 0, %s33
    %s34 = sphi 0, %s31
    %s35 = sphi 0, %s34
    %s51 = sphi 0, %s35
    %s59 = sphi 0, %s61
    %s62 = sphi 0, %s59
    %s63 = sphi 0, %s62
    %s79 = sphi 0, %s63
  $region4: #{forward.6} parent=0 // loop_header_branch
    %10 = sbr.rel (%p8) target = $region8
  $region5: #{forward.6} parent=0 // loop_body
    %s12 = ssub.s32 %s7, 1
    %s13 = ssub.s32 %s7, 2
    %s20 = sadd.s32 1, %s15
    %p21 = scmp.ge.s32.totalorder %s20, 1
    %s22 = scalar_select %p21, 0, %s20
    %s23 = sadd.s32 1, %s14
    %s24 = scalar_select %p21, %s23, %s14
    %p25 = scmp.ge.s32.totalorder %s24, 2
    %s26 = scalar_select %p25, 0, %s24
    %s27 = ssub.s32 %s14, %s26
    %s28 = ssub.s32 %s15, %s22
    %s29 = sor.u32 %s27, %s28
    %p30 = scmp.eq.s32.totalorder %s29, 0
    %s32 = sadd.s32 %s31, 1
    %s33 = scalar_select %p30, %s31, %s32
    %p36 = pneg %p30
    %p37 = scmp.eq.s32.totalorder %s7, 1
    %p38 = por %p36, %p37
    %p39 = scmp.ne.s32.totalorder %s31, %s34
    %p40 = scmp.eq.s32.totalorder %s7, 0
    %p41 = por %p39, %p40
    %p42 = scmp.ne.s32.totalorder %s31, %s34
    %p43 = scmp.eq.s32.totalorder %s12, 1
    %p44 = por %p42, %p43
    %p45 = scmp.ne.s32.totalorder %s34, %s35
    %p46 = scmp.eq.s32.totalorder %s12, 0
    %p47 = por %p45, %p46
    %p48 = scmp.ne.s32.totalorder %s34, %s35
    %p49 = scmp.eq.s32.totalorder %s13, 1
    %p50 = por %p48, %p49
    %p52 = scmp.ne.s32.totalorder %s35, %s51
    %p53 = scmp.eq.s32.totalorder %s13, 0
    %p54 = por %p52, %p53
    %s55 = ssub.s32 %s14, %s26
    %s56 = ssub.s32 %s15, %s22
    %s57 = sor.u32 %s55, %s56
    %p58 = scmp.eq.s32.totalorder %s57, 0
    %s60 = sadd.s32 %s59, 1
    %s61 = scalar_select %p58, %s59, %s60
    %p64 = pneg %p58
    %p65 = scmp.eq.s32.totalorder %s7, 1
    %p66 = por %p64, %p65
    %p67 = scmp.ne.s32.totalorder %s59, %s62
    %p68 = scmp.eq.s32.totalorder %s7, 0
    %p69 = por %p67, %p68
    %p70 = scmp.ne.s32.totalorder %s59, %s62
    %p71 = scmp.eq.s32.totalorder %s12, 1
    %p72 = por %p70, %p71
    %p73 = scmp.ne.s32.totalorder %s62, %s63
    %p74 = scmp.eq.s32.totalorder %s12, 0
    %p75 = por %p73, %p74
    %p76 = scmp.ne.s32.totalorder %s62, %s63
    %p77 = scmp.eq.s32.totalorder %s13, 1
    %p78 = por %p76, %p77
    %p80 = scmp.ne.s32.totalorder %s63, %s79
    %p81 = scmp.eq.s32.totalorder %s13, 0
    %p82 = por %p80, %p81
    %p83 = scmp.le.s32.totalorder 1, %s7
    %p84 = scmp.lt.s32.totalorder %s7, 3
    %p85 = pnand %p83, %p84
    %p86 = pneg %p85
    // Predicated region
    $region9: #{forward.6} parent=5 // pred_check
      _
    $region10: #{forward.6} parent=5 // pred_check_branch
      %88 = sbr.rel (%p85) target = $region12
    $region11: #{forward.6} parent=5 // pred_region
      %s89 = ssub.s32 %s7, 1
    $region12: #{forward.6} parent=5 // pred_fallthru
      _
    %p90 = scmp.lt.s32.totalorder %s7, 2
    // Predicated region
    $region13: #{forward.6} parent=5 // pred_check
      %p91 = pneg %p90
    $region14: #{forward.6} parent=5 // pred_check_branch
      %93 = sbr.rel (%p91) target = $region16
    $region15: #{forward.6} parent=5 // pred_region
      // Predicated region
      $region17: #{forward.6} parent=15 // pred_check
        %p94 = pneg %p41
      $region18: #{forward.6} parent=15 // pred_check_branch
        %96 = sbr.rel (%p94) target = $region20
      $region19: #{forward.6} parent=15 // pred_region
        %s97 = smul.u32 8, %s15
        %p98 = scmp.lt.s32.totalorder %s14, 1
        %s99 = scalar_select %p98, %s14, 1
        %p100 = scmp.lt.s32.totalorder %s97, 7
        %s101 = scalar_select %p100, %s97, 7
        %s102 = smul.addr %s101, 4
        %s103 = smul.addr %s99, 32
        %s104 = sadd.s32 %s102, %s103
        %s105 = smul.addr %s104, 4
        %s106 = scalar_lea.vmem %s0, %s105
        %s107 = smul.u32 8, %s15
      $region20: #{forward.6} parent=15 // pred_fallthru
        _
    $region16: #{forward.6} parent=5 // pred_fallthru
      _
    %p108 = scmp.le.s32.totalorder 1, %s7
    %p109 = scmp.lt.s32.totalorder %s7, 3
    %p110 = pnand %p108, %p109
    %p111 = pneg %p110
    // Predicated region
    $region21: #{forward.6} parent=5 // pred_check
      _
    $region22: #{forward.6} parent=5 // pred_check_branch
      %113 = sbr.rel (%p110) target = $region24
    $region23: #{forward.6} parent=5 // pred_region
      %s114 = ssub.s32 %s7, 1
      %s115 = smul.u32 8, %s17
      %p116 = scmp.lt.s32.totalorder %s16, 1
      %s117 = scalar_select %p116, %s16, 1
      %p118 = scmp.lt.s32.totalorder %s115, 7
      %s119 = scalar_select %p118, %s115, 7
      %s120 = smul.addr %s119, 4
      %s121 = smul.addr %s117, 32
      %s122 = sadd.s32 %s120, %s121
      %s123 = smul.addr %s122, 4
      %s124 = scalar_lea.vmem %s0, %s123
      %p125 = pneg %p47
      %p126 = pneg %p44
      %p127 = pneg %p75
      %p128 = pneg %p72
      %s129 = smul.u32 8, %s17
      %p130 = scmp.lt.s32.totalorder %s16, 1
      %s131 = scalar_select %p130, %s16, 1
      %p132 = scmp.lt.s32.totalorder %s129, 7
      %s133 = scalar_select %p132, %s129, 7
      %s134 = smul.addr %s131, 8
      %s135 = sadd.s32 %s133, %s134
      %s136 = smul.addr %s135, 4
      %s137 = scalar_lea.vmem %s1, %s136
      %s138 = smul.u32 8, %s17
      %p139 = scmp.lt.s32.totalorder %s16, 1
      %s140 = scalar_select %p139, %s16, 1
      %p141 = scmp.lt.s32.totalorder %s138, 7
      %s142 = scalar_select %p141, %s138, 7
      %s143 = smul.addr %s142, 4
      %s144 = smul.addr %s140, 32
      %s145 = sadd.s32 %s143, %s144
      %s146 = smul.addr %s145, 4
      %s147 = scalar_lea.vmem %s0, %s146
      %s148 = smul.u32 8, %s17
      %s149 = smul.u32 8, %s17
      %p150 = scmp.lt.s32.totalorder %s16, 1
      %s151 = scalar_select %p150, %s16, 1
      %p152 = scmp.lt.s32.totalorder %s149, 7
      %s153 = scalar_select %p152, %s149, 7
      %s154 = smul.addr %s151, 8
      %s155 = sadd.s32 %s153, %s154
      %s156 = smul.addr %s155, 4
      %s157 = scalar_lea.vmem %s1, %s156
      %s158 = smul.u32 8, %s17
      %v159 = vld [vmem:[%s147] sm:$0xff]
      %v160 = vld [vmem:[%s147 + $0x8] sm:$0xff]
      %v161 = vld [vmem:[%s147 + $0x10] sm:$0xff]
      %v162 = vld [vmem:[%s147 + $0x18] sm:$0xff]
      %v163 = vld [vmem:[%s147 + $0x20] sm:$0xff]
      %v164 = vld [vmem:[%s147 + $0x28] sm:$0xff]
      %v165 = vld [vmem:[%s147 + $0x30] sm:$0xff]
      %v166 = vld [vmem:[%s147 + $0x38] sm:$0xff]
      %v167 = vld [vmem:[%s147 + $0x40] sm:$0xff]
      %v168 = vld [vmem:[%s147 + $0x48] sm:$0xff]
      %v169 = vld [vmem:[%s147 + $0x50] sm:$0xff]
      %v170 = vld [vmem:[%s147 + $0x58] sm:$0xff]
      %v171 = vld [vmem:[%s147 + $0x60] sm:$0xff]
      %v172 = vld [vmem:[%s147 + $0x68] sm:$0xff]
      %v173 = vld [vmem:[%s147 + $0x70] sm:$0xff]
      %v174 = vld [vmem:[%s147 + $0x78] sm:$0xff]
      %v175 = vmax.bf16 %v159, %v160
      %v176 = vmax.bf16 %v161, %v162
      %v177 = vmax.bf16 %v163, %v164
      %v178 = vmax.bf16 %v165, %v166
      %v179 = vmax.bf16 %v167, %v168
      %v180 = vmax.bf16 %v169, %v170
      %v181 = vmax.bf16 %v171, %v172
      %v182 = vmax.bf16 %v173, %v174
      %v191 = vrot.slane %v175, 4
      %v192 = vrot.slane %v176, 4
      %v193 = vrot.slane %v177, 4
      %v194 = vrot.slane %v178, 4
      %v195 = vrot.slane %v179, 4
      %v196 = vrot.slane %v180, 4
      %v197 = vrot.slane %v181, 4
      %v198 = vrot.slane %v182, 4
      %v207 = vmax.bf16 %v175, %v191
      %v208 = vmax.bf16 %v176, %v192
      %v209 = vmax.bf16 %v177, %v193
      %v210 = vmax.bf16 %v178, %v194
      %v211 = vmax.bf16 %v179, %v195
      %v212 = vmax.bf16 %v180, %v196
      %v213 = vmax.bf16 %v181, %v197
      %v214 = vmax.bf16 %v182, %v198
      %215 = vst [vmem:[%s157] sm:$0xf] %v207
      %216 = vst [vmem:[%s157 + $0x4] sm:$0xf] %v208
      %217 = vst [vmem:[%s157 + $0x8] sm:$0xf] %v209
      %218 = vst [vmem:[%s157 + $0xc] sm:$0xf] %v210
      %219 = vst [vmem:[%s157 + $0x10] sm:$0xf] %v211
      %220 = vst [vmem:[%s157 + $0x14] sm:$0xf] %v212
      %221 = vst [vmem:[%s157 + $0x18] sm:$0xf] %v213
      %222 = vst [vmem:[%s157 + $0x1c] sm:$0xf] %v214
      %s223 = smul.u32 8, %s17
      %p224 = scmp.lt.s32.totalorder %s16, 1
      %s225 = scalar_select %p224, %s16, 1
      %p226 = scmp.lt.s32.totalorder %s223, 7
      %s227 = scalar_select %p226, %s223, 7
      %s228 = smul.addr %s225, 8
      %s229 = sadd.s32 %s227, %s228
      %s230 = smul.addr %s229, 4
      %s231 = scalar_lea.vmem %s1, %s230
      // Predicated region
      $region25: #{forward.6} parent=23 // pred_check
        %p232 = pneg %p72
      $region26: #{forward.6} parent=23 // pred_check_branch
        %234 = sbr.rel (%p232) target = $region28
      $region27: #{forward.6} parent=23 // pred_region
        %s235 = smul.u32 8, %s17
      $region28: #{forward.6} parent=23 // pred_fallthru
        _
    $region24: #{forward.6} parent=5 // pred_fallthru
      _
    %p236 = scmp.le.s32.totalorder 2, %s7
    // Predicated region
    $region29: #{forward.6} parent=5 // pred_check
      %p237 = pneg %p236
    $region30: #{forward.6} parent=5 // pred_check_branch
      %239 = sbr.rel (%p237) target = $region32
    $region31: #{forward.6} parent=5 // pred_region
      %s240 = ssub.s32 %s7, 2
      // Predicated region
      $region33: #{forward.6} parent=31 // pred_check
        %p241 = pneg %p78
      $region34: #{forward.6} parent=31 // pred_check_branch
        %243 = sbr.rel (%p241) target = $region36
      $region35: #{forward.6} parent=31 // pred_region
        %s244 = smul.u32 8, %s19
        %p245 = scmp.lt.s32.totalorder %s18, 1
        %s246 = scalar_select %p245, %s18, 1
        %p247 = scmp.lt.s32.totalorder %s244, 7
        %s248 = scalar_select %p247, %s244, 7
        %s249 = smul.addr %s246, 8
        %s250 = sadd.s32 %s248, %s249
        %s251 = smul.addr %s250, 4
        %s252 = scalar_lea.vmem %s1, %s251
      $region36: #{forward.6} parent=31 // pred_fallthru
        _
    $region32: #{forward.6} parent=5 // pred_fallthru
      _
  $region6: #{forward.6} parent=0 // loop_footer
    %s11 = sadd.s32 1, %s7
  $region7: #{forward.6} parent=0 // loop_footer_branch
    %6 = sbr.rel target = $region3
  $region8: #{forward.6} parent=0 // loop_exit
    _

// kernel: forward.8
$region0: #{forward.8}
  #allocation0 [shape = 'u32[]', space=smem, size = 0x4, offset = 0x4, fixed_abs, tag = 'smem constant byte address 0x4 - core index']
  #allocation1 [shape = 'u32[144,128]{1,0:T(1,128)}', space=vmem, size = 0x12000, scoped, tag = 'internal scratch']
  %s0 = inlined_call_operand.vmem [shape: bf16[2,9,9,128], index: 0, kind: input, shape index: {}]
  %s1 = inlined_call_operand.vmem [shape: bf16[2,8,8,128], index: 1, kind: output, shape index: {}]
  %s2 = sld [smem:[#allocation0]]
  $region37: #{forward.8} parent=0
    _
  %s4 = ssub.s32 1, %s2
  %s5 = scalar_select 0, %s4, %s2
  loop: start=0, step=1, limit=4
  $region2: #{forward.8} parent=0 // loop_pre_header
    _
  $region3: #{forward.8} parent=0 // loop_header
    %s7 = sphi 0, %s11
    %p8 = scmp.ge.s32.totalorder %s7, 4
    %s17 = sphi 0, %s19
    %s20 = sphi 0, %s17
    %s21 = sphi 0, %s20
    %s37 = sphi 0, %s21
    %s43 = sphi 0, %s45
    %s46 = sphi 0, %s43
    %s47 = sphi 0, %s46
    %s63 = sphi 0, %s47
  $region4: #{forward.8} parent=0 // loop_header_branch
    %10 = sbr.rel (%p8) target = $region8
  $region5: #{forward.8} parent=0 // loop_body
    %s12 = ssub.s32 %s7, 1
    %s13 = ssub.s32 %s7, 2
    %s14 = sadd.s32 %s7, 1
    %s15 = ssub.s32 %s7, %s14
    %p16 = scmp.eq.s32.totalorder %s15, 0
    %s18 = sadd.s32 %s17, 1
    %s19 = scalar_select %p16, %s17, %s18
    %p22 = pneg %p16
    %p23 = scmp.eq.s32.totalorder %s7, 1
    %p24 = por %p22, %p23
    %p25 = scmp.ne.s32.totalorder %s17, %s20
    %p26 = scmp.eq.s32.totalorder %s7, 0
    %p27 = por %p25, %p26
    %p28 = scmp.ne.s32.totalorder %s17, %s20
    %p29 = scmp.eq.s32.totalorder %s12, 1
    %p30 = por %p28, %p29
    %p31 = scmp.ne.s32.totalorder %s20, %s21
    %p32 = scmp.eq.s32.totalorder %s12, 0
    %p33 = por %p31, %p32
    %p34 = scmp.ne.s32.totalorder %s20, %s21
    %p35 = scmp.eq.s32.totalorder %s13, 1
    %p36 = por %p34, %p35
    %p38 = scmp.ne.s32.totalorder %s21, %s37
    %p39 = scmp.eq.s32.totalorder %s13, 0
    %p40 = por %p38, %p39
    %s41 = ssub.s32 %s7, %s14
    %p42 = scmp.eq.s32.totalorder %s41, 0
    %s44 = sadd.s32 %s43, 1
    %s45 = scalar_select %p42, %s43, %s44
    %p48 = pneg %p42
    %p49 = scmp.eq.s32.totalorder %s7, 1
    %p50 = por %p48, %p49
    %p51 = scmp.ne.s32.totalorder %s43, %s46
    %p52 = scmp.eq.s32.totalorder %s7, 0
    %p53 = por %p51, %p52
    %p54 = scmp.ne.s32.totalorder %s43, %s46
    %p55 = scmp.eq.s32.totalorder %s12, 1
    %p56 = por %p54, %p55
    %p57 = scmp.ne.s32.totalorder %s46, %s47
    %p58 = scmp.eq.s32.totalorder %s12, 0
    %p59 = por %p57, %p58
    %p60 = scmp.ne.s32.totalorder %s46, %s47
    %p61 = scmp.eq.s32.totalorder %s13, 1
    %p62 = por %p60, %p61
    %p64 = scmp.ne.s32.totalorder %s47, %s63
    %p65 = scmp.eq.s32.totalorder %s13, 0
    %p66 = por %p64, %p65
    %p67 = scmp.le.s32.totalorder 1, %s7
    %p68 = scmp.lt.s32.totalorder %s7, 3
    %p69 = pnand %p67, %p68
    %p70 = pneg %p69
    // Predicated region
    $region9: #{forward.8} parent=5 // pred_check
      _
    $region10: #{forward.8} parent=5 // pred_check_branch
      %72 = sbr.rel (%p69) target = $region12
    $region11: #{forward.8} parent=5 // pred_region
      %s73 = ssub.s32 %s7, 1
    $region12: #{forward.8} parent=5 // pred_fallthru
      _
    %p74 = scmp.lt.s32.totalorder %s7, 2
    // Predicated region
    $region13: #{forward.8} parent=5 // pred_check
      %p75 = pneg %p74
    $region14: #{forward.8} parent=5 // pred_check_branch
      %77 = sbr.rel (%p75) target = $region16
    $region15: #{forward.8} parent=5 // pred_region
      // Predicated region
      $region17: #{forward.8} parent=15 // pred_check
        %p78 = pneg %p27
      $region18: #{forward.8} parent=15 // pred_check_branch
        %80 = sbr.rel (%p78) target = $region20
      $region19: #{forward.8} parent=15 // pred_region
        %p81 = scmp.lt.s32.totalorder %s7, 1
        %s82 = scalar_select %p81, %s7, 1
        %s83 = smul.addr %s82, 18
        %s84 = smul.addr %s83, 4
        %s85 = scalar_lea.vmem %s0, %s84
      $region20: #{forward.8} parent=15 // pred_fallthru
        _
    $region16: #{forward.8} parent=5 // pred_fallthru
      _
    %p86 = scmp.le.s32.totalorder 1, %s7
    %p87 = scmp.lt.s32.totalorder %s7, 3
    %p88 = pnand %p86, %p87
    %p89 = pneg %p88
    // Predicated region
    $region21: #{forward.8} parent=5 // pred_check
      _
    $region22: #{forward.8} parent=5 // pred_check_branch
      %91 = sbr.rel (%p88) target = $region24
    $region23: #{forward.8} parent=5 // pred_region
      %s92 = ssub.s32 %s7, 1
      %p93 = scmp.lt.s32.totalorder %s12, 1
      %s94 = scalar_select %p93, %s12, 1
      %s95 = smul.addr %s94, 18
      %s96 = smul.addr %s95, 4
      %s97 = scalar_lea.vmem %s0, %s96
      %p98 = pneg %p33
      %p99 = pneg %p30
      %p100 = pneg %p59
      %p101 = pneg %p56
      %p102 = scmp.lt.s32.totalorder %s12, 1
      %s103 = scalar_select %p102, %s12, 1
      %s104 = smul.addr %s103, 8
      %s105 = smul.addr %s104, 4
      %s106 = scalar_lea.vmem %s1, %s105
      %p107 = scmp.lt.s32.totalorder %s12, 1
      %s108 = scalar_select %p107, %s12, 1
      %s109 = smul.addr %s108, 18
      %s110 = smul.addr %s109, 4
      %s111 = scalar_lea.vmem %s0, %s110
      %p112 = scmp.lt.s32.totalorder %s12, 1
      %s113 = scalar_select %p112, %s12, 1
      %s114 = smul.addr %s113, 8
      %s115 = smul.addr %s114, 4
      %s116 = scalar_lea.vmem %s1, %s115
      %v117 = vld [vmem:[%s111] sm:$0xf]
      %v118 = vld [vmem:[%s111 + $0x4] sm:$0x1]
      %v119 = vld [vmem:[%s111 + $0x8] sm:$0xf]
      %v120 = vld [vmem:[%s111 + $0xc] sm:$0x1]
      %v121 = vld [vmem:[%s111 + $0x10] sm:$0xf]
      %v122 = vld [vmem:[%s111 + $0x14] sm:$0x1]
      %v123 = vld [vmem:[%s111 + $0x18] sm:$0xf]
      %v124 = vld [vmem:[%s111 + $0x1c] sm:$0x1]
      %v125 = vld [vmem:[%s111 + $0x20] sm:$0xf]
      %v126 = vld [vmem:[%s111 + $0x24] sm:$0x1]
      %v127 = vld [vmem:[%s111 + $0x28] sm:$0xf]
      %v128 = vld [vmem:[%s111 + $0x2c] sm:$0x1]
      %v129 = vld [vmem:[%s111 + $0x30] sm:$0xf]
      %v130 = vld [vmem:[%s111 + $0x34] sm:$0x1]
      %v131 = vld [vmem:[%s111 + $0x38] sm:$0xf]
      %v132 = vld [vmem:[%s111 + $0x3c] sm:$0x1]
      %v133 = vld [vmem:[%s111 + $0x40] sm:$0xf]
      %v134 = vld [vmem:[%s111 + $0x44] sm:$0x1]
      %vm135 = vsmask.f32 3328
      %vm136 = vsmask.f32 7440
      %vm137 = vmor %vm135, %vm136
      %v139 = vshrl.u32 %v117, 16
      %v141 = vrot.slane %v139, 4
      %v142 = vshll.u32 %v117, 16
      %v144 = vrot.slane %v142, 5
      %v145 = vor.u32 %v141, %v144
      %v146 = vrot.slane %v145, 4
      %v148 = vshll.u32 %v118, 16
      %v150 = vrot.slane %v148, 5
      %v151 = vsel %vm137, %v146, %v150
      %v153 = vshrl.u32 %v119, 16
      %v155 = vrot.slane %v153, 4
      %v156 = vshll.u32 %v119, 16
      %v158 = vrot.slane %v156, 5
      %v159 = vor.u32 %v155, %v158
      %v160 = vrot.slane %v159, 4
      %v162 = vshll.u32 %v120, 16
      %v164 = vrot.slane %v162, 5
      %v165 = vsel %vm137, %v160, %v164
      %v167 = vshrl.u32 %v121, 16
      %v169 = vrot.slane %v167, 4
      %v170 = vshll.u32 %v121, 16
      %v172 = vrot.slane %v170, 5
      %v173 = vor.u32 %v169, %v172
      %v174 = vrot.slane %v173, 4
      %v176 = vshll.u32 %v122, 16
      %v178 = vrot.slane %v176, 5
      %v179 = vsel %vm137, %v174, %v178
      %v181 = vshrl.u32 %v123, 16
      %v183 = vrot.slane %v181, 4
      %v184 = vshll.u32 %v123, 16
      %v186 = vrot.slane %v184, 5
      %v187 = vor.u32 %v183, %v186
      %v188 = vrot.slane %v187, 4
      %v190 = vshll.u32 %v124, 16
      %v192 = vrot.slane %v190, 5
      %v193 = vsel %vm137, %v188, %v192
      %v195 = vshrl.u32 %v125, 16
      %v197 = vrot.slane %v195, 4
      %v198 = vshll.u32 %v125, 16
      %v200 = vrot.slane %v198, 5
      %v201 = vor.u32 %v197, %v200
      %v202 = vrot.slane %v201, 4
      %v204 = vshll.u32 %v126, 16
      %v206 = vrot.slane %v204, 5
      %v207 = vsel %vm137, %v202, %v206
      %v209 = vshrl.u32 %v127, 16
      %v211 = vrot.slane %v209, 4
      %v212 = vshll.u32 %v127, 16
      %v214 = vrot.slane %v212, 5
      %v215 = vor.u32 %v211, %v214
      %v216 = vrot.slane %v215, 4
      %v218 = vshll.u32 %v128, 16
      %v220 = vrot.slane %v218, 5
      %v221 = vsel %vm137, %v216, %v220
      %v223 = vshrl.u32 %v129, 16
      %v225 = vrot.slane %v223, 4
      %v226 = vshll.u32 %v129, 16
      %v228 = vrot.slane %v226, 5
      %v229 = vor.u32 %v225, %v228
      %v230 = vrot.slane %v229, 4
      %v232 = vshll.u32 %v130, 16
      %v234 = vrot.slane %v232, 5
      %v235 = vsel %vm137, %v230, %v234
      %v237 = vshrl.u32 %v131, 16
      %v239 = vrot.slane %v237, 4
      %v240 = vshll.u32 %v131, 16
      %v242 = vrot.slane %v240, 5
      %v243 = vor.u32 %v239, %v242
      %v244 = vrot.slane %v243, 4
      %v246 = vshll.u32 %v132, 16
      %v248 = vrot.slane %v246, 5
      %v249 = vsel %vm137, %v244, %v248
      %v251 = vshrl.u32 %v133, 16
      %v253 = vrot.slane %v251, 4
      %v254 = vshll.u32 %v133, 16
      %v256 = vrot.slane %v254, 5
      %v257 = vor.u32 %v253, %v256
      %v258 = vrot.slane %v257, 4
      %v260 = vshll.u32 %v134, 16
      %v262 = vrot.slane %v260, 5
      %v263 = vsel %vm137, %v258, %v262
      %v273 = vmax.bf16 %v117, %v151
      %v274 = vmax.bf16 %v119, %v165
      %v275 = vmax.bf16 %v121, %v179
      %v276 = vmax.bf16 %v123, %v193
      %v277 = vmax.bf16 %v125, %v207
      %v278 = vmax.bf16 %v127, %v221
      %v279 = vmax.bf16 %v129, %v235
      %v280 = vmax.bf16 %v131, %v249
      %v281 = vmax.bf16 %v133, %v263
      %v282 = vmax.bf16 %v273, %v274
      %v283 = vmax.bf16 %v274, %v275
      %v284 = vmax.bf16 %v275, %v276
      %v285 = vmax.bf16 %v276, %v277
      %v286 = vmax.bf16 %v277, %v278
      %v287 = vmax.bf16 %v278, %v279
      %v288 = vmax.bf16 %v279, %v280
      %v289 = vmax.bf16 %v280, %v281
      %290 = vst [vmem:[%s116] sm:$0xf] %v282
      %291 = vst [vmem:[%s116 + $0x4] sm:$0xf] %v283
      %292 = vst [vmem:[%s116 + $0x8] sm:$0xf] %v284
      %293 = vst [vmem:[%s116 + $0xc] sm:$0xf] %v285
      %294 = vst [vmem:[%s116 + $0x10] sm:$0xf] %v286
      %295 = vst [vmem:[%s116 + $0x14] sm:$0xf] %v287
      %296 = vst [vmem:[%s116 + $0x18] sm:$0xf] %v288
      %297 = vst [vmem:[%s116 + $0x1c] sm:$0xf] %v289
      %p298 = scmp.lt.s32.totalorder %s12, 1
      %s299 = scalar_select %p298, %s12, 1
      %s300 = smul.addr %s299, 8
      %s301 = smul.addr %s300, 4
      %s302 = scalar_lea.vmem %s1, %s301
      // Predicated region
      $region25: #{forward.8} parent=23 // pred_check
        %p303 = pneg %p56
      $region26: #{forward.8} parent=23 // pred_check_branch
        %305 = sbr.rel (%p303) target = $region28
      $region27: #{forward.8} parent=23 // pred_region
        _
      $region28: #{forward.8} parent=23 // pred_fallthru
        _
    $region24: #{forward.8} parent=5 // pred_fallthru
      _
    %p306 = scmp.le.s32.totalorder 2, %s7
    // Predicated region
    $region29: #{forward.8} parent=5 // pred_check
      %p307 = pneg %p306
    $region30: #{forward.8} parent=5 // pred_check_branch
      %309 = sbr.rel (%p307) target = $region32
    $region31: #{forward.8} parent=5 // pred_region
      %s310 = ssub.s32 %s7, 2
      // Predicated region
      $region33: #{forward.8} parent=31 // pred_check
        %p311 = pneg %p62
      $region34: #{forward.8} parent=31 // pred_check_branch
        %313 = sbr.rel (%p311) target = $region36
      $region35: #{forward.8} parent=31 // pred_region
        %p314 = scmp.lt.s32.totalorder %s13, 1
        %s315 = scalar_select %p314, %s13, 1
        %s316 = smul.addr %s315, 8
        %s317 = smul.addr %s316, 4
        %s318 = scalar_lea.vmem %s1, %s317
      $region36: #{forward.8} parent=31 // pred_fallthru
        _
    $region32: #{forward.8} parent=5 // pred_fallthru
      _
  $region6: #{forward.8} parent=0 // loop_footer
    %s11 = sadd.s32 1, %s7
  $region7: #{forward.8} parent=0 // loop_footer_branch
    %6 = sbr.rel target = $region3
  $region8: #{forward.8} parent=0 // loop_exit
    _

// kernel: forward.9
$region0: #{forward.9}
  #allocation0 [shape = 'u32[]', space=smem, size = 0x4, offset = 0x4, fixed_abs, tag = 'smem constant byte address 0x4 - core index']
  #allocation1 [shape = 'u32[144,128]{1,0:T(1,128)}', space=vmem, size = 0x12000, scoped, tag = 'internal scratch']
  #allocation2 [shape = 'f32[64,128]{1,0:T(8,128)}', space=vmem, size = 0x8000, scoped, tag = 'scratch operand']
  %s0 = inlined_call_operand.vmem [shape: bf16[2,8,8,256], index: 0, kind: input, shape index: {}]
  %s1 = inlined_call_operand.vmem [shape: bf16[1,256,128], index: 1, kind: input, shape index: {}]
  %s2 = inlined_call_operand.vmem [shape: f32[1,128], index: 2, kind: input, shape index: {}]
  %s3 = inlined_call_operand.vmem [shape: f32[1,128], index: 3, kind: input, shape index: {}]
  %s4 = inlined_call_operand.vmem [shape: bf16[2,64,128], index: 4, kind: output, shape index: {}]
  %s5 = sld [smem:[#allocation0]]
  $region49: #{forward.9} parent=0
    _
  %s7 = ssub.s32 1, %s5
  %s8 = scalar_select 0, %s7, %s5
  loop: start=0, step=1, limit=4
  $region2: #{forward.9} parent=0 // loop_pre_header
    _
  $region3: #{forward.9} parent=0 // loop_header
    %s10 = sphi 0, %s14
    %p11 = scmp.ge.s32.totalorder %s10, 4
    %s17 = sphi 0, %s29
    %s18 = sphi 0, %s25
    %s19 = sphi 0, %s17
    %s20 = sphi 0, %s18
    %s21 = sphi 0, %s19
    %s22 = sphi 0, %s20
    %s32 = sphi 0, %s34
    %s35 = sphi 0, %s32
    %s36 = sphi 0, %s35
    %s52 = sphi 0, %s36
    %s58 = sphi 0, %s60
    %s61 = sphi 0, %s58
    %s62 = sphi 0, %s61
    %s78 = sphi 0, %s62
    %s84 = sphi 0, %s86
    %s87 = sphi 0, %s84
    %s88 = sphi 0, %s87
    %s104 = sphi 0, %s88
    %s110 = sphi 0, %s112
    %s113 = sphi 0, %s110
    %s114 = sphi 0, %s113
    %s130 = sphi 0, %s114
    %s138 = sphi 0, %s140
    %s141 = sphi 0, %s138
    %s142 = sphi 0, %s141
    %s158 = sphi 0, %s142
  $region4: #{forward.9} parent=0 // loop_header_branch
    %13 = sbr.rel (%p11) target = $region8
  $region5: #{forward.9} parent=0 // loop_body
    %s15 = ssub.s32 %s10, 1
    %s16 = ssub.s32 %s10, 2
    %s23 = sadd.s32 1, %s18
    %p24 = scmp.ge.s32.totalorder %s23, 2
    %s25 = scalar_select %p24, 0, %s23
    %s26 = sadd.s32 1, %s17
    %s27 = scalar_select %p24, %s26, %s17
    %p28 = scmp.ge.s32.totalorder %s27, 1
    %s29 = scalar_select %p28, 0, %s27
    %s30 = ssub.s32 %s18, %s25
    %p31 = scmp.eq.s32.totalorder %s30, 0
    %s33 = sadd.s32 %s32, 1
    %s34 = scalar_select %p31, %s32, %s33
    %p37 = pneg %p31
    %p38 = scmp.eq.s32.totalorder %s10, 1
    %p39 = por %p37, %p38
    %p40 = scmp.ne.s32.totalorder %s32, %s35
    %p41 = scmp.eq.s32.totalorder %s10, 0
    %p42 = por %p40, %p41
    %p43 = scmp.ne.s32.totalorder %s32, %s35
    %p44 = scmp.eq.s32.totalorder %s15, 1
    %p45 = por %p43, %p44
    %p46 = scmp.ne.s32.totalorder %s35, %s36
    %p47 = scmp.eq.s32.totalorder %s15, 0
    %p48 = por %p46, %p47
    %p49 = scmp.ne.s32.totalorder %s35, %s36
    %p50 = scmp.eq.s32.totalorder %s16, 1
    %p51 = por %p49, %p50
    %p53 = scmp.ne.s32.totalorder %s36, %s52
    %p54 = scmp.eq.s32.totalorder %s16, 0
    %p55 = por %p53, %p54
    %s56 = ssub.s32 %s17, %s29
    %p57 = scmp.eq.s32.totalorder %s56, 0
    %s59 = sadd.s32 %s58, 1
    %s60 = scalar_select %p57, %s58, %s59
    %p63 = pneg %p57
    %p64 = scmp.eq.s32.totalorder %s10, 1
    %p65 = por %p63, %p64
    %p66 = scmp.ne.s32.totalorder %s58, %s61
    %p67 = scmp.eq.s32.totalorder %s10, 0
    %p68 = por %p66, %p67
    %p69 = scmp.ne.s32.totalorder %s58, %s61
    %p70 = scmp.eq.s32.totalorder %s15, 1
    %p71 = por %p69, %p70
    %p72 = scmp.ne.s32.totalorder %s61, %s62
    %p73 = scmp.eq.s32.totalorder %s15, 0
    %p74 = por %p72, %p73
    %p75 = scmp.ne.s32.totalorder %s61, %s62
    %p76 = scmp.eq.s32.totalorder %s16, 1
    %p77 = por %p75, %p76
    %p79 = scmp.ne.s32.totalorder %s62, %s78
    %p80 = scmp.eq.s32.totalorder %s16, 0
    %p81 = por %p79, %p80
    %s82 = ssub.s32 %s17, %s29
    %p83 = scmp.eq.s32.totalorder %s82, 0
    %s85 = sadd.s32 %s84, 1
    %s86 = scalar_select %p83, %s84, %s85
    %p89 = pneg %p83
    %p90 = scmp.eq.s32.totalorder %s10, 1
    %p91 = por %p89, %p90
    %p92 = scmp.ne.s32.totalorder %s84, %s87
    %p93 = scmp.eq.s32.totalorder %s10, 0
    %p94 = por %p92, %p93
    %p95 = scmp.ne.s32.totalorder %s84, %s87
    %p96 = scmp.eq.s32.totalorder %s15, 1
    %p97 = por %p95, %p96
    %p98 = scmp.ne.s32.totalorder %s87, %s88
    %p99 = scmp.eq.s32.totalorder %s15, 0
    %p100 = por %p98, %p99
    %p101 = scmp.ne.s32.totalorder %s87, %s88
    %p102 = scmp.eq.s32.totalorder %s16, 1
    %p103 = por %p101, %p102
    %p105 = scmp.ne.s32.totalorder %s88, %s104
    %p106 = scmp.eq.s32.totalorder %s16, 0
    %p107 = por %p105, %p106
    %s108 = ssub.s32 %s17, %s29
    %p109 = scmp.eq.s32.totalorder %s108, 0
    %s111 = sadd.s32 %s110, 1
    %s112 = scalar_select %p109, %s110, %s111
    %p115 = pneg %p109
    %p116 = scmp.eq.s32.totalorder %s10, 1
    %p117 = por %p115, %p116
    %p118 = scmp.ne.s32.totalorder %s110, %s113
    %p119 = scmp.eq.s32.totalorder %s10, 0
    %p120 = por %p118, %p119
    %p121 = scmp.ne.s32.totalorder %s110, %s113
    %p122 = scmp.eq.s32.totalorder %s15, 1
    %p123 = por %p121, %p122
    %p124 = scmp.ne.s32.totalorder %s113, %s114
    %p125 = scmp.eq.s32.totalorder %s15, 0
    %p126 = por %p124, %p125
    %p127 = scmp.ne.s32.totalorder %s113, %s114
    %p128 = scmp.eq.s32.totalorder %s16, 1
    %p129 = por %p127, %p128
    %p131 = scmp.ne.s32.totalorder %s114, %s130
    %p132 = scmp.eq.s32.totalorder %s16, 0
    %p133 = por %p131, %p132
    %s134 = ssub.s32 %s18, %s25
    %s135 = ssub.s32 %s17, %s29
    %s136 = sor.u32 %s134, %s135
    %p137 = scmp.eq.s32.totalorder %s136, 0
    %s139 = sadd.s32 %s138, 1
    %s140 = scalar_select %p137, %s138, %s139
    %p143 = pneg %p137
    %p144 = scmp.eq.s32.totalorder %s10, 1
    %p145 = por %p143, %p144
    %p146 = scmp.ne.s32.totalorder %s138, %s141
    %p147 = scmp.eq.s32.totalorder %s10, 0
    %p148 = por %p146, %p147
    %p149 = scmp.ne.s32.totalorder %s138, %s141
    %p150 = scmp.eq.s32.totalorder %s15, 1
    %p151 = por %p149, %p150
    %p152 = scmp.ne.s32.totalorder %s141, %s142
    %p153 = scmp.eq.s32.totalorder %s15, 0
    %p154 = por %p152, %p153
    %p155 = scmp.ne.s32.totalorder %s141, %s142
    %p156 = scmp.eq.s32.totalorder %s16, 1
    %p157 = por %p155, %p156
    %p159 = scmp.ne.s32.totalorder %s142, %s158
    %p160 = scmp.eq.s32.totalorder %s16, 0
    %p161 = por %p159, %p160
    %p162 = scmp.le.s32.totalorder 1, %s10
    %p163 = scmp.lt.s32.totalorder %s10, 3
    %p164 = pnand %p162, %p163
    %p165 = pneg %p164
    // Predicated region
    $region9: #{forward.9} parent=5 // pred_check
      _
    $region10: #{forward.9} parent=5 // pred_check_branch
      %167 = sbr.rel (%p164) target = $region12
    $region11: #{forward.9} parent=5 // pred_region
      %s168 = ssub.s32 %s10, 1
      // Predicated region
      $region13: #{forward.9} parent=11 // pred_check
        %p169 = pneg %p74
      $region14: #{forward.9} parent=11 // pred_check_branch
        %171 = sbr.rel (%p169) target = $region16
      $region15: #{forward.9} parent=11 // pred_region
        %p172 = scmp.lt.s32.totalorder %s19, 0
        %s173 = scalar_select %p172, %s19, 0
        %s174 = smul.addr %s173, 4
        %s175 = scalar_lea.vmem %s1, %s174
      $region16: #{forward.9} parent=11 // pred_fallthru
        _
      // Predicated region
      $region17: #{forward.9} parent=11 // pred_check
        %p176 = pneg %p100
      $region18: #{forward.9} parent=11 // pred_check_branch
        %178 = sbr.rel (%p176) target = $region20
      $region19: #{forward.9} parent=11 // pred_region
        %p179 = scmp.lt.s32.totalorder %s19, 0
        %s180 = scalar_select %p179, %s19, 0
        %s181 = scalar_lea.vmem %s2, %s180
      $region20: #{forward.9} parent=11 // pred_fallthru
        _
      // Predicated region
      $region21: #{forward.9} parent=11 // pred_check
        %p182 = pneg %p126
      $region22: #{forward.9} parent=11 // pred_check_branch
        %184 = sbr.rel (%p182) target = $region24
      $region23: #{forward.9} parent=11 // pred_region
        %p185 = scmp.lt.s32.totalorder %s19, 0
        %s186 = scalar_select %p185, %s19, 0
        %s187 = scalar_lea.vmem %s3, %s186
      $region24: #{forward.9} parent=11 // pred_fallthru
        _
    $region12: #{forward.9} parent=5 // pred_fallthru
      _
    %p188 = scmp.lt.s32.totalorder %s10, 2
    // Predicated region
    $region25: #{forward.9} parent=5 // pred_check
      %p189 = pneg %p188
    $region26: #{forward.9} parent=5 // pred_check_branch
      %191 = sbr.rel (%p189) target = $region28
    $region27: #{forward.9} parent=5 // pred_region
      // Predicated region
      $region29: #{forward.9} parent=27 // pred_check
        %p192 = pneg %p42
      $region30: #{forward.9} parent=27 // pred_check_branch
        %194 = sbr.rel (%p192) target = $region32
      $region31: #{forward.9} parent=27 // pred_region
        %p195 = scmp.lt.s32.totalorder %s18, 1
        %s196 = scalar_select %p195, %s18, 1
        %s197 = smul.addr %s196, 16
        %s198 = smul.addr %s197, 4
        %s199 = scalar_lea.vmem %s0, %s198
      $region32: #{forward.9} parent=27 // pred_fallthru
        _
    $region28: #{forward.9} parent=5 // pred_fallthru
      _
    %p200 = scmp.le.s32.totalorder 1, %s10
    %p201 = scmp.lt.s32.totalorder %s10, 3
    %p202 = pnand %p200, %p201
    %p203 = pneg %p202
    // Predicated region
    $region33: #{forward.9} parent=5 // pred_check
      _
    $region34: #{forward.9} parent=5 // pred_check_branch
      %205 = sbr.rel (%p202) target = $region36
    $region35: #{forward.9} parent=5 // pred_region
      %s206 = ssub.s32 %s10, 1
      %p207 = scmp.lt.s32.totalorder %s20, 1
      %s208 = scalar_select %p207, %s20, 1
      %s209 = smul.addr %s208, 16
      %s210 = smul.addr %s209, 4
      %s211 = scalar_lea.vmem %s0, %s210
      %p212 = pneg %p48
      %p213 = pneg %p45
      %p214 = scmp.lt.s32.totalorder %s19, 0
      %s215 = scalar_select %p214, %s19, 0
      %s216 = smul.addr %s215, 4
      %s217 = scalar_lea.vmem %s1, %s216
      %p218 = pneg %p74
      %p219 = pneg %p71
      %p220 = scmp.lt.s32.totalorder %s19, 0
      %s221 = scalar_select %p220, %s19, 0
      %s222 = scalar_lea.vmem %s2, %s221
      %p223 = pneg %p100
      %p224 = pneg %p97
      %p225 = scmp.lt.s32.totalorder %s19, 0
      %s226 = scalar_select %p225, %s19, 0
      %s227 = scalar_lea.vmem %s3, %s226
      %p228 = pneg %p126
      %p229 = pneg %p123
      %p230 = pneg %p154
      %p231 = pneg %p151
      %p232 = scmp.lt.s32.totalorder %s20, 1
      %s233 = scalar_select %p232, %s20, 1
      %p234 = scmp.lt.s32.totalorder %s19, 0
      %s235 = scalar_select %p234, %s19, 0
      %s236 = smul.addr %s233, 8
      %s237 = sadd.s32 %s235, %s236
      %s238 = smul.addr %s237, 4
      %s239 = scalar_lea.vmem %s4, %s238
      %p240 = scmp.lt.s32.totalorder %s20, 1
      %s241 = scalar_select %p240, %s20, 1
      %s242 = smul.addr %s241, 16
      %s243 = smul.addr %s242, 4
      %s244 = scalar_lea.vmem %s0, %s243
      %p245 = scmp.lt.s32.totalorder %s19, 0
      %s246 = scalar_select %p245, %s19, 0
      %s247 = smul.addr %s246, 4
      %s248 = scalar_lea.vmem %s1, %s247
      %p249 = scmp.lt.s32.totalorder %s19, 0
      %s250 = scalar_select %p249, %s19, 0
      %s251 = scalar_lea.vmem %s2, %s250
      %p252 = scmp.lt.s32.totalorder %s19, 0
      %s253 = scalar_select %p252, %s19, 0
      %s254 = scalar_lea.vmem %s3, %s253
      %p255 = scmp.lt.s32.totalorder %s20, 1
      %s256 = scalar_select %p255, %s20, 1
      %p257 = scmp.lt.s32.totalorder %s19, 0
      %s258 = scalar_select %p257, %s19, 0
      %s259 = smul.addr %s256, 8
      %s260 = sadd.s32 %s258, %s259
      %s261 = smul.addr %s260, 4
      %s262 = scalar_lea.vmem %s4, %s261
      %v264 = vld [vmem:[%s244] sm:$0xff]
      %v265 = vld [vmem:[%s244 + $0x8] sm:$0xff]
      %v266 = vld [vmem:[%s244 + $0x10] sm:$0xff]
      %v267 = vld [vmem:[%s244 + $0x18] sm:$0xff]
      %v268 = vld [vmem:[%s244 + $0x20] sm:$0xff]
      %v269 = vld [vmem:[%s244 + $0x28] sm:$0xff]
      %v270 = vld [vmem:[%s244 + $0x30] sm:$0xff]
      %v271 = vld [vmem:[%s244 + $0x38] sm:$0xff]
      %v272 = vld [vmem:[%s248] sm:$0xf]
      %v273 = vld [vmem:[%s248 + $0x4] sm:$0xf]
      %v274 = vld [vmem:[%s248 + $0x8] sm:$0xf]
      %v275 = vld [vmem:[%s248 + $0xc] sm:$0xf]
      %v276 = vld [vmem:[%s248 + $0x10] sm:$0xf]
      %v277 = vld [vmem:[%s248 + $0x14] sm:$0xf]
      %v278 = vld [vmem:[%s248 + $0x18] sm:$0xf]
      %v279 = vld [vmem:[%s248 + $0x1c] sm:$0xf]
      %v280 = vld [vmem:[%s248 + $0x20] sm:$0xf]
      %v281 = vld [vmem:[%s248 + $0x24] sm:$0xf]
      %v282 = vld [vmem:[%s248 + $0x28] sm:$0xf]
      %v283 = vld [vmem:[%s248 + $0x2c] sm:$0xf]
      %v284 = vld [vmem:[%s248 + $0x30] sm:$0xf]
      %v285 = vld [vmem:[%s248 + $0x34] sm:$0xf]
      %v286 = vld [vmem:[%s248 + $0x38] sm:$0xf]
      %v287 = vld [vmem:[%s248 + $0x3c] sm:$0xf]
      %v288 = vld [vmem:[%s248 + $0x40] sm:$0xf]
      %v289 = vld [vmem:[%s248 + $0x44] sm:$0xf]
      %v290 = vld [vmem:[%s248 + $0x48] sm:$0xf]
      %v291 = vld [vmem:[%s248 + $0x4c] sm:$0xf]
      %v292 = vld [vmem:[%s248 + $0x50] sm:$0xf]
      %v293 = vld [vmem:[%s248 + $0x54] sm:$0xf]
      %v294 = vld [vmem:[%s248 + $0x58] sm:$0xf]
      %v295 = vld [vmem:[%s248 + $0x5c] sm:$0xf]
      %v296 = vld [vmem:[%s248 + $0x60] sm:$0xf]
      %v297 = vld [vmem:[%s248 + $0x64] sm:$0xf]
      %v298 = vld [vmem:[%s248 + $0x68] sm:$0xf]
      %v299 = vld [vmem:[%s248 + $0x6c] sm:$0xf]
      %v300 = vld [vmem:[%s248 + $0x70] sm:$0xf]
      %v301 = vld [vmem:[%s248 + $0x74] sm:$0xf]
      %v302 = vld [vmem:[%s248 + $0x78] sm:$0xf]
      %v303 = vld [vmem:[%s248 + $0x7c] sm:$0xf]
      %v312 = vunpack.c.l.b16 %v264
      %v313 = vunpack.c.h.b16 %v264
      %v314 = vunpack.c.l.b16 %v265
      %v315 = vunpack.c.h.b16 %v265
      %v316 = vunpack.c.l.b16 %v266
      %v317 = vunpack.c.h.b16 %v266
      %v318 = vunpack.c.l.b16 %v267
      %v319 = vunpack.c.h.b16 %v267
      %v320 = vunpack.c.l.b16 %v268
      %v321 = vunpack.c.h.b16 %v268
      %v322 = vunpack.c.l.b16 %v269
      %v323 = vunpack.c.h.b16 %v269
      %v324 = vunpack.c.l.b16 %v270
      %v325 = vunpack.c.h.b16 %v270
      %v326 = vunpack.c.l.b16 %v271
      %v327 = vunpack.c.h.b16 %v271
      %v328 = vpack.c.b16 %v314, %v312
      %v329 = vpack.c.b16 %v315, %v313
      %v330 = vpack.c.b16 %v318, %v316
      %v331 = vpack.c.b16 %v319, %v317
      %v332 = vpack.c.b16 %v322, %v320
      %v333 = vpack.c.b16 %v323, %v321
      %v334 = vpack.c.b16 %v326, %v324
      %v335 = vpack.c.b16 %v327, %v325
      %v376 = vunpack.c.l.b16 %v272
      %v377 = vunpack.c.l.b16 %v273
      %v378 = vunpack.c.l.b16 %v274
      %v379 = vunpack.c.l.b16 %v275
      %v380 = vunpack.c.l.b16 %v276
      %v381 = vunpack.c.l.b16 %v277
      %v382 = vunpack.c.l.b16 %v278
      %v383 = vunpack.c.l.b16 %v279
      %v384 = vunpack.c.l.b16 %v280
      %v385 = vunpack.c.l.b16 %v281
      %v386 = vunpack.c.l.b16 %v282
      %v387 = vunpack.c.l.b16 %v283
      %v388 = vunpack.c.l.b16 %v284
      %v389 = vunpack.c.l.b16 %v285
      %v390 = vunpack.c.l.b16 %v286
      %v391 = vunpack.c.l.b16 %v287
      %v392 = vunpack.c.l.b16 %v288
      %v393 = vunpack.c.l.b16 %v289
      %v394 = vunpack.c.l.b16 %v290
      %v395 = vunpack.c.l.b16 %v291
      %v396 = vunpack.c.l.b16 %v292
      %v397 = vunpack.c.l.b16 %v293
      %v398 = vunpack.c.l.b16 %v294
      %v399 = vunpack.c.l.b16 %v295
      %v400 = vunpack.c.l.b16 %v296
      %v401 = vunpack.c.l.b16 %v297
      %v402 = vunpack.c.l.b16 %v298
      %v403 = vunpack.c.l.b16 %v299
      %v404 = vunpack.c.l.b16 %v300
      %v405 = vunpack.c.l.b16 %v301
      %v406 = vunpack.c.l.b16 %v302
      %v407 = vunpack.c.l.b16 %v303
      %v408 = vpack.c.b16 %v377, %v376
      %v409 = vpack.c.b16 %v379, %v378
      %v410 = vpack.c.b16 %v381, %v380
      %v411 = vpack.c.b16 %v383, %v382
      %v412 = vpack.c.b16 %v385, %v384
      %v413 = vpack.c.b16 %v387, %v386
      %v414 = vpack.c.b16 %v389, %v388
      %v415 = vpack.c.b16 %v391, %v390
      %v416 = vpack.c.b16 %v393, %v392
      %v417 = vpack.c.b16 %v395, %v394
      %v418 = vpack.c.b16 %v397, %v396
      %v419 = vpack.c.b16 %v399, %v398
      %v420 = vpack.c.b16 %v401, %v400
      %v421 = vpack.c.b16 %v403, %v402
      %v422 = vpack.c.b16 %v405, %v404
      %v423 = vpack.c.b16 %v407, %v406
      %440 = vmatprep.subr.bf16.mxu0 0
      %441 = vmatpush1.bf16.msra.mxu0 %v408
      %442 = vmatprep.subr.bf16.mxu0 0
      %443 = vmatpush1.bf16.msra.mxu0 %v409
      %444 = vmatprep.subr.bf16.mxu0 0
      %445 = vmatpush1.bf16.msra.mxu0 %v410
      %446 = vmatprep.subr.bf16.mxu0 0
      %447 = vmatpush1.bf16.msra.mxu0 %v411
      %448 = vmatprep.subr.bf16.mxu0 0
      %449 = vmatpush1.bf16.msra.mxu0 %v412
      %450 = vmatprep.subr.bf16.mxu0 0
      %451 = vmatpush1.bf16.msra.mxu0 %v413
      %452 = vmatprep.subr.bf16.mxu0 0
      %453 = vmatpush1.bf16.msra.mxu0 %v414
      %454 = vmatprep.subr.bf16.mxu0 0
      %455 = vmatpush1.bf16.msra.mxu0 %v415
      %456 = vmatprep.subr.bf16.mxu0 0
      %457 = vmatpush1.bf16.msra.mxu0 %v416
      %458 = vmatprep.subr.bf16.mxu0 0
      %459 = vmatpush1.bf16.msra.mxu0 %v417
      %460 = vmatprep.subr.bf16.mxu0 0
      %461 = vmatpush1.bf16.msra.mxu0 %v418
      %462 = vmatprep.subr.bf16.mxu0 0
      %463 = vmatpush1.bf16.msra.mxu0 %v419
      %464 = vmatprep.subr.bf16.mxu0 0
      %465 = vmatpush1.bf16.msra.mxu0 %v420
      %466 = vmatprep.subr.bf16.mxu0 0
      %467 = vmatpush1.bf16.msra.mxu0 %v421
      %468 = vmatprep.subr.bf16.mxu0 0
      %469 = vmatpush1.bf16.msra.mxu0 %v422
      %470 = vmatprep.subr.bf16.mxu0 0
      %471 = vmatpush1.bf16.msra.mxu0 %v423
      %472 = vmatprep.mubr.bf16.mxu0 %v329
      %473 = vmatmul.mubr.bf16.gmra.mrb[0].mxu0 %v328
      %v474 = vpop.f32.mrb[0].mxu0
      %v475 = vadd.f32 0.0, %v474
      %v476 = vpop.f32.mrb[0].mxu0
      %v477 = vpop.f32.mrb[0].mxu0
      %v478 = vadd.f32 0.0, %v477
      %v479 = vpop.f32.mrb[0].mxu0
      %480 = vmatprep.mubr.bf16.mxu0 %v331
      %481 = vmatmul.mubr.bf16.gmra.mrb[0].mxu0 %v330
      %v482 = vpop.f32.mrb[0].mxu0
      %v483 = vadd.f32 0.0, %v482
      %v484 = vpop.f32.mrb[0].mxu0
      %v485 = vpop.f32.mrb[0].mxu0
      %v486 = vadd.f32 0.0, %v485
      %v487 = vpop.f32.mrb[0].mxu0
      %488 = vmatprep.mubr.bf16.mxu0 %v333
      %489 = vmatmul.mubr.bf16.gmra.mrb[0].mxu0 %v332
      %v490 = vpop.f32.mrb[0].mxu0
      %v491 = vadd.f32 0.0, %v490
      %v492 = vpop.f32.mrb[0].mxu0
      %v493 = vpop.f32.mrb[0].mxu0
      %v494 = vadd.f32 0.0, %v493
      %v495 = vpop.f32.mrb[0].mxu0
      %496 = vmatprep.mubr.bf16.mxu0 %v335
      %497 = vmatmul.mubr.bf16.gmra.mrb[0].mxu0 %v334
      %v498 = vpop.f32.mrb[0].mxu0
      %v499 = vadd.f32 0.0, %v498
      %v500 = vpop.f32.mrb[0].mxu0
      %v501 = vpop.f32.mrb[0].mxu0
      %v502 = vadd.f32 0.0, %v501
      %v503 = vpop.f32.mrb[0].mxu0
      %504 = vdwg.mxu0
      %505 = vst [vmem:[#allocation2] sm:$0xff] %v475
      %506 = vst [vmem:[#allocation2 + $0x8] sm:$0xff] %v478
      %507 = vst [vmem:[#allocation2 + $0x10] sm:$0xff] %v483
      %508 = vst [vmem:[#allocation2 + $0x18] sm:$0xff] %v486
      %509 = vst [vmem:[#allocation2 + $0x20] sm:$0xff] %v491
      %510 = vst [vmem:[#allocation2 + $0x28] sm:$0xff] %v494
      %511 = vst [vmem:[#allocation2 + $0x30] sm:$0xff] %v499
      %512 = vst [vmem:[#allocation2 + $0x38] sm:$0xff] %v502
      %v513 = vld [vmem:[#allocation2] sm:$0xff]
      %v514 = vld [vmem:[#allocation2 + $0x8] sm:$0xff]
      %v515 = vld [vmem:[#allocation2 + $0x10] sm:$0xff]
      %v516 = vld [vmem:[#allocation2 + $0x18] sm:$0xff]
      %v517 = vld [vmem:[#allocation2 + $0x20] sm:$0xff]
      %v518 = vld [vmem:[#allocation2 + $0x28] sm:$0xff]
      %v519 = vld [vmem:[#allocation2 + $0x30] sm:$0xff]
      %v520 = vld [vmem:[#allocation2 + $0x38] sm:$0xff]
      %v521 = vld [vmem:[%s251] sm:$0x1]
      %v523 = vlaneseq
      %v524 = vshrl.u32 %v523, 7
      %v525 = vsub.s32 0, %v524
      %v526 = vrot.slane %v521, %v525
      %v528 = vmul.f32 %v513, %v526
      %v529 = vmul.f32 %v514, %v526
      %v530 = vmul.f32 %v515, %v526
      %v531 = vmul.f32 %v516, %v526
      %v532 = vmul.f32 %v517, %v526
      %v533 = vmul.f32 %v518, %v526
      %v534 = vmul.f32 %v519, %v526
      %v535 = vmul.f32 %v520, %v526
      %v536 = vld [vmem:[%s254] sm:$0x1]
      %v538 = vlaneseq
      %v539 = vshrl.u32 %v538, 7
      %v540 = vsub.s32 0, %v539
      %v541 = vrot.slane %v536, %v540
      %v543 = vadd.f32 %v528, %v541
      %v544 = vadd.f32 %v529, %v541
      %v545 = vadd.f32 %v530, %v541
      %v546 = vadd.f32 %v531, %v541
      %v547 = vadd.f32 %v532, %v541
      %v548 = vadd.f32 %v533, %v541
      %v549 = vadd.f32 %v534, %v541
      %v550 = vadd.f32 %v535, %v541
      %v551 = vpack.c.bf16 %v544, %v543
      %v552 = vpack.c.bf16 %v546, %v545
      %v553 = vpack.c.bf16 %v548, %v547
      %v554 = vpack.c.bf16 %v550, %v549
      %v559 = vunpack.c.l.b16 %v551
      %v560 = vunpack.c.h.b16 %v551
      %v561 = vunpack.c.l.b16 %v552
      %v562 = vunpack.c.h.b16 %v552
      %v563 = vunpack.c.l.b16 %v553
      %v564 = vunpack.c.h.b16 %v553
      %v565 = vunpack.c.l.b16 %v554
      %v566 = vunpack.c.h.b16 %v554
      %v567 = vpack.c.b16 %v559, %v559
      %v568 = vpack.c.b16 %v560, %v560
      %v569 = vpack.c.b16 %v561, %v561
      %v570 = vpack.c.b16 %v562, %v562
      %v571 = vpack.c.b16 %v563, %v563
      %v572 = vpack.c.b16 %v564, %v564
      %v573 = vpack.c.b16 %v565, %v565
      %v574 = vpack.c.b16 %v566, %v566
      %583 = vst [vmem:[%s262] sm:$0xf] %v567
      %584 = vst [vmem:[%s262 + $0x4] sm:$0xf] %v568
      %585 = vst [vmem:[%s262 + $0x8] sm:$0xf] %v569
      %586 = vst [vmem:[%s262 + $0xc] sm:$0xf] %v570
      %587 = vst [vmem:[%s262 + $0x10] sm:$0xf] %v571
      %588 = vst [vmem:[%s262 + $0x14] sm:$0xf] %v572
      %589 = vst [vmem:[%s262 + $0x18] sm:$0xf] %v573
      %590 = vst [vmem:[%s262 + $0x1c] sm:$0xf] %v574
      %p591 = scmp.lt.s32.totalorder %s20, 1
      %s592 = scalar_select %p591, %s20, 1
      %p593 = scmp.lt.s32.totalorder %s19, 0
      %s594 = scalar_select %p593, %s19, 0
      %s595 = smul.addr %s592, 8
      %s596 = sadd.s32 %s594, %s595
      %s597 = smul.addr %s596, 4
      %s598 = scalar_lea.vmem %s4, %s597
      // Predicated region
      $region37: #{forward.9} parent=35 // pred_check
        %p599 = pneg %p151
      $region38: #{forward.9} parent=35 // pred_check_branch
        %601 = sbr.rel (%p599) target = $region40
      $region39: #{forward.9} parent=35 // pred_region
        _
      $region40: #{forward.9} parent=35 // pred_fallthru
        _
    $region36: #{forward.9} parent=5 // pred_fallthru
      _
    %p602 = scmp.le.s32.totalorder 2, %s10
    // Predicated region
    $region41: #{forward.9} parent=5 // pred_check
      %p603 = pneg %p602
    $region42: #{forward.9} parent=5 // pred_check_branch
      %605 = sbr.rel (%p603) target = $region44
    $region43: #{forward.9} parent=5 // pred_region
      %s606 = ssub.s32 %s10, 2
      // Predicated region
      $region45: #{forward.9} parent=43 // pred_check
        %p607 = pneg %p157
      $region46: #{forward.9} parent=43 // pred_check_branch
        %609 = sbr.rel (%p607) target = $region48
      $region47: #{forward.9} parent=43 // pred_region
        %p610 = scmp.lt.s32.totalorder %s22, 1
        %s611 = scalar_select %p610, %s22, 1
        %p612 = scmp.lt.s32.totalorder %s21, 0
        %s613 = scalar_select %p612, %s21, 0
        %s614 = smul.addr %s611, 8
        %s615 = sadd.s32 %s613, %s614
        %s616 = smul.addr %s615, 4
        %s617 = scalar_lea.vmem %s4, %s616
      $region48: #{forward.9} parent=43 // pred_fallthru
        _
    $region44: #{forward.9} parent=5 // pred_fallthru
      _
  $region6: #{forward.9} parent=0 // loop_footer
    %s14 = sadd.s32 1, %s10
  $region7: #{forward.9} parent=0 // loop_footer_branch
    %9 = sbr.rel target = $region3
  $region8: #{forward.9} parent=0 // loop_exit
    _

// kernel: forward.7
$region0: #{forward.7}
  #allocation0 [shape = 'u32[]', space=smem, size = 0x4, offset = 0x4, fixed_abs, tag = 'smem constant byte address 0x4 - core index']
  #allocation1 [shape = 'u32[144,128]{1,0:T(1,128)}', space=vmem, size = 0x12000, scoped, tag = 'internal scratch']
  #allocation2 [shape = 'f32[64,128]{1,0:T(8,128)}', space=vmem, size = 0x8000, scoped, tag = 'scratch operand']
  %s0 = inlined_call_operand.vmem [shape: bf16[2,10,10,128], index: 0, kind: input, shape index: {}]
  %s1 = inlined_call_operand.vmem [shape: bf16[9,128,128], index: 1, kind: input, shape index: {}]
  %s2 = inlined_call_operand.vmem [shape: f32[1,128], index: 2, kind: input, shape index: {}]
  %s3 = inlined_call_operand.vmem [shape: f32[1,128], index: 3, kind: input, shape index: {}]
  %s4 = inlined_call_operand.vmem [shape: bf16[2,64,128], index: 4, kind: output, shape index: {}]
  %s5 = sld [smem:[#allocation0]]
  $region49: #{forward.7} parent=0
    _
  %s7 = ssub.s32 1, %s5
  %s8 = scalar_select 0, %s7, %s5
  loop: start=0, step=1, limit=4
  $region2: #{forward.7} parent=0 // loop_pre_header
    _
  $region3: #{forward.7} parent=0 // loop_header
    %s10 = sphi 0, %s14
    %p11 = scmp.ge.s32.totalorder %s10, 4
    %s17 = sphi 0, %s29
    %s18 = sphi 0, %s25
    %s19 = sphi 0, %s17
    %s20 = sphi 0, %s18
    %s21 = sphi 0, %s19
    %s22 = sphi 0, %s20
    %s32 = sphi 0, %s34
    %s35 = sphi 0, %s32
    %s36 = sphi 0, %s35
    %s52 = sphi 0, %s36
    %s58 = sphi 0, %s60
    %s61 = sphi 0, %s58
    %s62 = sphi 0, %s61
    %s78 = sphi 0, %s62
    %s84 = sphi 0, %s86
    %s87 = sphi 0, %s84
    %s88 = sphi 0, %s87
    %s104 = sphi 0, %s88
    %s110 = sphi 0, %s112
    %s113 = sphi 0, %s110
    %s114 = sphi 0, %s113
    %s130 = sphi 0, %s114
    %s138 = sphi 0, %s140
    %s141 = sphi 0, %s138
    %s142 = sphi 0, %s141
    %s158 = sphi 0, %s142
  $region4: #{forward.7} parent=0 // loop_header_branch
    %13 = sbr.rel (%p11) target = $region8
  $region5: #{forward.7} parent=0 // loop_body
    %s15 = ssub.s32 %s10, 1
    %s16 = ssub.s32 %s10, 2
    %s23 = sadd.s32 1, %s18
    %p24 = scmp.ge.s32.totalorder %s23, 2
    %s25 = scalar_select %p24, 0, %s23
    %s26 = sadd.s32 1, %s17
    %s27 = scalar_select %p24, %s26, %s17
    %p28 = scmp.ge.s32.totalorder %s27, 1
    %s29 = scalar_select %p28, 0, %s27
    %s30 = ssub.s32 %s18, %s25
    %p31 = scmp.eq.s32.totalorder %s30, 0
    %s33 = sadd.s32 %s32, 1
    %s34 = scalar_select %p31, %s32, %s33
    %p37 = pneg %p31
    %p38 = scmp.eq.s32.totalorder %s10, 1
    %p39 = por %p37, %p38
    %p40 = scmp.ne.s32.totalorder %s32, %s35
    %p41 = scmp.eq.s32.totalorder %s10, 0
    %p42 = por %p40, %p41
    %p43 = scmp.ne.s32.totalorder %s32, %s35
    %p44 = scmp.eq.s32.totalorder %s15, 1
    %p45 = por %p43, %p44
    %p46 = scmp.ne.s32.totalorder %s35, %s36
    %p47 = scmp.eq.s32.totalorder %s15, 0
    %p48 = por %p46, %p47
    %p49 = scmp.ne.s32.totalorder %s35, %s36
    %p50 = scmp.eq.s32.totalorder %s16, 1
    %p51 = por %p49, %p50
    %p53 = scmp.ne.s32.totalorder %s36, %s52
    %p54 = scmp.eq.s32.totalorder %s16, 0
    %p55 = por %p53, %p54
    %s56 = ssub.s32 %s17, %s29
    %p57 = scmp.eq.s32.totalorder %s56, 0
    %s59 = sadd.s32 %s58, 1
    %s60 = scalar_select %p57, %s58, %s59
    %p63 = pneg %p57
    %p64 = scmp.eq.s32.totalorder %s10, 1
    %p65 = por %p63, %p64
    %p66 = scmp.ne.s32.totalorder %s58, %s61
    %p67 = scmp.eq.s32.totalorder %s10, 0
    %p68 = por %p66, %p67
    %p69 = scmp.ne.s32.totalorder %s58, %s61
    %p70 = scmp.eq.s32.totalorder %s15, 1
    %p71 = por %p69, %p70
    %p72 = scmp.ne.s32.totalorder %s61, %s62
    %p73 = scmp.eq.s32.totalorder %s15, 0
    %p74 = por %p72, %p73
    %p75 = scmp.ne.s32.totalorder %s61, %s62
    %p76 = scmp.eq.s32.totalorder %s16, 1
    %p77 = por %p75, %p76
    %p79 = scmp.ne.s32.totalorder %s62, %s78
    %p80 = scmp.eq.s32.totalorder %s16, 0
    %p81 = por %p79, %p80
    %s82 = ssub.s32 %s17, %s29
    %p83 = scmp.eq.s32.totalorder %s82, 0
    %s85 = sadd.s32 %s84, 1
    %s86 = scalar_select %p83, %s84, %s85
    %p89 = pneg %p83
    %p90 = scmp.eq.s32.totalorder %s10, 1
    %p91 = por %p89, %p90
    %p92 = scmp.ne.s32.totalorder %s84, %s87
    %p93 = scmp.eq.s32.totalorder %s10, 0
    %p94 = por %p92, %p93
    %p95 = scmp.ne.s32.totalorder %s84, %s87
    %p96 = scmp.eq.s32.totalorder %s15, 1
    %p97 = por %p95, %p96
    %p98 = scmp.ne.s32.totalorder %s87, %s88
    %p99 = scmp.eq.s32.totalorder %s15, 0
    %p100 = por %p98, %p99
    %p101 = scmp.ne.s32.totalorder %s87, %s88
    %p102 = scmp.eq.s32.totalorder %s16, 1
    %p103 = por %p101, %p102
    %p105 = scmp.ne.s32.totalorder %s88, %s104
    %p106 = scmp.eq.s32.totalorder %s16, 0
    %p107 = por %p105, %p106
    %s108 = ssub.s32 %s17, %s29
    %p109 = scmp.eq.s32.totalorder %s108, 0
    %s111 = sadd.s32 %s110, 1
    %s112 = scalar_select %p109, %s110, %s111
    %p115 = pneg %p109
    %p116 = scmp.eq.s32.totalorder %s10, 1
    %p117 = por %p115, %p116
    %p118 = scmp.ne.s32.totalorder %s110, %s113
    %p119 = scmp.eq.s32.totalorder %s10, 0
    %p120 = por %p118, %p119
    %p121 = scmp.ne.s32.totalorder %s110, %s113
    %p122 = scmp.eq.s32.totalorder %s15, 1
    %p123 = por %p121, %p122
    %p124 = scmp.ne.s32.totalorder %s113, %s114
    %p125 = scmp.eq.s32.totalorder %s15, 0
    %p126 = por %p124, %p125
    %p127 = scmp.ne.s32.totalorder %s113, %s114
    %p128 = scmp.eq.s32.totalorder %s16, 1
    %p129 = por %p127, %p128
    %p131 = scmp.ne.s32.totalorder %s114, %s130
    %p132 = scmp.eq.s32.totalorder %s16, 0
    %p133 = por %p131, %p132
    %s134 = ssub.s32 %s18, %s25
    %s135 = ssub.s32 %s17, %s29
    %s136 = sor.u32 %s134, %s135
    %p137 = scmp.eq.s32.totalorder %s136, 0
    %s139 = sadd.s32 %s138, 1
    %s140 = scalar_select %p137, %s138, %s139
    %p143 = pneg %p137
    %p144 = scmp.eq.s32.totalorder %s10, 1
    %p145 = por %p143, %p144
    %p146 = scmp.ne.s32.totalorder %s138, %s141
    %p147 = scmp.eq.s32.totalorder %s10, 0
    %p148 = por %p146, %p147
    %p149 = scmp.ne.s32.totalorder %s138, %s141
    %p150 = scmp.eq.s32.totalorder %s15, 1
    %p151 = por %p149, %p150
    %p152 = scmp.ne.s32.totalorder %s141, %s142
    %p153 = scmp.eq.s32.totalorder %s15, 0
    %p154 = por %p152, %p153
    %p155 = scmp.ne.s32.totalorder %s141, %s142
    %p156 = scmp.eq.s32.totalorder %s16, 1
    %p157 = por %p155, %p156
    %p159 = scmp.ne.s32.totalorder %s142, %s158
    %p160 = scmp.eq.s32.totalorder %s16, 0
    %p161 = por %p159, %p160
    %p162 = scmp.le.s32.totalorder 1, %s10
    %p163 = scmp.lt.s32.totalorder %s10, 3
    %p164 = pnand %p162, %p163
    %p165 = pneg %p164
    // Predicated region
    $region9: #{forward.7} parent=5 // pred_check
      _
    $region10: #{forward.7} parent=5 // pred_check_branch
      %167 = sbr.rel (%p164) target = $region12
    $region11: #{forward.7} parent=5 // pred_region
      %s168 = ssub.s32 %s10, 1
      // Predicated region
      $region13: #{forward.7} parent=11 // pred_check
        %p169 = pneg %p74
      $region14: #{forward.7} parent=11 // pred_check_branch
        %171 = sbr.rel (%p169) target = $region16
      $region15: #{forward.7} parent=11 // pred_region
        %p172 = scmp.lt.s32.totalorder %s19, 0
        %s173 = scalar_select %p172, %s19, 0
        %s174 = smul.addr %s173, 4
        %s175 = scalar_lea.vmem %s1, %s174
      $region16: #{forward.7} parent=11 // pred_fallthru
        _
      // Predicated region
      $region17: #{forward.7} parent=11 // pred_check
        %p176 = pneg %p100
      $region18: #{forward.7} parent=11 // pred_check_branch
        %178 = sbr.rel (%p176) target = $region20
      $region19: #{forward.7} parent=11 // pred_region
        %p179 = scmp.lt.s32.totalorder %s19, 0
        %s180 = scalar_select %p179, %s19, 0
        %s181 = scalar_lea.vmem %s2, %s180
      $region20: #{forward.7} parent=11 // pred_fallthru
        _
      // Predicated region
      $region21: #{forward.7} parent=11 // pred_check
        %p182 = pneg %p126
      $region22: #{forward.7} parent=11 // pred_check_branch
        %184 = sbr.rel (%p182) target = $region24
      $region23: #{forward.7} parent=11 // pred_region
        %p185 = scmp.lt.s32.totalorder %s19, 0
        %s186 = scalar_select %p185, %s19, 0
        %s187 = scalar_lea.vmem %s3, %s186
      $region24: #{forward.7} parent=11 // pred_fallthru
        _
    $region12: #{forward.7} parent=5 // pred_fallthru
      _
    %p188 = scmp.lt.s32.totalorder %s10, 2
    // Predicated region
    $region25: #{forward.7} parent=5 // pred_check
      %p189 = pneg %p188
    $region26: #{forward.7} parent=5 // pred_check_branch
      %191 = sbr.rel (%p189) target = $region28
    $region27: #{forward.7} parent=5 // pred_region
      // Predicated region
      $region29: #{forward.7} parent=27 // pred_check
        %p192 = pneg %p42
      $region30: #{forward.7} parent=27 // pred_check_branch
        %194 = sbr.rel (%p192) target = $region32
      $region31: #{forward.7} parent=27 // pred_region
        %p195 = scmp.lt.s32.totalorder %s18, 1
        %s196 = scalar_select %p195, %s18, 1
        %s197 = smul.addr %s196, 20
        %s198 = smul.addr %s197, 4
        %s199 = scalar_lea.vmem %s0, %s198
      $region32: #{forward.7} parent=27 // pred_fallthru
        _
    $region28: #{forward.7} parent=5 // pred_fallthru
      _
    %p200 = scmp.le.s32.totalorder 1, %s10
    %p201 = scmp.lt.s32.totalorder %s10, 3
    %p202 = pnand %p200, %p201
    %p203 = pneg %p202
    // Predicated region
    $region33: #{forward.7} parent=5 // pred_check
      _
    $region34: #{forward.7} parent=5 // pred_check_branch
      %205 = sbr.rel (%p202) target = $region36
    $region35: #{forward.7} parent=5 // pred_region
      %s206 = ssub.s32 %s10, 1
      %p207 = scmp.lt.s32.totalorder %s20, 1
      %s208 = scalar_select %p207, %s20, 1
      %s209 = smul.addr %s208, 20
      %s210 = smul.addr %s209, 4
      %s211 = scalar_lea.vmem %s0, %s210
      %p212 = pneg %p48
      %p213 = pneg %p45
      %p214 = scmp.lt.s32.totalorder %s19, 0
      %s215 = scalar_select %p214, %s19, 0
      %s216 = smul.addr %s215, 4
      %s217 = scalar_lea.vmem %s1, %s216
      %p218 = pneg %p74
      %p219 = pneg %p71
      %p220 = scmp.lt.s32.totalorder %s19, 0
      %s221 = scalar_select %p220, %s19, 0
      %s222 = scalar_lea.vmem %s2, %s221
      %p223 = pneg %p100
      %p224 = pneg %p97
      %p225 = scmp.lt.s32.totalorder %s19, 0
      %s226 = scalar_select %p225, %s19, 0
      %s227 = scalar_lea.vmem %s3, %s226
      %p228 = pneg %p126
      %p229 = pneg %p123
      %p230 = pneg %p154
      %p231 = pneg %p151
      %p232 = scmp.lt.s32.totalorder %s20, 1
      %s233 = scalar_select %p232, %s20, 1
      %p234 = scmp.lt.s32.totalorder %s19, 0
      %s235 = scalar_select %p234, %s19, 0
      %s236 = smul.addr %s233, 8
      %s237 = sadd.s32 %s235, %s236
      %s238 = smul.addr %s237, 4
      %s239 = scalar_lea.vmem %s4, %s238
      %p240 = scmp.lt.s32.totalorder %s20, 1
      %s241 = scalar_select %p240, %s20, 1
      %s242 = smul.addr %s241, 20
      %s243 = smul.addr %s242, 4
      %s244 = scalar_lea.vmem %s0, %s243
      %p245 = scmp.lt.s32.totalorder %s19, 0
      %s246 = scalar_select %p245, %s19, 0
      %s247 = smul.addr %s246, 4
      %s248 = scalar_lea.vmem %s1, %s247
      %p249 = scmp.lt.s32.totalorder %s19, 0
      %s250 = scalar_select %p249, %s19, 0
      %s251 = scalar_lea.vmem %s2, %s250
      %p252 = scmp.lt.s32.totalorder %s19, 0
      %s253 = scalar_select %p252, %s19, 0
      %s254 = scalar_lea.vmem %s3, %s253
      %p255 = scmp.lt.s32.totalorder %s20, 1
      %s256 = scalar_select %p255, %s20, 1
      %p257 = scmp.lt.s32.totalorder %s19, 0
      %s258 = scalar_select %p257, %s19, 0
      %s259 = smul.addr %s256, 8
      %s260 = sadd.s32 %s258, %s259
      %s261 = smul.addr %s260, 4
      %s262 = scalar_lea.vmem %s4, %s261
      %v264 = vld [vmem:[%s244] sm:$0xf]
      %v265 = vld [vmem:[%s244 + $0x8] sm:$0xf]
      %v266 = vld [vmem:[%s244 + $0x10] sm:$0xf]
      %v267 = vld [vmem:[%s244 + $0x18] sm:$0xf]
      %v268 = vld [vmem:[%s244 + $0x20] sm:$0xf]
      %v269 = vld [vmem:[%s244 + $0x28] sm:$0xf]
      %v270 = vld [vmem:[%s244 + $0x30] sm:$0xf]
      %v271 = vld [vmem:[%s244 + $0x38] sm:$0xf]
      %v272 = vld [vmem:[%s248] sm:$0xf]
      %v273 = vld [vmem:[%s248 + $0x4] sm:$0xf]
      %v274 = vld [vmem:[%s248 + $0x8] sm:$0xf]
      %v275 = vld [vmem:[%s248 + $0xc] sm:$0xf]
      %v276 = vld [vmem:[%s248 + $0x10] sm:$0xf]
      %v277 = vld [vmem:[%s248 + $0x14] sm:$0xf]
      %v278 = vld [vmem:[%s248 + $0x18] sm:$0xf]
      %v279 = vld [vmem:[%s248 + $0x1c] sm:$0xf]
      %v280 = vld [vmem:[%s248 + $0x20] sm:$0xf]
      %v281 = vld [vmem:[%s248 + $0x24] sm:$0xf]
      %v282 = vld [vmem:[%s248 + $0x28] sm:$0xf]
      %v283 = vld [vmem:[%s248 + $0x2c] sm:$0xf]
      %v284 = vld [vmem:[%s248 + $0x30] sm:$0xf]
      %v285 = vld [vmem:[%s248 + $0x34] sm:$0xf]
      %v286 = vld [vmem:[%s248 + $0x38] sm:$0xf]
      %v287 = vld [vmem:[%s248 + $0x3c] sm:$0xf]
      %v296 = vunpack.c.l.b16 %v264
      %v297 = vunpack.c.l.b16 %v265
      %v298 = vunpack.c.l.b16 %v266
      %v299 = vunpack.c.l.b16 %v267
      %v300 = vunpack.c.l.b16 %v268
      %v301 = vunpack.c.l.b16 %v269
      %v302 = vunpack.c.l.b16 %v270
      %v303 = vunpack.c.l.b16 %v271
      %v304 = vpack.c.b16 %v297, %v296
      %v305 = vpack.c.b16 %v299, %v298
      %v306 = vpack.c.b16 %v301, %v300
      %v307 = vpack.c.b16 %v303, %v302
      %v328 = vunpack.c.l.b16 %v272
      %v329 = vunpack.c.l.b16 %v273
      %v330 = vunpack.c.l.b16 %v274
      %v331 = vunpack.c.l.b16 %v275
      %v332 = vunpack.c.l.b16 %v276
      %v333 = vunpack.c.l.b16 %v277
      %v334 = vunpack.c.l.b16 %v278
      %v335 = vunpack.c.l.b16 %v279
      %v336 = vunpack.c.l.b16 %v280
      %v337 = vunpack.c.l.b16 %v281
      %v338 = vunpack.c.l.b16 %v282
      %v339 = vunpack.c.l.b16 %v283
      %v340 = vunpack.c.l.b16 %v284
      %v341 = vunpack.c.l.b16 %v285
      %v342 = vunpack.c.l.b16 %v286
      %v343 = vunpack.c.l.b16 %v287
      %v344 = vpack.c.b16 %v329, %v328
      %v345 = vpack.c.b16 %v331, %v330
      %v346 = vpack.c.b16 %v333, %v332
      %v347 = vpack.c.b16 %v335, %v334
      %v348 = vpack.c.b16 %v337, %v336
      %v349 = vpack.c.b16 %v339, %v338
      %v350 = vpack.c.b16 %v341, %v340
      %v351 = vpack.c.b16 %v343, %v342
      %360 = vmatprep.subr.bf16.mxu0 0
      %361 = vmatpush1.bf16.msra.mxu0 %v344
      %362 = vmatprep.subr.bf16.mxu0 0
      %363 = vmatpush1.bf16.msra.mxu0 %v345
      %364 = vmatprep.subr.bf16.mxu0 0
      %365 = vmatpush1.bf16.msra.mxu0 %v346
      %366 = vmatprep.subr.bf16.mxu0 0
      %367 = vmatpush1.bf16.msra.mxu0 %v347
      %368 = vmatprep.subr.bf16.mxu0 0
      %369 = vmatpush1.bf16.msra.mxu0 %v348
      %370 = vmatprep.subr.bf16.mxu0 0
      %371 = vmatpush1.bf16.msra.mxu0 %v349
      %372 = vmatprep.subr.bf16.mxu0 0
      %373 = vmatpush1.bf16.msra.mxu0 %v350
      %374 = vmatprep.subr.bf16.mxu0 0
      %375 = vmatpush1.bf16.msra.mxu0 %v351
      %376 = vmatprep.subr.bf16.mxu0 0
      %377 = vmatpush1.bf16.msra.mxu0 0
      %378 = vmatprep.subr.bf16.mxu0 0
      %379 = vmatpush1.bf16.msra.mxu0 0
      %380 = vmatprep.subr.bf16.mxu0 0
      %381 = vmatpush1.bf16.msra.mxu0 0
      %382 = vmatprep.subr.bf16.mxu0 0
      %383 = vmatpush1.bf16.msra.mxu0 0
      %384 = vmatprep.subr.bf16.mxu0 0
      %385 = vmatpush1.bf16.msra.mxu0 0
      %386 = vmatprep.subr.bf16.mxu0 0
      %387 = vmatpush1.bf16.msra.mxu0 0
      %388 = vmatprep.subr.bf16.mxu0 0
      %389 = vmatpush1.bf16.msra.mxu0 0
      %390 = vmatprep.subr.bf16.mxu0 0
      %391 = vmatpush1.bf16.msra.mxu0 0
      %392 = vmatprep.mubr.bf16.mxu0 0
      %393 = vmatmul.mubr.bf16.gmra.mrb[0].mxu0 %v304
      %v394 = vpop.f32.mrb[0].mxu0
      %v395 = vadd.f32 0.0, %v394
      %v396 = vpop.f32.mrb[0].mxu0
      %v397 = vpop.f32.mrb[0].mxu0
      %v398 = vadd.f32 0.0, %v397
      %v399 = vpop.f32.mrb[0].mxu0
      %400 = vmatprep.mubr.bf16.mxu0 0
      %401 = vmatmul.mubr.bf16.gmra.mrb[0].mxu0 %v305
      %v402 = vpop.f32.mrb[0].mxu0
      %v403 = vadd.f32 0.0, %v402
      %v404 = vpop.f32.mrb[0].mxu0
      %v405 = vpop.f32.mrb[0].mxu0
      %v406 = vadd.f32 0.0, %v405
      %v407 = vpop.f32.mrb[0].mxu0
      %408 = vmatprep.mubr.bf16.mxu0 0
      %409 = vmatmul.mubr.bf16.gmra.mrb[0].mxu0 %v306
      %v410 = vpop.f32.mrb[0].mxu0
      %v411 = vadd.f32 0.0, %v410
      %v412 = vpop.f32.mrb[0].mxu0
      %v413 = vpop.f32.mrb[0].mxu0
      %v414 = vadd.f32 0.0, %v413
      %v415 = vpop.f32.mrb[0].mxu0
      %416 = vmatprep.mubr.bf16.mxu0 0
      %417 = vmatmul.mubr.bf16.gmra.mrb[0].mxu0 %v307
      %v418 = vpop.f32.mrb[0].mxu0
      %v419 = vadd.f32 0.0, %v418
      %v420 = vpop.f32.mrb[0].mxu0
      %v421 = vpop.f32.mrb[0].mxu0
      %v422 = vadd.f32 0.0, %v421
      %v423 = vpop.f32.mrb[0].mxu0
      %424 = vdwg.mxu0
      %425 = vst [vmem:[#allocation2] sm:$0xff] %v395
      %426 = vst [vmem:[#allocation2 + $0x8] sm:$0xff] %v398
      %427 = vst [vmem:[#allocation2 + $0x10] sm:$0xff] %v403
      %428 = vst [vmem:[#allocation2 + $0x18] sm:$0xff] %v406
      %429 = vst [vmem:[#allocation2 + $0x20] sm:$0xff] %v411
      %430 = vst [vmem:[#allocation2 + $0x28] sm:$0xff] %v414
      %431 = vst [vmem:[#allocation2 + $0x30] sm:$0xff] %v419
      %432 = vst [vmem:[#allocation2 + $0x38] sm:$0xff] %v422
      %v433 = vld [vmem:[%s244] sm:$0xf]
      %v434 = vld [vmem:[%s244 + $0x4] sm:$0x1]
      %v435 = vld [vmem:[%s244 + $0x8] sm:$0xf]
      %v436 = vld [vmem:[%s244 + $0xc] sm:$0x1]
      %v437 = vld [vmem:[%s244 + $0x10] sm:$0xf]
      %v438 = vld [vmem:[%s244 + $0x14] sm:$0x1]
      %v439 = vld [vmem:[%s244 + $0x18] sm:$0xf]
      %v440 = vld [vmem:[%s244 + $0x1c] sm:$0x1]
      %v441 = vld [vmem:[%s244 + $0x20] sm:$0xf]
      %v442 = vld [vmem:[%s244 + $0x24] sm:$0x1]
      %v443 = vld [vmem:[%s244 + $0x28] sm:$0xf]
      %v444 = vld [vmem:[%s244 + $0x2c] sm:$0x1]
      %v445 = vld [vmem:[%s244 + $0x30] sm:$0xf]
      %v446 = vld [vmem:[%s244 + $0x34] sm:$0x1]
      %v447 = vld [vmem:[%s244 + $0x38] sm:$0xf]
      %v448 = vld [vmem:[%s244 + $0x3c] sm:$0x1]
      %vm449 = vsmask.f32 3328
      %vm450 = vsmask.f32 7440
      %vm451 = vmor %vm449, %vm450
      %v453 = vshrl.u32 %v433, 16
      %v455 = vrot.slane %v453, 4
      %v456 = vshll.u32 %v433, 16
      %v458 = vrot.slane %v456, 5
      %v459 = vor.u32 %v455, %v458
      %v460 = vrot.slane %v459, 4
      %v462 = vshll.u32 %v434, 16
      %v464 = vrot.slane %v462, 5
      %v465 = vsel %vm451, %v460, %v464
      %v467 = vshrl.u32 %v435, 16
      %v469 = vrot.slane %v467, 4
      %v470 = vshll.u32 %v435, 16
      %v472 = vrot.slane %v470, 5
      %v473 = vor.u32 %v469, %v472
      %v474 = vrot.slane %v473, 4
      %v476 = vshll.u32 %v436, 16
      %v478 = vrot.slane %v476, 5
      %v479 = vsel %vm451, %v474, %v478
      %v481 = vshrl.u32 %v437, 16
      %v483 = vrot.slane %v481, 4
      %v484 = vshll.u32 %v437, 16
      %v486 = vrot.slane %v484, 5
      %v487 = vor.u32 %v483, %v486
      %v488 = vrot.slane %v487, 4
      %v490 = vshll.u32 %v438, 16
      %v492 = vrot.slane %v490, 5
      %v493 = vsel %vm451, %v488, %v492
      %v495 = vshrl.u32 %v439, 16
      %v497 = vrot.slane %v495, 4
      %v498 = vshll.u32 %v439, 16
      %v500 = vrot.slane %v498, 5
      %v501 = vor.u32 %v497, %v500
      %v502 = vrot.slane %v501, 4
      %v504 = vshll.u32 %v440, 16
      %v506 = vrot.slane %v504, 5
      %v507 = vsel %vm451, %v502, %v506
      %v509 = vshrl.u32 %v441, 16
      %v511 = vrot.slane %v509, 4
      %v512 = vshll.u32 %v441, 16
      %v514 = vrot.slane %v512, 5
      %v515 = vor.u32 %v511, %v514
      %v516 = vrot.slane %v515, 4
      %v518 = vshll.u32 %v442, 16
      %v520 = vrot.slane %v518, 5
      %v521 = vsel %vm451, %v516, %v520
      %v523 = vshrl.u32 %v443, 16
      %v525 = vrot.slane %v523, 4
      %v526 = vshll.u32 %v443, 16
      %v528 = vrot.slane %v526, 5
      %v529 = vor.u32 %v525, %v528
      %v530 = vrot.slane %v529, 4
      %v532 = vshll.u32 %v444, 16
      %v534 = vrot.slane %v532, 5
      %v535 = vsel %vm451, %v530, %v534
      %v537 = vshrl.u32 %v445, 16
      %v539 = vrot.slane %v537, 4
      %v540 = vshll.u32 %v445, 16
      %v542 = vrot.slane %v540, 5
      %v543 = vor.u32 %v539, %v542
      %v544 = vrot.slane %v543, 4
      %v546 = vshll.u32 %v446, 16
      %v548 = vrot.slane %v546, 5
      %v549 = vsel %vm451, %v544, %v548
      %v551 = vshrl.u32 %v447, 16
      %v553 = vrot.slane %v551, 4
      %v554 = vshll.u32 %v447, 16
      %v556 = vrot.slane %v554, 5
      %v557 = vor.u32 %v553, %v556
      %v558 = vrot.slane %v557, 4
      %v560 = vshll.u32 %v448, 16
      %v562 = vrot.slane %v560, 5
      %v563 = vsel %vm451, %v558, %v562
      %s564 = scalar_lea.vmem %s248, 64
      %v565 = vld [vmem:[%s564] sm:$0xf]
      %v566 = vld [vmem:[%s564 + $0x4] sm:$0xf]
      %v567 = vld [vmem:[%s564 + $0x8] sm:$0xf]
      %v568 = vld [vmem:[%s564 + $0xc] sm:$0xf]
      %v569 = vld [vmem:[%s564 + $0x10] sm:$0xf]
      %v570 = vld [vmem:[%s564 + $0x14] sm:$0xf]
      %v571 = vld [vmem:[%s564 + $0x18] sm:$0xf]
      %v572 = vld [vmem:[%s564 + $0x1c] sm:$0xf]
      %v573 = vld [vmem:[%s564 + $0x20] sm:$0xf]
      %v574 = vld [vmem:[%s564 + $0x24] sm:$0xf]
      %v575 = vld [vmem:[%s564 + $0x28] sm:$0xf]
      %v576 = vld [vmem:[%s564 + $0x2c] sm:$0xf]
      %v577 = vld [vmem:[%s564 + $0x30] sm:$0xf]
      %v578 = vld [vmem:[%s564 + $0x34] sm:$0xf]
      %v579 = vld [vmem:[%s564 + $0x38] sm:$0xf]
      %v580 = vld [vmem:[%s564 + $0x3c] sm:$0xf]
      %v581 = vunpack.c.l.b16 %v465
      %v582 = vunpack.c.l.b16 %v479
      %v583 = vunpack.c.l.b16 %v493
      %v584 = vunpack.c.l.b16 %v507
      %v585 = vunpack.c.l.b16 %v521
      %v586 = vunpack.c.l.b16 %v535
      %v587 = vunpack.c.l.b16 %v549
      %v588 = vunpack.c.l.b16 %v563
      %v589 = vpack.c.b16 %v582, %v581
      %v590 = vpack.c.b16 %v584, %v583
      %v591 = vpack.c.b16 %v586, %v585
      %v592 = vpack.c.b16 %v588, %v587
      %v613 = vunpack.c.l.b16 %v565
      %v614 = vunpack.c.l.b16 %v566
      %v615 = vunpack.c.l.b16 %v567
      %v616 = vunpack.c.l.b16 %v568
      %v617 = vunpack.c.l.b16 %v569
      %v618 = vunpack.c.l.b16 %v570
      %v619 = vunpack.c.l.b16 %v571
      %v620 = vunpack.c.l.b16 %v572
      %v621 = vunpack.c.l.b16 %v573
      %v622 = vunpack.c.l.b16 %v574
      %v623 = vunpack.c.l.b16 %v575
      %v624 = vunpack.c.l.b16 %v576
      %v625 = vunpack.c.l.b16 %v577
      %v626 = vunpack.c.l.b16 %v578
      %v627 = vunpack.c.l.b16 %v579
      %v628 = vunpack.c.l.b16 %v580
      %v629 = vpack.c.b16 %v614, %v613
      %v630 = vpack.c.b16 %v616, %v615
      %v631 = vpack.c.b16 %v618, %v617
      %v632 = vpack.c.b16 %v620, %v619
      %v633 = vpack.c.b16 %v622, %v621
      %v634 = vpack.c.b16 %v624, %v623
      %v635 = vpack.c.b16 %v626, %v625
      %v636 = vpack.c.b16 %v628, %v627
      %645 = vmatprep.subr.bf16.mxu0 0
      %646 = vmatpush1.bf16.msra.mxu0 %v629
      %647 = vmatprep.subr.bf16.mxu0 0
      %648 = vmatpush1.bf16.msra.mxu0 %v630
      %649 = vmatprep.subr.bf16.mxu0 0
      %650 = vmatpush1.bf16.msra.mxu0 %v631
      %651 = vmatprep.subr.bf16.mxu0 0
      %652 = vmatpush1.bf16.msra.mxu0 %v632
      %653 = vmatprep.subr.bf16.mxu0 0
      %654 = vmatpush1.bf16.msra.mxu0 %v633
      %655 = vmatprep.subr.bf16.mxu0 0
      %656 = vmatpush1.bf16.msra.mxu0 %v634
      %657 = vmatprep.subr.bf16.mxu0 0
      %658 = vmatpush1.bf16.msra.mxu0 %v635
      %659 = vmatprep.subr.bf16.mxu0 0
      %660 = vmatpush1.bf16.msra.mxu0 %v636
      %661 = vmatprep.subr.bf16.mxu0 0
      %662 = vmatpush1.bf16.msra.mxu0 0
      %663 = vmatprep.subr.bf16.mxu0 0
      %664 = vmatpush1.bf16.msra.mxu0 0
      %665 = vmatprep.subr.bf16.mxu0 0
      %666 = vmatpush1.bf16.msra.mxu0 0
      %667 = vmatprep.subr.bf16.mxu0 0
      %668 = vmatpush1.bf16.msra.mxu0 0
      %669 = vmatprep.subr.bf16.mxu0 0
      %670 = vmatpush1.bf16.msra.mxu0 0
      %671 = vmatprep.subr.bf16.mxu0 0
      %672 = vmatpush1.bf16.msra.mxu0 0
      %673 = vmatprep.subr.bf16.mxu0 0
      %674 = vmatpush1.bf16.msra.mxu0 0
      %675 = vmatprep.subr.bf16.mxu0 0
      %676 = vmatpush1.bf16.msra.mxu0 0
      %677 = vmatprep.mubr.bf16.mxu0 0
      %678 = vmatmul.mubr.bf16.gmra.mrb[0].mxu0 %v589
      %v679 = vpop.f32.mrb[0].mxu0
      %v680 = vadd.f32 0.0, %v679
      %v681 = vpop.f32.mrb[0].mxu0
      %v682 = vpop.f32.mrb[0].mxu0
      %v683 = vadd.f32 0.0, %v682
      %v684 = vpop.f32.mrb[0].mxu0
      %685 = vmatprep.mubr.bf16.mxu0 0
      %686 = vmatmul.mubr.bf16.gmra.mrb[0].mxu0 %v590
      %v687 = vpop.f32.mrb[0].mxu0
      %v688 = vadd.f32 0.0, %v687
      %v689 = vpop.f32.mrb[0].mxu0
      %v690 = vpop.f32.mrb[0].mxu0
      %v691 = vadd.f32 0.0, %v690
      %v692 = vpop.f32.mrb[0].mxu0
      %693 = vmatprep.mubr.bf16.mxu0 0
      %694 = vmatmul.mubr.bf16.gmra.mrb[0].mxu0 %v591
      %v695 = vpop.f32.mrb[0].mxu0
      %v696 = vadd.f32 0.0, %v695
      %v697 = vpop.f32.mrb[0].mxu0
      %v698 = vpop.f32.mrb[0].mxu0
      %v699 = vadd.f32 0.0, %v698
      %v700 = vpop.f32.mrb[0].mxu0
      %701 = vmatprep.mubr.bf16.mxu0 0
      %702 = vmatmul.mubr.bf16.gmra.mrb[0].mxu0 %v592
      %v703 = vpop.f32.mrb[0].mxu0
      %v704 = vadd.f32 0.0, %v703
      %v705 = vpop.f32.mrb[0].mxu0
      %v706 = vpop.f32.mrb[0].mxu0
      %v707 = vadd.f32 0.0, %v706
      %v708 = vpop.f32.mrb[0].mxu0
      %709 = vdwg.mxu0
      %v710 = vld [vmem:[#allocation2] sm:$0xff]
      %v711 = vld [vmem:[#allocation2 + $0x8] sm:$0xff]
      %v712 = vld [vmem:[#allocation2 + $0x10] sm:$0xff]
      %v713 = vld [vmem:[#allocation2 + $0x18] sm:$0xff]
      %v714 = vld [vmem:[#allocation2 + $0x20] sm:$0xff]
      %v715 = vld [vmem:[#allocation2 + $0x28] sm:$0xff]
      %v716 = vld [vmem:[#allocation2 + $0x30] sm:$0xff]
      %v717 = vld [vmem:[#allocation2 + $0x38] sm:$0xff]
      %v718 = vadd.f32 %v710, %v680
      %v719 = vadd.f32 %v711, %v683
      %v720 = vadd.f32 %v712, %v688
      %v721 = vadd.f32 %v713, %v691
      %v722 = vadd.f32 %v714, %v696
      %v723 = vadd.f32 %v715, %v699
      %v724 = vadd.f32 %v716, %v704
      %v725 = vadd.f32 %v717, %v707
      %726 = vst [vmem:[#allocation2] sm:$0xff] %v718
      %727 = vst [vmem:[#allocation2 + $0x8] sm:$0xff] %v719
      %728 = vst [vmem:[#allocation2 + $0x10] sm:$0xff] %v720
      %729 = vst [vmem:[#allocation2 + $0x18] sm:$0xff] %v721
      %730 = vst [vmem:[#allocation2 + $0x20] sm:$0xff] %v722
      %731 = vst [vmem:[#allocation2 + $0x28] sm:$0xff] %v723
      %732 = vst [vmem:[#allocation2 + $0x30] sm:$0xff] %v724
      %733 = vst [vmem:[#allocation2 + $0x38] sm:$0xff] %v725
      %v734 = vld [vmem:[%s244] sm:$0xe]
      %v735 = vld [vmem:[%s244 + $0x4] sm:$0x1]
      %v736 = vld [vmem:[%s244 + $0x8] sm:$0xe]
      %v737 = vld [vmem:[%s244 + $0xc] sm:$0x1]
      %v738 = vld [vmem:[%s244 + $0x10] sm:$0xe]
      %v739 = vld [vmem:[%s244 + $0x14] sm:$0x1]
      %v740 = vld [vmem:[%s244 + $0x18] sm:$0xe]
      %v741 = vld [vmem:[%s244 + $0x1c] sm:$0x1]
      %v742 = vld [vmem:[%s244 + $0x20] sm:$0xe]
      %v743 = vld [vmem:[%s244 + $0x24] sm:$0x1]
      %v744 = vld [vmem:[%s244 + $0x28] sm:$0xe]
      %v745 = vld [vmem:[%s244 + $0x2c] sm:$0x1]
      %v746 = vld [vmem:[%s244 + $0x30] sm:$0xe]
      %v747 = vld [vmem:[%s244 + $0x34] sm:$0x1]
      %v748 = vld [vmem:[%s244 + $0x38] sm:$0xe]
      %v749 = vld [vmem:[%s244 + $0x3c] sm:$0x1]
      %vm766 = vcmask 1042432
      %vm767 = vcmask 1046532
      %vm768 = vmor %vm766, %vm767
      %v769 = vrot.slane %v734, 5
      %v770 = vrot.slane %v769, 4
      %v771 = vrot.slane %v735, 5
      %v772 = vsel %vm768, %v770, %v771
      %v773 = vrot.slane %v736, 5
      %v774 = vrot.slane %v773, 4
      %v775 = vrot.slane %v737, 5
      %v776 = vsel %vm768, %v774, %v775
      %v777 = vrot.slane %v738, 5
      %v778 = vrot.slane %v777, 4
      %v779 = vrot.slane %v739, 5
      %v780 = vsel %vm768, %v778, %v779
      %v781 = vrot.slane %v740, 5
      %v782 = vrot.slane %v781, 4
      %v783 = vrot.slane %v741, 5
      %v784 = vsel %vm768, %v782, %v783
      %v785 = vrot.slane %v742, 5
      %v786 = vrot.slane %v785, 4
      %v787 = vrot.slane %v743, 5
      %v788 = vsel %vm768, %v786, %v787
      %v789 = vrot.slane %v744, 5
      %v790 = vrot.slane %v789, 4
      %v791 = vrot.slane %v745, 5
      %v792 = vsel %vm768, %v790, %v791
      %v793 = vrot.slane %v746, 5
      %v794 = vrot.slane %v793, 4
      %v795 = vrot.slane %v747, 5
      %v796 = vsel %vm768, %v794, %v795
      %v797 = vrot.slane %v748, 5
      %v798 = vrot.slane %v797, 4
      %v799 = vrot.slane %v749, 5
      %v800 = vsel %vm768, %v798, %v799
      %s801 = scalar_lea.vmem %s248, 128
      %v802 = vld [vmem:[%s801] sm:$0xf]
      %v803 = vld [vmem:[%s801 + $0x4] sm:$0xf]
      %v804 = vld [vmem:[%s801 + $0x8] sm:$0xf]
      %v805 = vld [vmem:[%s801 + $0xc] sm:$0xf]
      %v806 = vld [vmem:[%s801 + $0x10] sm:$0xf]
      %v807 = vld [vmem:[%s801 + $0x14] sm:$0xf]
      %v808 = vld [vmem:[%s801 + $0x18] sm:$0xf]
      %v809 = vld [vmem:[%s801 + $0x1c] sm:$0xf]
      %v810 = vld [vmem:[%s801 + $0x20] sm:$0xf]
      %v811 = vld [vmem:[%s801 + $0x24] sm:$0xf]
      %v812 = vld [vmem:[%s801 + $0x28] sm:$0xf]
      %v813 = vld [vmem:[%s801 + $0x2c] sm:$0xf]
      %v814 = vld [vmem:[%s801 + $0x30] sm:$0xf]
      %v815 = vld [vmem:[%s801 + $0x34] sm:$0xf]
      %v816 = vld [vmem:[%s801 + $0x38] sm:$0xf]
      %v817 = vld [vmem:[%s801 + $0x3c] sm:$0xf]
      %v818 = vunpack.c.l.b16 %v772
      %v819 = vunpack.c.l.b16 %v776
      %v820 = vunpack.c.l.b16 %v780
      %v821 = vunpack.c.l.b16 %v784
      %v822 = vunpack.c.l.b16 %v788
      %v823 = vunpack.c.l.b16 %v792
      %v824 = vunpack.c.l.b16 %v796
      %v825 = vunpack.c.l.b16 %v800
      %v826 = vpack.c.b16 %v819, %v818
      %v827 = vpack.c.b16 %v821, %v820
      %v828 = vpack.c.b16 %v823, %v822
      %v829 = vpack.c.b16 %v825, %v824
      %v850 = vunpack.c.l.b16 %v802
      %v851 = vunpack.c.l.b16 %v803
      %v852 = vunpack.c.l.b16 %v804
      %v853 = vunpack.c.l.b16 %v805
      %v854 = vunpack.c.l.b16 %v806
      %v855 = vunpack.c.l.b16 %v807
      %v856 = vunpack.c.l.b16 %v808
      %v857 = vunpack.c.l.b16 %v809
      %v858 = vunpack.c.l.b16 %v810
      %v859 = vunpack.c.l.b16 %v811
      %v860 = vunpack.c.l.b16 %v812
      %v861 = vunpack.c.l.b16 %v813
      %v862 = vunpack.c.l.b16 %v814
      %v863 = vunpack.c.l.b16 %v815
      %v864 = vunpack.c.l.b16 %v816
      %v865 = vunpack.c.l.b16 %v817
      %v866 = vpack.c.b16 %v851, %v850
      %v867 = vpack.c.b16 %v853, %v852
      %v868 = vpack.c.b16 %v855, %v854
      %v869 = vpack.c.b16 %v857, %v856
      %v870 = vpack.c.b16 %v859, %v858
      %v871 = vpack.c.b16 %v861, %v860
      %v872 = vpack.c.b16 %v863, %v862
      %v873 = vpack.c.b16 %v865, %v864
      %882 = vmatprep.subr.bf16.mxu0 0
      %883 = vmatpush1.bf16.msra.mxu0 %v866
      %884 = vmatprep.subr.bf16.mxu0 0
      %885 = vmatpush1.bf16.msra.mxu0 %v867
      %886 = vmatprep.subr.bf16.mxu0 0
      %887 = vmatpush1.bf16.msra.mxu0 %v868
      %888 = vmatprep.subr.bf16.mxu0 0
      %889 = vmatpush1.bf16.msra.mxu0 %v869
      %890 = vmatprep.subr.bf16.mxu0 0
      %891 = vmatpush1.bf16.msra.mxu0 %v870
      %892 = vmatprep.subr.bf16.mxu0 0
      %893 = vmatpush1.bf16.msra.mxu0 %v871
      %894 = vmatprep.subr.bf16.mxu0 0
      %895 = vmatpush1.bf16.msra.mxu0 %v872
      %896 = vmatprep.subr.bf16.mxu0 0
      %897 = vmatpush1.bf16.msra.mxu0 %v873
      %898 = vmatprep.subr.bf16.mxu0 0
      %899 = vmatpush1.bf16.msra.mxu0 0
      %900 = vmatprep.subr.bf16.mxu0 0
      %901 = vmatpush1.bf16.msra.mxu0 0
      %902 = vmatprep.subr.bf16.mxu0 0
      %903 = vmatpush1.bf16.msra.mxu0 0
      %904 = vmatprep.subr.bf16.mxu0 0
      %905 = vmatpush1.bf16.msra.mxu0 0
      %906 = vmatprep.subr.bf16.mxu0 0
      %907 = vmatpush1.bf16.msra.mxu0 0
      %908 = vmatprep.subr.bf16.mxu0 0
      %909 = vmatpush1.bf16.msra.mxu0 0
      %910 = vmatprep.subr.bf16.mxu0 0
      %911 = vmatpush1.bf16.msra.mxu0 0
      %912 = vmatprep.subr.bf16.mxu0 0
      %913 = vmatpush1.bf16.msra.mxu0 0
      %914 = vmatprep.mubr.bf16.mxu0 0
      %915 = vmatmul.mubr.bf16.gmra.mrb[0].mxu0 %v826
      %v916 = vpop.f32.mrb[0].mxu0
      %v917 = vadd.f32 0.0, %v916
      %v918 = vpop.f32.mrb[0].mxu0
      %v919 = vpop.f32.mrb[0].mxu0
      %v920 = vadd.f32 0.0, %v919
      %v921 = vpop.f32.mrb[0].mxu0
      %922 = vmatprep.mubr.bf16.mxu0 0
      %923 = vmatmul.mubr.bf16.gmra.mrb[0].mxu0 %v827
      %v924 = vpop.f32.mrb[0].mxu0
      %v925 = vadd.f32 0.0, %v924
      %v926 = vpop.f32.mrb[0].mxu0
      %v927 = vpop.f32.mrb[0].mxu0
      %v928 = vadd.f32 0.0, %v927
      %v929 = vpop.f32.mrb[0].mxu0
      %930 = vmatprep.mubr.bf16.mxu0 0
      %931 = vmatmul.mubr.bf16.gmra.mrb[0].mxu0 %v828
      %v932 = vpop.f32.mrb[0].mxu0
      %v933 = vadd.f32 0.0, %v932
      %v934 = vpop.f32.mrb[0].mxu0
      %v935 = vpop.f32.mrb[0].mxu0
      %v936 = vadd.f32 0.0, %v935
      %v937 = vpop.f32.mrb[0].mxu0
      %938 = vmatprep.mubr.bf16.mxu0 0
      %939 = vmatmul.mubr.bf16.gmra.mrb[0].mxu0 %v829
      %v940 = vpop.f32.mrb[0].mxu0
      %v941 = vadd.f32 0.0, %v940
      %v942 = vpop.f32.mrb[0].mxu0
      %v943 = vpop.f32.mrb[0].mxu0
      %v944 = vadd.f32 0.0, %v943
      %v945 = vpop.f32.mrb[0].mxu0
      %946 = vdwg.mxu0
      %v947 = vld [vmem:[#allocation2] sm:$0xff]
      %v948 = vld [vmem:[#allocation2 + $0x8] sm:$0xff]
      %v949 = vld [vmem:[#allocation2 + $0x10] sm:$0xff]
      %v950 = vld [vmem:[#allocation2 + $0x18] sm:$0xff]
      %v951 = vld [vmem:[#allocation2 + $0x20] sm:$0xff]
      %v952 = vld [vmem:[#allocation2 + $0x28] sm:$0xff]
      %v953 = vld [vmem:[#allocation2 + $0x30] sm:$0xff]
      %v954 = vld [vmem:[#allocation2 + $0x38] sm:$0xff]
      %v955 = vadd.f32 %v947, %v917
      %v956 = vadd.f32 %v948, %v920
      %v957 = vadd.f32 %v949, %v925
      %v958 = vadd.f32 %v950, %v928
      %v959 = vadd.f32 %v951, %v933
      %v960 = vadd.f32 %v952, %v936
      %v961 = vadd.f32 %v953, %v941
      %v962 = vadd.f32 %v954, %v944
      %963 = vst [vmem:[#allocation2] sm:$0xff] %v955
      %964 = vst [vmem:[#allocation2 + $0x8] sm:$0xff] %v956
      %965 = vst [vmem:[#allocation2 + $0x10] sm:$0xff] %v957
      %966 = vst [vmem:[#allocation2 + $0x18] sm:$0xff] %v958
      %967 = vst [vmem:[#allocation2 + $0x20] sm:$0xff] %v959
      %968 = vst [vmem:[#allocation2 + $0x28] sm:$0xff] %v960
      %969 = vst [vmem:[#allocation2 + $0x30] sm:$0xff] %v961
      %970 = vst [vmem:[#allocation2 + $0x38] sm:$0xff] %v962
      %s971 = scalar_lea.vmem %s244, 8
      %v972 = vld [vmem:[%s971] sm:$0xf]
      %v973 = vld [vmem:[%s971 + $0x8] sm:$0xf]
      %v974 = vld [vmem:[%s971 + $0x10] sm:$0xf]
      %v975 = vld [vmem:[%s971 + $0x18] sm:$0xf]
      %v976 = vld [vmem:[%s971 + $0x20] sm:$0xf]
      %v977 = vld [vmem:[%s971 + $0x28] sm:$0xf]
      %v978 = vld [vmem:[%s971 + $0x30] sm:$0xf]
      %v979 = vld [vmem:[%s971 + $0x38] sm:$0xf]
      %s980 = scalar_lea.vmem %s248, 192
      %v981 = vld [vmem:[%s980] sm:$0xf]
      %v982 = vld [vmem:[%s980 + $0x4] sm:$0xf]
      %v983 = vld [vmem:[%s980 + $0x8] sm:$0xf]
      %v984 = vld [vmem:[%s980 + $0xc] sm:$0xf]
      %v985 = vld [vmem:[%s980 + $0x10] sm:$0xf]
      %v986 = vld [vmem:[%s980 + $0x14] sm:$0xf]
      %v987 = vld [vmem:[%s980 + $0x18] sm:$0xf]
      %v988 = vld [vmem:[%s980 + $0x1c] sm:$0xf]
      %v989 = vld [vmem:[%s980 + $0x20] sm:$0xf]
      %v990 = vld [vmem:[%s980 + $0x24] sm:$0xf]
      %v991 = vld [vmem:[%s980 + $0x28] sm:$0xf]
      %v992 = vld [vmem:[%s980 + $0x2c] sm:$0xf]
      %v993 = vld [vmem:[%s980 + $0x30] sm:$0xf]
      %v994 = vld [vmem:[%s980 + $0x34] sm:$0xf]
      %v995 = vld [vmem:[%s980 + $0x38] sm:$0xf]
      %v996 = vld [vmem:[%s980 + $0x3c] sm:$0xf]
      %v1005 = vunpack.c.l.b16 %v972
      %v1006 = vunpack.c.l.b16 %v973
      %v1007 = vunpack.c.l.b16 %v974
      %v1008 = vunpack.c.l.b16 %v975
      %v1009 = vunpack.c.l.b16 %v976
      %v1010 = vunpack.c.l.b16 %v977
      %v1011 = vunpack.c.l.b16 %v978
      %v1012 = vunpack.c.l.b16 %v979
      %v1013 = vpack.c.b16 %v1006, %v1005
      %v1014 = vpack.c.b16 %v1008, %v1007
      %v1015 = vpack.c.b16 %v1010, %v1009
      %v1016 = vpack.c.b16 %v1012, %v1011
      %v1037 = vunpack.c.l.b16 %v981
      %v1038 = vunpack.c.l.b16 %v982
      %v1039 = vunpack.c.l.b16 %v983
      %v1040 = vunpack.c.l.b16 %v984
      %v1041 = vunpack.c.l.b16 %v985
      %v1042 = vunpack.c.l.b16 %v986
      %v1043 = vunpack.c.l.b16 %v987
      %v1044 = vunpack.c.l.b16 %v988
      %v1045 = vunpack.c.l.b16 %v989
      %v1046 = vunpack.c.l.b16 %v990
      %v1047 = vunpack.c.l.b16 %v991
      %v1048 = vunpack.c.l.b16 %v992
      %v1049 = vunpack.c.l.b16 %v993
      %v1050 = vunpack.c.l.b16 %v994
      %v1051 = vunpack.c.l.b16 %v995
      %v1052 = vunpack.c.l.b16 %v996
      %v1053 = vpack.c.b16 %v1038, %v1037
      %v1054 = vpack.c.b16 %v1040, %v1039
      %v1055 = vpack.c.b16 %v1042, %v1041
      %v1056 = vpack.c.b16 %v1044, %v1043
      %v1057 = vpack.c.b16 %v1046, %v1045
      %v1058 = vpack.c.b16 %v1048, %v1047
      %v1059 = vpack.c.b16 %v1050, %v1049
      %v1060 = vpack.c.b16 %v1052, %v1051
      %1069 = vmatprep.subr.bf16.mxu0 0
      %1070 = vmatpush1.bf16.msra.mxu0 %v1053
      %1071 = vmatprep.subr.bf16.mxu0 0
      %1072 = vmatpush1.bf16.msra.mxu0 %v1054
      %1073 = vmatprep.subr.bf16.mxu0 0
      %1074 = vmatpush1.bf16.msra.mxu0 %v1055
      %1075 = vmatprep.subr.bf16.mxu0 0
      %1076 = vmatpush1.bf16.msra.mxu0 %v1056
      %1077 = vmatprep.subr.bf16.mxu0 0
      %1078 = vmatpush1.bf16.msra.mxu0 %v1057
      %1079 = vmatprep.subr.bf16.mxu0 0
      %1080 = vmatpush1.bf16.msra.mxu0 %v1058
      %1081 = vmatprep.subr.bf16.mxu0 0
      %1082 = vmatpush1.bf16.msra.mxu0 %v1059
      %1083 = vmatprep.subr.bf16.mxu0 0
      %1084 = vmatpush1.bf16.msra.mxu0 %v1060
      %1085 = vmatprep.subr.bf16.mxu0 0
      %1086 = vmatpush1.bf16.msra.mxu0 0
      %1087 = vmatprep.subr.bf16.mxu0 0
      %1088 = vmatpush1.bf16.msra.mxu0 0
      %1089 = vmatprep.subr.bf16.mxu0 0
      %1090 = vmatpush1.bf16.msra.mxu0 0
      %1091 = vmatprep.subr.bf16.mxu0 0
      %1092 = vmatpush1.bf16.msra.mxu0 0
      %1093 = vmatprep.subr.bf16.mxu0 0
      %1094 = vmatpush1.bf16.msra.mxu0 0
      %1095 = vmatprep.subr.bf16.mxu0 0
      %1096 = vmatpush1.bf16.msra.mxu0 0
      %1097 = vmatprep.subr.bf16.mxu0 0
      %1098 = vmatpush1.bf16.msra.mxu0 0
      %1099 = vmatprep.subr.bf16.mxu0 0
      %1100 = vmatpush1.bf16.msra.mxu0 0
      %1101 = vmatprep.mubr.bf16.mxu0 0
      %1102 = vmatmul.mubr.bf16.gmra.mrb[0].mxu0 %v1013
      %v1103 = vpop.f32.mrb[0].mxu0
      %v1104 = vadd.f32 0.0, %v1103
      %v1105 = vpop.f32.mrb[0].mxu0
      %v1106 = vpop.f32.mrb[0].mxu0
      %v1107 = vadd.f32 0.0, %v1106
      %v1108 = vpop.f32.mrb[0].mxu0
      %1109 = vmatprep.mubr.bf16.mxu0 0
      %1110 = vmatmul.mubr.bf16.gmra.mrb[0].mxu0 %v1014
      %v1111 = vpop.f32.mrb[0].mxu0
      %v1112 = vadd.f32 0.0, %v1111
      %v1113 = vpop.f32.mrb[0].mxu0
      %v1114 = vpop.f32.mrb[0].mxu0
      %v1115 = vadd.f32 0.0, %v1114
      %v1116 = vpop.f32.mrb[0].mxu0
      %1117 = vmatprep.mubr.bf16.mxu0 0
      %1118 = vmatmul.mubr.bf16.gmra.mrb[0].mxu0 %v1015
      %v1119 = vpop.f32.mrb[0].mxu0
      %v1120 = vadd.f32 0.0, %v1119
      %v1121 = vpop.f32.mrb[0].mxu0
      %v1122 = vpop.f32.mrb[0].mxu0
      %v1123 = vadd.f32 0.0, %v1122
      %v1124 = vpop.f32.mrb[0].mxu0
      %1125 = vmatprep.mubr.bf16.mxu0 0
      %1126 = vmatmul.mubr.bf16.gmra.mrb[0].mxu0 %v1016
      %v1127 = vpop.f32.mrb[0].mxu0
      %v1128 = vadd.f32 0.0, %v1127
      %v1129 = vpop.f32.mrb[0].mxu0
      %v1130 = vpop.f32.mrb[0].mxu0
      %v1131 = vadd.f32 0.0, %v1130
      %v1132 = vpop.f32.mrb[0].mxu0
      %1133 = vdwg.mxu0
      %v1134 = vld [vmem:[#allocation2] sm:$0xff]
      %v1135 = vld [vmem:[#allocation2 + $0x8] sm:$0xff]
      %v1136 = vld [vmem:[#allocation2 + $0x10] sm:$0xff]
      %v1137 = vld [vmem:[#allocation2 + $0x18] sm:$0xff]
      %v1138 = vld [vmem:[#allocation2 + $0x20] sm:$0xff]
      %v1139 = vld [vmem:[#allocation2 + $0x28] sm:$0xff]
      %v1140 = vld [vmem:[#allocation2 + $0x30] sm:$0xff]
      %v1141 = vld [vmem:[#allocation2 + $0x38] sm:$0xff]
      %v1142 = vadd.f32 %v1134, %v1104
      %v1143 = vadd.f32 %v1135, %v1107
      %v1144 = vadd.f32 %v1136, %v1112
      %v1145 = vadd.f32 %v1137, %v1115
      %v1146 = vadd.f32 %v1138, %v1120
      %v1147 = vadd.f32 %v1139, %v1123
      %v1148 = vadd.f32 %v1140, %v1128
      %v1149 = vadd.f32 %v1141, %v1131
      %1150 = vst [vmem:[#allocation2] sm:$0xff] %v1142
      %1151 = vst [vmem:[#allocation2 + $0x8] sm:$0xff] %v1143
      %1152 = vst [vmem:[#allocation2 + $0x10] sm:$0xff] %v1144
      %1153 = vst [vmem:[#allocation2 + $0x18] sm:$0xff] %v1145
      %1154 = vst [vmem:[#allocation2 + $0x20] sm:$0xff] %v1146
      %1155 = vst [vmem:[#allocation2 + $0x28] sm:$0xff] %v1147
      %1156 = vst [vmem:[#allocation2 + $0x30] sm:$0xff] %v1148
      %1157 = vst [vmem:[#allocation2 + $0x38] sm:$0xff] %v1149
      %v1158 = vld [vmem:[%s971] sm:$0xf]
      %v1159 = vld [vmem:[%s971 + $0x4] sm:$0x1]
      %v1160 = vld [vmem:[%s971 + $0x8] sm:$0xf]
      %v1161 = vld [vmem:[%s971 + $0xc] sm:$0x1]
      %v1162 = vld [vmem:[%s971 + $0x10] sm:$0xf]
      %v1163 = vld [vmem:[%s971 + $0x14] sm:$0x1]
      %v1164 = vld [vmem:[%s971 + $0x18] sm:$0xf]
      %v1165 = vld [vmem:[%s971 + $0x1c] sm:$0x1]
      %v1166 = vld [vmem:[%s971 + $0x20] sm:$0xf]
      %v1167 = vld [vmem:[%s971 + $0x24] sm:$0x1]
      %v1168 = vld [vmem:[%s971 + $0x28] sm:$0xf]
      %v1169 = vld [vmem:[%s971 + $0x2c] sm:$0x1]
      %v1170 = vld [vmem:[%s971 + $0x30] sm:$0xf]
      %v1171 = vld [vmem:[%s971 + $0x34] sm:$0x1]
      %v1172 = vld [vmem:[%s971 + $0x38] sm:$0xf]
      %v1173 = vld [vmem:[%s971 + $0x3c] sm:$0x1]
      %v1175 = vshrl.u32 %v1158, 16
      %v1177 = vrot.slane %v1175, 4
      %v1178 = vshll.u32 %v1158, 16
      %v1180 = vrot.slane %v1178, 5
      %v1181 = vor.u32 %v1177, %v1180
      %v1182 = vrot.slane %v1181, 4
      %v1184 = vshll.u32 %v1159, 16
      %v1186 = vrot.slane %v1184, 5
      %v1187 = vsel %vm451, %v1182, %v1186
      %v1189 = vshrl.u32 %v1160, 16
      %v1191 = vrot.slane %v1189, 4
      %v1192 = vshll.u32 %v1160, 16
      %v1194 = vrot.slane %v1192, 5
      %v1195 = vor.u32 %v1191, %v1194
      %v1196 = vrot.slane %v1195, 4
      %v1198 = vshll.u32 %v1161, 16
      %v1200 = vrot.slane %v1198, 5
      %v1201 = vsel %vm451, %v1196, %v1200
      %v1203 = vshrl.u32 %v1162, 16
      %v1205 = vrot.slane %v1203, 4
      %v1206 = vshll.u32 %v1162, 16
      %v1208 = vrot.slane %v1206, 5
      %v1209 = vor.u32 %v1205, %v1208
      %v1210 = vrot.slane %v1209, 4
      %v1212 = vshll.u32 %v1163, 16
      %v1214 = vrot.slane %v1212, 5
      %v1215 = vsel %vm451, %v1210, %v1214
      %v1217 = vshrl.u32 %v1164, 16
      %v1219 = vrot.slane %v1217, 4
      %v1220 = vshll.u32 %v1164, 16
      %v1222 = vrot.slane %v1220, 5
      %v1223 = vor.u32 %v1219, %v1222
      %v1224 = vrot.slane %v1223, 4
      %v1226 = vshll.u32 %v1165, 16
      %v1228 = vrot.slane %v1226, 5
      %v1229 = vsel %vm451, %v1224, %v1228
      %v1231 = vshrl.u32 %v1166, 16
      %v1233 = vrot.slane %v1231, 4
      %v1234 = vshll.u32 %v1166, 16
      %v1236 = vrot.slane %v1234, 5
      %v1237 = vor.u32 %v1233, %v1236
      %v1238 = vrot.slane %v1237, 4
      %v1240 = vshll.u32 %v1167, 16
      %v1242 = vrot.slane %v1240, 5
      %v1243 = vsel %vm451, %v1238, %v1242
      %v1245 = vshrl.u32 %v1168, 16
      %v1247 = vrot.slane %v1245, 4
      %v1248 = vshll.u32 %v1168, 16
      %v1250 = vrot.slane %v1248, 5
      %v1251 = vor.u32 %v1247, %v1250
      %v1252 = vrot.slane %v1251, 4
      %v1254 = vshll.u32 %v1169, 16
      %v1256 = vrot.slane %v1254, 5
      %v1257 = vsel %vm451, %v1252, %v1256
      %v1259 = vshrl.u32 %v1170, 16
      %v1261 = vrot.slane %v1259, 4
      %v1262 = vshll.u32 %v1170, 16
      %v1264 = vrot.slane %v1262, 5
      %v1265 = vor.u32 %v1261, %v1264
      %v1266 = vrot.slane %v1265, 4
      %v1268 = vshll.u32 %v1171, 16
      %v1270 = vrot.slane %v1268, 5
      %v1271 = vsel %vm451, %v1266, %v1270
      %v1273 = vshrl.u32 %v1172, 16
      %v1275 = vrot.slane %v1273, 4
      %v1276 = vshll.u32 %v1172, 16
      %v1278 = vrot.slane %v1276, 5
      %v1279 = vor.u32 %v1275, %v1278
      %v1280 = vrot.slane %v1279, 4
      %v1282 = vshll.u32 %v1173, 16
      %v1284 = vrot.slane %v1282, 5
      %v1285 = vsel %vm451, %v1280, %v1284
      %s1286 = scalar_lea.vmem %s248, 256
      %v1287 = vld [vmem:[%s1286] sm:$0xf]
      %v1288 = vld [vmem:[%s1286 + $0x4] sm:$0xf]
      %v1289 = vld [vmem:[%s1286 + $0x8] sm:$0xf]
      %v1290 = vld [vmem:[%s1286 + $0xc] sm:$0xf]
      %v1291 = vld [vmem:[%s1286 + $0x10] sm:$0xf]
      %v1292 = vld [vmem:[%s1286 + $0x14] sm:$0xf]
      %v1293 = vld [vmem:[%s1286 + $0x18] sm:$0xf]
      %v1294 = vld [vmem:[%s1286 + $0x1c] sm:$0xf]
      %v1295 = vld [vmem:[%s1286 + $0x20] sm:$0xf]
      %v1296 = vld [vmem:[%s1286 + $0x24] sm:$0xf]
      %v1297 = vld [vmem:[%s1286 + $0x28] sm:$0xf]
      %v1298 = vld [vmem:[%s1286 + $0x2c] sm:$0xf]
      %v1299 = vld [vmem:[%s1286 + $0x30] sm:$0xf]
      %v1300 = vld [vmem:[%s1286 + $0x34] sm:$0xf]
      %v1301 = vld [vmem:[%s1286 + $0x38] sm:$0xf]
      %v1302 = vld [vmem:[%s1286 + $0x3c] sm:$0xf]
      %v1303 = vunpack.c.l.b16 %v1187
      %v1304 = vunpack.c.l.b16 %v1201
      %v1305 = vunpack.c.l.b16 %v1215
      %v1306 = vunpack.c.l.b16 %v1229
      %v1307 = vunpack.c.l.b16 %v1243
      %v1308 = vunpack.c.l.b16 %v1257
      %v1309 = vunpack.c.l.b16 %v1271
      %v1310 = vunpack.c.l.b16 %v1285
      %v1311 = vpack.c.b16 %v1304, %v1303
      %v1312 = vpack.c.b16 %v1306, %v1305
      %v1313 = vpack.c.b16 %v1308, %v1307
      %v1314 = vpack.c.b16 %v1310, %v1309
      %v1335 = vunpack.c.l.b16 %v1287
      %v1336 = vunpack.c.l.b16 %v1288
      %v1337 = vunpack.c.l.b16 %v1289
      %v1338 = vunpack.c.l.b16 %v1290
      %v1339 = vunpack.c.l.b16 %v1291
      %v1340 = vunpack.c.l.b16 %v1292
      %v1341 = vunpack.c.l.b16 %v1293
      %v1342 = vunpack.c.l.b16 %v1294
      %v1343 = vunpack.c.l.b16 %v1295
      %v1344 = vunpack.c.l.b16 %v1296
      %v1345 = vunpack.c.l.b16 %v1297
      %v1346 = vunpack.c.l.b16 %v1298
      %v1347 = vunpack.c.l.b16 %v1299
      %v1348 = vunpack.c.l.b16 %v1300
      %v1349 = vunpack.c.l.b16 %v1301
      %v1350 = vunpack.c.l.b16 %v1302
      %v1351 = vpack.c.b16 %v1336, %v1335
      %v1352 = vpack.c.b16 %v1338, %v1337
      %v1353 = vpack.c.b16 %v1340, %v1339
      %v1354 = vpack.c.b16 %v1342, %v1341
      %v1355 = vpack.c.b16 %v1344, %v1343
      %v1356 = vpack.c.b16 %v1346, %v1345
      %v1357 = vpack.c.b16 %v1348, %v1347
      %v1358 = vpack.c.b16 %v1350, %v1349
      %1367 = vmatprep.subr.bf16.mxu0 0
      %1368 = vmatpush1.bf16.msra.mxu0 %v1351
      %1369 = vmatprep.subr.bf16.mxu0 0
      %1370 = vmatpush1.bf16.msra.mxu0 %v1352
      %1371 = vmatprep.subr.bf16.mxu0 0
      %1372 = vmatpush1.bf16.msra.mxu0 %v1353
      %1373 = vmatprep.subr.bf16.mxu0 0
      %1374 = vmatpush1.bf16.msra.mxu0 %v1354
      %1375 = vmatprep.subr.bf16.mxu0 0
      %1376 = vmatpush1.bf16.msra.mxu0 %v1355
      %1377 = vmatprep.subr.bf16.mxu0 0
      %1378 = vmatpush1.bf16.msra.mxu0 %v1356
      %1379 = vmatprep.subr.bf16.mxu0 0
      %1380 = vmatpush1.bf16.msra.mxu0 %v1357
      %1381 = vmatprep.subr.bf16.mxu0 0
      %1382 = vmatpush1.bf16.msra.mxu0 %v1358
      %1383 = vmatprep.subr.bf16.mxu0 0
      %1384 = vmatpush1.bf16.msra.mxu0 0
      %1385 = vmatprep.subr.bf16.mxu0 0
      %1386 = vmatpush1.bf16.msra.mxu0 0
      %1387 = vmatprep.subr.bf16.mxu0 0
      %1388 = vmatpush1.bf16.msra.mxu0 0
      %1389 = vmatprep.subr.bf16.mxu0 0
      %1390 = vmatpush1.bf16.msra.mxu0 0
      %1391 = vmatprep.subr.bf16.mxu0 0
      %1392 = vmatpush1.bf16.msra.mxu0 0
      %1393 = vmatprep.subr.bf16.mxu0 0
      %1394 = vmatpush1.bf16.msra.mxu0 0
      %1395 = vmatprep.subr.bf16.mxu0 0
      %1396 = vmatpush1.bf16.msra.mxu0 0
      %1397 = vmatprep.subr.bf16.mxu0 0
      %1398 = vmatpush1.bf16.msra.mxu0 0
      %1399 = vmatprep.mubr.bf16.mxu0 0
      %1400 = vmatmul.mubr.bf16.gmra.mrb[0].mxu0 %v1311
      %v1401 = vpop.f32.mrb[0].mxu0
      %v1402 = vadd.f32 0.0, %v1401
      %v1403 = vpop.f32.mrb[0].mxu0
      %v1404 = vpop.f32.mrb[0].mxu0
      %v1405 = vadd.f32 0.0, %v1404
      %v1406 = vpop.f32.mrb[0].mxu0
      %1407 = vmatprep.mubr.bf16.mxu0 0
      %1408 = vmatmul.mubr.bf16.gmra.mrb[0].mxu0 %v1312
      %v1409 = vpop.f32.mrb[0].mxu0
      %v1410 = vadd.f32 0.0, %v1409
      %v1411 = vpop.f32.mrb[0].mxu0
      %v1412 = vpop.f32.mrb[0].mxu0
      %v1413 = vadd.f32 0.0, %v1412
      %v1414 = vpop.f32.mrb[0].mxu0
      %1415 = vmatprep.mubr.bf16.mxu0 0
      %1416 = vmatmul.mubr.bf16.gmra.mrb[0].mxu0 %v1313
      %v1417 = vpop.f32.mrb[0].mxu0
      %v1418 = vadd.f32 0.0, %v1417
      %v1419 = vpop.f32.mrb[0].mxu0
      %v1420 = vpop.f32.mrb[0].mxu0
      %v1421 = vadd.f32 0.0, %v1420
      %v1422 = vpop.f32.mrb[0].mxu0
      %1423 = vmatprep.mubr.bf16.mxu0 0
      %1424 = vmatmul.mubr.bf16.gmra.mrb[0].mxu0 %v1314
      %v1425 = vpop.f32.mrb[0].mxu0
      %v1426 = vadd.f32 0.0, %v1425
      %v1427 = vpop.f32.mrb[0].mxu0
      %v1428 = vpop.f32.mrb[0].mxu0
      %v1429 = vadd.f32 0.0, %v1428
      %v1430 = vpop.f32.mrb[0].mxu0
      %1431 = vdwg.mxu0
      %v1432 = vld [vmem:[#allocation2] sm:$0xff]
      %v1433 = vld [vmem:[#allocation2 + $0x8] sm:$0xff]
      %v1434 = vld [vmem:[#allocation2 + $0x10] sm:$0xff]
      %v1435 = vld [vmem:[#allocation2 + $0x18] sm:$0xff]
      %v1436 = vld [vmem:[#allocation2 + $0x20] sm:$0xff]
      %v1437 = vld [vmem:[#allocation2 + $0x28] sm:$0xff]
      %v1438 = vld [vmem:[#allocation2 + $0x30] sm:$0xff]
      %v1439 = vld [vmem:[#allocation2 + $0x38] sm:$0xff]
      %v1440 = vadd.f32 %v1432, %v1402
      %v1441 = vadd.f32 %v1433, %v1405
      %v1442 = vadd.f32 %v1434, %v1410
      %v1443 = vadd.f32 %v1435, %v1413
      %v1444 = vadd.f32 %v1436, %v1418
      %v1445 = vadd.f32 %v1437, %v1421
      %v1446 = vadd.f32 %v1438, %v1426
      %v1447 = vadd.f32 %v1439, %v1429
      %1448 = vst [vmem:[#allocation2] sm:$0xff] %v1440
      %1449 = vst [vmem:[#allocation2 + $0x8] sm:$0xff] %v1441
      %1450 = vst [vmem:[#allocation2 + $0x10] sm:$0xff] %v1442
      %1451 = vst [vmem:[#allocation2 + $0x18] sm:$0xff] %v1443
      %1452 = vst [vmem:[#allocation2 + $0x20] sm:$0xff] %v1444
      %1453 = vst [vmem:[#allocation2 + $0x28] sm:$0xff] %v1445
      %1454 = vst [vmem:[#allocation2 + $0x30] sm:$0xff] %v1446
      %1455 = vst [vmem:[#allocation2 + $0x38] sm:$0xff] %v1447
      %v1456 = vld [vmem:[%s971] sm:$0xe]
      %v1457 = vld [vmem:[%s971 + $0x4] sm:$0x1]
      %v1458 = vld [vmem:[%s971 + $0x8] sm:$0xe]
      %v1459 = vld [vmem:[%s971 + $0xc] sm:$0x1]
      %v1460 = vld [vmem:[%s971 + $0x10] sm:$0xe]
      %v1461 = vld [vmem:[%s971 + $0x14] sm:$0x1]
      %v1462 = vld [vmem:[%s971 + $0x18] sm:$0xe]
      %v1463 = vld [vmem:[%s971 + $0x1c] sm:$0x1]
      %v1464 = vld [vmem:[%s971 + $0x20] sm:$0xe]
      %v1465 = vld [vmem:[%s971 + $0x24] sm:$0x1]
      %v1466 = vld [vmem:[%s971 + $0x28] sm:$0xe]
      %v1467 = vld [vmem:[%s971 + $0x2c] sm:$0x1]
      %v1468 = vld [vmem:[%s971 + $0x30] sm:$0xe]
      %v1469 = vld [vmem:[%s971 + $0x34] sm:$0x1]
      %v1470 = vld [vmem:[%s971 + $0x38] sm:$0xe]
      %v1471 = vld [vmem:[%s971 + $0x3c] sm:$0x1]
      %v1488 = vrot.slane %v1456, 5
      %v1489 = vrot.slane %v1488, 4
      %v1490 = vrot.slane %v1457, 5
      %v1491 = vsel %vm768, %v1489, %v1490
      %v1492 = vrot.slane %v1458, 5
      %v1493 = vrot.slane %v1492, 4
      %v1494 = vrot.slane %v1459, 5
      %v1495 = vsel %vm768, %v1493, %v1494
      %v1496 = vrot.slane %v1460, 5
      %v1497 = vrot.slane %v1496, 4
      %v1498 = vrot.slane %v1461, 5
      %v1499 = vsel %vm768, %v1497, %v1498
      %v1500 = vrot.slane %v1462, 5
      %v1501 = vrot.slane %v1500, 4
      %v1502 = vrot.slane %v1463, 5
      %v1503 = vsel %vm768, %v1501, %v1502
      %v1504 = vrot.slane %v1464, 5
      %v1505 = vrot.slane %v1504, 4
      %v1506 = vrot.slane %v1465, 5
      %v1507 = vsel %vm768, %v1505, %v1506
      %v1508 = vrot.slane %v1466, 5
      %v1509 = vrot.slane %v1508, 4
      %v1510 = vrot.slane %v1467, 5
      %v1511 = vsel %vm768, %v1509, %v1510
      %v1512 = vrot.slane %v1468, 5
      %v1513 = vrot.slane %v1512, 4
      %v1514 = vrot.slane %v1469, 5
      %v1515 = vsel %vm768, %v1513, %v1514
      %v1516 = vrot.slane %v1470, 5
      %v1517 = vrot.slane %v1516, 4
      %v1518 = vrot.slane %v1471, 5
      %v1519 = vsel %vm768, %v1517, %v1518
      %s1520 = scalar_lea.vmem %s248, 320
      %v1521 = vld [vmem:[%s1520] sm:$0xf]
      %v1522 = vld [vmem:[%s1520 + $0x4] sm:$0xf]
      %v1523 = vld [vmem:[%s1520 + $0x8] sm:$0xf]
      %v1524 = vld [vmem:[%s1520 + $0xc] sm:$0xf]
      %v1525 = vld [vmem:[%s1520 + $0x10] sm:$0xf]
      %v1526 = vld [vmem:[%s1520 + $0x14] sm:$0xf]
      %v1527 = vld [vmem:[%s1520 + $0x18] sm:$0xf]
      %v1528 = vld [vmem:[%s1520 + $0x1c] sm:$0xf]
      %v1529 = vld [vmem:[%s1520 + $0x20] sm:$0xf]
      %v1530 = vld [vmem:[%s1520 + $0x24] sm:$0xf]
      %v1531 = vld [vmem:[%s1520 + $0x28] sm:$0xf]
      %v1532 = vld [vmem:[%s1520 + $0x2c] sm:$0xf]
      %v1533 = vld [vmem:[%s1520 + $0x30] sm:$0xf]
      %v1534 = vld [vmem:[%s1520 + $0x34] sm:$0xf]
      %v1535 = vld [vmem:[%s1520 + $0x38] sm:$0xf]
      %v1536 = vld [vmem:[%s1520 + $0x3c] sm:$0xf]
      %v1537 = vunpack.c.l.b16 %v1491
      %v1538 = vunpack.c.l.b16 %v1495
      %v1539 = vunpack.c.l.b16 %v1499
      %v1540 = vunpack.c.l.b16 %v1503
      %v1541 = vunpack.c.l.b16 %v1507
      %v1542 = vunpack.c.l.b16 %v1511
      %v1543 = vunpack.c.l.b16 %v1515
      %v1544 = vunpack.c.l.b16 %v1519
      %v1545 = vpack.c.b16 %v1538, %v1537
      %v1546 = vpack.c.b16 %v1540, %v1539
      %v1547 = vpack.c.b16 %v1542, %v1541
      %v1548 = vpack.c.b16 %v1544, %v1543
      %v1569 = vunpack.c.l.b16 %v1521
      %v1570 = vunpack.c.l.b16 %v1522
      %v1571 = vunpack.c.l.b16 %v1523
      %v1572 = vunpack.c.l.b16 %v1524
      %v1573 = vunpack.c.l.b16 %v1525
      %v1574 = vunpack.c.l.b16 %v1526
      %v1575 = vunpack.c.l.b16 %v1527
      %v1576 = vunpack.c.l.b16 %v1528
      %v1577 = vunpack.c.l.b16 %v1529
      %v1578 = vunpack.c.l.b16 %v1530
      %v1579 = vunpack.c.l.b16 %v1531
      %v1580 = vunpack.c.l.b16 %v1532
      %v1581 = vunpack.c.l.b16 %v1533
      %v1582 = vunpack.c.l.b16 %v1534
      %v1583 = vunpack.c.l.b16 %v1535
      %v1584 = vunpack.c.l.b16 %v1536
      %v1585 = vpack.c.b16 %v1570, %v1569
      %v1586 = vpack.c.b16 %v1572, %v1571
      %v1587 = vpack.c.b16 %v1574, %v1573
      %v1588 = vpack.c.b16 %v1576, %v1575
      %v1589 = vpack.c.b16 %v1578, %v1577
      %v1590 = vpack.c.b16 %v1580, %v1579
      %v1591 = vpack.c.b16 %v1582, %v1581
      %v1592 = vpack.c.b16 %v1584, %v1583
      %1601 = vmatprep.subr.bf16.mxu0 0
      %1602 = vmatpush1.bf16.msra.mxu0 %v1585
      %1603 = vmatprep.subr.bf16.mxu0 0
      %1604 = vmatpush1.bf16.msra.mxu0 %v1586
      %1605 = vmatprep.subr.bf16.mxu0 0
      %1606 = vmatpush1.bf16.msra.mxu0 %v1587
      %1607 = vmatprep.subr.bf16.mxu0 0
      %1608 = vmatpush1.bf16.msra.mxu0 %v1588
      %1609 = vmatprep.subr.bf16.mxu0 0
      %1610 = vmatpush1.bf16.msra.mxu0 %v1589
      %1611 = vmatprep.subr.bf16.mxu0 0
      %1612 = vmatpush1.bf16.msra.mxu0 %v1590
      %1613 = vmatprep.subr.bf16.mxu0 0
      %1614 = vmatpush1.bf16.msra.mxu0 %v1591
      %1615 = vmatprep.subr.bf16.mxu0 0
      %1616 = vmatpush1.bf16.msra.mxu0 %v1592
      %1617 = vmatprep.subr.bf16.mxu0 0
      %1618 = vmatpush1.bf16.msra.mxu0 0
      %1619 = vmatprep.subr.bf16.mxu0 0
      %1620 = vmatpush1.bf16.msra.mxu0 0
      %1621 = vmatprep.subr.bf16.mxu0 0
      %1622 = vmatpush1.bf16.msra.mxu0 0
      %1623 = vmatprep.subr.bf16.mxu0 0
      %1624 = vmatpush1.bf16.msra.mxu0 0
      %1625 = vmatprep.subr.bf16.mxu0 0
      %1626 = vmatpush1.bf16.msra.mxu0 0
      %1627 = vmatprep.subr.bf16.mxu0 0
      %1628 = vmatpush1.bf16.msra.mxu0 0
      %1629 = vmatprep.subr.bf16.mxu0 0
      %1630 = vmatpush1.bf16.msra.mxu0 0
      %1631 = vmatprep.subr.bf16.mxu0 0
      %1632 = vmatpush1.bf16.msra.mxu0 0
      %1633 = vmatprep.mubr.bf16.mxu0 0
      %1634 = vmatmul.mubr.bf16.gmra.mrb[0].mxu0 %v1545
      %v1635 = vpop.f32.mrb[0].mxu0
      %v1636 = vadd.f32 0.0, %v1635
      %v1637 = vpop.f32.mrb[0].mxu0
      %v1638 = vpop.f32.mrb[0].mxu0
      %v1639 = vadd.f32 0.0, %v1638
      %v1640 = vpop.f32.mrb[0].mxu0
      %1641 = vmatprep.mubr.bf16.mxu0 0
      %1642 = vmatmul.mubr.bf16.gmra.mrb[0].mxu0 %v1546
      %v1643 = vpop.f32.mrb[0].mxu0
      %v1644 = vadd.f32 0.0, %v1643
      %v1645 = vpop.f32.mrb[0].mxu0
      %v1646 = vpop.f32.mrb[0].mxu0
      %v1647 = vadd.f32 0.0, %v1646
      %v1648 = vpop.f32.mrb[0].mxu0
      %1649 = vmatprep.mubr.bf16.mxu0 0
      %1650 = vmatmul.mubr.bf16.gmra.mrb[0].mxu0 %v1547
      %v1651 = vpop.f32.mrb[0].mxu0
      %v1652 = vadd.f32 0.0, %v1651
      %v1653 = vpop.f32.mrb[0].mxu0
      %v1654 = vpop.f32.mrb[0].mxu0
      %v1655 = vadd.f32 0.0, %v1654
      %v1656 = vpop.f32.mrb[0].mxu0
      %1657 = vmatprep.mubr.bf16.mxu0 0
      %1658 = vmatmul.mubr.bf16.gmra.mrb[0].mxu0 %v1548
      %v1659 = vpop.f32.mrb[0].mxu0
      %v1660 = vadd.f32 0.0, %v1659
      %v1661 = vpop.f32.mrb[0].mxu0
      %v1662 = vpop.f32.mrb[0].mxu0
      %v1663 = vadd.f32 0.0, %v1662
      %v1664 = vpop.f32.mrb[0].mxu0
      %1665 = vdwg.mxu0
      %v1666 = vld [vmem:[#allocation2] sm:$0xff]
      %v1667 = vld [vmem:[#allocation2 + $0x8] sm:$0xff]
      %v1668 = vld [vmem:[#allocation2 + $0x10] sm:$0xff]
      %v1669 = vld [vmem:[#allocation2 + $0x18] sm:$0xff]
      %v1670 = vld [vmem:[#allocation2 + $0x20] sm:$0xff]
      %v1671 = vld [vmem:[#allocation2 + $0x28] sm:$0xff]
      %v1672 = vld [vmem:[#allocation2 + $0x30] sm:$0xff]
      %v1673 = vld [vmem:[#allocation2 + $0x38] sm:$0xff]
      %v1674 = vadd.f32 %v1666, %v1636
      %v1675 = vadd.f32 %v1667, %v1639
      %v1676 = vadd.f32 %v1668, %v1644
      %v1677 = vadd.f32 %v1669, %v1647
      %v1678 = vadd.f32 %v1670, %v1652
      %v1679 = vadd.f32 %v1671, %v1655
      %v1680 = vadd.f32 %v1672, %v1660
      %v1681 = vadd.f32 %v1673, %v1663
      %1682 = vst [vmem:[#allocation2] sm:$0xff] %v1674
      %1683 = vst [vmem:[#allocation2 + $0x8] sm:$0xff] %v1675
      %1684 = vst [vmem:[#allocation2 + $0x10] sm:$0xff] %v1676
      %1685 = vst [vmem:[#allocation2 + $0x18] sm:$0xff] %v1677
      %1686 = vst [vmem:[#allocation2 + $0x20] sm:$0xff] %v1678
      %1687 = vst [vmem:[#allocation2 + $0x28] sm:$0xff] %v1679
      %1688 = vst [vmem:[#allocation2 + $0x30] sm:$0xff] %v1680
      %1689 = vst [vmem:[#allocation2 + $0x38] sm:$0xff] %v1681
      %s1690 = scalar_lea.vmem %s244, 16
      %v1691 = vld [vmem:[%s1690] sm:$0xf]
      %v1692 = vld [vmem:[%s1690 + $0x8] sm:$0xf]
      %v1693 = vld [vmem:[%s1690 + $0x10] sm:$0xf]
      %v1694 = vld [vmem:[%s1690 + $0x18] sm:$0xf]
      %v1695 = vld [vmem:[%s1690 + $0x20] sm:$0xf]
      %v1696 = vld [vmem:[%s1690 + $0x28] sm:$0xf]
      %v1697 = vld [vmem:[%s1690 + $0x30] sm:$0xf]
      %v1698 = vld [vmem:[%s1690 + $0x38] sm:$0xf]
      %s1699 = scalar_lea.vmem %s248, 384
      %v1700 = vld [vmem:[%s1699] sm:$0xf]
      %v1701 = vld [vmem:[%s1699 + $0x4] sm:$0xf]
      %v1702 = vld [vmem:[%s1699 + $0x8] sm:$0xf]
      %v1703 = vld [vmem:[%s1699 + $0xc] sm:$0xf]
      %v1704 = vld [vmem:[%s1699 + $0x10] sm:$0xf]
      %v1705 = vld [vmem:[%s1699 + $0x14] sm:$0xf]
      %v1706 = vld [vmem:[%s1699 + $0x18] sm:$0xf]
      %v1707 = vld [vmem:[%s1699 + $0x1c] sm:$0xf]
      %v1708 = vld [vmem:[%s1699 + $0x20] sm:$0xf]
      %v1709 = vld [vmem:[%s1699 + $0x24] sm:$0xf]
      %v1710 = vld [vmem:[%s1699 + $0x28] sm:$0xf]
      %v1711 = vld [vmem:[%s1699 + $0x2c] sm:$0xf]
      %v1712 = vld [vmem:[%s1699 + $0x30] sm:$0xf]
      %v1713 = vld [vmem:[%s1699 + $0x34] sm:$0xf]
      %v1714 = vld [vmem:[%s1699 + $0x38] sm:$0xf]
      %v1715 = vld [vmem:[%s1699 + $0x3c] sm:$0xf]
      %v1724 = vunpack.c.l.b16 %v1691
      %v1725 = vunpack.c.l.b16 %v1692
      %v1726 = vunpack.c.l.b16 %v1693
      %v1727 = vunpack.c.l.b16 %v1694
      %v1728 = vunpack.c.l.b16 %v1695
      %v1729 = vunpack.c.l.b16 %v1696
      %v1730 = vunpack.c.l.b16 %v1697
      %v1731 = vunpack.c.l.b16 %v1698
      %v1732 = vpack.c.b16 %v1725, %v1724
      %v1733 = vpack.c.b16 %v1727, %v1726
      %v1734 = vpack.c.b16 %v1729, %v1728
      %v1735 = vpack.c.b16 %v1731, %v1730
      %v1756 = vunpack.c.l.b16 %v1700
      %v1757 = vunpack.c.l.b16 %v1701
      %v1758 = vunpack.c.l.b16 %v1702
      %v1759 = vunpack.c.l.b16 %v1703
      %v1760 = vunpack.c.l.b16 %v1704
      %v1761 = vunpack.c.l.b16 %v1705
      %v1762 = vunpack.c.l.b16 %v1706
      %v1763 = vunpack.c.l.b16 %v1707
      %v1764 = vunpack.c.l.b16 %v1708
      %v1765 = vunpack.c.l.b16 %v1709
      %v1766 = vunpack.c.l.b16 %v1710
      %v1767 = vunpack.c.l.b16 %v1711
      %v1768 = vunpack.c.l.b16 %v1712
      %v1769 = vunpack.c.l.b16 %v1713
      %v1770 = vunpack.c.l.b16 %v1714
      %v1771 = vunpack.c.l.b16 %v1715
      %v1772 = vpack.c.b16 %v1757, %v1756
      %v1773 = vpack.c.b16 %v1759, %v1758
      %v1774 = vpack.c.b16 %v1761, %v1760
      %v1775 = vpack.c.b16 %v1763, %v1762
      %v1776 = vpack.c.b16 %v1765, %v1764
      %v1777 = vpack.c.b16 %v1767, %v1766
      %v1778 = vpack.c.b16 %v1769, %v1768
      %v1779 = vpack.c.b16 %v1771, %v1770
      %1788 = vmatprep.subr.bf16.mxu0 0
      %1789 = vmatpush1.bf16.msra.mxu0 %v1772
      %1790 = vmatprep.subr.bf16.mxu0 0
      %1791 = vmatpush1.bf16.msra.mxu0 %v1773
      %1792 = vmatprep.subr.bf16.mxu0 0
      %1793 = vmatpush1.bf16.msra.mxu0 %v1774
      %1794 = vmatprep.subr.bf16.mxu0 0
      %1795 = vmatpush1.bf16.msra.mxu0 %v1775
      %1796 = vmatprep.subr.bf16.mxu0 0
      %1797 = vmatpush1.bf16.msra.mxu0 %v1776
      %1798 = vmatprep.subr.bf16.mxu0 0
      %1799 = vmatpush1.bf16.msra.mxu0 %v1777
      %1800 = vmatprep.subr.bf16.mxu0 0
      %1801 = vmatpush1.bf16.msra.mxu0 %v1778
      %1802 = vmatprep.subr.bf16.mxu0 0
      %1803 = vmatpush1.bf16.msra.mxu0 %v1779
      %1804 = vmatprep.subr.bf16.mxu0 0
      %1805 = vmatpush1.bf16.msra.mxu0 0
      %1806 = vmatprep.subr.bf16.mxu0 0
      %1807 = vmatpush1.bf16.msra.mxu0 0
      %1808 = vmatprep.subr.bf16.mxu0 0
      %1809 = vmatpush1.bf16.msra.mxu0 0
      %1810 = vmatprep.subr.bf16.mxu0 0
      %1811 = vmatpush1.bf16.msra.mxu0 0
      %1812 = vmatprep.subr.bf16.mxu0 0
      %1813 = vmatpush1.bf16.msra.mxu0 0
      %1814 = vmatprep.subr.bf16.mxu0 0
      %1815 = vmatpush1.bf16.msra.mxu0 0
      %1816 = vmatprep.subr.bf16.mxu0 0
      %1817 = vmatpush1.bf16.msra.mxu0 0
      %1818 = vmatprep.subr.bf16.mxu0 0
      %1819 = vmatpush1.bf16.msra.mxu0 0
      %1820 = vmatprep.mubr.bf16.mxu0 0
      %1821 = vmatmul.mubr.bf16.gmra.mrb[0].mxu0 %v1732
      %v1822 = vpop.f32.mrb[0].mxu0
      %v1823 = vadd.f32 0.0, %v1822
      %v1824 = vpop.f32.mrb[0].mxu0
      %v1825 = vpop.f32.mrb[0].mxu0
      %v1826 = vadd.f32 0.0, %v1825
      %v1827 = vpop.f32.mrb[0].mxu0
      %1828 = vmatprep.mubr.bf16.mxu0 0
      %1829 = vmatmul.mubr.bf16.gmra.mrb[0].mxu0 %v1733
      %v1830 = vpop.f32.mrb[0].mxu0
      %v1831 = vadd.f32 0.0, %v1830
      %v1832 = vpop.f32.mrb[0].mxu0
      %v1833 = vpop.f32.mrb[0].mxu0
      %v1834 = vadd.f32 0.0, %v1833
      %v1835 = vpop.f32.mrb[0].mxu0
      %1836 = vmatprep.mubr.bf16.mxu0 0
      %1837 = vmatmul.mubr.bf16.gmra.mrb[0].mxu0 %v1734
      %v1838 = vpop.f32.mrb[0].mxu0
      %v1839 = vadd.f32 0.0, %v1838
      %v1840 = vpop.f32.mrb[0].mxu0
      %v1841 = vpop.f32.mrb[0].mxu0
      %v1842 = vadd.f32 0.0, %v1841
      %v1843 = vpop.f32.mrb[0].mxu0
      %1844 = vmatprep.mubr.bf16.mxu0 0
      %1845 = vmatmul.mubr.bf16.gmra.mrb[0].mxu0 %v1735
      %v1846 = vpop.f32.mrb[0].mxu0
      %v1847 = vadd.f32 0.0, %v1846
      %v1848 = vpop.f32.mrb[0].mxu0
      %v1849 = vpop.f32.mrb[0].mxu0
      %v1850 = vadd.f32 0.0, %v1849
      %v1851 = vpop.f32.mrb[0].mxu0
      %1852 = vdwg.mxu0
      %v1853 = vld [vmem:[#allocation2] sm:$0xff]
      %v1854 = vld [vmem:[#allocation2 + $0x8] sm:$0xff]
      %v1855 = vld [vmem:[#allocation2 + $0x10] sm:$0xff]
      %v1856 = vld [vmem:[#allocation2 + $0x18] sm:$0xff]
      %v1857 = vld [vmem:[#allocation2 + $0x20] sm:$0xff]
      %v1858 = vld [vmem:[#allocation2 + $0x28] sm:$0xff]
      %v1859 = vld [vmem:[#allocation2 + $0x30] sm:$0xff]
      %v1860 = vld [vmem:[#allocation2 + $0x38] sm:$0xff]
      %v1861 = vadd.f32 %v1853, %v1823
      %v1862 = vadd.f32 %v1854, %v1826
      %v1863 = vadd.f32 %v1855, %v1831
      %v1864 = vadd.f32 %v1856, %v1834
      %v1865 = vadd.f32 %v1857, %v1839
      %v1866 = vadd.f32 %v1858, %v1842
      %v1867 = vadd.f32 %v1859, %v1847
      %v1868 = vadd.f32 %v1860, %v1850
      %1869 = vst [vmem:[#allocation2] sm:$0xff] %v1861
      %1870 = vst [vmem:[#allocation2 + $0x8] sm:$0xff] %v1862
      %1871 = vst [vmem:[#allocation2 + $0x10] sm:$0xff] %v1863
      %1872 = vst [vmem:[#allocation2 + $0x18] sm:$0xff] %v1864
      %1873 = vst [vmem:[#allocation2 + $0x20] sm:$0xff] %v1865
      %1874 = vst [vmem:[#allocation2 + $0x28] sm:$0xff] %v1866
      %1875 = vst [vmem:[#allocation2 + $0x30] sm:$0xff] %v1867
      %1876 = vst [vmem:[#allocation2 + $0x38] sm:$0xff] %v1868
      %v1877 = vld [vmem:[%s1690] sm:$0xf]
      %v1878 = vld [vmem:[%s1690 + $0x4] sm:$0x1]
      %v1879 = vld [vmem:[%s1690 + $0x8] sm:$0xf]
      %v1880 = vld [vmem:[%s1690 + $0xc] sm:$0x1]
      %v1881 = vld [vmem:[%s1690 + $0x10] sm:$0xf]
      %v1882 = vld [vmem:[%s1690 + $0x14] sm:$0x1]
      %v1883 = vld [vmem:[%s1690 + $0x18] sm:$0xf]
      %v1884 = vld [vmem:[%s1690 + $0x1c] sm:$0x1]
      %v1885 = vld [vmem:[%s1690 + $0x20] sm:$0xf]
      %v1886 = vld [vmem:[%s1690 + $0x24] sm:$0x1]
      %v1887 = vld [vmem:[%s1690 + $0x28] sm:$0xf]
      %v1888 = vld [vmem:[%s1690 + $0x2c] sm:$0x1]
      %v1889 = vld [vmem:[%s1690 + $0x30] sm:$0xf]
      %v1890 = vld [vmem:[%s1690 + $0x34] sm:$0x1]
      %v1891 = vld [vmem:[%s1690 + $0x38] sm:$0xf]
      %v1892 = vld [vmem:[%s1690 + $0x3c] sm:$0x1]
      %v1894 = vshrl.u32 %v1877, 16
      %v1896 = vrot.slane %v1894, 4
      %v1897 = vshll.u32 %v1877, 16
      %v1899 = vrot.slane %v1897, 5
      %v1900 = vor.u32 %v1896, %v1899
      %v1901 = vrot.slane %v1900, 4
      %v1903 = vshll.u32 %v1878, 16
      %v1905 = vrot.slane %v1903, 5
      %v1906 = vsel %vm451, %v1901, %v1905
      %v1908 = vshrl.u32 %v1879, 16
      %v1910 = vrot.slane %v1908, 4
      %v1911 = vshll.u32 %v1879, 16
      %v1913 = vrot.slane %v1911, 5
      %v1914 = vor.u32 %v1910, %v1913
      %v1915 = vrot.slane %v1914, 4
      %v1917 = vshll.u32 %v1880, 16
      %v1919 = vrot.slane %v1917, 5
      %v1920 = vsel %vm451, %v1915, %v1919
      %v1922 = vshrl.u32 %v1881, 16
      %v1924 = vrot.slane %v1922, 4
      %v1925 = vshll.u32 %v1881, 16
      %v1927 = vrot.slane %v1925, 5
      %v1928 = vor.u32 %v1924, %v1927
      %v1929 = vrot.slane %v1928, 4
      %v1931 = vshll.u32 %v1882, 16
      %v1933 = vrot.slane %v1931, 5
      %v1934 = vsel %vm451, %v1929, %v1933
      %v1936 = vshrl.u32 %v1883, 16
      %v1938 = vrot.slane %v1936, 4
      %v1939 = vshll.u32 %v1883, 16
      %v1941 = vrot.slane %v1939, 5
      %v1942 = vor.u32 %v1938, %v1941
      %v1943 = vrot.slane %v1942, 4
      %v1945 = vshll.u32 %v1884, 16
      %v1947 = vrot.slane %v1945, 5
      %v1948 = vsel %vm451, %v1943, %v1947
      %v1950 = vshrl.u32 %v1885, 16
      %v1952 = vrot.slane %v1950, 4
      %v1953 = vshll.u32 %v1885, 16
      %v1955 = vrot.slane %v1953, 5
      %v1956 = vor.u32 %v1952, %v1955
      %v1957 = vrot.slane %v1956, 4
      %v1959 = vshll.u32 %v1886, 16
      %v1961 = vrot.slane %v1959, 5
      %v1962 = vsel %vm451, %v1957, %v1961
      %v1964 = vshrl.u32 %v1887, 16
      %v1966 = vrot.slane %v1964, 4
      %v1967 = vshll.u32 %v1887, 16
      %v1969 = vrot.slane %v1967, 5
      %v1970 = vor.u32 %v1966, %v1969
      %v1971 = vrot.slane %v1970, 4
      %v1973 = vshll.u32 %v1888, 16
      %v1975 = vrot.slane %v1973, 5
      %v1976 = vsel %vm451, %v1971, %v1975
      %v1978 = vshrl.u32 %v1889, 16
      %v1980 = vrot.slane %v1978, 4
      %v1981 = vshll.u32 %v1889, 16
      %v1983 = vrot.slane %v1981, 5
      %v1984 = vor.u32 %v1980, %v1983
      %v1985 = vrot.slane %v1984, 4
      %v1987 = vshll.u32 %v1890, 16
      %v1989 = vrot.slane %v1987, 5
      %v1990 = vsel %vm451, %v1985, %v1989
      %v1992 = vshrl.u32 %v1891, 16
      %v1994 = vrot.slane %v1992, 4
      %v1995 = vshll.u32 %v1891, 16
      %v1997 = vrot.slane %v1995, 5
      %v1998 = vor.u32 %v1994, %v1997
      %v1999 = vrot.slane %v1998, 4
      %v2001 = vshll.u32 %v1892, 16
      %v2003 = vrot.slane %v2001, 5
      %v2004 = vsel %vm451, %v1999, %v2003
      %s2005 = scalar_lea.vmem %s248, 448
      %v2006 = vld [vmem:[%s2005] sm:$0xf]
      %v2007 = vld [vmem:[%s2005 + $0x4] sm:$0xf]
      %v2008 = vld [vmem:[%s2005 + $0x8] sm:$0xf]
      %v2009 = vld [vmem:[%s2005 + $0xc] sm:$0xf]
      %v2010 = vld [vmem:[%s2005 + $0x10] sm:$0xf]
      %v2011 = vld [vmem:[%s2005 + $0x14] sm:$0xf]
      %v2012 = vld [vmem:[%s2005 + $0x18] sm:$0xf]
      %v2013 = vld [vmem:[%s2005 + $0x1c] sm:$0xf]
      %v2014 = vld [vmem:[%s2005 + $0x20] sm:$0xf]
      %v2015 = vld [vmem:[%s2005 + $0x24] sm:$0xf]
      %v2016 = vld [vmem:[%s2005 + $0x28] sm:$0xf]
      %v2017 = vld [vmem:[%s2005 + $0x2c] sm:$0xf]
      %v2018 = vld [vmem:[%s2005 + $0x30] sm:$0xf]
      %v2019 = vld [vmem:[%s2005 + $0x34] sm:$0xf]
      %v2020 = vld [vmem:[%s2005 + $0x38] sm:$0xf]
      %v2021 = vld [vmem:[%s2005 + $0x3c] sm:$0xf]
      %v2022 = vunpack.c.l.b16 %v1906
      %v2023 = vunpack.c.l.b16 %v1920
      %v2024 = vunpack.c.l.b16 %v1934
      %v2025 = vunpack.c.l.b16 %v1948
      %v2026 = vunpack.c.l.b16 %v1962
      %v2027 = vunpack.c.l.b16 %v1976
      %v2028 = vunpack.c.l.b16 %v1990
      %v2029 = vunpack.c.l.b16 %v2004
      %v2030 = vpack.c.b16 %v2023, %v2022
      %v2031 = vpack.c.b16 %v2025, %v2024
      %v2032 = vpack.c.b16 %v2027, %v2026
      %v2033 = vpack.c.b16 %v2029, %v2028
      %v2054 = vunpack.c.l.b16 %v2006
      %v2055 = vunpack.c.l.b16 %v2007
      %v2056 = vunpack.c.l.b16 %v2008
      %v2057 = vunpack.c.l.b16 %v2009
      %v2058 = vunpack.c.l.b16 %v2010
      %v2059 = vunpack.c.l.b16 %v2011
      %v2060 = vunpack.c.l.b16 %v2012
      %v2061 = vunpack.c.l.b16 %v2013
      %v2062 = vunpack.c.l.b16 %v2014
      %v2063 = vunpack.c.l.b16 %v2015
      %v2064 = vunpack.c.l.b16 %v2016
      %v2065 = vunpack.c.l.b16 %v2017
      %v2066 = vunpack.c.l.b16 %v2018
      %v2067 = vunpack.c.l.b16 %v2019
      %v2068 = vunpack.c.l.b16 %v2020
      %v2069 = vunpack.c.l.b16 %v2021
      %v2070 = vpack.c.b16 %v2055, %v2054
      %v2071 = vpack.c.b16 %v2057, %v2056
      %v2072 = vpack.c.b16 %v2059, %v2058
      %v2073 = vpack.c.b16 %v2061, %v2060
      %v2074 = vpack.c.b16 %v2063, %v2062
      %v2075 = vpack.c.b16 %v2065, %v2064
      %v2076 = vpack.c.b16 %v2067, %v2066
      %v2077 = vpack.c.b16 %v2069, %v2068
      %2086 = vmatprep.subr.bf16.mxu0 0
      %2087 = vmatpush1.bf16.msra.mxu0 %v2070
      %2088 = vmatprep.subr.bf16.mxu0 0
      %2089 = vmatpush1.bf16.msra.mxu0 %v2071
      %2090 = vmatprep.subr.bf16.mxu0 0
      %2091 = vmatpush1.bf16.msra.mxu0 %v2072
      %2092 = vmatprep.subr.bf16.mxu0 0
      %2093 = vmatpush1.bf16.msra.mxu0 %v2073
      %2094 = vmatprep.subr.bf16.mxu0 0
      %2095 = vmatpush1.bf16.msra.mxu0 %v2074
      %2096 = vmatprep.subr.bf16.mxu0 0
      %2097 = vmatpush1.bf16.msra.mxu0 %v2075
      %2098 = vmatprep.subr.bf16.mxu0 0
      %2099 = vmatpush1.bf16.msra.mxu0 %v2076
      %2100 = vmatprep.subr.bf16.mxu0 0
      %2101 = vmatpush1.bf16.msra.mxu0 %v2077
      %2102 = vmatprep.subr.bf16.mxu0 0
      %2103 = vmatpush1.bf16.msra.mxu0 0
      %2104 = vmatprep.subr.bf16.mxu0 0
      %2105 = vmatpush1.bf16.msra.mxu0 0
      %2106 = vmatprep.subr.bf16.mxu0 0
      %2107 = vmatpush1.bf16.msra.mxu0 0
      %2108 = vmatprep.subr.bf16.mxu0 0
      %2109 = vmatpush1.bf16.msra.mxu0 0
      %2110 = vmatprep.subr.bf16.mxu0 0
      %2111 = vmatpush1.bf16.msra.mxu0 0
      %2112 = vmatprep.subr.bf16.mxu0 0
      %2113 = vmatpush1.bf16.msra.mxu0 0
      %2114 = vmatprep.subr.bf16.mxu0 0
      %2115 = vmatpush1.bf16.msra.mxu0 0
      %2116 = vmatprep.subr.bf16.mxu0 0
      %2117 = vmatpush1.bf16.msra.mxu0 0
      %2118 = vmatprep.mubr.bf16.mxu0 0
      %2119 = vmatmul.mubr.bf16.gmra.mrb[0].mxu0 %v2030
      %v2120 = vpop.f32.mrb[0].mxu0
      %v2121 = vadd.f32 0.0, %v2120
      %v2122 = vpop.f32.mrb[0].mxu0
      %v2123 = vpop.f32.mrb[0].mxu0
      %v2124 = vadd.f32 0.0, %v2123
      %v2125 = vpop.f32.mrb[0].mxu0
      %2126 = vmatprep.mubr.bf16.mxu0 0
      %2127 = vmatmul.mubr.bf16.gmra.mrb[0].mxu0 %v2031
      %v2128 = vpop.f32.mrb[0].mxu0
      %v2129 = vadd.f32 0.0, %v2128
      %v2130 = vpop.f32.mrb[0].mxu0
      %v2131 = vpop.f32.mrb[0].mxu0
      %v2132 = vadd.f32 0.0, %v2131
      %v2133 = vpop.f32.mrb[0].mxu0
      %2134 = vmatprep.mubr.bf16.mxu0 0
      %2135 = vmatmul.mubr.bf16.gmra.mrb[0].mxu0 %v2032
      %v2136 = vpop.f32.mrb[0].mxu0
      %v2137 = vadd.f32 0.0, %v2136
      %v2138 = vpop.f32.mrb[0].mxu0
      %v2139 = vpop.f32.mrb[0].mxu0
      %v2140 = vadd.f32 0.0, %v2139
      %v2141 = vpop.f32.mrb[0].mxu0
      %2142 = vmatprep.mubr.bf16.mxu0 0
      %2143 = vmatmul.mubr.bf16.gmra.mrb[0].mxu0 %v2033
      %v2144 = vpop.f32.mrb[0].mxu0
      %v2145 = vadd.f32 0.0, %v2144
      %v2146 = vpop.f32.mrb[0].mxu0
      %v2147 = vpop.f32.mrb[0].mxu0
      %v2148 = vadd.f32 0.0, %v2147
      %v2149 = vpop.f32.mrb[0].mxu0
      %2150 = vdwg.mxu0
      %v2151 = vld [vmem:[#allocation2] sm:$0xff]
      %v2152 = vld [vmem:[#allocation2 + $0x8] sm:$0xff]
      %v2153 = vld [vmem:[#allocation2 + $0x10] sm:$0xff]
      %v2154 = vld [vmem:[#allocation2 + $0x18] sm:$0xff]
      %v2155 = vld [vmem:[#allocation2 + $0x20] sm:$0xff]
      %v2156 = vld [vmem:[#allocation2 + $0x28] sm:$0xff]
      %v2157 = vld [vmem:[#allocation2 + $0x30] sm:$0xff]
      %v2158 = vld [vmem:[#allocation2 + $0x38] sm:$0xff]
      %v2159 = vadd.f32 %v2151, %v2121
      %v2160 = vadd.f32 %v2152, %v2124
      %v2161 = vadd.f32 %v2153, %v2129
      %v2162 = vadd.f32 %v2154, %v2132
      %v2163 = vadd.f32 %v2155, %v2137
      %v2164 = vadd.f32 %v2156, %v2140
      %v2165 = vadd.f32 %v2157, %v2145
      %v2166 = vadd.f32 %v2158, %v2148
      %2167 = vst [vmem:[#allocation2] sm:$0xff] %v2159
      %2168 = vst [vmem:[#allocation2 + $0x8] sm:$0xff] %v2160
      %2169 = vst [vmem:[#allocation2 + $0x10] sm:$0xff] %v2161
      %2170 = vst [vmem:[#allocation2 + $0x18] sm:$0xff] %v2162
      %2171 = vst [vmem:[#allocation2 + $0x20] sm:$0xff] %v2163
      %2172 = vst [vmem:[#allocation2 + $0x28] sm:$0xff] %v2164
      %2173 = vst [vmem:[#allocation2 + $0x30] sm:$0xff] %v2165
      %2174 = vst [vmem:[#allocation2 + $0x38] sm:$0xff] %v2166
      %v2175 = vld [vmem:[%s1690] sm:$0xe]
      %v2176 = vld [vmem:[%s1690 + $0x4] sm:$0x1]
      %v2177 = vld [vmem:[%s1690 + $0x8] sm:$0xe]
      %v2178 = vld [vmem:[%s1690 + $0xc] sm:$0x1]
      %v2179 = vld [vmem:[%s1690 + $0x10] sm:$0xe]
      %v2180 = vld [vmem:[%s1690 + $0x14] sm:$0x1]
      %v2181 = vld [vmem:[%s1690 + $0x18] sm:$0xe]
      %v2182 = vld [vmem:[%s1690 + $0x1c] sm:$0x1]
      %v2183 = vld [vmem:[%s1690 + $0x20] sm:$0xe]
      %v2184 = vld [vmem:[%s1690 + $0x24] sm:$0x1]
      %v2185 = vld [vmem:[%s1690 + $0x28] sm:$0xe]
      %v2186 = vld [vmem:[%s1690 + $0x2c] sm:$0x1]
      %v2187 = vld [vmem:[%s1690 + $0x30] sm:$0xe]
      %v2188 = vld [vmem:[%s1690 + $0x34] sm:$0x1]
      %v2189 = vld [vmem:[%s1690 + $0x38] sm:$0xe]
      %v2190 = vld [vmem:[%s1690 + $0x3c] sm:$0x1]
      %v2207 = vrot.slane %v2175, 5
      %v2208 = vrot.slane %v2207, 4
      %v2209 = vrot.slane %v2176, 5
      %v2210 = vsel %vm768, %v2208, %v2209
      %v2211 = vrot.slane %v2177, 5
      %v2212 = vrot.slane %v2211, 4
      %v2213 = vrot.slane %v2178, 5
      %v2214 = vsel %vm768, %v2212, %v2213
      %v2215 = vrot.slane %v2179, 5
      %v2216 = vrot.slane %v2215, 4
      %v2217 = vrot.slane %v2180, 5
      %v2218 = vsel %vm768, %v2216, %v2217
      %v2219 = vrot.slane %v2181, 5
      %v2220 = vrot.slane %v2219, 4
      %v2221 = vrot.slane %v2182, 5
      %v2222 = vsel %vm768, %v2220, %v2221
      %v2223 = vrot.slane %v2183, 5
      %v2224 = vrot.slane %v2223, 4
      %v2225 = vrot.slane %v2184, 5
      %v2226 = vsel %vm768, %v2224, %v2225
      %v2227 = vrot.slane %v2185, 5
      %v2228 = vrot.slane %v2227, 4
      %v2229 = vrot.slane %v2186, 5
      %v2230 = vsel %vm768, %v2228, %v2229
      %v2231 = vrot.slane %v2187, 5
      %v2232 = vrot.slane %v2231, 4
      %v2233 = vrot.slane %v2188, 5
      %v2234 = vsel %vm768, %v2232, %v2233
      %v2235 = vrot.slane %v2189, 5
      %v2236 = vrot.slane %v2235, 4
      %v2237 = vrot.slane %v2190, 5
      %v2238 = vsel %vm768, %v2236, %v2237
      %s2239 = scalar_lea.vmem %s248, 512
      %v2240 = vld [vmem:[%s2239] sm:$0xf]
      %v2241 = vld [vmem:[%s2239 + $0x4] sm:$0xf]
      %v2242 = vld [vmem:[%s2239 + $0x8] sm:$0xf]
      %v2243 = vld [vmem:[%s2239 + $0xc] sm:$0xf]
      %v2244 = vld [vmem:[%s2239 + $0x10] sm:$0xf]
      %v2245 = vld [vmem:[%s2239 + $0x14] sm:$0xf]
      %v2246 = vld [vmem:[%s2239 + $0x18] sm:$0xf]
      %v2247 = vld [vmem:[%s2239 + $0x1c] sm:$0xf]
      %v2248 = vld [vmem:[%s2239 + $0x20] sm:$0xf]
      %v2249 = vld [vmem:[%s2239 + $0x24] sm:$0xf]
      %v2250 = vld [vmem:[%s2239 + $0x28] sm:$0xf]
      %v2251 = vld [vmem:[%s2239 + $0x2c] sm:$0xf]
      %v2252 = vld [vmem:[%s2239 + $0x30] sm:$0xf]
      %v2253 = vld [vmem:[%s2239 + $0x34] sm:$0xf]
      %v2254 = vld [vmem:[%s2239 + $0x38] sm:$0xf]
      %v2255 = vld [vmem:[%s2239 + $0x3c] sm:$0xf]
      %v2256 = vunpack.c.l.b16 %v2210
      %v2257 = vunpack.c.l.b16 %v2214
      %v2258 = vunpack.c.l.b16 %v2218
      %v2259 = vunpack.c.l.b16 %v2222
      %v2260 = vunpack.c.l.b16 %v2226
      %v2261 = vunpack.c.l.b16 %v2230
      %v2262 = vunpack.c.l.b16 %v2234
      %v2263 = vunpack.c.l.b16 %v2238
      %v2264 = vpack.c.b16 %v2257, %v2256
      %v2265 = vpack.c.b16 %v2259, %v2258
      %v2266 = vpack.c.b16 %v2261, %v2260
      %v2267 = vpack.c.b16 %v2263, %v2262
      %v2288 = vunpack.c.l.b16 %v2240
      %v2289 = vunpack.c.l.b16 %v2241
      %v2290 = vunpack.c.l.b16 %v2242
      %v2291 = vunpack.c.l.b16 %v2243
      %v2292 = vunpack.c.l.b16 %v2244
      %v2293 = vunpack.c.l.b16 %v2245
      %v2294 = vunpack.c.l.b16 %v2246
      %v2295 = vunpack.c.l.b16 %v2247
      %v2296 = vunpack.c.l.b16 %v2248
      %v2297 = vunpack.c.l.b16 %v2249
      %v2298 = vunpack.c.l.b16 %v2250
      %v2299 = vunpack.c.l.b16 %v2251
      %v2300 = vunpack.c.l.b16 %v2252
      %v2301 = vunpack.c.l.b16 %v2253
      %v2302 = vunpack.c.l.b16 %v2254
      %v2303 = vunpack.c.l.b16 %v2255
      %v2304 = vpack.c.b16 %v2289, %v2288
      %v2305 = vpack.c.b16 %v2291, %v2290
      %v2306 = vpack.c.b16 %v2293, %v2292
      %v2307 = vpack.c.b16 %v2295, %v2294
      %v2308 = vpack.c.b16 %v2297, %v2296
      %v2309 = vpack.c.b16 %v2299, %v2298
      %v2310 = vpack.c.b16 %v2301, %v2300
      %v2311 = vpack.c.b16 %v2303, %v2302
      %2320 = vmatprep.subr.bf16.mxu0 0
      %2321 = vmatpush1.bf16.msra.mxu0 %v2304
      %2322 = vmatprep.subr.bf16.mxu0 0
      %2323 = vmatpush1.bf16.msra.mxu0 %v2305
      %2324 = vmatprep.subr.bf16.mxu0 0
      %2325 = vmatpush1.bf16.msra.mxu0 %v2306
      %2326 = vmatprep.subr.bf16.mxu0 0
      %2327 = vmatpush1.bf16.msra.mxu0 %v2307
      %2328 = vmatprep.subr.bf16.mxu0 0
      %2329 = vmatpush1.bf16.msra.mxu0 %v2308
      %2330 = vmatprep.subr.bf16.mxu0 0
      %2331 = vmatpush1.bf16.msra.mxu0 %v2309
      %2332 = vmatprep.subr.bf16.mxu0 0
      %2333 = vmatpush1.bf16.msra.mxu0 %v2310
      %2334 = vmatprep.subr.bf16.mxu0 0
      %2335 = vmatpush1.bf16.msra.mxu0 %v2311
      %2336 = vmatprep.subr.bf16.mxu0 0
      %2337 = vmatpush1.bf16.msra.mxu0 0
      %2338 = vmatprep.subr.bf16.mxu0 0
      %2339 = vmatpush1.bf16.msra.mxu0 0
      %2340 = vmatprep.subr.bf16.mxu0 0
      %2341 = vmatpush1.bf16.msra.mxu0 0
      %2342 = vmatprep.subr.bf16.mxu0 0
      %2343 = vmatpush1.bf16.msra.mxu0 0
      %2344 = vmatprep.subr.bf16.mxu0 0
      %2345 = vmatpush1.bf16.msra.mxu0 0
      %2346 = vmatprep.subr.bf16.mxu0 0
      %2347 = vmatpush1.bf16.msra.mxu0 0
      %2348 = vmatprep.subr.bf16.mxu0 0
      %2349 = vmatpush1.bf16.msra.mxu0 0
      %2350 = vmatprep.subr.bf16.mxu0 0
      %2351 = vmatpush1.bf16.msra.mxu0 0
      %2352 = vmatprep.mubr.bf16.mxu0 0
      %2353 = vmatmul.mubr.bf16.gmra.mrb[0].mxu0 %v2264
      %v2354 = vpop.f32.mrb[0].mxu0
      %v2355 = vadd.f32 0.0, %v2354
      %v2356 = vpop.f32.mrb[0].mxu0
      %v2357 = vpop.f32.mrb[0].mxu0
      %v2358 = vadd.f32 0.0, %v2357
      %v2359 = vpop.f32.mrb[0].mxu0
      %2360 = vmatprep.mubr.bf16.mxu0 0
      %2361 = vmatmul.mubr.bf16.gmra.mrb[0].mxu0 %v2265
      %v2362 = vpop.f32.mrb[0].mxu0
      %v2363 = vadd.f32 0.0, %v2362
      %v2364 = vpop.f32.mrb[0].mxu0
      %v2365 = vpop.f32.mrb[0].mxu0
      %v2366 = vadd.f32 0.0, %v2365
      %v2367 = vpop.f32.mrb[0].mxu0
      %2368 = vmatprep.mubr.bf16.mxu0 0
      %2369 = vmatmul.mubr.bf16.gmra.mrb[0].mxu0 %v2266
      %v2370 = vpop.f32.mrb[0].mxu0
      %v2371 = vadd.f32 0.0, %v2370
      %v2372 = vpop.f32.mrb[0].mxu0
      %v2373 = vpop.f32.mrb[0].mxu0
      %v2374 = vadd.f32 0.0, %v2373
      %v2375 = vpop.f32.mrb[0].mxu0
      %2376 = vmatprep.mubr.bf16.mxu0 0
      %2377 = vmatmul.mubr.bf16.gmra.mrb[0].mxu0 %v2267
      %v2378 = vpop.f32.mrb[0].mxu0
      %v2379 = vadd.f32 0.0, %v2378
      %v2380 = vpop.f32.mrb[0].mxu0
      %v2381 = vpop.f32.mrb[0].mxu0
      %v2382 = vadd.f32 0.0, %v2381
      %v2383 = vpop.f32.mrb[0].mxu0
      %2384 = vdwg.mxu0
      %v2385 = vld [vmem:[#allocation2] sm:$0xff]
      %v2386 = vld [vmem:[#allocation2 + $0x8] sm:$0xff]
      %v2387 = vld [vmem:[#allocation2 + $0x10] sm:$0xff]
      %v2388 = vld [vmem:[#allocation2 + $0x18] sm:$0xff]
      %v2389 = vld [vmem:[#allocation2 + $0x20] sm:$0xff]
      %v2390 = vld [vmem:[#allocation2 + $0x28] sm:$0xff]
      %v2391 = vld [vmem:[#allocation2 + $0x30] sm:$0xff]
      %v2392 = vld [vmem:[#allocation2 + $0x38] sm:$0xff]
      %v2393 = vadd.f32 %v2385, %v2355
      %v2394 = vadd.f32 %v2386, %v2358
      %v2395 = vadd.f32 %v2387, %v2363
      %v2396 = vadd.f32 %v2388, %v2366
      %v2397 = vadd.f32 %v2389, %v2371
      %v2398 = vadd.f32 %v2390, %v2374
      %v2399 = vadd.f32 %v2391, %v2379
      %v2400 = vadd.f32 %v2392, %v2382
      %2401 = vst [vmem:[#allocation2] sm:$0xff] %v2393
      %2402 = vst [vmem:[#allocation2 + $0x8] sm:$0xff] %v2394
      %2403 = vst [vmem:[#allocation2 + $0x10] sm:$0xff] %v2395
      %2404 = vst [vmem:[#allocation2 + $0x18] sm:$0xff] %v2396
      %2405 = vst [vmem:[#allocation2 + $0x20] sm:$0xff] %v2397
      %2406 = vst [vmem:[#allocation2 + $0x28] sm:$0xff] %v2398
      %2407 = vst [vmem:[#allocation2 + $0x30] sm:$0xff] %v2399
      %2408 = vst [vmem:[#allocation2 + $0x38] sm:$0xff] %v2400
      %v2409 = vld [vmem:[#allocation2] sm:$0xff]
      %v2410 = vld [vmem:[#allocation2 + $0x8] sm:$0xff]
      %v2411 = vld [vmem:[#allocation2 + $0x10] sm:$0xff]
      %v2412 = vld [vmem:[#allocation2 + $0x18] sm:$0xff]
      %v2413 = vld [vmem:[#allocation2 + $0x20] sm:$0xff]
      %v2414 = vld [vmem:[#allocation2 + $0x28] sm:$0xff]
      %v2415 = vld [vmem:[#allocation2 + $0x30] sm:$0xff]
      %v2416 = vld [vmem:[#allocation2 + $0x38] sm:$0xff]
      %v2417 = vld [vmem:[%s251] sm:$0x1]
      %v2419 = vlaneseq
      %v2420 = vshrl.u32 %v2419, 7
      %v2421 = vsub.s32 0, %v2420
      %v2422 = vrot.slane %v2417, %v2421
      %v2424 = vmul.f32 %v2409, %v2422
      %v2425 = vmul.f32 %v2410, %v2422
      %v2426 = vmul.f32 %v2411, %v2422
      %v2427 = vmul.f32 %v2412, %v2422
      %v2428 = vmul.f32 %v2413, %v2422
      %v2429 = vmul.f32 %v2414, %v2422
      %v2430 = vmul.f32 %v2415, %v2422
      %v2431 = vmul.f32 %v2416, %v2422
      %v2432 = vld [vmem:[%s254] sm:$0x1]
      %v2434 = vlaneseq
      %v2435 = vshrl.u32 %v2434, 7
      %v2436 = vsub.s32 0, %v2435
      %v2437 = vrot.slane %v2432, %v2436
      %v2439 = vadd.f32 %v2424, %v2437
      %v2440 = vadd.f32 %v2425, %v2437
      %v2441 = vadd.f32 %v2426, %v2437
      %v2442 = vadd.f32 %v2427, %v2437
      %v2443 = vadd.f32 %v2428, %v2437
      %v2444 = vadd.f32 %v2429, %v2437
      %v2445 = vadd.f32 %v2430, %v2437
      %v2446 = vadd.f32 %v2431, %v2437
      %vm2447 = vcmp.gt.f32.partialorder %v2439, 0.0
      %vm2448 = vcmp.gt.f32.partialorder %v2440, 0.0
      %vm2449 = vcmp.gt.f32.partialorder %v2441, 0.0
      %vm2450 = vcmp.gt.f32.partialorder %v2442, 0.0
      %vm2451 = vcmp.gt.f32.partialorder %v2443, 0.0
      %vm2452 = vcmp.gt.f32.partialorder %v2444, 0.0
      %vm2453 = vcmp.gt.f32.partialorder %v2445, 0.0
      %vm2454 = vcmp.gt.f32.partialorder %v2446, 0.0
      %v2455 = vmul.f32 %v2439, 0.1
      %v2456 = vmul.f32 %v2440, 0.1
      %v2457 = vmul.f32 %v2441, 0.1
      %v2458 = vmul.f32 %v2442, 0.1
      %v2459 = vmul.f32 %v2443, 0.1
      %v2460 = vmul.f32 %v2444, 0.1
      %v2461 = vmul.f32 %v2445, 0.1
      %v2462 = vmul.f32 %v2446, 0.1
      %v2463 = vsel %vm2447, %v2439, %v2455
      %v2464 = vsel %vm2448, %v2440, %v2456
      %v2465 = vsel %vm2449, %v2441, %v2457
      %v2466 = vsel %vm2450, %v2442, %v2458
      %v2467 = vsel %vm2451, %v2443, %v2459
      %v2468 = vsel %vm2452, %v2444, %v2460
      %v2469 = vsel %vm2453, %v2445, %v2461
      %v2470 = vsel %vm2454, %v2446, %v2462
      %v2471 = vpack.c.bf16 %v2464, %v2463
      %v2472 = vpack.c.bf16 %v2466, %v2465
      %v2473 = vpack.c.bf16 %v2468, %v2467
      %v2474 = vpack.c.bf16 %v2470, %v2469
      %v2479 = vunpack.c.l.b16 %v2471
      %v2480 = vunpack.c.h.b16 %v2471
      %v2481 = vunpack.c.l.b16 %v2472
      %v2482 = vunpack.c.h.b16 %v2472
      %v2483 = vunpack.c.l.b16 %v2473
      %v2484 = vunpack.c.h.b16 %v2473
      %v2485 = vunpack.c.l.b16 %v2474
      %v2486 = vunpack.c.h.b16 %v2474
      %v2487 = vpack.c.b16 %v2479, %v2479
      %v2488 = vpack.c.b16 %v2480, %v2480
      %v2489 = vpack.c.b16 %v2481, %v2481
      %v2490 = vpack.c.b16 %v2482, %v2482
      %v2491 = vpack.c.b16 %v2483, %v2483
      %v2492 = vpack.c.b16 %v2484, %v2484
      %v2493 = vpack.c.b16 %v2485, %v2485
      %v2494 = vpack.c.b16 %v2486, %v2486
      %2503 = vst [vmem:[%s262] sm:$0xf] %v2487
      %2504 = vst [vmem:[%s262 + $0x4] sm:$0xf] %v2488
      %2505 = vst [vmem:[%s262 + $0x8] sm:$0xf] %v2489
      %2506 = vst [vmem:[%s262 + $0xc] sm:$0xf] %v2490
      %2507 = vst [vmem:[%s262 + $0x10] sm:$0xf] %v2491
      %2508 = vst [vmem:[%s262 + $0x14] sm:$0xf] %v2492
      %2509 = vst [vmem:[%s262 + $0x18] sm:$0xf] %v2493
      %2510 = vst [vmem:[%s262 + $0x1c] sm:$0xf] %v2494
      %p2511 = scmp.lt.s32.totalorder %s20, 1
      %s2512 = scalar_select %p2511, %s20, 1
      %p2513 = scmp.lt.s32.totalorder %s19, 0
      %s2514 = scalar_select %p2513, %s19, 0
      %s2515 = smul.addr %s2512, 8
      %s2516 = sadd.s32 %s2514, %s2515
      %s2517 = smul.addr %s2516, 4
      %s2518 = scalar_lea.vmem %s4, %s2517
      // Predicated region
      $region37: #{forward.7} parent=35 // pred_check
        %p2519 = pneg %p151
      $region38: #{forward.7} parent=35 // pred_check_branch
        %2521 = sbr.rel (%p2519) target = $region40
      $region39: #{forward.7} parent=35 // pred_region
        _
      $region40: #{forward.7} parent=35 // pred_fallthru
        _
    $region36: #{forward.7} parent=5 // pred_fallthru
      _
    %p2522 = scmp.le.s32.totalorder 2, %s10
    // Predicated region
    $region41: #{forward.7} parent=5 // pred_check
      %p2523 = pneg %p2522
    $region42: #{forward.7} parent=5 // pred_check_branch
      %2525 = sbr.rel (%p2523) target = $region44
    $region43: #{forward.7} parent=5 // pred_region
      %s2526 = ssub.s32 %s10, 2
      // Predicated region
      $region45: #{forward.7} parent=43 // pred_check
        %p2527 = pneg %p157
      $region46: #{forward.7} parent=43 // pred_check_branch
        %2529 = sbr.rel (%p2527) target = $region48
      $region47: #{forward.7} parent=43 // pred_region
        %p2530 = scmp.lt.s32.totalorder %s22, 1
        %s2531 = scalar_select %p2530, %s22, 1
        %p2532 = scmp.lt.s32.totalorder %s21, 0
        %s2533 = scalar_select %p2532, %s21, 0
        %s2534 = smul.addr %s2531, 8
        %s2535 = sadd.s32 %s2533, %s2534
        %s2536 = smul.addr %s2535, 4
        %s2537 = scalar_lea.vmem %s4, %s2536
      $region48: #{forward.7} parent=43 // pred_fallthru
        _
    $region44: #{forward.7} parent=5 // pred_fallthru
      _
  $region6: #{forward.7} parent=0 // loop_footer
    %s14 = sadd.s32 1, %s10
  $region7: #{forward.7} parent=0 // loop_footer_branch
    %9 = sbr.rel target = $region3
  $region8: #{forward.7} parent=0 // loop_exit
    _

// kernel: forward.5
$region0: #{forward.5}
  #allocation0 [shape = 'u32[]', space=smem, size = 0x4, offset = 0x4, fixed_abs, tag = 'smem constant byte address 0x4 - core index']
  #allocation1 [shape = 'u32[144,128]{1,0:T(1,128)}', space=vmem, size = 0x12000, scoped, tag = 'internal scratch']
  #allocation2 [shape = 'f32[256,128]{1,0:T(8,128)}', space=vmem, size = 0x20000, scoped, tag = 'scratch operand']
  %s0 = inlined_call_operand.vmem [shape: bf16[2,18,18,128], index: 0, kind: input, shape index: {}]
  %s1 = inlined_call_operand.vmem [shape: bf16[9,128,128], index: 1, kind: input, shape index: {}]
  %s2 = inlined_call_operand.vmem [shape: f32[1,128], index: 2, kind: input, shape index: {}]
  %s3 = inlined_call_operand.vmem [shape: f32[1,128], index: 3, kind: input, shape index: {}]
  %s4 = inlined_call_operand.vmem [shape: bf16[2,256,128], index: 4, kind: output, shape index: {}]
  %s5 = sld [smem:[#allocation0]]
  $region49: #{forward.5} parent=0
    _
  %s7 = ssub.s32 1, %s5
  %s8 = scalar_select 0, %s7, %s5
  loop: start=0, step=1, limit=4
  $region2: #{forward.5} parent=0 // loop_pre_header
    _
  $region3: #{forward.5} parent=0 // loop_header
    %s10 = sphi 0, %s14
    %p11 = scmp.ge.s32.totalorder %s10, 4
    %s17 = sphi 0, %s29
    %s18 = sphi 0, %s25
    %s19 = sphi 0, %s17
    %s20 = sphi 0, %s18
    %s21 = sphi 0, %s19
    %s22 = sphi 0, %s20
    %s32 = sphi 0, %s34
    %s35 = sphi 0, %s32
    %s36 = sphi 0, %s35
    %s52 = sphi 0, %s36
    %s58 = sphi 0, %s60
    %s61 = sphi 0, %s58
    %s62 = sphi 0, %s61
    %s78 = sphi 0, %s62
    %s84 = sphi 0, %s86
    %s87 = sphi 0, %s84
    %s88 = sphi 0, %s87
    %s104 = sphi 0, %s88
    %s110 = sphi 0, %s112
    %s113 = sphi 0, %s110
    %s114 = sphi 0, %s113
    %s130 = sphi 0, %s114
    %s138 = sphi 0, %s140
    %s141 = sphi 0, %s138
    %s142 = sphi 0, %s141
    %s158 = sphi 0, %s142
  $region4: #{forward.5} parent=0 // loop_header_branch
    %13 = sbr.rel (%p11) target = $region8
  $region5: #{forward.5} parent=0 // loop_body
    %s15 = ssub.s32 %s10, 1
    %s16 = ssub.s32 %s10, 2
    %s23 = sadd.s32 1, %s18
    %p24 = scmp.ge.s32.totalorder %s23, 2
    %s25 = scalar_select %p24, 0, %s23
    %s26 = sadd.s32 1, %s17
    %s27 = scalar_select %p24, %s26, %s17
    %p28 = scmp.ge.s32.totalorder %s27, 1
    %s29 = scalar_select %p28, 0, %s27
    %s30 = ssub.s32 %s18, %s25
    %p31 = scmp.eq.s32.totalorder %s30, 0
    %s33 = sadd.s32 %s32, 1
    %s34 = scalar_select %p31, %s32, %s33
    %p37 = pneg %p31
    %p38 = scmp.eq.s32.totalorder %s10, 1
    %p39 = por %p37, %p38
    %p40 = scmp.ne.s32.totalorder %s32, %s35
    %p41 = scmp.eq.s32.totalorder %s10, 0
    %p42 = por %p40, %p41
    %p43 = scmp.ne.s32.totalorder %s32, %s35
    %p44 = scmp.eq.s32.totalorder %s15, 1
    %p45 = por %p43, %p44
    %p46 = scmp.ne.s32.totalorder %s35, %s36
    %p47 = scmp.eq.s32.totalorder %s15, 0
    %p48 = por %p46, %p47
    %p49 = scmp.ne.s32.totalorder %s35, %s36
    %p50 = scmp.eq.s32.totalorder %s16, 1
    %p51 = por %p49, %p50
    %p53 = scmp.ne.s32.totalorder %s36, %s52
    %p54 = scmp.eq.s32.totalorder %s16, 0
    %p55 = por %p53, %p54
    %s56 = ssub.s32 %s17, %s29
    %p57 = scmp.eq.s32.totalorder %s56, 0
    %s59 = sadd.s32 %s58, 1
    %s60 = scalar_select %p57, %s58, %s59
    %p63 = pneg %p57
    %p64 = scmp.eq.s32.totalorder %s10, 1
    %p65 = por %p63, %p64
    %p66 = scmp.ne.s32.totalorder %s58, %s61
    %p67 = scmp.eq.s32.totalorder %s10, 0
    %p68 = por %p66, %p67
    %p69 = scmp.ne.s32.totalorder %s58, %s61
    %p70 = scmp.eq.s32.totalorder %s15, 1
    %p71 = por %p69, %p70
    %p72 = scmp.ne.s32.totalorder %s61, %s62
    %p73 = scmp.eq.s32.totalorder %s15, 0
    %p74 = por %p72, %p73
    %p75 = scmp.ne.s32.totalorder %s61, %s62
    %p76 = scmp.eq.s32.totalorder %s16, 1
    %p77 = por %p75, %p76
    %p79 = scmp.ne.s32.totalorder %s62, %s78
    %p80 = scmp.eq.s32.totalorder %s16, 0
    %p81 = por %p79, %p80
    %s82 = ssub.s32 %s17, %s29
    %p83 = scmp.eq.s32.totalorder %s82, 0
    %s85 = sadd.s32 %s84, 1
    %s86 = scalar_select %p83, %s84, %s85
    %p89 = pneg %p83
    %p90 = scmp.eq.s32.totalorder %s10, 1
    %p91 = por %p89, %p90
    %p92 = scmp.ne.s32.totalorder %s84, %s87
    %p93 = scmp.eq.s32.totalorder %s10, 0
    %p94 = por %p92, %p93
    %p95 = scmp.ne.s32.totalorder %s84, %s87
    %p96 = scmp.eq.s32.totalorder %s15, 1
    %p97 = por %p95, %p96
    %p98 = scmp.ne.s32.totalorder %s87, %s88
    %p99 = scmp.eq.s32.totalorder %s15, 0
    %p100 = por %p98, %p99
    %p101 = scmp.ne.s32.totalorder %s87, %s88
    %p102 = scmp.eq.s32.totalorder %s16, 1
    %p103 = por %p101, %p102
    %p105 = scmp.ne.s32.totalorder %s88, %s104
    %p106 = scmp.eq.s32.totalorder %s16, 0
    %p107 = por %p105, %p106
    %s108 = ssub.s32 %s17, %s29
    %p109 = scmp.eq.s32.totalorder %s108, 0
    %s111 = sadd.s32 %s110, 1
    %s112 = scalar_select %p109, %s110, %s111
    %p115 = pneg %p109
    %p116 = scmp.eq.s32.totalorder %s10, 1
    %p117 = por %p115, %p116
    %p118 = scmp.ne.s32.totalorder %s110, %s113
    %p119 = scmp.eq.s32.totalorder %s10, 0
    %p120 = por %p118, %p119
    %p121 = scmp.ne.s32.totalorder %s110, %s113
    %p122 = scmp.eq.s32.totalorder %s15, 1
    %p123 = por %p121, %p122
    %p124 = scmp.ne.s32.totalorder %s113, %s114
    %p125 = scmp.eq.s32.totalorder %s15, 0
    %p126 = por %p124, %p125
    %p127 = scmp.ne.s32.totalorder %s113, %s114
    %p128 = scmp.eq.s32.totalorder %s16, 1
    %p129 = por %p127, %p128
    %p131 = scmp.ne.s32.totalorder %s114, %s130
    %p132 = scmp.eq.s32.totalorder %s16, 0
    %p133 = por %p131, %p132
    %s134 = ssub.s32 %s18, %s25
    %s135 = ssub.s32 %s17, %s29
    %s136 = sor.u32 %s134, %s135
    %p137 = scmp.eq.s32.totalorder %s136, 0
    %s139 = sadd.s32 %s138, 1
    %s140 = scalar_select %p137, %s138, %s139
    %p143 = pneg %p137
    %p144 = scmp.eq.s32.totalorder %s10, 1
    %p145 = por %p143, %p144
    %p146 = scmp.ne.s32.totalorder %s138, %s141
    %p147 = scmp.eq.s32.totalorder %s10, 0
    %p148 = por %p146, %p147
    %p149 = scmp.ne.s32.totalorder %s138, %s141
    %p150 = scmp.eq.s32.totalorder %s15, 1
    %p151 = por %p149, %p150
    %p152 = scmp.ne.s32.totalorder %s141, %s142
    %p153 = scmp.eq.s32.totalorder %s15, 0
    %p154 = por %p152, %p153
    %p155 = scmp.ne.s32.totalorder %s141, %s142
    %p156 = scmp.eq.s32.totalorder %s16, 1
    %p157 = por %p155, %p156
    %p159 = scmp.ne.s32.totalorder %s142, %s158
    %p160 = scmp.eq.s32.totalorder %s16, 0
    %p161 = por %p159, %p160
    %p162 = scmp.le.s32.totalorder 1, %s10
    %p163 = scmp.lt.s32.totalorder %s10, 3
    %p164 = pnand %p162, %p163
    %p165 = pneg %p164
    // Predicated region
    $region9: #{forward.5} parent=5 // pred_check
      _
    $region10: #{forward.5} parent=5 // pred_check_branch
      %167 = sbr.rel (%p164) target = $region12
    $region11: #{forward.5} parent=5 // pred_region
      %s168 = ssub.s32 %s10, 1
      // Predicated region
      $region13: #{forward.5} parent=11 // pred_check
        %p169 = pneg %p74
      $region14: #{forward.5} parent=11 // pred_check_branch
        %171 = sbr.rel (%p169) target = $region16
      $region15: #{forward.5} parent=11 // pred_region
        %p172 = scmp.lt.s32.totalorder %s19, 0
        %s173 = scalar_select %p172, %s19, 0
        %s174 = smul.addr %s173, 4
        %s175 = scalar_lea.vmem %s1, %s174
      $region16: #{forward.5} parent=11 // pred_fallthru
        _
      // Predicated region
      $region17: #{forward.5} parent=11 // pred_check
        %p176 = pneg %p100
      $region18: #{forward.5} parent=11 // pred_check_branch
        %178 = sbr.rel (%p176) target = $region20
      $region19: #{forward.5} parent=11 // pred_region
        %p179 = scmp.lt.s32.totalorder %s19, 0
        %s180 = scalar_select %p179, %s19, 0
        %s181 = scalar_lea.vmem %s2, %s180
      $region20: #{forward.5} parent=11 // pred_fallthru
        _
      // Predicated region
      $region21: #{forward.5} parent=11 // pred_check
        %p182 = pneg %p126
      $region22: #{forward.5} parent=11 // pred_check_branch
        %184 = sbr.rel (%p182) target = $region24
      $region23: #{forward.5} parent=11 // pred_region
        %p185 = scmp.lt.s32.totalorder %s19, 0
        %s186 = scalar_select %p185, %s19, 0
        %s187 = scalar_lea.vmem %s3, %s186
      $region24: #{forward.5} parent=11 // pred_fallthru
        _
    $region12: #{forward.5} parent=5 // pred_fallthru
      _
    %p188 = scmp.lt.s32.totalorder %s10, 2
    // Predicated region
    $region25: #{forward.5} parent=5 // pred_check
      %p189 = pneg %p188
    $region26: #{forward.5} parent=5 // pred_check_branch
      %191 = sbr.rel (%p189) target = $region28
    $region27: #{forward.5} parent=5 // pred_region
      // Predicated region
      $region29: #{forward.5} parent=27 // pred_check
        %p192 = pneg %p42
      $region30: #{forward.5} parent=27 // pred_check_branch
        %194 = sbr.rel (%p192) target = $region32
      $region31: #{forward.5} parent=27 // pred_region
        %p195 = scmp.lt.s32.totalorder %s18, 1
        %s196 = scalar_select %p195, %s18, 1
        %s197 = smul.addr %s196, 54
        %s198 = smul.addr %s197, 4
        %s199 = scalar_lea.vmem %s0, %s198
      $region32: #{forward.5} parent=27 // pred_fallthru
        _
    $region28: #{forward.5} parent=5 // pred_fallthru
      _
    %p200 = scmp.le.s32.totalorder 1, %s10
    %p201 = scmp.lt.s32.totalorder %s10, 3
    %p202 = pnand %p200, %p201
    %p203 = pneg %p202
    // Predicated region
    $region33: #{forward.5} parent=5 // pred_check
      _
    $region34: #{forward.5} parent=5 // pred_check_branch
      %205 = sbr.rel (%p202) target = $region36
    $region35: #{forward.5} parent=5 // pred_region
      %s206 = ssub.s32 %s10, 1
      %p207 = scmp.lt.s32.totalorder %s20, 1
      %s208 = scalar_select %p207, %s20, 1
      %s209 = smul.addr %s208, 54
      %s210 = smul.addr %s209, 4
      %s211 = scalar_lea.vmem %s0, %s210
      %p212 = pneg %p48
      %p213 = pneg %p45
      %p214 = scmp.lt.s32.totalorder %s19, 0
      %s215 = scalar_select %p214, %s19, 0
      %s216 = smul.addr %s215, 4
      %s217 = scalar_lea.vmem %s1, %s216
      %p218 = pneg %p74
      %p219 = pneg %p71
      %p220 = scmp.lt.s32.totalorder %s19, 0
      %s221 = scalar_select %p220, %s19, 0
      %s222 = scalar_lea.vmem %s2, %s221
      %p223 = pneg %p100
      %p224 = pneg %p97
      %p225 = scmp.lt.s32.totalorder %s19, 0
      %s226 = scalar_select %p225, %s19, 0
      %s227 = scalar_lea.vmem %s3, %s226
      %p228 = pneg %p126
      %p229 = pneg %p123
      %p230 = pneg %p154
      %p231 = pneg %p151
      %p232 = scmp.lt.s32.totalorder %s20, 1
      %s233 = scalar_select %p232, %s20, 1
      %p234 = scmp.lt.s32.totalorder %s19, 0
      %s235 = scalar_select %p234, %s19, 0
      %s236 = smul.addr %s233, 32
      %s237 = sadd.s32 %s235, %s236
      %s238 = smul.addr %s237, 4
      %s239 = scalar_lea.vmem %s4, %s238
      %p240 = scmp.lt.s32.totalorder %s20, 1
      %s241 = scalar_select %p240, %s20, 1
      %s242 = smul.addr %s241, 54
      %s243 = smul.addr %s242, 4
      %s244 = scalar_lea.vmem %s0, %s243
      %p245 = scmp.lt.s32.totalorder %s19, 0
      %s246 = scalar_select %p245, %s19, 0
      %s247 = smul.addr %s246, 4
      %s248 = scalar_lea.vmem %s1, %s247
      %p249 = scmp.lt.s32.totalorder %s19, 0
      %s250 = scalar_select %p249, %s19, 0
      %s251 = scalar_lea.vmem %s2, %s250
      %p252 = scmp.lt.s32.totalorder %s19, 0
      %s253 = scalar_select %p252, %s19, 0
      %s254 = scalar_lea.vmem %s3, %s253
      %p255 = scmp.lt.s32.totalorder %s20, 1
      %s256 = scalar_select %p255, %s20, 1
      %p257 = scmp.lt.s32.totalorder %s19, 0
      %s258 = scalar_select %p257, %s19, 0
      %s259 = smul.addr %s256, 32
      %s260 = sadd.s32 %s258, %s259
      %s261 = smul.addr %s260, 4
      %s262 = scalar_lea.vmem %s4, %s261
      %v264 = vld [vmem:[%s244] sm:$0xf]
      %v265 = vld [vmem:[%s244 + $0x4] sm:$0xf]
      %v266 = vld [vmem:[%s244 + $0xc] sm:$0xf]
      %v267 = vld [vmem:[%s244 + $0x10] sm:$0xf]
      %v268 = vld [vmem:[%s244 + $0x18] sm:$0xf]
      %v269 = vld [vmem:[%s244 + $0x1c] sm:$0xf]
      %v270 = vld [vmem:[%s244 + $0x24] sm:$0xf]
      %v271 = vld [vmem:[%s244 + $0x28] sm:$0xf]
      %v272 = vld [vmem:[%s244 + $0x30] sm:$0xf]
      %v273 = vld [vmem:[%s244 + $0x34] sm:$0xf]
      %v274 = vld [vmem:[%s244 + $0x3c] sm:$0xf]
      %v275 = vld [vmem:[%s244 + $0x40] sm:$0xf]
      %v276 = vld [vmem:[%s244 + $0x48] sm:$0xf]
      %v277 = vld [vmem:[%s244 + $0x4c] sm:$0xf]
      %v278 = vld [vmem:[%s244 + $0x54] sm:$0xf]
      %v279 = vld [vmem:[%s244 + $0x58] sm:$0xf]
      %v280 = vld [vmem:[%s244 + $0x60] sm:$0xf]
      %v281 = vld [vmem:[%s244 + $0x64] sm:$0xf]
      %v282 = vld [vmem:[%s244 + $0x6c] sm:$0xf]
      %v283 = vld [vmem:[%s244 + $0x70] sm:$0xf]
      %v284 = vld [vmem:[%s244 + $0x78] sm:$0xf]
      %v285 = vld [vmem:[%s244 + $0x7c] sm:$0xf]
      %v286 = vld [vmem:[%s244 + $0x84] sm:$0xf]
      %v287 = vld [vmem:[%s244 + $0x88] sm:$0xf]
      %v288 = vld [vmem:[%s244 + $0x90] sm:$0xf]
      %v289 = vld [vmem:[%s244 + $0x94] sm:$0xf]
      %v290 = vld [vmem:[%s244 + $0x9c] sm:$0xf]
      %v291 = vld [vmem:[%s244 + $0xa0] sm:$0xf]
      %v292 = vld [vmem:[%s244 + $0xa8] sm:$0xf]
      %v293 = vld [vmem:[%s244 + $0xac] sm:$0xf]
      %v294 = vld [vmem:[%s244 + $0xb4] sm:$0xf]
      %v295 = vld [vmem:[%s244 + $0xb8] sm:$0xf]
      %v296 = vld [vmem:[%s248] sm:$0xf]
      %v297 = vld [vmem:[%s248 + $0x4] sm:$0xf]
      %v298 = vld [vmem:[%s248 + $0x8] sm:$0xf]
      %v299 = vld [vmem:[%s248 + $0xc] sm:$0xf]
      %v300 = vld [vmem:[%s248 + $0x10] sm:$0xf]
      %v301 = vld [vmem:[%s248 + $0x14] sm:$0xf]
      %v302 = vld [vmem:[%s248 + $0x18] sm:$0xf]
      %v303 = vld [vmem:[%s248 + $0x1c] sm:$0xf]
      %v304 = vld [vmem:[%s248 + $0x20] sm:$0xf]
      %v305 = vld [vmem:[%s248 + $0x24] sm:$0xf]
      %v306 = vld [vmem:[%s248 + $0x28] sm:$0xf]
      %v307 = vld [vmem:[%s248 + $0x2c] sm:$0xf]
      %v308 = vld [vmem:[%s248 + $0x30] sm:$0xf]
      %v309 = vld [vmem:[%s248 + $0x34] sm:$0xf]
      %v310 = vld [vmem:[%s248 + $0x38] sm:$0xf]
      %v311 = vld [vmem:[%s248 + $0x3c] sm:$0xf]
      %v344 = vunpack.c.l.b16 %v264
      %v345 = vunpack.c.l.b16 %v265
      %v346 = vunpack.c.l.b16 %v266
      %v347 = vunpack.c.l.b16 %v267
      %v348 = vunpack.c.l.b16 %v268
      %v349 = vunpack.c.l.b16 %v269
      %v350 = vunpack.c.l.b16 %v270
      %v351 = vunpack.c.l.b16 %v271
      %v352 = vunpack.c.l.b16 %v272
      %v353 = vunpack.c.l.b16 %v273
      %v354 = vunpack.c.l.b16 %v274
      %v355 = vunpack.c.l.b16 %v275
      %v356 = vunpack.c.l.b16 %v276
      %v357 = vunpack.c.l.b16 %v277
      %v358 = vunpack.c.l.b16 %v278
      %v359 = vunpack.c.l.b16 %v279
      %v360 = vunpack.c.l.b16 %v280
      %v361 = vunpack.c.l.b16 %v281
      %v362 = vunpack.c.l.b16 %v282
      %v363 = vunpack.c.l.b16 %v283
      %v364 = vunpack.c.l.b16 %v284
      %v365 = vunpack.c.l.b16 %v285
      %v366 = vunpack.c.l.b16 %v286
      %v367 = vunpack.c.l.b16 %v287
      %v368 = vunpack.c.l.b16 %v288
      %v369 = vunpack.c.l.b16 %v289
      %v370 = vunpack.c.l.b16 %v290
      %v371 = vunpack.c.l.b16 %v291
      %v372 = vunpack.c.l.b16 %v292
      %v373 = vunpack.c.l.b16 %v293
      %v374 = vunpack.c.l.b16 %v294
      %v375 = vunpack.c.l.b16 %v295
      %v376 = vpack.c.b16 %v345, %v344
      %v377 = vpack.c.b16 %v347, %v346
      %v378 = vpack.c.b16 %v349, %v348
      %v379 = vpack.c.b16 %v351, %v350
      %v380 = vpack.c.b16 %v353, %v352
      %v381 = vpack.c.b16 %v355, %v354
      %v382 = vpack.c.b16 %v357, %v356
      %v383 = vpack.c.b16 %v359, %v358
      %v384 = vpack.c.b16 %v361, %v360
      %v385 = vpack.c.b16 %v363, %v362
      %v386 = vpack.c.b16 %v365, %v364
      %v387 = vpack.c.b16 %v367, %v366
      %v388 = vpack.c.b16 %v369, %v368
      %v389 = vpack.c.b16 %v371, %v370
      %v390 = vpack.c.b16 %v373, %v372
      %v391 = vpack.c.b16 %v375, %v374
      %v424 = vunpack.c.l.b16 %v296
      %v425 = vunpack.c.l.b16 %v297
      %v426 = vunpack.c.l.b16 %v298
      %v427 = vunpack.c.l.b16 %v299
      %v428 = vunpack.c.l.b16 %v300
      %v429 = vunpack.c.l.b16 %v301
      %v430 = vunpack.c.l.b16 %v302
      %v431 = vunpack.c.l.b16 %v303
      %v432 = vunpack.c.l.b16 %v304
      %v433 = vunpack.c.l.b16 %v305
      %v434 = vunpack.c.l.b16 %v306
      %v435 = vunpack.c.l.b16 %v307
      %v436 = vunpack.c.l.b16 %v308
      %v437 = vunpack.c.l.b16 %v309
      %v438 = vunpack.c.l.b16 %v310
      %v439 = vunpack.c.l.b16 %v311
      %v440 = vpack.c.b16 %v425, %v424
      %v441 = vpack.c.b16 %v427, %v426
      %v442 = vpack.c.b16 %v429, %v428
      %v443 = vpack.c.b16 %v431, %v430
      %v444 = vpack.c.b16 %v433, %v432
      %v445 = vpack.c.b16 %v435, %v434
      %v446 = vpack.c.b16 %v437, %v436
      %v447 = vpack.c.b16 %v439, %v438
      %456 = vmatprep.subr.bf16.mxu0 0
      %457 = vmatpush1.bf16.msra.mxu0 %v440
      %458 = vmatprep.subr.bf16.mxu0 0
      %459 = vmatpush1.bf16.msra.mxu0 %v441
      %460 = vmatprep.subr.bf16.mxu0 0
      %461 = vmatpush1.bf16.msra.mxu0 %v442
      %462 = vmatprep.subr.bf16.mxu0 0
      %463 = vmatpush1.bf16.msra.mxu0 %v443
      %464 = vmatprep.subr.bf16.mxu0 0
      %465 = vmatpush1.bf16.msra.mxu0 %v444
      %466 = vmatprep.subr.bf16.mxu0 0
      %467 = vmatpush1.bf16.msra.mxu0 %v445
      %468 = vmatprep.subr.bf16.mxu0 0
      %469 = vmatpush1.bf16.msra.mxu0 %v446
      %470 = vmatprep.subr.bf16.mxu0 0
      %471 = vmatpush1.bf16.msra.mxu0 %v447
      %472 = vmatprep.subr.bf16.mxu0 0
      %473 = vmatpush1.bf16.msra.mxu0 0
      %474 = vmatprep.subr.bf16.mxu0 0
      %475 = vmatpush1.bf16.msra.mxu0 0
      %476 = vmatprep.subr.bf16.mxu0 0
      %477 = vmatpush1.bf16.msra.mxu0 0
      %478 = vmatprep.subr.bf16.mxu0 0
      %479 = vmatpush1.bf16.msra.mxu0 0
      %480 = vmatprep.subr.bf16.mxu0 0
      %481 = vmatpush1.bf16.msra.mxu0 0
      %482 = vmatprep.subr.bf16.mxu0 0
      %483 = vmatpush1.bf16.msra.mxu0 0
      %484 = vmatprep.subr.bf16.mxu0 0
      %485 = vmatpush1.bf16.msra.mxu0 0
      %486 = vmatprep.subr.bf16.mxu0 0
      %487 = vmatpush1.bf16.msra.mxu0 0
      %488 = vmatprep.mubr.bf16.mxu0 0
      %489 = vmatmul.mubr.bf16.gmra.mrb[0].mxu0 %v376
      %v490 = vpop.f32.mrb[0].mxu0
      %v491 = vadd.f32 0.0, %v490
      %v492 = vpop.f32.mrb[0].mxu0
      %v493 = vpop.f32.mrb[0].mxu0
      %v494 = vadd.f32 0.0, %v493
      %v495 = vpop.f32.mrb[0].mxu0
      %496 = vmatprep.mubr.bf16.mxu0 0
      %497 = vmatmul.mubr.bf16.gmra.mrb[0].mxu0 %v377
      %v498 = vpop.f32.mrb[0].mxu0
      %v499 = vadd.f32 0.0, %v498
      %v500 = vpop.f32.mrb[0].mxu0
      %v501 = vpop.f32.mrb[0].mxu0
      %v502 = vadd.f32 0.0, %v501
      %v503 = vpop.f32.mrb[0].mxu0
      %504 = vmatprep.mubr.bf16.mxu0 0
      %505 = vmatmul.mubr.bf16.gmra.mrb[0].mxu0 %v378
      %v506 = vpop.f32.mrb[0].mxu0
      %v507 = vadd.f32 0.0, %v506
      %v508 = vpop.f32.mrb[0].mxu0
      %v509 = vpop.f32.mrb[0].mxu0
      %v510 = vadd.f32 0.0, %v509
      %v511 = vpop.f32.mrb[0].mxu0
      %512 = vmatprep.mubr.bf16.mxu0 0
      %513 = vmatmul.mubr.bf16.gmra.mrb[0].mxu0 %v379
      %v514 = vpop.f32.mrb[0].mxu0
      %v515 = vadd.f32 0.0, %v514
      %v516 = vpop.f32.mrb[0].mxu0
      %v517 = vpop.f32.mrb[0].mxu0
      %v518 = vadd.f32 0.0, %v517
      %v519 = vpop.f32.mrb[0].mxu0
      %520 = vmatprep.mubr.bf16.mxu0 0
      %521 = vmatmul.mubr.bf16.gmra.mrb[0].mxu0 %v380
      %v522 = vpop.f32.mrb[0].mxu0
      %v523 = vadd.f32 0.0, %v522
      %v524 = vpop.f32.mrb[0].mxu0
      %v525 = vpop.f32.mrb[0].mxu0
      %v526 = vadd.f32 0.0, %v525
      %v527 = vpop.f32.mrb[0].mxu0
      %528 = vmatprep.mubr.bf16.mxu0 0
      %529 = vmatmul.mubr.bf16.gmra.mrb[0].mxu0 %v381
      %v530 = vpop.f32.mrb[0].mxu0
      %v531 = vadd.f32 0.0, %v530
      %v532 = vpop.f32.mrb[0].mxu0
      %v533 = vpop.f32.mrb[0].mxu0
      %v534 = vadd.f32 0.0, %v533
      %v535 = vpop.f32.mrb[0].mxu0
      %536 = vmatprep.mubr.bf16.mxu0 0
      %537 = vmatmul.mubr.bf16.gmra.mrb[0].mxu0 %v382
      %v538 = vpop.f32.mrb[0].mxu0
      %v539 = vadd.f32 0.0, %v538
      %v540 = vpop.f32.mrb[0].mxu0
      %v541 = vpop.f32.mrb[0].mxu0
      %v542 = vadd.f32 0.0, %v541
      %v543 = vpop.f32.mrb[0].mxu0
      %544 = vmatprep.mubr.bf16.mxu0 0
      %545 = vmatmul.mubr.bf16.gmra.mrb[0].mxu0 %v383
      %v546 = vpop.f32.mrb[0].mxu0
      %v547 = vadd.f32 0.0, %v546
      %v548 = vpop.f32.mrb[0].mxu0
      %v549 = vpop.f32.mrb[0].mxu0
      %v550 = vadd.f32 0.0, %v549
      %v551 = vpop.f32.mrb[0].mxu0
      %552 = vmatprep.mubr.bf16.mxu0 0
      %553 = vmatmul.mubr.bf16.gmra.mrb[0].mxu0 %v384
      %v554 = vpop.f32.mrb[0].mxu0
      %v555 = vadd.f32 0.0, %v554
      %v556 = vpop.f32.mrb[0].mxu0
      %v557 = vpop.f32.mrb[0].mxu0
      %v558 = vadd.f32 0.0, %v557
      %v559 = vpop.f32.mrb[0].mxu0
      %560 = vmatprep.mubr.bf16.mxu0 0
      %561 = vmatmul.mubr.bf16.gmra.mrb[0].mxu0 %v385
      %v562 = vpop.f32.mrb[0].mxu0
      %v563 = vadd.f32 0.0, %v562
      %v564 = vpop.f32.mrb[0].mxu0
      %v565 = vpop.f32.mrb[0].mxu0
      %v566 = vadd.f32 0.0, %v565
      %v567 = vpop.f32.mrb[0].mxu0
      %568 = vmatprep.mubr.bf16.mxu0 0
      %569 = vmatmul.mubr.bf16.gmra.mrb[0].mxu0 %v386
      %v570 = vpop.f32.mrb[0].mxu0
      %v571 = vadd.f32 0.0, %v570
      %v572 = vpop.f32.mrb[0].mxu0
      %v573 = vpop.f32.mrb[0].mxu0
      %v574 = vadd.f32 0.0, %v573
      %v575 = vpop.f32.mrb[0].mxu0
      %576 = vmatprep.mubr.bf16.mxu0 0
      %577 = vmatmul.mubr.bf16.gmra.mrb[0].mxu0 %v387
      %v578 = vpop.f32.mrb[0].mxu0
      %v579 = vadd.f32 0.0, %v578
      %v580 = vpop.f32.mrb[0].mxu0
      %v581 = vpop.f32.mrb[0].mxu0
      %v582 = vadd.f32 0.0, %v581
      %v583 = vpop.f32.mrb[0].mxu0
      %584 = vmatprep.mubr.bf16.mxu0 0
      %585 = vmatmul.mubr.bf16.gmra.mrb[0].mxu0 %v388
      %v586 = vpop.f32.mrb[0].mxu0
      %v587 = vadd.f32 0.0, %v586
      %v588 = vpop.f32.mrb[0].mxu0
      %v589 = vpop.f32.mrb[0].mxu0
      %v590 = vadd.f32 0.0, %v589
      %v591 = vpop.f32.mrb[0].mxu0
      %592 = vmatprep.mubr.bf16.mxu0 0
      %593 = vmatmul.mubr.bf16.gmra.mrb[0].mxu0 %v389
      %v594 = vpop.f32.mrb[0].mxu0
      %v595 = vadd.f32 0.0, %v594
      %v596 = vpop.f32.mrb[0].mxu0
      %v597 = vpop.f32.mrb[0].mxu0
      %v598 = vadd.f32 0.0, %v597
      %v599 = vpop.f32.mrb[0].mxu0
      %600 = vmatprep.mubr.bf16.mxu0 0
      %601 = vmatmul.mubr.bf16.gmra.mrb[0].mxu0 %v390
      %v602 = vpop.f32.mrb[0].mxu0
      %v603 = vadd.f32 0.0, %v602
      %v604 = vpop.f32.mrb[0].mxu0
      %v605 = vpop.f32.mrb[0].mxu0
      %v606 = vadd.f32 0.0, %v605
      %v607 = vpop.f32.mrb[0].mxu0
      %608 = vmatprep.mubr.bf16.mxu0 0
      %609 = vmatmul.mubr.bf16.gmra.mrb[0].mxu0 %v391
      %v610 = vpop.f32.mrb[0].mxu0
      %v611 = vadd.f32 0.0, %v610
      %v612 = vpop.f32.mrb[0].mxu0
      %v613 = vpop.f32.mrb[0].mxu0
      %v614 = vadd.f32 0.0, %v613
      %v615 = vpop.f32.mrb[0].mxu0
      %616 = vdwg.mxu0
      %617 = vst [vmem:[#allocation2] sm:$0xff] %v491
      %618 = vst [vmem:[#allocation2 + $0x8] sm:$0xff] %v494
      %619 = vst [vmem:[#allocation2 + $0x10] sm:$0xff] %v499
      %620 = vst [vmem:[#allocation2 + $0x18] sm:$0xff] %v502
      %621 = vst [vmem:[#allocation2 + $0x20] sm:$0xff] %v507
      %622 = vst [vmem:[#allocation2 + $0x28] sm:$0xff] %v510
      %623 = vst [vmem:[#allocation2 + $0x30] sm:$0xff] %v515
      %624 = vst [vmem:[#allocation2 + $0x38] sm:$0xff] %v518
      %625 = vst [vmem:[#allocation2 + $0x40] sm:$0xff] %v523
      %626 = vst [vmem:[#allocation2 + $0x48] sm:$0xff] %v526
      %627 = vst [vmem:[#allocation2 + $0x50] sm:$0xff] %v531
      %628 = vst [vmem:[#allocation2 + $0x58] sm:$0xff] %v534
      %629 = vst [vmem:[#allocation2 + $0x60] sm:$0xff] %v539
      %630 = vst [vmem:[#allocation2 + $0x68] sm:$0xff] %v542
      %631 = vst [vmem:[#allocation2 + $0x70] sm:$0xff] %v547
      %632 = vst [vmem:[#allocation2 + $0x78] sm:$0xff] %v550
      %633 = vst [vmem:[#allocation2 + $0x80] sm:$0xff] %v555
      %634 = vst [vmem:[#allocation2 + $0x88] sm:$0xff] %v558
      %635 = vst [vmem:[#allocation2 + $0x90] sm:$0xff] %v563
      %636 = vst [vmem:[#allocation2 + $0x98] sm:$0xff] %v566
      %637 = vst [vmem:[#allocation2 + $0xa0] sm:$0xff] %v571
      %638 = vst [vmem:[#allocation2 + $0xa8] sm:$0xff] %v574
      %639 = vst [vmem:[#allocation2 + $0xb0] sm:$0xff] %v579
      %640 = vst [vmem:[#allocation2 + $0xb8] sm:$0xff] %v582
      %641 = vst [vmem:[#allocation2 + $0xc0] sm:$0xff] %v587
      %642 = vst [vmem:[#allocation2 + $0xc8] sm:$0xff] %v590
      %643 = vst [vmem:[#allocation2 + $0xd0] sm:$0xff] %v595
      %644 = vst [vmem:[#allocation2 + $0xd8] sm:$0xff] %v598
      %645 = vst [vmem:[#allocation2 + $0xe0] sm:$0xff] %v603
      %646 = vst [vmem:[#allocation2 + $0xe8] sm:$0xff] %v606
      %647 = vst [vmem:[#allocation2 + $0xf0] sm:$0xff] %v611
      %648 = vst [vmem:[#allocation2 + $0xf8] sm:$0xff] %v614
      %v649 = vld [vmem:[%s244] sm:$0xf]
      %v650 = vld [vmem:[%s244 + $0x4] sm:$0xf]
      %v651 = vld [vmem:[%s244 + $0x8] sm:$0x1]
      %v652 = vld [vmem:[%s244 + $0xc] sm:$0xf]
      %v653 = vld [vmem:[%s244 + $0x10] sm:$0xf]
      %v654 = vld [vmem:[%s244 + $0x14] sm:$0x1]
      %v655 = vld [vmem:[%s244 + $0x18] sm:$0xf]
      %v656 = vld [vmem:[%s244 + $0x1c] sm:$0xf]
      %v657 = vld [vmem:[%s244 + $0x20] sm:$0x1]
      %v658 = vld [vmem:[%s244 + $0x24] sm:$0xf]
      %v659 = vld [vmem:[%s244 + $0x28] sm:$0xf]
      %v660 = vld [vmem:[%s244 + $0x2c] sm:$0x1]
      %v661 = vld [vmem:[%s244 + $0x30] sm:$0xf]
      %v662 = vld [vmem:[%s244 + $0x34] sm:$0xf]
      %v663 = vld [vmem:[%s244 + $0x38] sm:$0x1]
      %v664 = vld [vmem:[%s244 + $0x3c] sm:$0xf]
      %v665 = vld [vmem:[%s244 + $0x40] sm:$0xf]
      %v666 = vld [vmem:[%s244 + $0x44] sm:$0x1]
      %v667 = vld [vmem:[%s244 + $0x48] sm:$0xf]
      %v668 = vld [vmem:[%s244 + $0x4c] sm:$0xf]
      %v669 = vld [vmem:[%s244 + $0x50] sm:$0x1]
      %v670 = vld [vmem:[%s244 + $0x54] sm:$0xf]
      %v671 = vld [vmem:[%s244 + $0x58] sm:$0xf]
      %v672 = vld [vmem:[%s244 + $0x5c] sm:$0x1]
      %v673 = vld [vmem:[%s244 + $0x60] sm:$0xf]
      %v674 = vld [vmem:[%s244 + $0x64] sm:$0xf]
      %v675 = vld [vmem:[%s244 + $0x68] sm:$0x1]
      %v676 = vld [vmem:[%s244 + $0x6c] sm:$0xf]
      %v677 = vld [vmem:[%s244 + $0x70] sm:$0xf]
      %v678 = vld [vmem:[%s244 + $0x74] sm:$0x1]
      %v679 = vld [vmem:[%s244 + $0x78] sm:$0xf]
      %v680 = vld [vmem:[%s244 + $0x7c] sm:$0xf]
      %v681 = vld [vmem:[%s244 + $0x80] sm:$0x1]
      %v682 = vld [vmem:[%s244 + $0x84] sm:$0xf]
      %v683 = vld [vmem:[%s244 + $0x88] sm:$0xf]
      %v684 = vld [vmem:[%s244 + $0x8c] sm:$0x1]
      %v685 = vld [vmem:[%s244 + $0x90] sm:$0xf]
      %v686 = vld [vmem:[%s244 + $0x94] sm:$0xf]
      %v687 = vld [vmem:[%s244 + $0x98] sm:$0x1]
      %v688 = vld [vmem:[%s244 + $0x9c] sm:$0xf]
      %v689 = vld [vmem:[%s244 + $0xa0] sm:$0xf]
      %v690 = vld [vmem:[%s244 + $0xa4] sm:$0x1]
      %v691 = vld [vmem:[%s244 + $0xa8] sm:$0xf]
      %v692 = vld [vmem:[%s244 + $0xac] sm:$0xf]
      %v693 = vld [vmem:[%s244 + $0xb0] sm:$0x1]
      %v694 = vld [vmem:[%s244 + $0xb4] sm:$0xf]
      %v695 = vld [vmem:[%s244 + $0xb8] sm:$0xf]
      %v696 = vld [vmem:[%s244 + $0xbc] sm:$0x1]
      %vm697 = vsmask.f32 3328
      %vm698 = vsmask.f32 7440
      %vm699 = vmor %vm697, %vm698
      %v701 = vshrl.u32 %v649, 16
      %v703 = vrot.slane %v701, 4
      %v704 = vshll.u32 %v649, 16
      %v706 = vrot.slane %v704, 5
      %v707 = vor.u32 %v703, %v706
      %v708 = vrot.slane %v707, 4
      %v710 = vshll.u32 %v650, 16
      %v712 = vrot.slane %v710, 5
      %v713 = vsel %vm699, %v708, %v712
      %v714 = vshrl.u32 %v650, 16
      %v716 = vrot.slane %v714, 4
      %v717 = vor.u32 %v716, %v712
      %v718 = vrot.slane %v717, 4
      %v720 = vshll.u32 %v651, 16
      %v722 = vrot.slane %v720, 5
      %v723 = vsel %vm699, %v718, %v722
      %v725 = vshrl.u32 %v652, 16
      %v727 = vrot.slane %v725, 4
      %v728 = vshll.u32 %v652, 16
      %v730 = vrot.slane %v728, 5
      %v731 = vor.u32 %v727, %v730
      %v732 = vrot.slane %v731, 4
      %v734 = vshll.u32 %v653, 16
      %v736 = vrot.slane %v734, 5
      %v737 = vsel %vm699, %v732, %v736
      %v738 = vshrl.u32 %v653, 16
      %v740 = vrot.slane %v738, 4
      %v741 = vor.u32 %v740, %v736
      %v742 = vrot.slane %v741, 4
      %v744 = vshll.u32 %v654, 16
      %v746 = vrot.slane %v744, 5
      %v747 = vsel %vm699, %v742, %v746
      %v749 = vshrl.u32 %v655, 16
      %v751 = vrot.slane %v749, 4
      %v752 = vshll.u32 %v655, 16
      %v754 = vrot.slane %v752, 5
      %v755 = vor.u32 %v751, %v754
      %v756 = vrot.slane %v755, 4
      %v758 = vshll.u32 %v656, 16
      %v760 = vrot.slane %v758, 5
      %v761 = vsel %vm699, %v756, %v760
      %v762 = vshrl.u32 %v656, 16
      %v764 = vrot.slane %v762, 4
      %v765 = vor.u32 %v764, %v760
      %v766 = vrot.slane %v765, 4
      %v768 = vshll.u32 %v657, 16
      %v770 = vrot.slane %v768, 5
      %v771 = vsel %vm699, %v766, %v770
      %v773 = vshrl.u32 %v658, 16
      %v775 = vrot.slane %v773, 4
      %v776 = vshll.u32 %v658, 16
      %v778 = vrot.slane %v776, 5
      %v779 = vor.u32 %v775, %v778
      %v780 = vrot.slane %v779, 4
      %v782 = vshll.u32 %v659, 16
      %v784 = vrot.slane %v782, 5
      %v785 = vsel %vm699, %v780, %v784
      %v786 = vshrl.u32 %v659, 16
      %v788 = vrot.slane %v786, 4
      %v789 = vor.u32 %v788, %v784
      %v790 = vrot.slane %v789, 4
      %v792 = vshll.u32 %v660, 16
      %v794 = vrot.slane %v792, 5
      %v795 = vsel %vm699, %v790, %v794
      %v797 = vshrl.u32 %v661, 16
      %v799 = vrot.slane %v797, 4
      %v800 = vshll.u32 %v661, 16
      %v802 = vrot.slane %v800, 5
      %v803 = vor.u32 %v799, %v802
      %v804 = vrot.slane %v803, 4
      %v806 = vshll.u32 %v662, 16
      %v808 = vrot.slane %v806, 5
      %v809 = vsel %vm699, %v804, %v808
      %v810 = vshrl.u32 %v662, 16
      %v812 = vrot.slane %v810, 4
      %v813 = vor.u32 %v812, %v808
      %v814 = vrot.slane %v813, 4
      %v816 = vshll.u32 %v663, 16
      %v818 = vrot.slane %v816, 5
      %v819 = vsel %vm699, %v814, %v818
      %v821 = vshrl.u32 %v664, 16
      %v823 = vrot.slane %v821, 4
      %v824 = vshll.u32 %v664, 16
      %v826 = vrot.slane %v824, 5
      %v827 = vor.u32 %v823, %v826
      %v828 = vrot.slane %v827, 4
      %v830 = vshll.u32 %v665, 16
      %v832 = vrot.slane %v830, 5
      %v833 = vsel %vm699, %v828, %v832
      %v834 = vshrl.u32 %v665, 16
      %v836 = vrot.slane %v834, 4
      %v837 = vor.u32 %v836, %v832
      %v838 = vrot.slane %v837, 4
      %v840 = vshll.u32 %v666, 16
      %v842 = vrot.slane %v840, 5
      %v843 = vsel %vm699, %v838, %v842
      %v845 = vshrl.u32 %v667, 16
      %v847 = vrot.slane %v845, 4
      %v848 = vshll.u32 %v667, 16
      %v850 = vrot.slane %v848, 5
      %v851 = vor.u32 %v847, %v850
      %v852 = vrot.slane %v851, 4
      %v854 = vshll.u32 %v668, 16
      %v856 = vrot.slane %v854, 5
      %v857 = vsel %vm699, %v852, %v856
      %v858 = vshrl.u32 %v668, 16
      %v860 = vrot.slane %v858, 4
      %v861 = vor.u32 %v860, %v856
      %v862 = vrot.slane %v861, 4
      %v864 = vshll.u32 %v669, 16
      %v866 = vrot.slane %v864, 5
      %v867 = vsel %vm699, %v862, %v866
      %v869 = vshrl.u32 %v670, 16
      %v871 = vrot.slane %v869, 4
      %v872 = vshll.u32 %v670, 16
      %v874 = vrot.slane %v872, 5
      %v875 = vor.u32 %v871, %v874
      %v876 = vrot.slane %v875, 4
      %v878 = vshll.u32 %v671, 16
      %v880 = vrot.slane %v878, 5
      %v881 = vsel %vm699, %v876, %v880
      %v882 = vshrl.u32 %v671, 16
      %v884 = vrot.slane %v882, 4
      %v885 = vor.u32 %v884, %v880
      %v886 = vrot.slane %v885, 4
      %v888 = vshll.u32 %v672, 16
      %v890 = vrot.slane %v888, 5
      %v891 = vsel %vm699, %v886, %v890
      %v893 = vshrl.u32 %v673, 16
      %v895 = vrot.slane %v893, 4
      %v896 = vshll.u32 %v673, 16
      %v898 = vrot.slane %v896, 5
      %v899 = vor.u32 %v895, %v898
      %v900 = vrot.slane %v899, 4
      %v902 = vshll.u32 %v674, 16
      %v904 = vrot.slane %v902, 5
      %v905 = vsel %vm699, %v900, %v904
      %v906 = vshrl.u32 %v674, 16
      %v908 = vrot.slane %v906, 4
      %v909 = vor.u32 %v908, %v904
      %v910 = vrot.slane %v909, 4
      %v912 = vshll.u32 %v675, 16
      %v914 = vrot.slane %v912, 5
      %v915 = vsel %vm699, %v910, %v914
      %v917 = vshrl.u32 %v676, 16
      %v919 = vrot.slane %v917, 4
      %v920 = vshll.u32 %v676, 16
      %v922 = vrot.slane %v920, 5
      %v923 = vor.u32 %v919, %v922
      %v924 = vrot.slane %v923, 4
      %v926 = vshll.u32 %v677, 16
      %v928 = vrot.slane %v926, 5
      %v929 = vsel %vm699, %v924, %v928
      %v930 = vshrl.u32 %v677, 16
      %v932 = vrot.slane %v930, 4
      %v933 = vor.u32 %v932, %v928
      %v934 = vrot.slane %v933, 4
      %v936 = vshll.u32 %v678, 16
      %v938 = vrot.slane %v936, 5
      %v939 = vsel %vm699, %v934, %v938
      %v941 = vshrl.u32 %v679, 16
      %v943 = vrot.slane %v941, 4
      %v944 = vshll.u32 %v679, 16
      %v946 = vrot.slane %v944, 5
      %v947 = vor.u32 %v943, %v946
      %v948 = vrot.slane %v947, 4
      %v950 = vshll.u32 %v680, 16
      %v952 = vrot.slane %v950, 5
      %v953 = vsel %vm699, %v948, %v952
      %v954 = vshrl.u32 %v680, 16
      %v956 = vrot.slane %v954, 4
      %v957 = vor.u32 %v956, %v952
      %v958 = vrot.slane %v957, 4
      %v960 = vshll.u32 %v681, 16
      %v962 = vrot.slane %v960, 5
      %v963 = vsel %vm699, %v958, %v962
      %v965 = vshrl.u32 %v682, 16
      %v967 = vrot.slane %v965, 4
      %v968 = vshll.u32 %v682, 16
      %v970 = vrot.slane %v968, 5
      %v971 = vor.u32 %v967, %v970
      %v972 = vrot.slane %v971, 4
      %v974 = vshll.u32 %v683, 16
      %v976 = vrot.slane %v974, 5
      %v977 = vsel %vm699, %v972, %v976
      %v978 = vshrl.u32 %v683, 16
      %v980 = vrot.slane %v978, 4
      %v981 = vor.u32 %v980, %v976
      %v982 = vrot.slane %v981, 4
      %v984 = vshll.u32 %v684, 16
      %v986 = vrot.slane %v984, 5
      %v987 = vsel %vm699, %v982, %v986
      %v989 = vshrl.u32 %v685, 16
      %v991 = vrot.slane %v989, 4
      %v992 = vshll.u32 %v685, 16
      %v994 = vrot.slane %v992, 5
      %v995 = vor.u32 %v991, %v994
      %v996 = vrot.slane %v995, 4
      %v998 = vshll.u32 %v686, 16
      %v1000 = vrot.slane %v998, 5
      %v1001 = vsel %vm699, %v996, %v1000
      %v1002 = vshrl.u32 %v686, 16
      %v1004 = vrot.slane %v1002, 4
      %v1005 = vor.u32 %v1004, %v1000
      %v1006 = vrot.slane %v1005, 4
      %v1008 = vshll.u32 %v687, 16
      %v1010 = vrot.slane %v1008, 5
      %v1011 = vsel %vm699, %v1006, %v1010
      %v1013 = vshrl.u32 %v688, 16
      %v1015 = vrot.slane %v1013, 4
      %v1016 = vshll.u32 %v688, 16
      %v1018 = vrot.slane %v1016, 5
      %v1019 = vor.u32 %v1015, %v1018
      %v1020 = vrot.slane %v1019, 4
      %v1022 = vshll.u32 %v689, 16
      %v1024 = vrot.slane %v1022, 5
      %v1025 = vsel %vm699, %v1020, %v1024
      %v1026 = vshrl.u32 %v689, 16
      %v1028 = vrot.slane %v1026, 4
      %v1029 = vor.u32 %v1028, %v1024
      %v1030 = vrot.slane %v1029, 4
      %v1032 = vshll.u32 %v690, 16
      %v1034 = vrot.slane %v1032, 5
      %v1035 = vsel %vm699, %v1030, %v1034
      %v1037 = vshrl.u32 %v691, 16
      %v1039 = vrot.slane %v1037, 4
      %v1040 = vshll.u32 %v691, 16
      %v1042 = vrot.slane %v1040, 5
      %v1043 = vor.u32 %v1039, %v1042
      %v1044 = vrot.slane %v1043, 4
      %v1046 = vshll.u32 %v692, 16
      %v1048 = vrot.slane %v1046, 5
      %v1049 = vsel %vm699, %v1044, %v1048
      %v1050 = vshrl.u32 %v692, 16
      %v1052 = vrot.slane %v1050, 4
      %v1053 = vor.u32 %v1052, %v1048
      %v1054 = vrot.slane %v1053, 4
      %v1056 = vshll.u32 %v693, 16
      %v1058 = vrot.slane %v1056, 5
      %v1059 = vsel %vm699, %v1054, %v1058
      %v1061 = vshrl.u32 %v694, 16
      %v1063 = vrot.slane %v1061, 4
      %v1064 = vshll.u32 %v694, 16
      %v1066 = vrot.slane %v1064, 5
      %v1067 = vor.u32 %v1063, %v1066
      %v1068 = vrot.slane %v1067, 4
      %v1070 = vshll.u32 %v695, 16
      %v1072 = vrot.slane %v1070, 5
      %v1073 = vsel %vm699, %v1068, %v1072
      %v1074 = vshrl.u32 %v695, 16
      %v1076 = vrot.slane %v1074, 4
      %v1077 = vor.u32 %v1076, %v1072
      %v1078 = vrot.slane %v1077, 4
      %v1080 = vshll.u32 %v696, 16
      %v1082 = vrot.slane %v1080, 5
      %v1083 = vsel %vm699, %v1078, %v1082
      %s1084 = scalar_lea.vmem %s248, 64
      %v1085 = vld [vmem:[%s1084] sm:$0xf]
      %v1086 = vld [vmem:[%s1084 + $0x4] sm:$0xf]
      %v1087 = vld [vmem:[%s1084 + $0x8] sm:$0xf]
      %v1088 = vld [vmem:[%s1084 + $0xc] sm:$0xf]
      %v1089 = vld [vmem:[%s1084 + $0x10] sm:$0xf]
      %v1090 = vld [vmem:[%s1084 + $0x14] sm:$0xf]
      %v1091 = vld [vmem:[%s1084 + $0x18] sm:$0xf]
      %v1092 = vld [vmem:[%s1084 + $0x1c] sm:$0xf]
      %v1093 = vld [vmem:[%s1084 + $0x20] sm:$0xf]
      %v1094 = vld [vmem:[%s1084 + $0x24] sm:$0xf]
      %v1095 = vld [vmem:[%s1084 + $0x28] sm:$0xf]
      %v1096 = vld [vmem:[%s1084 + $0x2c] sm:$0xf]
      %v1097 = vld [vmem:[%s1084 + $0x30] sm:$0xf]
      %v1098 = vld [vmem:[%s1084 + $0x34] sm:$0xf]
      %v1099 = vld [vmem:[%s1084 + $0x38] sm:$0xf]
      %v1100 = vld [vmem:[%s1084 + $0x3c] sm:$0xf]
      %v1101 = vunpack.c.l.b16 %v713
      %v1102 = vunpack.c.l.b16 %v723
      %v1103 = vunpack.c.l.b16 %v737
      %v1104 = vunpack.c.l.b16 %v747
      %v1105 = vunpack.c.l.b16 %v761
      %v1106 = vunpack.c.l.b16 %v771
      %v1107 = vunpack.c.l.b16 %v785
      %v1108 = vunpack.c.l.b16 %v795
      %v1109 = vunpack.c.l.b16 %v809
      %v1110 = vunpack.c.l.b16 %v819
      %v1111 = vunpack.c.l.b16 %v833
      %v1112 = vunpack.c.l.b16 %v843
      %v1113 = vunpack.c.l.b16 %v857
      %v1114 = vunpack.c.l.b16 %v867
      %v1115 = vunpack.c.l.b16 %v881
      %v1116 = vunpack.c.l.b16 %v891
      %v1117 = vunpack.c.l.b16 %v905
      %v1118 = vunpack.c.l.b16 %v915
      %v1119 = vunpack.c.l.b16 %v929
      %v1120 = vunpack.c.l.b16 %v939
      %v1121 = vunpack.c.l.b16 %v953
      %v1122 = vunpack.c.l.b16 %v963
      %v1123 = vunpack.c.l.b16 %v977
      %v1124 = vunpack.c.l.b16 %v987
      %v1125 = vunpack.c.l.b16 %v1001
      %v1126 = vunpack.c.l.b16 %v1011
      %v1127 = vunpack.c.l.b16 %v1025
      %v1128 = vunpack.c.l.b16 %v1035
      %v1129 = vunpack.c.l.b16 %v1049
      %v1130 = vunpack.c.l.b16 %v1059
      %v1131 = vunpack.c.l.b16 %v1073
      %v1132 = vunpack.c.l.b16 %v1083
      %v1133 = vpack.c.b16 %v1102, %v1101
      %v1134 = vpack.c.b16 %v1104, %v1103
      %v1135 = vpack.c.b16 %v1106, %v1105
      %v1136 = vpack.c.b16 %v1108, %v1107
      %v1137 = vpack.c.b16 %v1110, %v1109
      %v1138 = vpack.c.b16 %v1112, %v1111
      %v1139 = vpack.c.b16 %v1114, %v1113
      %v1140 = vpack.c.b16 %v1116, %v1115
      %v1141 = vpack.c.b16 %v1118, %v1117
      %v1142 = vpack.c.b16 %v1120, %v1119
      %v1143 = vpack.c.b16 %v1122, %v1121
      %v1144 = vpack.c.b16 %v1124, %v1123
      %v1145 = vpack.c.b16 %v1126, %v1125
      %v1146 = vpack.c.b16 %v1128, %v1127
      %v1147 = vpack.c.b16 %v1130, %v1129
      %v1148 = vpack.c.b16 %v1132, %v1131
      %v1181 = vunpack.c.l.b16 %v1085
      %v1182 = vunpack.c.l.b16 %v1086
      %v1183 = vunpack.c.l.b16 %v1087
      %v1184 = vunpack.c.l.b16 %v1088
      %v1185 = vunpack.c.l.b16 %v1089
      %v1186 = vunpack.c.l.b16 %v1090
      %v1187 = vunpack.c.l.b16 %v1091
      %v1188 = vunpack.c.l.b16 %v1092
      %v1189 = vunpack.c.l.b16 %v1093
      %v1190 = vunpack.c.l.b16 %v1094
      %v1191 = vunpack.c.l.b16 %v1095
      %v1192 = vunpack.c.l.b16 %v1096
      %v1193 = vunpack.c.l.b16 %v1097
      %v1194 = vunpack.c.l.b16 %v1098
      %v1195 = vunpack.c.l.b16 %v1099
      %v1196 = vunpack.c.l.b16 %v1100
      %v1197 = vpack.c.b16 %v1182, %v1181
      %v1198 = vpack.c.b16 %v1184, %v1183
      %v1199 = vpack.c.b16 %v1186, %v1185
      %v1200 = vpack.c.b16 %v1188, %v1187
      %v1201 = vpack.c.b16 %v1190, %v1189
      %v1202 = vpack.c.b16 %v1192, %v1191
      %v1203 = vpack.c.b16 %v1194, %v1193
      %v1204 = vpack.c.b16 %v1196, %v1195
      %1213 = vmatprep.subr.bf16.mxu0 0
      %1214 = vmatpush1.bf16.msra.mxu0 %v1197
      %1215 = vmatprep.subr.bf16.mxu0 0
      %1216 = vmatpush1.bf16.msra.mxu0 %v1198
      %1217 = vmatprep.subr.bf16.mxu0 0
      %1218 = vmatpush1.bf16.msra.mxu0 %v1199
      %1219 = vmatprep.subr.bf16.mxu0 0
      %1220 = vmatpush1.bf16.msra.mxu0 %v1200
      %1221 = vmatprep.subr.bf16.mxu0 0
      %1222 = vmatpush1.bf16.msra.mxu0 %v1201
      %1223 = vmatprep.subr.bf16.mxu0 0
      %1224 = vmatpush1.bf16.msra.mxu0 %v1202
      %1225 = vmatprep.subr.bf16.mxu0 0
      %1226 = vmatpush1.bf16.msra.mxu0 %v1203
      %1227 = vmatprep.subr.bf16.mxu0 0
      %1228 = vmatpush1.bf16.msra.mxu0 %v1204
      %1229 = vmatprep.subr.bf16.mxu0 0
      %1230 = vmatpush1.bf16.msra.mxu0 0
      %1231 = vmatprep.subr.bf16.mxu0 0
      %1232 = vmatpush1.bf16.msra.mxu0 0
      %1233 = vmatprep.subr.bf16.mxu0 0
      %1234 = vmatpush1.bf16.msra.mxu0 0
      %1235 = vmatprep.subr.bf16.mxu0 0
      %1236 = vmatpush1.bf16.msra.mxu0 0
      %1237 = vmatprep.subr.bf16.mxu0 0
      %1238 = vmatpush1.bf16.msra.mxu0 0
      %1239 = vmatprep.subr.bf16.mxu0 0
      %1240 = vmatpush1.bf16.msra.mxu0 0
      %1241 = vmatprep.subr.bf16.mxu0 0
      %1242 = vmatpush1.bf16.msra.mxu0 0
      %1243 = vmatprep.subr.bf16.mxu0 0
      %1244 = vmatpush1.bf16.msra.mxu0 0
      %1245 = vmatprep.mubr.bf16.mxu0 0
      %1246 = vmatmul.mubr.bf16.gmra.mrb[0].mxu0 %v1133
      %v1247 = vpop.f32.mrb[0].mxu0
      %v1248 = vadd.f32 0.0, %v1247
      %v1249 = vpop.f32.mrb[0].mxu0
      %v1250 = vpop.f32.mrb[0].mxu0
      %v1251 = vadd.f32 0.0, %v1250
      %v1252 = vpop.f32.mrb[0].mxu0
      %1253 = vmatprep.mubr.bf16.mxu0 0
      %1254 = vmatmul.mubr.bf16.gmra.mrb[0].mxu0 %v1134
      %v1255 = vpop.f32.mrb[0].mxu0
      %v1256 = vadd.f32 0.0, %v1255
      %v1257 = vpop.f32.mrb[0].mxu0
      %v1258 = vpop.f32.mrb[0].mxu0
      %v1259 = vadd.f32 0.0, %v1258
      %v1260 = vpop.f32.mrb[0].mxu0
      %1261 = vmatprep.mubr.bf16.mxu0 0
      %1262 = vmatmul.mubr.bf16.gmra.mrb[0].mxu0 %v1135
      %v1263 = vpop.f32.mrb[0].mxu0
      %v1264 = vadd.f32 0.0, %v1263
      %v1265 = vpop.f32.mrb[0].mxu0
      %v1266 = vpop.f32.mrb[0].mxu0
      %v1267 = vadd.f32 0.0, %v1266
      %v1268 = vpop.f32.mrb[0].mxu0
      %1269 = vmatprep.mubr.bf16.mxu0 0
      %1270 = vmatmul.mubr.bf16.gmra.mrb[0].mxu0 %v1136
      %v1271 = vpop.f32.mrb[0].mxu0
      %v1272 = vadd.f32 0.0, %v1271
      %v1273 = vpop.f32.mrb[0].mxu0
      %v1274 = vpop.f32.mrb[0].mxu0
      %v1275 = vadd.f32 0.0, %v1274
      %v1276 = vpop.f32.mrb[0].mxu0
      %1277 = vmatprep.mubr.bf16.mxu0 0
      %1278 = vmatmul.mubr.bf16.gmra.mrb[0].mxu0 %v1137
      %v1279 = vpop.f32.mrb[0].mxu0
      %v1280 = vadd.f32 0.0, %v1279
      %v1281 = vpop.f32.mrb[0].mxu0
      %v1282 = vpop.f32.mrb[0].mxu0
      %v1283 = vadd.f32 0.0, %v1282
      %v1284 = vpop.f32.mrb[0].mxu0
      %1285 = vmatprep.mubr.bf16.mxu0 0
      %1286 = vmatmul.mubr.bf16.gmra.mrb[0].mxu0 %v1138
      %v1287 = vpop.f32.mrb[0].mxu0
      %v1288 = vadd.f32 0.0, %v1287
      %v1289 = vpop.f32.mrb[0].mxu0
      %v1290 = vpop.f32.mrb[0].mxu0
      %v1291 = vadd.f32 0.0, %v1290
      %v1292 = vpop.f32.mrb[0].mxu0
      %1293 = vmatprep.mubr.bf16.mxu0 0
      %1294 = vmatmul.mubr.bf16.gmra.mrb[0].mxu0 %v1139
      %v1295 = vpop.f32.mrb[0].mxu0
      %v1296 = vadd.f32 0.0, %v1295
      %v1297 = vpop.f32.mrb[0].mxu0
      %v1298 = vpop.f32.mrb[0].mxu0
      %v1299 = vadd.f32 0.0, %v1298
      %v1300 = vpop.f32.mrb[0].mxu0
      %1301 = vmatprep.mubr.bf16.mxu0 0
      %1302 = vmatmul.mubr.bf16.gmra.mrb[0].mxu0 %v1140
      %v1303 = vpop.f32.mrb[0].mxu0
      %v1304 = vadd.f32 0.0, %v1303
      %v1305 = vpop.f32.mrb[0].mxu0
      %v1306 = vpop.f32.mrb[0].mxu0
      %v1307 = vadd.f32 0.0, %v1306
      %v1308 = vpop.f32.mrb[0].mxu0
      %1309 = vmatprep.mubr.bf16.mxu0 0
      %1310 = vmatmul.mubr.bf16.gmra.mrb[0].mxu0 %v1141
      %v1311 = vpop.f32.mrb[0].mxu0
      %v1312 = vadd.f32 0.0, %v1311
      %v1313 = vpop.f32.mrb[0].mxu0
      %v1314 = vpop.f32.mrb[0].mxu0
      %v1315 = vadd.f32 0.0, %v1314
      %v1316 = vpop.f32.mrb[0].mxu0
      %1317 = vmatprep.mubr.bf16.mxu0 0
      %1318 = vmatmul.mubr.bf16.gmra.mrb[0].mxu0 %v1142
      %v1319 = vpop.f32.mrb[0].mxu0
      %v1320 = vadd.f32 0.0, %v1319
      %v1321 = vpop.f32.mrb[0].mxu0
      %v1322 = vpop.f32.mrb[0].mxu0
      %v1323 = vadd.f32 0.0, %v1322
      %v1324 = vpop.f32.mrb[0].mxu0
      %1325 = vmatprep.mubr.bf16.mxu0 0
      %1326 = vmatmul.mubr.bf16.gmra.mrb[0].mxu0 %v1143
      %v1327 = vpop.f32.mrb[0].mxu0
      %v1328 = vadd.f32 0.0, %v1327
      %v1329 = vpop.f32.mrb[0].mxu0
      %v1330 = vpop.f32.mrb[0].mxu0
      %v1331 = vadd.f32 0.0, %v1330
      %v1332 = vpop.f32.mrb[0].mxu0
      %1333 = vmatprep.mubr.bf16.mxu0 0
      %1334 = vmatmul.mubr.bf16.gmra.mrb[0].mxu0 %v1144
      %v1335 = vpop.f32.mrb[0].mxu0
      %v1336 = vadd.f32 0.0, %v1335
      %v1337 = vpop.f32.mrb[0].mxu0
      %v1338 = vpop.f32.mrb[0].mxu0
      %v1339 = vadd.f32 0.0, %v1338
      %v1340 = vpop.f32.mrb[0].mxu0
      %1341 = vmatprep.mubr.bf16.mxu0 0
      %1342 = vmatmul.mubr.bf16.gmra.mrb[0].mxu0 %v1145
      %v1343 = vpop.f32.mrb[0].mxu0
      %v1344 = vadd.f32 0.0, %v1343
      %v1345 = vpop.f32.mrb[0].mxu0
      %v1346 = vpop.f32.mrb[0].mxu0
      %v1347 = vadd.f32 0.0, %v1346
      %v1348 = vpop.f32.mrb[0].mxu0
      %1349 = vmatprep.mubr.bf16.mxu0 0
      %1350 = vmatmul.mubr.bf16.gmra.mrb[0].mxu0 %v1146
      %v1351 = vpop.f32.mrb[0].mxu0
      %v1352 = vadd.f32 0.0, %v1351
      %v1353 = vpop.f32.mrb[0].mxu0
      %v1354 = vpop.f32.mrb[0].mxu0
      %v1355 = vadd.f32 0.0, %v1354
      %v1356 = vpop.f32.mrb[0].mxu0
      %1357 = vmatprep.mubr.bf16.mxu0 0
      %1358 = vmatmul.mubr.bf16.gmra.mrb[0].mxu0 %v1147
      %v1359 = vpop.f32.mrb[0].mxu0
      %v1360 = vadd.f32 0.0, %v1359
      %v1361 = vpop.f32.mrb[0].mxu0
      %v1362 = vpop.f32.mrb[0].mxu0
      %v1363 = vadd.f32 0.0, %v1362
      %v1364 = vpop.f32.mrb[0].mxu0
      %1365 = vmatprep.mubr.bf16.mxu0 0
      %1366 = vmatmul.mubr.bf16.gmra.mrb[0].mxu0 %v1148
      %v1367 = vpop.f32.mrb[0].mxu0
      %v1368 = vadd.f32 0.0, %v1367
      %v1369 = vpop.f32.mrb[0].mxu0
      %v1370 = vpop.f32.mrb[0].mxu0
      %v1371 = vadd.f32 0.0, %v1370
      %v1372 = vpop.f32.mrb[0].mxu0
      %1373 = vdwg.mxu0
      %v1374 = vld [vmem:[#allocation2] sm:$0xff]
      %v1375 = vld [vmem:[#allocation2 + $0x8] sm:$0xff]
      %v1376 = vld [vmem:[#allocation2 + $0x10] sm:$0xff]
      %v1377 = vld [vmem:[#allocation2 + $0x18] sm:$0xff]
      %v1378 = vld [vmem:[#allocation2 + $0x20] sm:$0xff]
      %v1379 = vld [vmem:[#allocation2 + $0x28] sm:$0xff]
      %v1380 = vld [vmem:[#allocation2 + $0x30] sm:$0xff]
      %v1381 = vld [vmem:[#allocation2 + $0x38] sm:$0xff]
      %v1382 = vld [vmem:[#allocation2 + $0x40] sm:$0xff]
      %v1383 = vld [vmem:[#allocation2 + $0x48] sm:$0xff]
      %v1384 = vld [vmem:[#allocation2 + $0x50] sm:$0xff]
      %v1385 = vld [vmem:[#allocation2 + $0x58] sm:$0xff]
      %v1386 = vld [vmem:[#allocation2 + $0x60] sm:$0xff]
      %v1387 = vld [vmem:[#allocation2 + $0x68] sm:$0xff]
      %v1388 = vld [vmem:[#allocation2 + $0x70] sm:$0xff]
      %v1389 = vld [vmem:[#allocation2 + $0x78] sm:$0xff]
      %v1390 = vld [vmem:[#allocation2 + $0x80] sm:$0xff]
      %v1391 = vld [vmem:[#allocation2 + $0x88] sm:$0xff]
      %v1392 = vld [vmem:[#allocation2 + $0x90] sm:$0xff]
      %v1393 = vld [vmem:[#allocation2 + $0x98] sm:$0xff]
      %v1394 = vld [vmem:[#allocation2 + $0xa0] sm:$0xff]
      %v1395 = vld [vmem:[#allocation2 + $0xa8] sm:$0xff]
      %v1396 = vld [vmem:[#allocation2 + $0xb0] sm:$0xff]
      %v1397 = vld [vmem:[#allocation2 + $0xb8] sm:$0xff]
      %v1398 = vld [vmem:[#allocation2 + $0xc0] sm:$0xff]
      %v1399 = vld [vmem:[#allocation2 + $0xc8] sm:$0xff]
      %v1400 = vld [vmem:[#allocation2 + $0xd0] sm:$0xff]
      %v1401 = vld [vmem:[#allocation2 + $0xd8] sm:$0xff]
      %v1402 = vld [vmem:[#allocation2 + $0xe0] sm:$0xff]
      %v1403 = vld [vmem:[#allocation2 + $0xe8] sm:$0xff]
      %v1404 = vld [vmem:[#allocation2 + $0xf0] sm:$0xff]
      %v1405 = vld [vmem:[#allocation2 + $0xf8] sm:$0xff]
      %v1406 = vadd.f32 %v1374, %v1248
      %v1407 = vadd.f32 %v1375, %v1251
      %v1408 = vadd.f32 %v1376, %v1256
      %v1409 = vadd.f32 %v1377, %v1259
      %v1410 = vadd.f32 %v1378, %v1264
      %v1411 = vadd.f32 %v1379, %v1267
      %v1412 = vadd.f32 %v1380, %v1272
      %v1413 = vadd.f32 %v1381, %v1275
      %v1414 = vadd.f32 %v1382, %v1280
      %v1415 = vadd.f32 %v1383, %v1283
      %v1416 = vadd.f32 %v1384, %v1288
      %v1417 = vadd.f32 %v1385, %v1291
      %v1418 = vadd.f32 %v1386, %v1296
      %v1419 = vadd.f32 %v1387, %v1299
      %v1420 = vadd.f32 %v1388, %v1304
      %v1421 = vadd.f32 %v1389, %v1307
      %v1422 = vadd.f32 %v1390, %v1312
      %v1423 = vadd.f32 %v1391, %v1315
      %v1424 = vadd.f32 %v1392, %v1320
      %v1425 = vadd.f32 %v1393, %v1323
      %v1426 = vadd.f32 %v1394, %v1328
      %v1427 = vadd.f32 %v1395, %v1331
      %v1428 = vadd.f32 %v1396, %v1336
      %v1429 = vadd.f32 %v1397, %v1339
      %v1430 = vadd.f32 %v1398, %v1344
      %v1431 = vadd.f32 %v1399, %v1347
      %v1432 = vadd.f32 %v1400, %v1352
      %v1433 = vadd.f32 %v1401, %v1355
      %v1434 = vadd.f32 %v1402, %v1360
      %v1435 = vadd.f32 %v1403, %v1363
      %v1436 = vadd.f32 %v1404, %v1368
      %v1437 = vadd.f32 %v1405, %v1371
      %1438 = vst [vmem:[#allocation2] sm:$0xff] %v1406
      %1439 = vst [vmem:[#allocation2 + $0x8] sm:$0xff] %v1407
      %1440 = vst [vmem:[#allocation2 + $0x10] sm:$0xff] %v1408
      %1441 = vst [vmem:[#allocation2 + $0x18] sm:$0xff] %v1409
      %1442 = vst [vmem:[#allocation2 + $0x20] sm:$0xff] %v1410
      %1443 = vst [vmem:[#allocation2 + $0x28] sm:$0xff] %v1411
      %1444 = vst [vmem:[#allocation2 + $0x30] sm:$0xff] %v1412
      %1445 = vst [vmem:[#allocation2 + $0x38] sm:$0xff] %v1413
      %1446 = vst [vmem:[#allocation2 + $0x40] sm:$0xff] %v1414
      %1447 = vst [vmem:[#allocation2 + $0x48] sm:$0xff] %v1415
      %1448 = vst [vmem:[#allocation2 + $0x50] sm:$0xff] %v1416
      %1449 = vst [vmem:[#allocation2 + $0x58] sm:$0xff] %v1417
      %1450 = vst [vmem:[#allocation2 + $0x60] sm:$0xff] %v1418
      %1451 = vst [vmem:[#allocation2 + $0x68] sm:$0xff] %v1419
      %1452 = vst [vmem:[#allocation2 + $0x70] sm:$0xff] %v1420
      %1453 = vst [vmem:[#allocation2 + $0x78] sm:$0xff] %v1421
      %1454 = vst [vmem:[#allocation2 + $0x80] sm:$0xff] %v1422
      %1455 = vst [vmem:[#allocation2 + $0x88] sm:$0xff] %v1423
      %1456 = vst [vmem:[#allocation2 + $0x90] sm:$0xff] %v1424
      %1457 = vst [vmem:[#allocation2 + $0x98] sm:$0xff] %v1425
      %1458 = vst [vmem:[#allocation2 + $0xa0] sm:$0xff] %v1426
      %1459 = vst [vmem:[#allocation2 + $0xa8] sm:$0xff] %v1427
      %1460 = vst [vmem:[#allocation2 + $0xb0] sm:$0xff] %v1428
      %1461 = vst [vmem:[#allocation2 + $0xb8] sm:$0xff] %v1429
      %1462 = vst [vmem:[#allocation2 + $0xc0] sm:$0xff] %v1430
      %1463 = vst [vmem:[#allocation2 + $0xc8] sm:$0xff] %v1431
      %1464 = vst [vmem:[#allocation2 + $0xd0] sm:$0xff] %v1432
      %1465 = vst [vmem:[#allocation2 + $0xd8] sm:$0xff] %v1433
      %1466 = vst [vmem:[#allocation2 + $0xe0] sm:$0xff] %v1434
      %1467 = vst [vmem:[#allocation2 + $0xe8] sm:$0xff] %v1435
      %1468 = vst [vmem:[#allocation2 + $0xf0] sm:$0xff] %v1436
      %1469 = vst [vmem:[#allocation2 + $0xf8] sm:$0xff] %v1437
      %v1470 = vld [vmem:[%s244] sm:$0xe]
      %v1471 = vld [vmem:[%s244 + $0x4] sm:$0xf]
      %v1472 = vld [vmem:[%s244 + $0x8] sm:$0x1]
      %v1473 = vld [vmem:[%s244 + $0xc] sm:$0xe]
      %v1474 = vld [vmem:[%s244 + $0x10] sm:$0xf]
      %v1475 = vld [vmem:[%s244 + $0x14] sm:$0x1]
      %v1476 = vld [vmem:[%s244 + $0x18] sm:$0xe]
      %v1477 = vld [vmem:[%s244 + $0x1c] sm:$0xf]
      %v1478 = vld [vmem:[%s244 + $0x20] sm:$0x1]
      %v1479 = vld [vmem:[%s244 + $0x24] sm:$0xe]
      %v1480 = vld [vmem:[%s244 + $0x28] sm:$0xf]
      %v1481 = vld [vmem:[%s244 + $0x2c] sm:$0x1]
      %v1482 = vld [vmem:[%s244 + $0x30] sm:$0xe]
      %v1483 = vld [vmem:[%s244 + $0x34] sm:$0xf]
      %v1484 = vld [vmem:[%s244 + $0x38] sm:$0x1]
      %v1485 = vld [vmem:[%s244 + $0x3c] sm:$0xe]
      %v1486 = vld [vmem:[%s244 + $0x40] sm:$0xf]
      %v1487 = vld [vmem:[%s244 + $0x44] sm:$0x1]
      %v1488 = vld [vmem:[%s244 + $0x48] sm:$0xe]
      %v1489 = vld [vmem:[%s244 + $0x4c] sm:$0xf]
      %v1490 = vld [vmem:[%s244 + $0x50] sm:$0x1]
      %v1491 = vld [vmem:[%s244 + $0x54] sm:$0xe]
      %v1492 = vld [vmem:[%s244 + $0x58] sm:$0xf]
      %v1493 = vld [vmem:[%s244 + $0x5c] sm:$0x1]
      %v1494 = vld [vmem:[%s244 + $0x60] sm:$0xe]
      %v1495 = vld [vmem:[%s244 + $0x64] sm:$0xf]
      %v1496 = vld [vmem:[%s244 + $0x68] sm:$0x1]
      %v1497 = vld [vmem:[%s244 + $0x6c] sm:$0xe]
      %v1498 = vld [vmem:[%s244 + $0x70] sm:$0xf]
      %v1499 = vld [vmem:[%s244 + $0x74] sm:$0x1]
      %v1500 = vld [vmem:[%s244 + $0x78] sm:$0xe]
      %v1501 = vld [vmem:[%s244 + $0x7c] sm:$0xf]
      %v1502 = vld [vmem:[%s244 + $0x80] sm:$0x1]
      %v1503 = vld [vmem:[%s244 + $0x84] sm:$0xe]
      %v1504 = vld [vmem:[%s244 + $0x88] sm:$0xf]
      %v1505 = vld [vmem:[%s244 + $0x8c] sm:$0x1]
      %v1506 = vld [vmem:[%s244 + $0x90] sm:$0xe]
      %v1507 = vld [vmem:[%s244 + $0x94] sm:$0xf]
      %v1508 = vld [vmem:[%s244 + $0x98] sm:$0x1]
      %v1509 = vld [vmem:[%s244 + $0x9c] sm:$0xe]
      %v1510 = vld [vmem:[%s244 + $0xa0] sm:$0xf]
      %v1511 = vld [vmem:[%s244 + $0xa4] sm:$0x1]
      %v1512 = vld [vmem:[%s244 + $0xa8] sm:$0xe]
      %v1513 = vld [vmem:[%s244 + $0xac] sm:$0xf]
      %v1514 = vld [vmem:[%s244 + $0xb0] sm:$0x1]
      %v1515 = vld [vmem:[%s244 + $0xb4] sm:$0xe]
      %v1516 = vld [vmem:[%s244 + $0xb8] sm:$0xf]
      %v1517 = vld [vmem:[%s244 + $0xbc] sm:$0x1]
      %vm1566 = vcmask 1042432
      %vm1567 = vcmask 1046532
      %vm1568 = vmor %vm1566, %vm1567
      %v1569 = vrot.slane %v1470, 5
      %v1570 = vrot.slane %v1569, 4
      %v1571 = vrot.slane %v1471, 5
      %v1572 = vsel %vm1568, %v1570, %v1571
      %v1573 = vrot.slane %v1571, 4
      %v1574 = vrot.slane %v1472, 5
      %v1575 = vsel %vm1568, %v1573, %v1574
      %v1576 = vrot.slane %v1473, 5
      %v1577 = vrot.slane %v1576, 4
      %v1578 = vrot.slane %v1474, 5
      %v1579 = vsel %vm1568, %v1577, %v1578
      %v1580 = vrot.slane %v1578, 4
      %v1581 = vrot.slane %v1475, 5
      %v1582 = vsel %vm1568, %v1580, %v1581
      %v1583 = vrot.slane %v1476, 5
      %v1584 = vrot.slane %v1583, 4
      %v1585 = vrot.slane %v1477, 5
      %v1586 = vsel %vm1568, %v1584, %v1585
      %v1587 = vrot.slane %v1585, 4
      %v1588 = vrot.slane %v1478, 5
      %v1589 = vsel %vm1568, %v1587, %v1588
      %v1590 = vrot.slane %v1479, 5
      %v1591 = vrot.slane %v1590, 4
      %v1592 = vrot.slane %v1480, 5
      %v1593 = vsel %vm1568, %v1591, %v1592
      %v1594 = vrot.slane %v1592, 4
      %v1595 = vrot.slane %v1481, 5
      %v1596 = vsel %vm1568, %v1594, %v1595
      %v1597 = vrot.slane %v1482, 5
      %v1598 = vrot.slane %v1597, 4
      %v1599 = vrot.slane %v1483, 5
      %v1600 = vsel %vm1568, %v1598, %v1599
      %v1601 = vrot.slane %v1599, 4
      %v1602 = vrot.slane %v1484, 5
      %v1603 = vsel %vm1568, %v1601, %v1602
      %v1604 = vrot.slane %v1485, 5
      %v1605 = vrot.slane %v1604, 4
      %v1606 = vrot.slane %v1486, 5
      %v1607 = vsel %vm1568, %v1605, %v1606
      %v1608 = vrot.slane %v1606, 4
      %v1609 = vrot.slane %v1487, 5
      %v1610 = vsel %vm1568, %v1608, %v1609
      %v1611 = vrot.slane %v1488, 5
      %v1612 = vrot.slane %v1611, 4
      %v1613 = vrot.slane %v1489, 5
      %v1614 = vsel %vm1568, %v1612, %v1613
      %v1615 = vrot.slane %v1613, 4
      %v1616 = vrot.slane %v1490, 5
      %v1617 = vsel %vm1568, %v1615, %v1616
      %v1618 = vrot.slane %v1491, 5
      %v1619 = vrot.slane %v1618, 4
      %v1620 = vrot.slane %v1492, 5
      %v1621 = vsel %vm1568, %v1619, %v1620
      %v1622 = vrot.slane %v1620, 4
      %v1623 = vrot.slane %v1493, 5
      %v1624 = vsel %vm1568, %v1622, %v1623
      %v1625 = vrot.slane %v1494, 5
      %v1626 = vrot.slane %v1625, 4
      %v1627 = vrot.slane %v1495, 5
      %v1628 = vsel %vm1568, %v1626, %v1627
      %v1629 = vrot.slane %v1627, 4
      %v1630 = vrot.slane %v1496, 5
      %v1631 = vsel %vm1568, %v1629, %v1630
      %v1632 = vrot.slane %v1497, 5
      %v1633 = vrot.slane %v1632, 4
      %v1634 = vrot.slane %v1498, 5
      %v1635 = vsel %vm1568, %v1633, %v1634
      %v1636 = vrot.slane %v1634, 4
      %v1637 = vrot.slane %v1499, 5
      %v1638 = vsel %vm1568, %v1636, %v1637
      %v1639 = vrot.slane %v1500, 5
      %v1640 = vrot.slane %v1639, 4
      %v1641 = vrot.slane %v1501, 5
      %v1642 = vsel %vm1568, %v1640, %v1641
      %v1643 = vrot.slane %v1641, 4
      %v1644 = vrot.slane %v1502, 5
      %v1645 = vsel %vm1568, %v1643, %v1644
      %v1646 = vrot.slane %v1503, 5
      %v1647 = vrot.slane %v1646, 4
      %v1648 = vrot.slane %v1504, 5
      %v1649 = vsel %vm1568, %v1647, %v1648
      %v1650 = vrot.slane %v1648, 4
      %v1651 = vrot.slane %v1505, 5
      %v1652 = vsel %vm1568, %v1650, %v1651
      %v1653 = vrot.slane %v1506, 5
      %v1654 = vrot.slane %v1653, 4
      %v1655 = vrot.slane %v1507, 5
      %v1656 = vsel %vm1568, %v1654, %v1655
      %v1657 = vrot.slane %v1655, 4
      %v1658 = vrot.slane %v1508, 5
      %v1659 = vsel %vm1568, %v1657, %v1658
      %v1660 = vrot.slane %v1509, 5
      %v1661 = vrot.slane %v1660, 4
      %v1662 = vrot.slane %v1510, 5
      %v1663 = vsel %vm1568, %v1661, %v1662
      %v1664 = vrot.slane %v1662, 4
      %v1665 = vrot.slane %v1511, 5
      %v1666 = vsel %vm1568, %v1664, %v1665
      %v1667 = vrot.slane %v1512, 5
      %v1668 = vrot.slane %v1667, 4
      %v1669 = vrot.slane %v1513, 5
      %v1670 = vsel %vm1568, %v1668, %v1669
      %v1671 = vrot.slane %v1669, 4
      %v1672 = vrot.slane %v1514, 5
      %v1673 = vsel %vm1568, %v1671, %v1672
      %v1674 = vrot.slane %v1515, 5
      %v1675 = vrot.slane %v1674, 4
      %v1676 = vrot.slane %v1516, 5
      %v1677 = vsel %vm1568, %v1675, %v1676
      %v1678 = vrot.slane %v1676, 4
      %v1679 = vrot.slane %v1517, 5
      %v1680 = vsel %vm1568, %v1678, %v1679
      %s1681 = scalar_lea.vmem %s248, 128
      %v1682 = vld [vmem:[%s1681] sm:$0xf]
      %v1683 = vld [vmem:[%s1681 + $0x4] sm:$0xf]
      %v1684 = vld [vmem:[%s1681 + $0x8] sm:$0xf]
      %v1685 = vld [vmem:[%s1681 + $0xc] sm:$0xf]
      %v1686 = vld [vmem:[%s1681 + $0x10] sm:$0xf]
      %v1687 = vld [vmem:[%s1681 + $0x14] sm:$0xf]
      %v1688 = vld [vmem:[%s1681 + $0x18] sm:$0xf]
      %v1689 = vld [vmem:[%s1681 + $0x1c] sm:$0xf]
      %v1690 = vld [vmem:[%s1681 + $0x20] sm:$0xf]
      %v1691 = vld [vmem:[%s1681 + $0x24] sm:$0xf]
      %v1692 = vld [vmem:[%s1681 + $0x28] sm:$0xf]
      %v1693 = vld [vmem:[%s1681 + $0x2c] sm:$0xf]
      %v1694 = vld [vmem:[%s1681 + $0x30] sm:$0xf]
      %v1695 = vld [vmem:[%s1681 + $0x34] sm:$0xf]
      %v1696 = vld [vmem:[%s1681 + $0x38] sm:$0xf]
      %v1697 = vld [vmem:[%s1681 + $0x3c] sm:$0xf]
      %v1698 = vunpack.c.l.b16 %v1572
      %v1699 = vunpack.c.l.b16 %v1575
      %v1700 = vunpack.c.l.b16 %v1579
      %v1701 = vunpack.c.l.b16 %v1582
      %v1702 = vunpack.c.l.b16 %v1586
      %v1703 = vunpack.c.l.b16 %v1589
      %v1704 = vunpack.c.l.b16 %v1593
      %v1705 = vunpack.c.l.b16 %v1596
      %v1706 = vunpack.c.l.b16 %v1600
      %v1707 = vunpack.c.l.b16 %v1603
      %v1708 = vunpack.c.l.b16 %v1607
      %v1709 = vunpack.c.l.b16 %v1610
      %v1710 = vunpack.c.l.b16 %v1614
      %v1711 = vunpack.c.l.b16 %v1617
      %v1712 = vunpack.c.l.b16 %v1621
      %v1713 = vunpack.c.l.b16 %v1624
      %v1714 = vunpack.c.l.b16 %v1628
      %v1715 = vunpack.c.l.b16 %v1631
      %v1716 = vunpack.c.l.b16 %v1635
      %v1717 = vunpack.c.l.b16 %v1638
      %v1718 = vunpack.c.l.b16 %v1642
      %v1719 = vunpack.c.l.b16 %v1645
      %v1720 = vunpack.c.l.b16 %v1649
      %v1721 = vunpack.c.l.b16 %v1652
      %v1722 = vunpack.c.l.b16 %v1656
      %v1723 = vunpack.c.l.b16 %v1659
      %v1724 = vunpack.c.l.b16 %v1663
      %v1725 = vunpack.c.l.b16 %v1666
      %v1726 = vunpack.c.l.b16 %v1670
      %v1727 = vunpack.c.l.b16 %v1673
      %v1728 = vunpack.c.l.b16 %v1677
      %v1729 = vunpack.c.l.b16 %v1680
      %v1730 = vpack.c.b16 %v1699, %v1698
      %v1731 = vpack.c.b16 %v1701, %v1700
      %v1732 = vpack.c.b16 %v1703, %v1702
      %v1733 = vpack.c.b16 %v1705, %v1704
      %v1734 = vpack.c.b16 %v1707, %v1706
      %v1735 = vpack.c.b16 %v1709, %v1708
      %v1736 = vpack.c.b16 %v1711, %v1710
      %v1737 = vpack.c.b16 %v1713, %v1712
      %v1738 = vpack.c.b16 %v1715, %v1714
      %v1739 = vpack.c.b16 %v1717, %v1716
      %v1740 = vpack.c.b16 %v1719, %v1718
      %v1741 = vpack.c.b16 %v1721, %v1720
      %v1742 = vpack.c.b16 %v1723, %v1722
      %v1743 = vpack.c.b16 %v1725, %v1724
      %v1744 = vpack.c.b16 %v1727, %v1726
      %v1745 = vpack.c.b16 %v1729, %v1728
      %v1778 = vunpack.c.l.b16 %v1682
      %v1779 = vunpack.c.l.b16 %v1683
      %v1780 = vunpack.c.l.b16 %v1684
      %v1781 = vunpack.c.l.b16 %v1685
      %v1782 = vunpack.c.l.b16 %v1686
      %v1783 = vunpack.c.l.b16 %v1687
      %v1784 = vunpack.c.l.b16 %v1688
      %v1785 = vunpack.c.l.b16 %v1689
      %v1786 = vunpack.c.l.b16 %v1690
      %v1787 = vunpack.c.l.b16 %v1691
      %v1788 = vunpack.c.l.b16 %v1692
      %v1789 = vunpack.c.l.b16 %v1693
      %v1790 = vunpack.c.l.b16 %v1694
      %v1791 = vunpack.c.l.b16 %v1695
      %v1792 = vunpack.c.l.b16 %v1696
      %v1793 = vunpack.c.l.b16 %v1697
      %v1794 = vpack.c.b16 %v1779, %v1778
      %v1795 = vpack.c.b16 %v1781, %v1780
      %v1796 = vpack.c.b16 %v1783, %v1782
      %v1797 = vpack.c.b16 %v1785, %v1784
      %v1798 = vpack.c.b16 %v1787, %v1786
      %v1799 = vpack.c.b16 %v1789, %v1788
      %v1800 = vpack.c.b16 %v1791, %v1790
      %v1801 = vpack.c.b16 %v1793, %v1792
      %1810 = vmatprep.subr.bf16.mxu0 0
      %1811 = vmatpush1.bf16.msra.mxu0 %v1794
      %1812 = vmatprep.subr.bf16.mxu0 0
      %1813 = vmatpush1.bf16.msra.mxu0 %v1795
      %1814 = vmatprep.subr.bf16.mxu0 0
      %1815 = vmatpush1.bf16.msra.mxu0 %v1796
      %1816 = vmatprep.subr.bf16.mxu0 0
      %1817 = vmatpush1.bf16.msra.mxu0 %v1797
      %1818 = vmatprep.subr.bf16.mxu0 0
      %1819 = vmatpush1.bf16.msra.mxu0 %v1798
      %1820 = vmatprep.subr.bf16.mxu0 0
      %1821 = vmatpush1.bf16.msra.mxu0 %v1799
      %1822 = vmatprep.subr.bf16.mxu0 0
      %1823 = vmatpush1.bf16.msra.mxu0 %v1800
      %1824 = vmatprep.subr.bf16.mxu0 0
      %1825 = vmatpush1.bf16.msra.mxu0 %v1801
      %1826 = vmatprep.subr.bf16.mxu0 0
      %1827 = vmatpush1.bf16.msra.mxu0 0
      %1828 = vmatprep.subr.bf16.mxu0 0
      %1829 = vmatpush1.bf16.msra.mxu0 0
      %1830 = vmatprep.subr.bf16.mxu0 0
      %1831 = vmatpush1.bf16.msra.mxu0 0
      %1832 = vmatprep.subr.bf16.mxu0 0
      %1833 = vmatpush1.bf16.msra.mxu0 0
      %1834 = vmatprep.subr.bf16.mxu0 0
      %1835 = vmatpush1.bf16.msra.mxu0 0
      %1836 = vmatprep.subr.bf16.mxu0 0
      %1837 = vmatpush1.bf16.msra.mxu0 0
      %1838 = vmatprep.subr.bf16.mxu0 0
      %1839 = vmatpush1.bf16.msra.mxu0 0
      %1840 = vmatprep.subr.bf16.mxu0 0
      %1841 = vmatpush1.bf16.msra.mxu0 0
      %1842 = vmatprep.mubr.bf16.mxu0 0
      %1843 = vmatmul.mubr.bf16.gmra.mrb[0].mxu0 %v1730
      %v1844 = vpop.f32.mrb[0].mxu0
      %v1845 = vadd.f32 0.0, %v1844
      %v1846 = vpop.f32.mrb[0].mxu0
      %v1847 = vpop.f32.mrb[0].mxu0
      %v1848 = vadd.f32 0.0, %v1847
      %v1849 = vpop.f32.mrb[0].mxu0
      %1850 = vmatprep.mubr.bf16.mxu0 0
      %1851 = vmatmul.mubr.bf16.gmra.mrb[0].mxu0 %v1731
      %v1852 = vpop.f32.mrb[0].mxu0
      %v1853 = vadd.f32 0.0, %v1852
      %v1854 = vpop.f32.mrb[0].mxu0
      %v1855 = vpop.f32.mrb[0].mxu0
      %v1856 = vadd.f32 0.0, %v1855
      %v1857 = vpop.f32.mrb[0].mxu0
      %1858 = vmatprep.mubr.bf16.mxu0 0
      %1859 = vmatmul.mubr.bf16.gmra.mrb[0].mxu0 %v1732
      %v1860 = vpop.f32.mrb[0].mxu0
      %v1861 = vadd.f32 0.0, %v1860
      %v1862 = vpop.f32.mrb[0].mxu0
      %v1863 = vpop.f32.mrb[0].mxu0
      %v1864 = vadd.f32 0.0, %v1863
      %v1865 = vpop.f32.mrb[0].mxu0
      %1866 = vmatprep.mubr.bf16.mxu0 0
      %1867 = vmatmul.mubr.bf16.gmra.mrb[0].mxu0 %v1733
      %v1868 = vpop.f32.mrb[0].mxu0
      %v1869 = vadd.f32 0.0, %v1868
      %v1870 = vpop.f32.mrb[0].mxu0
      %v1871 = vpop.f32.mrb[0].mxu0
      %v1872 = vadd.f32 0.0, %v1871
      %v1873 = vpop.f32.mrb[0].mxu0
      %1874 = vmatprep.mubr.bf16.mxu0 0
      %1875 = vmatmul.mubr.bf16.gmra.mrb[0].mxu0 %v1734
      %v1876 = vpop.f32.mrb[0].mxu0
      %v1877 = vadd.f32 0.0, %v1876
      %v1878 = vpop.f32.mrb[0].mxu0
      %v1879 = vpop.f32.mrb[0].mxu0
      %v1880 = vadd.f32 0.0, %v1879
      %v1881 = vpop.f32.mrb[0].mxu0
      %1882 = vmatprep.mubr.bf16.mxu0 0
      %1883 = vmatmul.mubr.bf16.gmra.mrb[0].mxu0 %v1735
      %v1884 = vpop.f32.mrb[0].mxu0
      %v1885 = vadd.f32 0.0, %v1884
      %v1886 = vpop.f32.mrb[0].mxu0
      %v1887 = vpop.f32.mrb[0].mxu0
      %v1888 = vadd.f32 0.0, %v1887
      %v1889 = vpop.f32.mrb[0].mxu0
      %1890 = vmatprep.mubr.bf16.mxu0 0
      %1891 = vmatmul.mubr.bf16.gmra.mrb[0].mxu0 %v1736
      %v1892 = vpop.f32.mrb[0].mxu0
      %v1893 = vadd.f32 0.0, %v1892
      %v1894 = vpop.f32.mrb[0].mxu0
      %v1895 = vpop.f32.mrb[0].mxu0
      %v1896 = vadd.f32 0.0, %v1895
      %v1897 = vpop.f32.mrb[0].mxu0
      %1898 = vmatprep.mubr.bf16.mxu0 0
      %1899 = vmatmul.mubr.bf16.gmra.mrb[0].mxu0 %v1737
      %v1900 = vpop.f32.mrb[0].mxu0
      %v1901 = vadd.f32 0.0, %v1900
      %v1902 = vpop.f32.mrb[0].mxu0
      %v1903 = vpop.f32.mrb[0].mxu0
      %v1904 = vadd.f32 0.0, %v1903
      %v1905 = vpop.f32.mrb[0].mxu0
      %1906 = vmatprep.mubr.bf16.mxu0 0
      %1907 = vmatmul.mubr.bf16.gmra.mrb[0].mxu0 %v1738
      %v1908 = vpop.f32.mrb[0].mxu0
      %v1909 = vadd.f32 0.0, %v1908
      %v1910 = vpop.f32.mrb[0].mxu0
      %v1911 = vpop.f32.mrb[0].mxu0
      %v1912 = vadd.f32 0.0, %v1911
      %v1913 = vpop.f32.mrb[0].mxu0
      %1914 = vmatprep.mubr.bf16.mxu0 0
      %1915 = vmatmul.mubr.bf16.gmra.mrb[0].mxu0 %v1739
      %v1916 = vpop.f32.mrb[0].mxu0
      %v1917 = vadd.f32 0.0, %v1916
      %v1918 = vpop.f32.mrb[0].mxu0
      %v1919 = vpop.f32.mrb[0].mxu0
      %v1920 = vadd.f32 0.0, %v1919
      %v1921 = vpop.f32.mrb[0].mxu0
      %1922 = vmatprep.mubr.bf16.mxu0 0
      %1923 = vmatmul.mubr.bf16.gmra.mrb[0].mxu0 %v1740
      %v1924 = vpop.f32.mrb[0].mxu0
      %v1925 = vadd.f32 0.0, %v1924
      %v1926 = vpop.f32.mrb[0].mxu0
      %v1927 = vpop.f32.mrb[0].mxu0
      %v1928 = vadd.f32 0.0, %v1927
      %v1929 = vpop.f32.mrb[0].mxu0
      %1930 = vmatprep.mubr.bf16.mxu0 0
      %1931 = vmatmul.mubr.bf16.gmra.mrb[0].mxu0 %v1741
      %v1932 = vpop.f32.mrb[0].mxu0
      %v1933 = vadd.f32 0.0, %v1932
      %v1934 = vpop.f32.mrb[0].mxu0
      %v1935 = vpop.f32.mrb[0].mxu0
      %v1936 = vadd.f32 0.0, %v1935
      %v1937 = vpop.f32.mrb[0].mxu0
      %1938 = vmatprep.mubr.bf16.mxu0 0
      %1939 = vmatmul.mubr.bf16.gmra.mrb[0].mxu0 %v1742
      %v1940 = vpop.f32.mrb[0].mxu0
      %v1941 = vadd.f32 0.0, %v1940
      %v1942 = vpop.f32.mrb[0].mxu0
      %v1943 = vpop.f32.mrb[0].mxu0
      %v1944 = vadd.f32 0.0, %v1943
      %v1945 = vpop.f32.mrb[0].mxu0
      %1946 = vmatprep.mubr.bf16.mxu0 0
      %1947 = vmatmul.mubr.bf16.gmra.mrb[0].mxu0 %v1743
      %v1948 = vpop.f32.mrb[0].mxu0
      %v1949 = vadd.f32 0.0, %v1948
      %v1950 = vpop.f32.mrb[0].mxu0
      %v1951 = vpop.f32.mrb[0].mxu0
      %v1952 = vadd.f32 0.0, %v1951
      %v1953 = vpop.f32.mrb[0].mxu0
      %1954 = vmatprep.mubr.bf16.mxu0 0
      %1955 = vmatmul.mubr.bf16.gmra.mrb[0].mxu0 %v1744
      %v1956 = vpop.f32.mrb[0].mxu0
      %v1957 = vadd.f32 0.0, %v1956
      %v1958 = vpop.f32.mrb[0].mxu0
      %v1959 = vpop.f32.mrb[0].mxu0
      %v1960 = vadd.f32 0.0, %v1959
      %v1961 = vpop.f32.mrb[0].mxu0
      %1962 = vmatprep.mubr.bf16.mxu0 0
      %1963 = vmatmul.mubr.bf16.gmra.mrb[0].mxu0 %v1745
      %v1964 = vpop.f32.mrb[0].mxu0
      %v1965 = vadd.f32 0.0, %v1964
      %v1966 = vpop.f32.mrb[0].mxu0
      %v1967 = vpop.f32.mrb[0].mxu0
      %v1968 = vadd.f32 0.0, %v1967
      %v1969 = vpop.f32.mrb[0].mxu0
      %1970 = vdwg.mxu0
      %v1971 = vld [vmem:[#allocation2] sm:$0xff]
      %v1972 = vld [vmem:[#allocation2 + $0x8] sm:$0xff]
      %v1973 = vld [vmem:[#allocation2 + $0x10] sm:$0xff]
      %v1974 = vld [vmem:[#allocation2 + $0x18] sm:$0xff]
      %v1975 = vld [vmem:[#allocation2 + $0x20] sm:$0xff]
      %v1976 = vld [vmem:[#allocation2 + $0x28] sm:$0xff]
      %v1977 = vld [vmem:[#allocation2 + $0x30] sm:$0xff]
      %v1978 = vld [vmem:[#allocation2 + $0x38] sm:$0xff]
      %v1979 = vld [vmem:[#allocation2 + $0x40] sm:$0xff]
      %v1980 = vld [vmem:[#allocation2 + $0x48] sm:$0xff]
      %v1981 = vld [vmem:[#allocation2 + $0x50] sm:$0xff]
      %v1982 = vld [vmem:[#allocation2 + $0x58] sm:$0xff]
      %v1983 = vld [vmem:[#allocation2 + $0x60] sm:$0xff]
      %v1984 = vld [vmem:[#allocation2 + $0x68] sm:$0xff]
      %v1985 = vld [vmem:[#allocation2 + $0x70] sm:$0xff]
      %v1986 = vld [vmem:[#allocation2 + $0x78] sm:$0xff]
      %v1987 = vld [vmem:[#allocation2 + $0x80] sm:$0xff]
      %v1988 = vld [vmem:[#allocation2 + $0x88] sm:$0xff]
      %v1989 = vld [vmem:[#allocation2 + $0x90] sm:$0xff]
      %v1990 = vld [vmem:[#allocation2 + $0x98] sm:$0xff]
      %v1991 = vld [vmem:[#allocation2 + $0xa0] sm:$0xff]
      %v1992 = vld [vmem:[#allocation2 + $0xa8] sm:$0xff]
      %v1993 = vld [vmem:[#allocation2 + $0xb0] sm:$0xff]
      %v1994 = vld [vmem:[#allocation2 + $0xb8] sm:$0xff]
      %v1995 = vld [vmem:[#allocation2 + $0xc0] sm:$0xff]
      %v1996 = vld [vmem:[#allocation2 + $0xc8] sm:$0xff]
      %v1997 = vld [vmem:[#allocation2 + $0xd0] sm:$0xff]
      %v1998 = vld [vmem:[#allocation2 + $0xd8] sm:$0xff]
      %v1999 = vld [vmem:[#allocation2 + $0xe0] sm:$0xff]
      %v2000 = vld [vmem:[#allocation2 + $0xe8] sm:$0xff]
      %v2001 = vld [vmem:[#allocation2 + $0xf0] sm:$0xff]
      %v2002 = vld [vmem:[#allocation2 + $0xf8] sm:$0xff]
      %v2003 = vadd.f32 %v1971, %v1845
      %v2004 = vadd.f32 %v1972, %v1848
      %v2005 = vadd.f32 %v1973, %v1853
      %v2006 = vadd.f32 %v1974, %v1856
      %v2007 = vadd.f32 %v1975, %v1861
      %v2008 = vadd.f32 %v1976, %v1864
      %v2009 = vadd.f32 %v1977, %v1869
      %v2010 = vadd.f32 %v1978, %v1872
      %v2011 = vadd.f32 %v1979, %v1877
      %v2012 = vadd.f32 %v1980, %v1880
      %v2013 = vadd.f32 %v1981, %v1885
      %v2014 = vadd.f32 %v1982, %v1888
      %v2015 = vadd.f32 %v1983, %v1893
      %v2016 = vadd.f32 %v1984, %v1896
      %v2017 = vadd.f32 %v1985, %v1901
      %v2018 = vadd.f32 %v1986, %v1904
      %v2019 = vadd.f32 %v1987, %v1909
      %v2020 = vadd.f32 %v1988, %v1912
      %v2021 = vadd.f32 %v1989, %v1917
      %v2022 = vadd.f32 %v1990, %v1920
      %v2023 = vadd.f32 %v1991, %v1925
      %v2024 = vadd.f32 %v1992, %v1928
      %v2025 = vadd.f32 %v1993, %v1933
      %v2026 = vadd.f32 %v1994, %v1936
      %v2027 = vadd.f32 %v1995, %v1941
      %v2028 = vadd.f32 %v1996, %v1944
      %v2029 = vadd.f32 %v1997, %v1949
      %v2030 = vadd.f32 %v1998, %v1952
      %v2031 = vadd.f32 %v1999, %v1957
      %v2032 = vadd.f32 %v2000, %v1960
      %v2033 = vadd.f32 %v2001, %v1965
      %v2034 = vadd.f32 %v2002, %v1968
      %2035 = vst [vmem:[#allocation2] sm:$0xff] %v2003
      %2036 = vst [vmem:[#allocation2 + $0x8] sm:$0xff] %v2004
      %2037 = vst [vmem:[#allocation2 + $0x10] sm:$0xff] %v2005
      %2038 = vst [vmem:[#allocation2 + $0x18] sm:$0xff] %v2006
      %2039 = vst [vmem:[#allocation2 + $0x20] sm:$0xff] %v2007
      %2040 = vst [vmem:[#allocation2 + $0x28] sm:$0xff] %v2008
      %2041 = vst [vmem:[#allocation2 + $0x30] sm:$0xff] %v2009
      %2042 = vst [vmem:[#allocation2 + $0x38] sm:$0xff] %v2010
      %2043 = vst [vmem:[#allocation2 + $0x40] sm:$0xff] %v2011
      %2044 = vst [vmem:[#allocation2 + $0x48] sm:$0xff] %v2012
      %2045 = vst [vmem:[#allocation2 + $0x50] sm:$0xff] %v2013
      %2046 = vst [vmem:[#allocation2 + $0x58] sm:$0xff] %v2014
      %2047 = vst [vmem:[#allocation2 + $0x60] sm:$0xff] %v2015
      %2048 = vst [vmem:[#allocation2 + $0x68] sm:$0xff] %v2016
      %2049 = vst [vmem:[#allocation2 + $0x70] sm:$0xff] %v2017
      %2050 = vst [vmem:[#allocation2 + $0x78] sm:$0xff] %v2018
      %2051 = vst [vmem:[#allocation2 + $0x80] sm:$0xff] %v2019
      %2052 = vst [vmem:[#allocation2 + $0x88] sm:$0xff] %v2020
      %2053 = vst [vmem:[#allocation2 + $0x90] sm:$0xff] %v2021
      %2054 = vst [vmem:[#allocation2 + $0x98] sm:$0xff] %v2022
      %2055 = vst [vmem:[#allocation2 + $0xa0] sm:$0xff] %v2023
      %2056 = vst [vmem:[#allocation2 + $0xa8] sm:$0xff] %v2024
      %2057 = vst [vmem:[#allocation2 + $0xb0] sm:$0xff] %v2025
      %2058 = vst [vmem:[#allocation2 + $0xb8] sm:$0xff] %v2026
      %2059 = vst [vmem:[#allocation2 + $0xc0] sm:$0xff] %v2027
      %2060 = vst [vmem:[#allocation2 + $0xc8] sm:$0xff] %v2028
      %2061 = vst [vmem:[#allocation2 + $0xd0] sm:$0xff] %v2029
      %2062 = vst [vmem:[#allocation2 + $0xd8] sm:$0xff] %v2030
      %2063 = vst [vmem:[#allocation2 + $0xe0] sm:$0xff] %v2031
      %2064 = vst [vmem:[#allocation2 + $0xe8] sm:$0xff] %v2032
      %2065 = vst [vmem:[#allocation2 + $0xf0] sm:$0xff] %v2033
      %2066 = vst [vmem:[#allocation2 + $0xf8] sm:$0xff] %v2034
      %s2067 = scalar_lea.vmem %s244, 12
      %v2068 = vld [vmem:[%s2067] sm:$0xf]
      %v2069 = vld [vmem:[%s2067 + $0x4] sm:$0xf]
      %v2070 = vld [vmem:[%s2067 + $0xc] sm:$0xf]
      %v2071 = vld [vmem:[%s2067 + $0x10] sm:$0xf]
      %v2072 = vld [vmem:[%s2067 + $0x18] sm:$0xf]
      %v2073 = vld [vmem:[%s2067 + $0x1c] sm:$0xf]
      %v2074 = vld [vmem:[%s2067 + $0x24] sm:$0xf]
      %v2075 = vld [vmem:[%s2067 + $0x28] sm:$0xf]
      %v2076 = vld [vmem:[%s2067 + $0x30] sm:$0xf]
      %v2077 = vld [vmem:[%s2067 + $0x34] sm:$0xf]
      %v2078 = vld [vmem:[%s2067 + $0x3c] sm:$0xf]
      %v2079 = vld [vmem:[%s2067 + $0x40] sm:$0xf]
      %v2080 = vld [vmem:[%s2067 + $0x48] sm:$0xf]
      %v2081 = vld [vmem:[%s2067 + $0x4c] sm:$0xf]
      %v2082 = vld [vmem:[%s2067 + $0x54] sm:$0xf]
      %v2083 = vld [vmem:[%s2067 + $0x58] sm:$0xf]
      %v2084 = vld [vmem:[%s2067 + $0x60] sm:$0xf]
      %v2085 = vld [vmem:[%s2067 + $0x64] sm:$0xf]
      %v2086 = vld [vmem:[%s2067 + $0x6c] sm:$0xf]
      %v2087 = vld [vmem:[%s2067 + $0x70] sm:$0xf]
      %v2088 = vld [vmem:[%s2067 + $0x78] sm:$0xf]
      %v2089 = vld [vmem:[%s2067 + $0x7c] sm:$0xf]
      %v2090 = vld [vmem:[%s2067 + $0x84] sm:$0xf]
      %v2091 = vld [vmem:[%s2067 + $0x88] sm:$0xf]
      %v2092 = vld [vmem:[%s2067 + $0x90] sm:$0xf]
      %v2093 = vld [vmem:[%s2067 + $0x94] sm:$0xf]
      %v2094 = vld [vmem:[%s2067 + $0x9c] sm:$0xf]
      %v2095 = vld [vmem:[%s2067 + $0xa0] sm:$0xf]
      %v2096 = vld [vmem:[%s2067 + $0xa8] sm:$0xf]
      %v2097 = vld [vmem:[%s2067 + $0xac] sm:$0xf]
      %v2098 = vld [vmem:[%s2067 + $0xb4] sm:$0xf]
      %v2099 = vld [vmem:[%s2067 + $0xb8] sm:$0xf]
      %s2100 = scalar_lea.vmem %s248, 192
      %v2101 = vld [vmem:[%s2100] sm:$0xf]
      %v2102 = vld [vmem:[%s2100 + $0x4] sm:$0xf]
      %v2103 = vld [vmem:[%s2100 + $0x8] sm:$0xf]
      %v2104 = vld [vmem:[%s2100 + $0xc] sm:$0xf]
      %v2105 = vld [vmem:[%s2100 + $0x10] sm:$0xf]
      %v2106 = vld [vmem:[%s2100 + $0x14] sm:$0xf]
      %v2107 = vld [vmem:[%s2100 + $0x18] sm:$0xf]
      %v2108 = vld [vmem:[%s2100 + $0x1c] sm:$0xf]
      %v2109 = vld [vmem:[%s2100 + $0x20] sm:$0xf]
      %v2110 = vld [vmem:[%s2100 + $0x24] sm:$0xf]
      %v2111 = vld [vmem:[%s2100 + $0x28] sm:$0xf]
      %v2112 = vld [vmem:[%s2100 + $0x2c] sm:$0xf]
      %v2113 = vld [vmem:[%s2100 + $0x30] sm:$0xf]
      %v2114 = vld [vmem:[%s2100 + $0x34] sm:$0xf]
      %v2115 = vld [vmem:[%s2100 + $0x38] sm:$0xf]
      %v2116 = vld [vmem:[%s2100 + $0x3c] sm:$0xf]
      %v2149 = vunpack.c.l.b16 %v2068
      %v2150 = vunpack.c.l.b16 %v2069
      %v2151 = vunpack.c.l.b16 %v2070
      %v2152 = vunpack.c.l.b16 %v2071
      %v2153 = vunpack.c.l.b16 %v2072
      %v2154 = vunpack.c.l.b16 %v2073
      %v2155 = vunpack.c.l.b16 %v2074
      %v2156 = vunpack.c.l.b16 %v2075
      %v2157 = vunpack.c.l.b16 %v2076
      %v2158 = vunpack.c.l.b16 %v2077
      %v2159 = vunpack.c.l.b16 %v2078
      %v2160 = vunpack.c.l.b16 %v2079
      %v2161 = vunpack.c.l.b16 %v2080
      %v2162 = vunpack.c.l.b16 %v2081
      %v2163 = vunpack.c.l.b16 %v2082
      %v2164 = vunpack.c.l.b16 %v2083
      %v2165 = vunpack.c.l.b16 %v2084
      %v2166 = vunpack.c.l.b16 %v2085
      %v2167 = vunpack.c.l.b16 %v2086
      %v2168 = vunpack.c.l.b16 %v2087
      %v2169 = vunpack.c.l.b16 %v2088
      %v2170 = vunpack.c.l.b16 %v2089
      %v2171 = vunpack.c.l.b16 %v2090
      %v2172 = vunpack.c.l.b16 %v2091
      %v2173 = vunpack.c.l.b16 %v2092
      %v2174 = vunpack.c.l.b16 %v2093
      %v2175 = vunpack.c.l.b16 %v2094
      %v2176 = vunpack.c.l.b16 %v2095
      %v2177 = vunpack.c.l.b16 %v2096
      %v2178 = vunpack.c.l.b16 %v2097
      %v2179 = vunpack.c.l.b16 %v2098
      %v2180 = vunpack.c.l.b16 %v2099
      %v2181 = vpack.c.b16 %v2150, %v2149
      %v2182 = vpack.c.b16 %v2152, %v2151
      %v2183 = vpack.c.b16 %v2154, %v2153
      %v2184 = vpack.c.b16 %v2156, %v2155
      %v2185 = vpack.c.b16 %v2158, %v2157
      %v2186 = vpack.c.b16 %v2160, %v2159
      %v2187 = vpack.c.b16 %v2162, %v2161
      %v2188 = vpack.c.b16 %v2164, %v2163
      %v2189 = vpack.c.b16 %v2166, %v2165
      %v2190 = vpack.c.b16 %v2168, %v2167
      %v2191 = vpack.c.b16 %v2170, %v2169
      %v2192 = vpack.c.b16 %v2172, %v2171
      %v2193 = vpack.c.b16 %v2174, %v2173
      %v2194 = vpack.c.b16 %v2176, %v2175
      %v2195 = vpack.c.b16 %v2178, %v2177
      %v2196 = vpack.c.b16 %v2180, %v2179
      %v2229 = vunpack.c.l.b16 %v2101
      %v2230 = vunpack.c.l.b16 %v2102
      %v2231 = vunpack.c.l.b16 %v2103
      %v2232 = vunpack.c.l.b16 %v2104
      %v2233 = vunpack.c.l.b16 %v2105
      %v2234 = vunpack.c.l.b16 %v2106
      %v2235 = vunpack.c.l.b16 %v2107
      %v2236 = vunpack.c.l.b16 %v2108
      %v2237 = vunpack.c.l.b16 %v2109
      %v2238 = vunpack.c.l.b16 %v2110
      %v2239 = vunpack.c.l.b16 %v2111
      %v2240 = vunpack.c.l.b16 %v2112
      %v2241 = vunpack.c.l.b16 %v2113
      %v2242 = vunpack.c.l.b16 %v2114
      %v2243 = vunpack.c.l.b16 %v2115
      %v2244 = vunpack.c.l.b16 %v2116
      %v2245 = vpack.c.b16 %v2230, %v2229
      %v2246 = vpack.c.b16 %v2232, %v2231
      %v2247 = vpack.c.b16 %v2234, %v2233
      %v2248 = vpack.c.b16 %v2236, %v2235
      %v2249 = vpack.c.b16 %v2238, %v2237
      %v2250 = vpack.c.b16 %v2240, %v2239
      %v2251 = vpack.c.b16 %v2242, %v2241
      %v2252 = vpack.c.b16 %v2244, %v2243
      %2261 = vmatprep.subr.bf16.mxu0 0
      %2262 = vmatpush1.bf16.msra.mxu0 %v2245
      %2263 = vmatprep.subr.bf16.mxu0 0
      %2264 = vmatpush1.bf16.msra.mxu0 %v2246
      %2265 = vmatprep.subr.bf16.mxu0 0
      %2266 = vmatpush1.bf16.msra.mxu0 %v2247
      %2267 = vmatprep.subr.bf16.mxu0 0
      %2268 = vmatpush1.bf16.msra.mxu0 %v2248
      %2269 = vmatprep.subr.bf16.mxu0 0
      %2270 = vmatpush1.bf16.msra.mxu0 %v2249
      %2271 = vmatprep.subr.bf16.mxu0 0
      %2272 = vmatpush1.bf16.msra.mxu0 %v2250
      %2273 = vmatprep.subr.bf16.mxu0 0
      %2274 = vmatpush1.bf16.msra.mxu0 %v2251
      %2275 = vmatprep.subr.bf16.mxu0 0
      %2276 = vmatpush1.bf16.msra.mxu0 %v2252
      %2277 = vmatprep.subr.bf16.mxu0 0
      %2278 = vmatpush1.bf16.msra.mxu0 0
      %2279 = vmatprep.subr.bf16.mxu0 0
      %2280 = vmatpush1.bf16.msra.mxu0 0
      %2281 = vmatprep.subr.bf16.mxu0 0
      %2282 = vmatpush1.bf16.msra.mxu0 0
      %2283 = vmatprep.subr.bf16.mxu0 0
      %2284 = vmatpush1.bf16.msra.mxu0 0
      %2285 = vmatprep.subr.bf16.mxu0 0
      %2286 = vmatpush1.bf16.msra.mxu0 0
      %2287 = vmatprep.subr.bf16.mxu0 0
      %2288 = vmatpush1.bf16.msra.mxu0 0
      %2289 = vmatprep.subr.bf16.mxu0 0
      %2290 = vmatpush1.bf16.msra.mxu0 0
      %2291 = vmatprep.subr.bf16.mxu0 0
      %2292 = vmatpush1.bf16.msra.mxu0 0
      %2293 = vmatprep.mubr.bf16.mxu0 0
      %2294 = vmatmul.mubr.bf16.gmra.mrb[0].mxu0 %v2181
      %v2295 = vpop.f32.mrb[0].mxu0
      %v2296 = vadd.f32 0.0, %v2295
      %v2297 = vpop.f32.mrb[0].mxu0
      %v2298 = vpop.f32.mrb[0].mxu0
      %v2299 = vadd.f32 0.0, %v2298
      %v2300 = vpop.f32.mrb[0].mxu0
      %2301 = vmatprep.mubr.bf16.mxu0 0
      %2302 = vmatmul.mubr.bf16.gmra.mrb[0].mxu0 %v2182
      %v2303 = vpop.f32.mrb[0].mxu0
      %v2304 = vadd.f32 0.0, %v2303
      %v2305 = vpop.f32.mrb[0].mxu0
      %v2306 = vpop.f32.mrb[0].mxu0
      %v2307 = vadd.f32 0.0, %v2306
      %v2308 = vpop.f32.mrb[0].mxu0
      %2309 = vmatprep.mubr.bf16.mxu0 0
      %2310 = vmatmul.mubr.bf16.gmra.mrb[0].mxu0 %v2183
      %v2311 = vpop.f32.mrb[0].mxu0
      %v2312 = vadd.f32 0.0, %v2311
      %v2313 = vpop.f32.mrb[0].mxu0
      %v2314 = vpop.f32.mrb[0].mxu0
      %v2315 = vadd.f32 0.0, %v2314
      %v2316 = vpop.f32.mrb[0].mxu0
      %2317 = vmatprep.mubr.bf16.mxu0 0
      %2318 = vmatmul.mubr.bf16.gmra.mrb[0].mxu0 %v2184
      %v2319 = vpop.f32.mrb[0].mxu0
      %v2320 = vadd.f32 0.0, %v2319
      %v2321 = vpop.f32.mrb[0].mxu0
      %v2322 = vpop.f32.mrb[0].mxu0
      %v2323 = vadd.f32 0.0, %v2322
      %v2324 = vpop.f32.mrb[0].mxu0
      %2325 = vmatprep.mubr.bf16.mxu0 0
      %2326 = vmatmul.mubr.bf16.gmra.mrb[0].mxu0 %v2185
      %v2327 = vpop.f32.mrb[0].mxu0
      %v2328 = vadd.f32 0.0, %v2327
      %v2329 = vpop.f32.mrb[0].mxu0
      %v2330 = vpop.f32.mrb[0].mxu0
      %v2331 = vadd.f32 0.0, %v2330
      %v2332 = vpop.f32.mrb[0].mxu0
      %2333 = vmatprep.mubr.bf16.mxu0 0
      %2334 = vmatmul.mubr.bf16.gmra.mrb[0].mxu0 %v2186
      %v2335 = vpop.f32.mrb[0].mxu0
      %v2336 = vadd.f32 0.0, %v2335
      %v2337 = vpop.f32.mrb[0].mxu0
      %v2338 = vpop.f32.mrb[0].mxu0
      %v2339 = vadd.f32 0.0, %v2338
      %v2340 = vpop.f32.mrb[0].mxu0
      %2341 = vmatprep.mubr.bf16.mxu0 0
      %2342 = vmatmul.mubr.bf16.gmra.mrb[0].mxu0 %v2187
      %v2343 = vpop.f32.mrb[0].mxu0
      %v2344 = vadd.f32 0.0, %v2343
      %v2345 = vpop.f32.mrb[0].mxu0
      %v2346 = vpop.f32.mrb[0].mxu0
      %v2347 = vadd.f32 0.0, %v2346
      %v2348 = vpop.f32.mrb[0].mxu0
      %2349 = vmatprep.mubr.bf16.mxu0 0
      %2350 = vmatmul.mubr.bf16.gmra.mrb[0].mxu0 %v2188
      %v2351 = vpop.f32.mrb[0].mxu0
      %v2352 = vadd.f32 0.0, %v2351
      %v2353 = vpop.f32.mrb[0].mxu0
      %v2354 = vpop.f32.mrb[0].mxu0
      %v2355 = vadd.f32 0.0, %v2354
      %v2356 = vpop.f32.mrb[0].mxu0
      %2357 = vmatprep.mubr.bf16.mxu0 0
      %2358 = vmatmul.mubr.bf16.gmra.mrb[0].mxu0 %v2189
      %v2359 = vpop.f32.mrb[0].mxu0
      %v2360 = vadd.f32 0.0, %v2359
      %v2361 = vpop.f32.mrb[0].mxu0
      %v2362 = vpop.f32.mrb[0].mxu0
      %v2363 = vadd.f32 0.0, %v2362
      %v2364 = vpop.f32.mrb[0].mxu0
      %2365 = vmatprep.mubr.bf16.mxu0 0
      %2366 = vmatmul.mubr.bf16.gmra.mrb[0].mxu0 %v2190
      %v2367 = vpop.f32.mrb[0].mxu0
      %v2368 = vadd.f32 0.0, %v2367
      %v2369 = vpop.f32.mrb[0].mxu0
      %v2370 = vpop.f32.mrb[0].mxu0
      %v2371 = vadd.f32 0.0, %v2370
      %v2372 = vpop.f32.mrb[0].mxu0
      %2373 = vmatprep.mubr.bf16.mxu0 0
      %2374 = vmatmul.mubr.bf16.gmra.mrb[0].mxu0 %v2191
      %v2375 = vpop.f32.mrb[0].mxu0
      %v2376 = vadd.f32 0.0, %v2375
      %v2377 = vpop.f32.mrb[0].mxu0
      %v2378 = vpop.f32.mrb[0].mxu0
      %v2379 = vadd.f32 0.0, %v2378
      %v2380 = vpop.f32.mrb[0].mxu0
      %2381 = vmatprep.mubr.bf16.mxu0 0
      %2382 = vmatmul.mubr.bf16.gmra.mrb[0].mxu0 %v2192
      %v2383 = vpop.f32.mrb[0].mxu0
      %v2384 = vadd.f32 0.0, %v2383
      %v2385 = vpop.f32.mrb[0].mxu0
      %v2386 = vpop.f32.mrb[0].mxu0
      %v2387 = vadd.f32 0.0, %v2386
      %v2388 = vpop.f32.mrb[0].mxu0
      %2389 = vmatprep.mubr.bf16.mxu0 0
      %2390 = vmatmul.mubr.bf16.gmra.mrb[0].mxu0 %v2193
      %v2391 = vpop.f32.mrb[0].mxu0
      %v2392 = vadd.f32 0.0, %v2391
      %v2393 = vpop.f32.mrb[0].mxu0
      %v2394 = vpop.f32.mrb[0].mxu0
      %v2395 = vadd.f32 0.0, %v2394
      %v2396 = vpop.f32.mrb[0].mxu0
      %2397 = vmatprep.mubr.bf16.mxu0 0
      %2398 = vmatmul.mubr.bf16.gmra.mrb[0].mxu0 %v2194
      %v2399 = vpop.f32.mrb[0].mxu0
      %v2400 = vadd.f32 0.0, %v2399
      %v2401 = vpop.f32.mrb[0].mxu0
      %v2402 = vpop.f32.mrb[0].mxu0
      %v2403 = vadd.f32 0.0, %v2402
      %v2404 = vpop.f32.mrb[0].mxu0
      %2405 = vmatprep.mubr.bf16.mxu0 0
      %2406 = vmatmul.mubr.bf16.gmra.mrb[0].mxu0 %v2195
      %v2407 = vpop.f32.mrb[0].mxu0
      %v2408 = vadd.f32 0.0, %v2407
      %v2409 = vpop.f32.mrb[0].mxu0
      %v2410 = vpop.f32.mrb[0].mxu0
      %v2411 = vadd.f32 0.0, %v2410
      %v2412 = vpop.f32.mrb[0].mxu0
      %2413 = vmatprep.mubr.bf16.mxu0 0
      %2414 = vmatmul.mubr.bf16.gmra.mrb[0].mxu0 %v2196
      %v2415 = vpop.f32.mrb[0].mxu0
      %v2416 = vadd.f32 0.0, %v2415
      %v2417 = vpop.f32.mrb[0].mxu0
      %v2418 = vpop.f32.mrb[0].mxu0
      %v2419 = vadd.f32 0.0, %v2418
      %v2420 = vpop.f32.mrb[0].mxu0
      %2421 = vdwg.mxu0
      %v2422 = vld [vmem:[#allocation2] sm:$0xff]
      %v2423 = vld [vmem:[#allocation2 + $0x8] sm:$0xff]
      %v2424 = vld [vmem:[#allocation2 + $0x10] sm:$0xff]
      %v2425 = vld [vmem:[#allocation2 + $0x18] sm:$0xff]
      %v2426 = vld [vmem:[#allocation2 + $0x20] sm:$0xff]
      %v2427 = vld [vmem:[#allocation2 + $0x28] sm:$0xff]
      %v2428 = vld [vmem:[#allocation2 + $0x30] sm:$0xff]
      %v2429 = vld [vmem:[#allocation2 + $0x38] sm:$0xff]
      %v2430 = vld [vmem:[#allocation2 + $0x40] sm:$0xff]
      %v2431 = vld [vmem:[#allocation2 + $0x48] sm:$0xff]
      %v2432 = vld [vmem:[#allocation2 + $0x50] sm:$0xff]
      %v2433 = vld [vmem:[#allocation2 + $0x58] sm:$0xff]
      %v2434 = vld [vmem:[#allocation2 + $0x60] sm:$0xff]
      %v2435 = vld [vmem:[#allocation2 + $0x68] sm:$0xff]
      %v2436 = vld [vmem:[#allocation2 + $0x70] sm:$0xff]
      %v2437 = vld [vmem:[#allocation2 + $0x78] sm:$0xff]
      %v2438 = vld [vmem:[#allocation2 + $0x80] sm:$0xff]
      %v2439 = vld [vmem:[#allocation2 + $0x88] sm:$0xff]
      %v2440 = vld [vmem:[#allocation2 + $0x90] sm:$0xff]
      %v2441 = vld [vmem:[#allocation2 + $0x98] sm:$0xff]
      %v2442 = vld [vmem:[#allocation2 + $0xa0] sm:$0xff]
      %v2443 = vld [vmem:[#allocation2 + $0xa8] sm:$0xff]
      %v2444 = vld [vmem:[#allocation2 + $0xb0] sm:$0xff]
      %v2445 = vld [vmem:[#allocation2 + $0xb8] sm:$0xff]
      %v2446 = vld [vmem:[#allocation2 + $0xc0] sm:$0xff]
      %v2447 = vld [vmem:[#allocation2 + $0xc8] sm:$0xff]
      %v2448 = vld [vmem:[#allocation2 + $0xd0] sm:$0xff]
      %v2449 = vld [vmem:[#allocation2 + $0xd8] sm:$0xff]
      %v2450 = vld [vmem:[#allocation2 + $0xe0] sm:$0xff]
      %v2451 = vld [vmem:[#allocation2 + $0xe8] sm:$0xff]
      %v2452 = vld [vmem:[#allocation2 + $0xf0] sm:$0xff]
      %v2453 = vld [vmem:[#allocation2 + $0xf8] sm:$0xff]
      %v2454 = vadd.f32 %v2422, %v2296
      %v2455 = vadd.f32 %v2423, %v2299
      %v2456 = vadd.f32 %v2424, %v2304
      %v2457 = vadd.f32 %v2425, %v2307
      %v2458 = vadd.f32 %v2426, %v2312
      %v2459 = vadd.f32 %v2427, %v2315
      %v2460 = vadd.f32 %v2428, %v2320
      %v2461 = vadd.f32 %v2429, %v2323
      %v2462 = vadd.f32 %v2430, %v2328
      %v2463 = vadd.f32 %v2431, %v2331
      %v2464 = vadd.f32 %v2432, %v2336
      %v2465 = vadd.f32 %v2433, %v2339
      %v2466 = vadd.f32 %v2434, %v2344
      %v2467 = vadd.f32 %v2435, %v2347
      %v2468 = vadd.f32 %v2436, %v2352
      %v2469 = vadd.f32 %v2437, %v2355
      %v2470 = vadd.f32 %v2438, %v2360
      %v2471 = vadd.f32 %v2439, %v2363
      %v2472 = vadd.f32 %v2440, %v2368
      %v2473 = vadd.f32 %v2441, %v2371
      %v2474 = vadd.f32 %v2442, %v2376
      %v2475 = vadd.f32 %v2443, %v2379
      %v2476 = vadd.f32 %v2444, %v2384
      %v2477 = vadd.f32 %v2445, %v2387
      %v2478 = vadd.f32 %v2446, %v2392
      %v2479 = vadd.f32 %v2447, %v2395
      %v2480 = vadd.f32 %v2448, %v2400
      %v2481 = vadd.f32 %v2449, %v2403
      %v2482 = vadd.f32 %v2450, %v2408
      %v2483 = vadd.f32 %v2451, %v2411
      %v2484 = vadd.f32 %v2452, %v2416
      %v2485 = vadd.f32 %v2453, %v2419
      %2486 = vst [vmem:[#allocation2] sm:$0xff] %v2454
      %2487 = vst [vmem:[#allocation2 + $0x8] sm:$0xff] %v2455
      %2488 = vst [vmem:[#allocation2 + $0x10] sm:$0xff] %v2456
      %2489 = vst [vmem:[#allocation2 + $0x18] sm:$0xff] %v2457
      %2490 = vst [vmem:[#allocation2 + $0x20] sm:$0xff] %v2458
      %2491 = vst [vmem:[#allocation2 + $0x28] sm:$0xff] %v2459
      %2492 = vst [vmem:[#allocation2 + $0x30] sm:$0xff] %v2460
      %2493 = vst [vmem:[#allocation2 + $0x38] sm:$0xff] %v2461
      %2494 = vst [vmem:[#allocation2 + $0x40] sm:$0xff] %v2462
      %2495 = vst [vmem:[#allocation2 + $0x48] sm:$0xff] %v2463
      %2496 = vst [vmem:[#allocation2 + $0x50] sm:$0xff] %v2464
      %2497 = vst [vmem:[#allocation2 + $0x58] sm:$0xff] %v2465
      %2498 = vst [vmem:[#allocation2 + $0x60] sm:$0xff] %v2466
      %2499 = vst [vmem:[#allocation2 + $0x68] sm:$0xff] %v2467
      %2500 = vst [vmem:[#allocation2 + $0x70] sm:$0xff] %v2468
      %2501 = vst [vmem:[#allocation2 + $0x78] sm:$0xff] %v2469
      %2502 = vst [vmem:[#allocation2 + $0x80] sm:$0xff] %v2470
      %2503 = vst [vmem:[#allocation2 + $0x88] sm:$0xff] %v2471
      %2504 = vst [vmem:[#allocation2 + $0x90] sm:$0xff] %v2472
      %2505 = vst [vmem:[#allocation2 + $0x98] sm:$0xff] %v2473
      %2506 = vst [vmem:[#allocation2 + $0xa0] sm:$0xff] %v2474
      %2507 = vst [vmem:[#allocation2 + $0xa8] sm:$0xff] %v2475
      %2508 = vst [vmem:[#allocation2 + $0xb0] sm:$0xff] %v2476
      %2509 = vst [vmem:[#allocation2 + $0xb8] sm:$0xff] %v2477
      %2510 = vst [vmem:[#allocation2 + $0xc0] sm:$0xff] %v2478
      %2511 = vst [vmem:[#allocation2 + $0xc8] sm:$0xff] %v2479
      %2512 = vst [vmem:[#allocation2 + $0xd0] sm:$0xff] %v2480
      %2513 = vst [vmem:[#allocation2 + $0xd8] sm:$0xff] %v2481
      %2514 = vst [vmem:[#allocation2 + $0xe0] sm:$0xff] %v2482
      %2515 = vst [vmem:[#allocation2 + $0xe8] sm:$0xff] %v2483
      %2516 = vst [vmem:[#allocation2 + $0xf0] sm:$0xff] %v2484
      %2517 = vst [vmem:[#allocation2 + $0xf8] sm:$0xff] %v2485
      %v2518 = vld [vmem:[%s2067] sm:$0xf]
      %v2519 = vld [vmem:[%s2067 + $0x4] sm:$0xf]
      %v2520 = vld [vmem:[%s2067 + $0x8] sm:$0x1]
      %v2521 = vld [vmem:[%s2067 + $0xc] sm:$0xf]
      %v2522 = vld [vmem:[%s2067 + $0x10] sm:$0xf]
      %v2523 = vld [vmem:[%s2067 + $0x14] sm:$0x1]
      %v2524 = vld [vmem:[%s2067 + $0x18] sm:$0xf]
      %v2525 = vld [vmem:[%s2067 + $0x1c] sm:$0xf]
      %v2526 = vld [vmem:[%s2067 + $0x20] sm:$0x1]
      %v2527 = vld [vmem:[%s2067 + $0x24] sm:$0xf]
      %v2528 = vld [vmem:[%s2067 + $0x28] sm:$0xf]
      %v2529 = vld [vmem:[%s2067 + $0x2c] sm:$0x1]
      %v2530 = vld [vmem:[%s2067 + $0x30] sm:$0xf]
      %v2531 = vld [vmem:[%s2067 + $0x34] sm:$0xf]
      %v2532 = vld [vmem:[%s2067 + $0x38] sm:$0x1]
      %v2533 = vld [vmem:[%s2067 + $0x3c] sm:$0xf]
      %v2534 = vld [vmem:[%s2067 + $0x40] sm:$0xf]
      %v2535 = vld [vmem:[%s2067 + $0x44] sm:$0x1]
      %v2536 = vld [vmem:[%s2067 + $0x48] sm:$0xf]
      %v2537 = vld [vmem:[%s2067 + $0x4c] sm:$0xf]
      %v2538 = vld [vmem:[%s2067 + $0x50] sm:$0x1]
      %v2539 = vld [vmem:[%s2067 + $0x54] sm:$0xf]
      %v2540 = vld [vmem:[%s2067 + $0x58] sm:$0xf]
      %v2541 = vld [vmem:[%s2067 + $0x5c] sm:$0x1]
      %v2542 = vld [vmem:[%s2067 + $0x60] sm:$0xf]
      %v2543 = vld [vmem:[%s2067 + $0x64] sm:$0xf]
      %v2544 = vld [vmem:[%s2067 + $0x68] sm:$0x1]
      %v2545 = vld [vmem:[%s2067 + $0x6c] sm:$0xf]
      %v2546 = vld [vmem:[%s2067 + $0x70] sm:$0xf]
      %v2547 = vld [vmem:[%s2067 + $0x74] sm:$0x1]
      %v2548 = vld [vmem:[%s2067 + $0x78] sm:$0xf]
      %v2549 = vld [vmem:[%s2067 + $0x7c] sm:$0xf]
      %v2550 = vld [vmem:[%s2067 + $0x80] sm:$0x1]
      %v2551 = vld [vmem:[%s2067 + $0x84] sm:$0xf]
      %v2552 = vld [vmem:[%s2067 + $0x88] sm:$0xf]
      %v2553 = vld [vmem:[%s2067 + $0x8c] sm:$0x1]
      %v2554 = vld [vmem:[%s2067 + $0x90] sm:$0xf]
      %v2555 = vld [vmem:[%s2067 + $0x94] sm:$0xf]
      %v2556 = vld [vmem:[%s2067 + $0x98] sm:$0x1]
      %v2557 = vld [vmem:[%s2067 + $0x9c] sm:$0xf]
      %v2558 = vld [vmem:[%s2067 + $0xa0] sm:$0xf]
      %v2559 = vld [vmem:[%s2067 + $0xa4] sm:$0x1]
      %v2560 = vld [vmem:[%s2067 + $0xa8] sm:$0xf]
      %v2561 = vld [vmem:[%s2067 + $0xac] sm:$0xf]
      %v2562 = vld [vmem:[%s2067 + $0xb0] sm:$0x1]
      %v2563 = vld [vmem:[%s2067 + $0xb4] sm:$0xf]
      %v2564 = vld [vmem:[%s2067 + $0xb8] sm:$0xf]
      %v2565 = vld [vmem:[%s2067 + $0xbc] sm:$0x1]
      %v2567 = vshrl.u32 %v2518, 16
      %v2569 = vrot.slane %v2567, 4
      %v2570 = vshll.u32 %v2518, 16
      %v2572 = vrot.slane %v2570, 5
      %v2573 = vor.u32 %v2569, %v2572
      %v2574 = vrot.slane %v2573, 4
      %v2576 = vshll.u32 %v2519, 16
      %v2578 = vrot.slane %v2576, 5
      %v2579 = vsel %vm699, %v2574, %v2578
      %v2580 = vshrl.u32 %v2519, 16
      %v2582 = vrot.slane %v2580, 4
      %v2583 = vor.u32 %v2582, %v2578
      %v2584 = vrot.slane %v2583, 4
      %v2586 = vshll.u32 %v2520, 16
      %v2588 = vrot.slane %v2586, 5
      %v2589 = vsel %vm699, %v2584, %v2588
      %v2591 = vshrl.u32 %v2521, 16
      %v2593 = vrot.slane %v2591, 4
      %v2594 = vshll.u32 %v2521, 16
      %v2596 = vrot.slane %v2594, 5
      %v2597 = vor.u32 %v2593, %v2596
      %v2598 = vrot.slane %v2597, 4
      %v2600 = vshll.u32 %v2522, 16
      %v2602 = vrot.slane %v2600, 5
      %v2603 = vsel %vm699, %v2598, %v2602
      %v2604 = vshrl.u32 %v2522, 16
      %v2606 = vrot.slane %v2604, 4
      %v2607 = vor.u32 %v2606, %v2602
      %v2608 = vrot.slane %v2607, 4
      %v2610 = vshll.u32 %v2523, 16
      %v2612 = vrot.slane %v2610, 5
      %v2613 = vsel %vm699, %v2608, %v2612
      %v2615 = vshrl.u32 %v2524, 16
      %v2617 = vrot.slane %v2615, 4
      %v2618 = vshll.u32 %v2524, 16
      %v2620 = vrot.slane %v2618, 5
      %v2621 = vor.u32 %v2617, %v2620
      %v2622 = vrot.slane %v2621, 4
      %v2624 = vshll.u32 %v2525, 16
      %v2626 = vrot.slane %v2624, 5
      %v2627 = vsel %vm699, %v2622, %v2626
      %v2628 = vshrl.u32 %v2525, 16
      %v2630 = vrot.slane %v2628, 4
      %v2631 = vor.u32 %v2630, %v2626
      %v2632 = vrot.slane %v2631, 4
      %v2634 = vshll.u32 %v2526, 16
      %v2636 = vrot.slane %v2634, 5
      %v2637 = vsel %vm699, %v2632, %v2636
      %v2639 = vshrl.u32 %v2527, 16
      %v2641 = vrot.slane %v2639, 4
      %v2642 = vshll.u32 %v2527, 16
      %v2644 = vrot.slane %v2642, 5
      %v2645 = vor.u32 %v2641, %v2644
      %v2646 = vrot.slane %v2645, 4
      %v2648 = vshll.u32 %v2528, 16
      %v2650 = vrot.slane %v2648, 5
      %v2651 = vsel %vm699, %v2646, %v2650
      %v2652 = vshrl.u32 %v2528, 16
      %v2654 = vrot.slane %v2652, 4
      %v2655 = vor.u32 %v2654, %v2650
      %v2656 = vrot.slane %v2655, 4
      %v2658 = vshll.u32 %v2529, 16
      %v2660 = vrot.slane %v2658, 5
      %v2661 = vsel %vm699, %v2656, %v2660
      %v2663 = vshrl.u32 %v2530, 16
      %v2665 = vrot.slane %v2663, 4
      %v2666 = vshll.u32 %v2530, 16
      %v2668 = vrot.slane %v2666, 5
      %v2669 = vor.u32 %v2665, %v2668
      %v2670 = vrot.slane %v2669, 4
      %v2672 = vshll.u32 %v2531, 16
      %v2674 = vrot.slane %v2672, 5
      %v2675 = vsel %vm699, %v2670, %v2674
      %v2676 = vshrl.u32 %v2531, 16
      %v2678 = vrot.slane %v2676, 4
      %v2679 = vor.u32 %v2678, %v2674
      %v2680 = vrot.slane %v2679, 4
      %v2682 = vshll.u32 %v2532, 16
      %v2684 = vrot.slane %v2682, 5
      %v2685 = vsel %vm699, %v2680, %v2684
      %v2687 = vshrl.u32 %v2533, 16
      %v2689 = vrot.slane %v2687, 4
      %v2690 = vshll.u32 %v2533, 16
      %v2692 = vrot.slane %v2690, 5
      %v2693 = vor.u32 %v2689, %v2692
      %v2694 = vrot.slane %v2693, 4
      %v2696 = vshll.u32 %v2534, 16
      %v2698 = vrot.slane %v2696, 5
      %v2699 = vsel %vm699, %v2694, %v2698
      %v2700 = vshrl.u32 %v2534, 16
      %v2702 = vrot.slane %v2700, 4
      %v2703 = vor.u32 %v2702, %v2698
      %v2704 = vrot.slane %v2703, 4
      %v2706 = vshll.u32 %v2535, 16
      %v2708 = vrot.slane %v2706, 5
      %v2709 = vsel %vm699, %v2704, %v2708
      %v2711 = vshrl.u32 %v2536, 16
      %v2713 = vrot.slane %v2711, 4
      %v2714 = vshll.u32 %v2536, 16
      %v2716 = vrot.slane %v2714, 5
      %v2717 = vor.u32 %v2713, %v2716
      %v2718 = vrot.slane %v2717, 4
      %v2720 = vshll.u32 %v2537, 16
      %v2722 = vrot.slane %v2720, 5
      %v2723 = vsel %vm699, %v2718, %v2722
      %v2724 = vshrl.u32 %v2537, 16
      %v2726 = vrot.slane %v2724, 4
      %v2727 = vor.u32 %v2726, %v2722
      %v2728 = vrot.slane %v2727, 4
      %v2730 = vshll.u32 %v2538, 16
      %v2732 = vrot.slane %v2730, 5
      %v2733 = vsel %vm699, %v2728, %v2732
      %v2735 = vshrl.u32 %v2539, 16
      %v2737 = vrot.slane %v2735, 4
      %v2738 = vshll.u32 %v2539, 16
      %v2740 = vrot.slane %v2738, 5
      %v2741 = vor.u32 %v2737, %v2740
      %v2742 = vrot.slane %v2741, 4
      %v2744 = vshll.u32 %v2540, 16
      %v2746 = vrot.slane %v2744, 5
      %v2747 = vsel %vm699, %v2742, %v2746
      %v2748 = vshrl.u32 %v2540, 16
      %v2750 = vrot.slane %v2748, 4
      %v2751 = vor.u32 %v2750, %v2746
      %v2752 = vrot.slane %v2751, 4
      %v2754 = vshll.u32 %v2541, 16
      %v2756 = vrot.slane %v2754, 5
      %v2757 = vsel %vm699, %v2752, %v2756
      %v2759 = vshrl.u32 %v2542, 16
      %v2761 = vrot.slane %v2759, 4
      %v2762 = vshll.u32 %v2542, 16
      %v2764 = vrot.slane %v2762, 5
      %v2765 = vor.u32 %v2761, %v2764
      %v2766 = vrot.slane %v2765, 4
      %v2768 = vshll.u32 %v2543, 16
      %v2770 = vrot.slane %v2768, 5
      %v2771 = vsel %vm699, %v2766, %v2770
      %v2772 = vshrl.u32 %v2543, 16
      %v2774 = vrot.slane %v2772, 4
      %v2775 = vor.u32 %v2774, %v2770
      %v2776 = vrot.slane %v2775, 4
      %v2778 = vshll.u32 %v2544, 16
      %v2780 = vrot.slane %v2778, 5
      %v2781 = vsel %vm699, %v2776, %v2780
      %v2783 = vshrl.u32 %v2545, 16
      %v2785 = vrot.slane %v2783, 4
      %v2786 = vshll.u32 %v2545, 16
      %v2788 = vrot.slane %v2786, 5
      %v2789 = vor.u32 %v2785, %v2788
      %v2790 = vrot.slane %v2789, 4
      %v2792 = vshll.u32 %v2546, 16
      %v2794 = vrot.slane %v2792, 5
      %v2795 = vsel %vm699, %v2790, %v2794
      %v2796 = vshrl.u32 %v2546, 16
      %v2798 = vrot.slane %v2796, 4
      %v2799 = vor.u32 %v2798, %v2794
      %v2800 = vrot.slane %v2799, 4
      %v2802 = vshll.u32 %v2547, 16
      %v2804 = vrot.slane %v2802, 5
      %v2805 = vsel %vm699, %v2800, %v2804
      %v2807 = vshrl.u32 %v2548, 16
      %v2809 = vrot.slane %v2807, 4
      %v2810 = vshll.u32 %v2548, 16
      %v2812 = vrot.slane %v2810, 5
      %v2813 = vor.u32 %v2809, %v2812
      %v2814 = vrot.slane %v2813, 4
      %v2816 = vshll.u32 %v2549, 16
      %v2818 = vrot.slane %v2816, 5
      %v2819 = vsel %vm699, %v2814, %v2818
      %v2820 = vshrl.u32 %v2549, 16
      %v2822 = vrot.slane %v2820, 4
      %v2823 = vor.u32 %v2822, %v2818
      %v2824 = vrot.slane %v2823, 4
      %v2826 = vshll.u32 %v2550, 16
      %v2828 = vrot.slane %v2826, 5
      %v2829 = vsel %vm699, %v2824, %v2828
      %v2831 = vshrl.u32 %v2551, 16
      %v2833 = vrot.slane %v2831, 4
      %v2834 = vshll.u32 %v2551, 16
      %v2836 = vrot.slane %v2834, 5
      %v2837 = vor.u32 %v2833, %v2836
      %v2838 = vrot.slane %v2837, 4
      %v2840 = vshll.u32 %v2552, 16
      %v2842 = vrot.slane %v2840, 5
      %v2843 = vsel %vm699, %v2838, %v2842
      %v2844 = vshrl.u32 %v2552, 16
      %v2846 = vrot.slane %v2844, 4
      %v2847 = vor.u32 %v2846, %v2842
      %v2848 = vrot.slane %v2847, 4
      %v2850 = vshll.u32 %v2553, 16
      %v2852 = vrot.slane %v2850, 5
      %v2853 = vsel %vm699, %v2848, %v2852
      %v2855 = vshrl.u32 %v2554, 16
      %v2857 = vrot.slane %v2855, 4
      %v2858 = vshll.u32 %v2554, 16
      %v2860 = vrot.slane %v2858, 5
      %v2861 = vor.u32 %v2857, %v2860
      %v2862 = vrot.slane %v2861, 4
      %v2864 = vshll.u32 %v2555, 16
      %v2866 = vrot.slane %v2864, 5
      %v2867 = vsel %vm699, %v2862, %v2866
      %v2868 = vshrl.u32 %v2555, 16
      %v2870 = vrot.slane %v2868, 4
      %v2871 = vor.u32 %v2870, %v2866
      %v2872 = vrot.slane %v2871, 4
      %v2874 = vshll.u32 %v2556, 16
      %v2876 = vrot.slane %v2874, 5
      %v2877 = vsel %vm699, %v2872, %v2876
      %v2879 = vshrl.u32 %v2557, 16
      %v2881 = vrot.slane %v2879, 4
      %v2882 = vshll.u32 %v2557, 16
      %v2884 = vrot.slane %v2882, 5
      %v2885 = vor.u32 %v2881, %v2884
      %v2886 = vrot.slane %v2885, 4
      %v2888 = vshll.u32 %v2558, 16
      %v2890 = vrot.slane %v2888, 5
      %v2891 = vsel %vm699, %v2886, %v2890
      %v2892 = vshrl.u32 %v2558, 16
      %v2894 = vrot.slane %v2892, 4
      %v2895 = vor.u32 %v2894, %v2890
      %v2896 = vrot.slane %v2895, 4
      %v2898 = vshll.u32 %v2559, 16
      %v2900 = vrot.slane %v2898, 5
      %v2901 = vsel %vm699, %v2896, %v2900
      %v2903 = vshrl.u32 %v2560, 16
      %v2905 = vrot.slane %v2903, 4
      %v2906 = vshll.u32 %v2560, 16
      %v2908 = vrot.slane %v2906, 5
      %v2909 = vor.u32 %v2905, %v2908
      %v2910 = vrot.slane %v2909, 4
      %v2912 = vshll.u32 %v2561, 16
      %v2914 = vrot.slane %v2912, 5
      %v2915 = vsel %vm699, %v2910, %v2914
      %v2916 = vshrl.u32 %v2561, 16
      %v2918 = vrot.slane %v2916, 4
      %v2919 = vor.u32 %v2918, %v2914
      %v2920 = vrot.slane %v2919, 4
      %v2922 = vshll.u32 %v2562, 16
      %v2924 = vrot.slane %v2922, 5
      %v2925 = vsel %vm699, %v2920, %v2924
      %v2927 = vshrl.u32 %v2563, 16
      %v2929 = vrot.slane %v2927, 4
      %v2930 = vshll.u32 %v2563, 16
      %v2932 = vrot.slane %v2930, 5
      %v2933 = vor.u32 %v2929, %v2932
      %v2934 = vrot.slane %v2933, 4
      %v2936 = vshll.u32 %v2564, 16
      %v2938 = vrot.slane %v2936, 5
      %v2939 = vsel %vm699, %v2934, %v2938
      %v2940 = vshrl.u32 %v2564, 16
      %v2942 = vrot.slane %v2940, 4
      %v2943 = vor.u32 %v2942, %v2938
      %v2944 = vrot.slane %v2943, 4
      %v2946 = vshll.u32 %v2565, 16
      %v2948 = vrot.slane %v2946, 5
      %v2949 = vsel %vm699, %v2944, %v2948
      %s2950 = scalar_lea.vmem %s248, 256
      %v2951 = vld [vmem:[%s2950] sm:$0xf]
      %v2952 = vld [vmem:[%s2950 + $0x4] sm:$0xf]
      %v2953 = vld [vmem:[%s2950 + $0x8] sm:$0xf]
      %v2954 = vld [vmem:[%s2950 + $0xc] sm:$0xf]
      %v2955 = vld [vmem:[%s2950 + $0x10] sm:$0xf]
      %v2956 = vld [vmem:[%s2950 + $0x14] sm:$0xf]
      %v2957 = vld [vmem:[%s2950 + $0x18] sm:$0xf]
      %v2958 = vld [vmem:[%s2950 + $0x1c] sm:$0xf]
      %v2959 = vld [vmem:[%s2950 + $0x20] sm:$0xf]
      %v2960 = vld [vmem:[%s2950 + $0x24] sm:$0xf]
      %v2961 = vld [vmem:[%s2950 + $0x28] sm:$0xf]
      %v2962 = vld [vmem:[%s2950 + $0x2c] sm:$0xf]
      %v2963 = vld [vmem:[%s2950 + $0x30] sm:$0xf]
      %v2964 = vld [vmem:[%s2950 + $0x34] sm:$0xf]
      %v2965 = vld [vmem:[%s2950 + $0x38] sm:$0xf]
      %v2966 = vld [vmem:[%s2950 + $0x3c] sm:$0xf]
      %v2967 = vunpack.c.l.b16 %v2579
      %v2968 = vunpack.c.l.b16 %v2589
      %v2969 = vunpack.c.l.b16 %v2603
      %v2970 = vunpack.c.l.b16 %v2613
      %v2971 = vunpack.c.l.b16 %v2627
      %v2972 = vunpack.c.l.b16 %v2637
      %v2973 = vunpack.c.l.b16 %v2651
      %v2974 = vunpack.c.l.b16 %v2661
      %v2975 = vunpack.c.l.b16 %v2675
      %v2976 = vunpack.c.l.b16 %v2685
      %v2977 = vunpack.c.l.b16 %v2699
      %v2978 = vunpack.c.l.b16 %v2709
      %v2979 = vunpack.c.l.b16 %v2723
      %v2980 = vunpack.c.l.b16 %v2733
      %v2981 = vunpack.c.l.b16 %v2747
      %v2982 = vunpack.c.l.b16 %v2757
      %v2983 = vunpack.c.l.b16 %v2771
      %v2984 = vunpack.c.l.b16 %v2781
      %v2985 = vunpack.c.l.b16 %v2795
      %v2986 = vunpack.c.l.b16 %v2805
      %v2987 = vunpack.c.l.b16 %v2819
      %v2988 = vunpack.c.l.b16 %v2829
      %v2989 = vunpack.c.l.b16 %v2843
      %v2990 = vunpack.c.l.b16 %v2853
      %v2991 = vunpack.c.l.b16 %v2867
      %v2992 = vunpack.c.l.b16 %v2877
      %v2993 = vunpack.c.l.b16 %v2891
      %v2994 = vunpack.c.l.b16 %v2901
      %v2995 = vunpack.c.l.b16 %v2915
      %v2996 = vunpack.c.l.b16 %v2925
      %v2997 = vunpack.c.l.b16 %v2939
      %v2998 = vunpack.c.l.b16 %v2949
      %v2999 = vpack.c.b16 %v2968, %v2967
      %v3000 = vpack.c.b16 %v2970, %v2969
      %v3001 = vpack.c.b16 %v2972, %v2971
      %v3002 = vpack.c.b16 %v2974, %v2973
      %v3003 = vpack.c.b16 %v2976, %v2975
      %v3004 = vpack.c.b16 %v2978, %v2977
      %v3005 = vpack.c.b16 %v2980, %v2979
      %v3006 = vpack.c.b16 %v2982, %v2981
      %v3007 = vpack.c.b16 %v2984, %v2983
      %v3008 = vpack.c.b16 %v2986, %v2985
      %v3009 = vpack.c.b16 %v2988, %v2987
      %v3010 = vpack.c.b16 %v2990, %v2989
      %v3011 = vpack.c.b16 %v2992, %v2991
      %v3012 = vpack.c.b16 %v2994, %v2993
      %v3013 = vpack.c.b16 %v2996, %v2995
      %v3014 = vpack.c.b16 %v2998, %v2997
      %v3047 = vunpack.c.l.b16 %v2951
      %v3048 = vunpack.c.l.b16 %v2952
      %v3049 = vunpack.c.l.b16 %v2953
      %v3050 = vunpack.c.l.b16 %v2954
      %v3051 = vunpack.c.l.b16 %v2955
      %v3052 = vunpack.c.l.b16 %v2956
      %v3053 = vunpack.c.l.b16 %v2957
      %v3054 = vunpack.c.l.b16 %v2958
      %v3055 = vunpack.c.l.b16 %v2959
      %v3056 = vunpack.c.l.b16 %v2960
      %v3057 = vunpack.c.l.b16 %v2961
      %v3058 = vunpack.c.l.b16 %v2962
      %v3059 = vunpack.c.l.b16 %v2963
      %v3060 = vunpack.c.l.b16 %v2964
      %v3061 = vunpack.c.l.b16 %v2965
      %v3062 = vunpack.c.l.b16 %v2966
      %v3063 = vpack.c.b16 %v3048, %v3047
      %v3064 = vpack.c.b16 %v3050, %v3049
      %v3065 = vpack.c.b16 %v3052, %v3051
      %v3066 = vpack.c.b16 %v3054, %v3053
      %v3067 = vpack.c.b16 %v3056, %v3055
      %v3068 = vpack.c.b16 %v3058, %v3057
      %v3069 = vpack.c.b16 %v3060, %v3059
      %v3070 = vpack.c.b16 %v3062, %v3061
      %3079 = vmatprep.subr.bf16.mxu0 0
      %3080 = vmatpush1.bf16.msra.mxu0 %v3063
      %3081 = vmatprep.subr.bf16.mxu0 0
      %3082 = vmatpush1.bf16.msra.mxu0 %v3064
      %3083 = vmatprep.subr.bf16.mxu0 0
      %3084 = vmatpush1.bf16.msra.mxu0 %v3065
      %3085 = vmatprep.subr.bf16.mxu0 0
      %3086 = vmatpush1.bf16.msra.mxu0 %v3066
      %3087 = vmatprep.subr.bf16.mxu0 0
      %3088 = vmatpush1.bf16.msra.mxu0 %v3067
      %3089 = vmatprep.subr.bf16.mxu0 0
      %3090 = vmatpush1.bf16.msra.mxu0 %v3068
      %3091 = vmatprep.subr.bf16.mxu0 0
      %3092 = vmatpush1.bf16.msra.mxu0 %v3069
      %3093 = vmatprep.subr.bf16.mxu0 0
      %3094 = vmatpush1.bf16.msra.mxu0 %v3070
      %3095 = vmatprep.subr.bf16.mxu0 0
      %3096 = vmatpush1.bf16.msra.mxu0 0
      %3097 = vmatprep.subr.bf16.mxu0 0
      %3098 = vmatpush1.bf16.msra.mxu0 0
      %3099 = vmatprep.subr.bf16.mxu0 0
      %3100 = vmatpush1.bf16.msra.mxu0 0
      %3101 = vmatprep.subr.bf16.mxu0 0
      %3102 = vmatpush1.bf16.msra.mxu0 0
      %3103 = vmatprep.subr.bf16.mxu0 0
      %3104 = vmatpush1.bf16.msra.mxu0 0
      %3105 = vmatprep.subr.bf16.mxu0 0
      %3106 = vmatpush1.bf16.msra.mxu0 0
      %3107 = vmatprep.subr.bf16.mxu0 0
      %3108 = vmatpush1.bf16.msra.mxu0 0
      %3109 = vmatprep.subr.bf16.mxu0 0
      %3110 = vmatpush1.bf16.msra.mxu0 0
      %3111 = vmatprep.mubr.bf16.mxu0 0
      %3112 = vmatmul.mubr.bf16.gmra.mrb[0].mxu0 %v2999
      %v3113 = vpop.f32.mrb[0].mxu0
      %v3114 = vadd.f32 0.0, %v3113
      %v3115 = vpop.f32.mrb[0].mxu0
      %v3116 = vpop.f32.mrb[0].mxu0
      %v3117 = vadd.f32 0.0, %v3116
      %v3118 = vpop.f32.mrb[0].mxu0
      %3119 = vmatprep.mubr.bf16.mxu0 0
      %3120 = vmatmul.mubr.bf16.gmra.mrb[0].mxu0 %v3000
      %v3121 = vpop.f32.mrb[0].mxu0
      %v3122 = vadd.f32 0.0, %v3121
      %v3123 = vpop.f32.mrb[0].mxu0
      %v3124 = vpop.f32.mrb[0].mxu0
      %v3125 = vadd.f32 0.0, %v3124
      %v3126 = vpop.f32.mrb[0].mxu0
      %3127 = vmatprep.mubr.bf16.mxu0 0
      %3128 = vmatmul.mubr.bf16.gmra.mrb[0].mxu0 %v3001
      %v3129 = vpop.f32.mrb[0].mxu0
      %v3130 = vadd.f32 0.0, %v3129
      %v3131 = vpop.f32.mrb[0].mxu0
      %v3132 = vpop.f32.mrb[0].mxu0
      %v3133 = vadd.f32 0.0, %v3132
      %v3134 = vpop.f32.mrb[0].mxu0
      %3135 = vmatprep.mubr.bf16.mxu0 0
      %3136 = vmatmul.mubr.bf16.gmra.mrb[0].mxu0 %v3002
      %v3137 = vpop.f32.mrb[0].mxu0
      %v3138 = vadd.f32 0.0, %v3137
      %v3139 = vpop.f32.mrb[0].mxu0
      %v3140 = vpop.f32.mrb[0].mxu0
      %v3141 = vadd.f32 0.0, %v3140
      %v3142 = vpop.f32.mrb[0].mxu0
      %3143 = vmatprep.mubr.bf16.mxu0 0
      %3144 = vmatmul.mubr.bf16.gmra.mrb[0].mxu0 %v3003
      %v3145 = vpop.f32.mrb[0].mxu0
      %v3146 = vadd.f32 0.0, %v3145
      %v3147 = vpop.f32.mrb[0].mxu0
      %v3148 = vpop.f32.mrb[0].mxu0
      %v3149 = vadd.f32 0.0, %v3148
      %v3150 = vpop.f32.mrb[0].mxu0
      %3151 = vmatprep.mubr.bf16.mxu0 0
      %3152 = vmatmul.mubr.bf16.gmra.mrb[0].mxu0 %v3004
      %v3153 = vpop.f32.mrb[0].mxu0
      %v3154 = vadd.f32 0.0, %v3153
      %v3155 = vpop.f32.mrb[0].mxu0
      %v3156 = vpop.f32.mrb[0].mxu0
      %v3157 = vadd.f32 0.0, %v3156
      %v3158 = vpop.f32.mrb[0].mxu0
      %3159 = vmatprep.mubr.bf16.mxu0 0
      %3160 = vmatmul.mubr.bf16.gmra.mrb[0].mxu0 %v3005
      %v3161 = vpop.f32.mrb[0].mxu0
      %v3162 = vadd.f32 0.0, %v3161
      %v3163 = vpop.f32.mrb[0].mxu0
      %v3164 = vpop.f32.mrb[0].mxu0
      %v3165 = vadd.f32 0.0, %v3164
      %v3166 = vpop.f32.mrb[0].mxu0
      %3167 = vmatprep.mubr.bf16.mxu0 0
      %3168 = vmatmul.mubr.bf16.gmra.mrb[0].mxu0 %v3006
      %v3169 = vpop.f32.mrb[0].mxu0
      %v3170 = vadd.f32 0.0, %v3169
      %v3171 = vpop.f32.mrb[0].mxu0
      %v3172 = vpop.f32.mrb[0].mxu0
      %v3173 = vadd.f32 0.0, %v3172
      %v3174 = vpop.f32.mrb[0].mxu0
      %3175 = vmatprep.mubr.bf16.mxu0 0
      %3176 = vmatmul.mubr.bf16.gmra.mrb[0].mxu0 %v3007
      %v3177 = vpop.f32.mrb[0].mxu0
      %v3178 = vadd.f32 0.0, %v3177
      %v3179 = vpop.f32.mrb[0].mxu0
      %v3180 = vpop.f32.mrb[0].mxu0
      %v3181 = vadd.f32 0.0, %v3180
      %v3182 = vpop.f32.mrb[0].mxu0
      %3183 = vmatprep.mubr.bf16.mxu0 0
      %3184 = vmatmul.mubr.bf16.gmra.mrb[0].mxu0 %v3008
      %v3185 = vpop.f32.mrb[0].mxu0
      %v3186 = vadd.f32 0.0, %v3185
      %v3187 = vpop.f32.mrb[0].mxu0
      %v3188 = vpop.f32.mrb[0].mxu0
      %v3189 = vadd.f32 0.0, %v3188
      %v3190 = vpop.f32.mrb[0].mxu0
      %3191 = vmatprep.mubr.bf16.mxu0 0
      %3192 = vmatmul.mubr.bf16.gmra.mrb[0].mxu0 %v3009
      %v3193 = vpop.f32.mrb[0].mxu0
      %v3194 = vadd.f32 0.0, %v3193
      %v3195 = vpop.f32.mrb[0].mxu0
      %v3196 = vpop.f32.mrb[0].mxu0
      %v3197 = vadd.f32 0.0, %v3196
      %v3198 = vpop.f32.mrb[0].mxu0
      %3199 = vmatprep.mubr.bf16.mxu0 0
      %3200 = vmatmul.mubr.bf16.gmra.mrb[0].mxu0 %v3010
      %v3201 = vpop.f32.mrb[0].mxu0
      %v3202 = vadd.f32 0.0, %v3201
      %v3203 = vpop.f32.mrb[0].mxu0
      %v3204 = vpop.f32.mrb[0].mxu0
      %v3205 = vadd.f32 0.0, %v3204
      %v3206 = vpop.f32.mrb[0].mxu0
      %3207 = vmatprep.mubr.bf16.mxu0 0
      %3208 = vmatmul.mubr.bf16.gmra.mrb[0].mxu0 %v3011
      %v3209 = vpop.f32.mrb[0].mxu0
      %v3210 = vadd.f32 0.0, %v3209
      %v3211 = vpop.f32.mrb[0].mxu0
      %v3212 = vpop.f32.mrb[0].mxu0
      %v3213 = vadd.f32 0.0, %v3212
      %v3214 = vpop.f32.mrb[0].mxu0
      %3215 = vmatprep.mubr.bf16.mxu0 0
      %3216 = vmatmul.mubr.bf16.gmra.mrb[0].mxu0 %v3012
      %v3217 = vpop.f32.mrb[0].mxu0
      %v3218 = vadd.f32 0.0, %v3217
      %v3219 = vpop.f32.mrb[0].mxu0
      %v3220 = vpop.f32.mrb[0].mxu0
      %v3221 = vadd.f32 0.0, %v3220
      %v3222 = vpop.f32.mrb[0].mxu0
      %3223 = vmatprep.mubr.bf16.mxu0 0
      %3224 = vmatmul.mubr.bf16.gmra.mrb[0].mxu0 %v3013
      %v3225 = vpop.f32.mrb[0].mxu0
      %v3226 = vadd.f32 0.0, %v3225
      %v3227 = vpop.f32.mrb[0].mxu0
      %v3228 = vpop.f32.mrb[0].mxu0
      %v3229 = vadd.f32 0.0, %v3228
      %v3230 = vpop.f32.mrb[0].mxu0
      %3231 = vmatprep.mubr.bf16.mxu0 0
      %3232 = vmatmul.mubr.bf16.gmra.mrb[0].mxu0 %v3014
      %v3233 = vpop.f32.mrb[0].mxu0
      %v3234 = vadd.f32 0.0, %v3233
      %v3235 = vpop.f32.mrb[0].mxu0
      %v3236 = vpop.f32.mrb[0].mxu0
      %v3237 = vadd.f32 0.0, %v3236
      %v3238 = vpop.f32.mrb[0].mxu0
      %3239 = vdwg.mxu0
      %v3240 = vld [vmem:[#allocation2] sm:$0xff]
      %v3241 = vld [vmem:[#allocation2 + $0x8] sm:$0xff]
      %v3242 = vld [vmem:[#allocation2 + $0x10] sm:$0xff]
      %v3243 = vld [vmem:[#allocation2 + $0x18] sm:$0xff]
      %v3244 = vld [vmem:[#allocation2 + $0x20] sm:$0xff]
      %v3245 = vld [vmem:[#allocation2 + $0x28] sm:$0xff]
      %v3246 = vld [vmem:[#allocation2 + $0x30] sm:$0xff]
      %v3247 = vld [vmem:[#allocation2 + $0x38] sm:$0xff]
      %v3248 = vld [vmem:[#allocation2 + $0x40] sm:$0xff]
      %v3249 = vld [vmem:[#allocation2 + $0x48] sm:$0xff]
      %v3250 = vld [vmem:[#allocation2 + $0x50] sm:$0xff]
      %v3251 = vld [vmem:[#allocation2 + $0x58] sm:$0xff]
      %v3252 = vld [vmem:[#allocation2 + $0x60] sm:$0xff]
      %v3253 = vld [vmem:[#allocation2 + $0x68] sm:$0xff]
      %v3254 = vld [vmem:[#allocation2 + $0x70] sm:$0xff]
      %v3255 = vld [vmem:[#allocation2 + $0x78] sm:$0xff]
      %v3256 = vld [vmem:[#allocation2 + $0x80] sm:$0xff]
      %v3257 = vld [vmem:[#allocation2 + $0x88] sm:$0xff]
      %v3258 = vld [vmem:[#allocation2 + $0x90] sm:$0xff]
      %v3259 = vld [vmem:[#allocation2 + $0x98] sm:$0xff]
      %v3260 = vld [vmem:[#allocation2 + $0xa0] sm:$0xff]
      %v3261 = vld [vmem:[#allocation2 + $0xa8] sm:$0xff]
      %v3262 = vld [vmem:[#allocation2 + $0xb0] sm:$0xff]
      %v3263 = vld [vmem:[#allocation2 + $0xb8] sm:$0xff]
      %v3264 = vld [vmem:[#allocation2 + $0xc0] sm:$0xff]
      %v3265 = vld [vmem:[#allocation2 + $0xc8] sm:$0xff]
      %v3266 = vld [vmem:[#allocation2 + $0xd0] sm:$0xff]
      %v3267 = vld [vmem:[#allocation2 + $0xd8] sm:$0xff]
      %v3268 = vld [vmem:[#allocation2 + $0xe0] sm:$0xff]
      %v3269 = vld [vmem:[#allocation2 + $0xe8] sm:$0xff]
      %v3270 = vld [vmem:[#allocation2 + $0xf0] sm:$0xff]
      %v3271 = vld [vmem:[#allocation2 + $0xf8] sm:$0xff]
      %v3272 = vadd.f32 %v3240, %v3114
      %v3273 = vadd.f32 %v3241, %v3117
      %v3274 = vadd.f32 %v3242, %v3122
      %v3275 = vadd.f32 %v3243, %v3125
      %v3276 = vadd.f32 %v3244, %v3130
      %v3277 = vadd.f32 %v3245, %v3133
      %v3278 = vadd.f32 %v3246, %v3138
      %v3279 = vadd.f32 %v3247, %v3141
      %v3280 = vadd.f32 %v3248, %v3146
      %v3281 = vadd.f32 %v3249, %v3149
      %v3282 = vadd.f32 %v3250, %v3154
      %v3283 = vadd.f32 %v3251, %v3157
      %v3284 = vadd.f32 %v3252, %v3162
      %v3285 = vadd.f32 %v3253, %v3165
      %v3286 = vadd.f32 %v3254, %v3170
      %v3287 = vadd.f32 %v3255, %v3173
      %v3288 = vadd.f32 %v3256, %v3178
      %v3289 = vadd.f32 %v3257, %v3181
      %v3290 = vadd.f32 %v3258, %v3186
      %v3291 = vadd.f32 %v3259, %v3189
      %v3292 = vadd.f32 %v3260, %v3194
      %v3293 = vadd.f32 %v3261, %v3197
      %v3294 = vadd.f32 %v3262, %v3202
      %v3295 = vadd.f32 %v3263, %v3205
      %v3296 = vadd.f32 %v3264, %v3210
      %v3297 = vadd.f32 %v3265, %v3213
      %v3298 = vadd.f32 %v3266, %v3218
      %v3299 = vadd.f32 %v3267, %v3221
      %v3300 = vadd.f32 %v3268, %v3226
      %v3301 = vadd.f32 %v3269, %v3229
      %v3302 = vadd.f32 %v3270, %v3234
      %v3303 = vadd.f32 %v3271, %v3237
      %3304 = vst [vmem:[#allocation2] sm:$0xff] %v3272
      %3305 = vst [vmem:[#allocation2 + $0x8] sm:$0xff] %v3273
      %3306 = vst [vmem:[#allocation2 + $0x10] sm:$0xff] %v3274
      %3307 = vst [vmem:[#allocation2 + $0x18] sm:$0xff] %v3275
      %3308 = vst [vmem:[#allocation2 + $0x20] sm:$0xff] %v3276
      %3309 = vst [vmem:[#allocation2 + $0x28] sm:$0xff] %v3277
      %3310 = vst [vmem:[#allocation2 + $0x30] sm:$0xff] %v3278
      %3311 = vst [vmem:[#allocation2 + $0x38] sm:$0xff] %v3279
      %3312 = vst [vmem:[#allocation2 + $0x40] sm:$0xff] %v3280
      %3313 = vst [vmem:[#allocation2 + $0x48] sm:$0xff] %v3281
      %3314 = vst [vmem:[#allocation2 + $0x50] sm:$0xff] %v3282
      %3315 = vst [vmem:[#allocation2 + $0x58] sm:$0xff] %v3283
      %3316 = vst [vmem:[#allocation2 + $0x60] sm:$0xff] %v3284
      %3317 = vst [vmem:[#allocation2 + $0x68] sm:$0xff] %v3285
      %3318 = vst [vmem:[#allocation2 + $0x70] sm:$0xff] %v3286
      %3319 = vst [vmem:[#allocation2 + $0x78] sm:$0xff] %v3287
      %3320 = vst [vmem:[#allocation2 + $0x80] sm:$0xff] %v3288
      %3321 = vst [vmem:[#allocation2 + $0x88] sm:$0xff] %v3289
      %3322 = vst [vmem:[#allocation2 + $0x90] sm:$0xff] %v3290
      %3323 = vst [vmem:[#allocation2 + $0x98] sm:$0xff] %v3291
      %3324 = vst [vmem:[#allocation2 + $0xa0] sm:$0xff] %v3292
      %3325 = vst [vmem:[#allocation2 + $0xa8] sm:$0xff] %v3293
      %3326 = vst [vmem:[#allocation2 + $0xb0] sm:$0xff] %v3294
      %3327 = vst [vmem:[#allocation2 + $0xb8] sm:$0xff] %v3295
      %3328 = vst [vmem:[#allocation2 + $0xc0] sm:$0xff] %v3296
      %3329 = vst [vmem:[#allocation2 + $0xc8] sm:$0xff] %v3297
      %3330 = vst [vmem:[#allocation2 + $0xd0] sm:$0xff] %v3298
      %3331 = vst [vmem:[#allocation2 + $0xd8] sm:$0xff] %v3299
      %3332 = vst [vmem:[#allocation2 + $0xe0] sm:$0xff] %v3300
      %3333 = vst [vmem:[#allocation2 + $0xe8] sm:$0xff] %v3301
      %3334 = vst [vmem:[#allocation2 + $0xf0] sm:$0xff] %v3302
      %3335 = vst [vmem:[#allocation2 + $0xf8] sm:$0xff] %v3303
      %v3336 = vld [vmem:[%s2067] sm:$0xe]
      %v3337 = vld [vmem:[%s2067 + $0x4] sm:$0xf]
      %v3338 = vld [vmem:[%s2067 + $0x8] sm:$0x1]
      %v3339 = vld [vmem:[%s2067 + $0xc] sm:$0xe]
      %v3340 = vld [vmem:[%s2067 + $0x10] sm:$0xf]
      %v3341 = vld [vmem:[%s2067 + $0x14] sm:$0x1]
      %v3342 = vld [vmem:[%s2067 + $0x18] sm:$0xe]
      %v3343 = vld [vmem:[%s2067 + $0x1c] sm:$0xf]
      %v3344 = vld [vmem:[%s2067 + $0x20] sm:$0x1]
      %v3345 = vld [vmem:[%s2067 + $0x24] sm:$0xe]
      %v3346 = vld [vmem:[%s2067 + $0x28] sm:$0xf]
      %v3347 = vld [vmem:[%s2067 + $0x2c] sm:$0x1]
      %v3348 = vld [vmem:[%s2067 + $0x30] sm:$0xe]
      %v3349 = vld [vmem:[%s2067 + $0x34] sm:$0xf]
      %v3350 = vld [vmem:[%s2067 + $0x38] sm:$0x1]
      %v3351 = vld [vmem:[%s2067 + $0x3c] sm:$0xe]
      %v3352 = vld [vmem:[%s2067 + $0x40] sm:$0xf]
      %v3353 = vld [vmem:[%s2067 + $0x44] sm:$0x1]
      %v3354 = vld [vmem:[%s2067 + $0x48] sm:$0xe]
      %v3355 = vld [vmem:[%s2067 + $0x4c] sm:$0xf]
      %v3356 = vld [vmem:[%s2067 + $0x50] sm:$0x1]
      %v3357 = vld [vmem:[%s2067 + $0x54] sm:$0xe]
      %v3358 = vld [vmem:[%s2067 + $0x58] sm:$0xf]
      %v3359 = vld [vmem:[%s2067 + $0x5c] sm:$0x1]
      %v3360 = vld [vmem:[%s2067 + $0x60] sm:$0xe]
      %v3361 = vld [vmem:[%s2067 + $0x64] sm:$0xf]
      %v3362 = vld [vmem:[%s2067 + $0x68] sm:$0x1]
      %v3363 = vld [vmem:[%s2067 + $0x6c] sm:$0xe]
      %v3364 = vld [vmem:[%s2067 + $0x70] sm:$0xf]
      %v3365 = vld [vmem:[%s2067 + $0x74] sm:$0x1]
      %v3366 = vld [vmem:[%s2067 + $0x78] sm:$0xe]
      %v3367 = vld [vmem:[%s2067 + $0x7c] sm:$0xf]
      %v3368 = vld [vmem:[%s2067 + $0x80] sm:$0x1]
      %v3369 = vld [vmem:[%s2067 + $0x84] sm:$0xe]
      %v3370 = vld [vmem:[%s2067 + $0x88] sm:$0xf]
      %v3371 = vld [vmem:[%s2067 + $0x8c] sm:$0x1]
      %v3372 = vld [vmem:[%s2067 + $0x90] sm:$0xe]
      %v3373 = vld [vmem:[%s2067 + $0x94] sm:$0xf]
      %v3374 = vld [vmem:[%s2067 + $0x98] sm:$0x1]
      %v3375 = vld [vmem:[%s2067 + $0x9c] sm:$0xe]
      %v3376 = vld [vmem:[%s2067 + $0xa0] sm:$0xf]
      %v3377 = vld [vmem:[%s2067 + $0xa4] sm:$0x1]
      %v3378 = vld [vmem:[%s2067 + $0xa8] sm:$0xe]
      %v3379 = vld [vmem:[%s2067 + $0xac] sm:$0xf]
      %v3380 = vld [vmem:[%s2067 + $0xb0] sm:$0x1]
      %v3381 = vld [vmem:[%s2067 + $0xb4] sm:$0xe]
      %v3382 = vld [vmem:[%s2067 + $0xb8] sm:$0xf]
      %v3383 = vld [vmem:[%s2067 + $0xbc] sm:$0x1]
      %v3432 = vrot.slane %v3336, 5
      %v3433 = vrot.slane %v3432, 4
      %v3434 = vrot.slane %v3337, 5
      %v3435 = vsel %vm1568, %v3433, %v3434
      %v3436 = vrot.slane %v3434, 4
      %v3437 = vrot.slane %v3338, 5
      %v3438 = vsel %vm1568, %v3436, %v3437
      %v3439 = vrot.slane %v3339, 5
      %v3440 = vrot.slane %v3439, 4
      %v3441 = vrot.slane %v3340, 5
      %v3442 = vsel %vm1568, %v3440, %v3441
      %v3443 = vrot.slane %v3441, 4
      %v3444 = vrot.slane %v3341, 5
      %v3445 = vsel %vm1568, %v3443, %v3444
      %v3446 = vrot.slane %v3342, 5
      %v3447 = vrot.slane %v3446, 4
      %v3448 = vrot.slane %v3343, 5
      %v3449 = vsel %vm1568, %v3447, %v3448
      %v3450 = vrot.slane %v3448, 4
      %v3451 = vrot.slane %v3344, 5
      %v3452 = vsel %vm1568, %v3450, %v3451
      %v3453 = vrot.slane %v3345, 5
      %v3454 = vrot.slane %v3453, 4
      %v3455 = vrot.slane %v3346, 5
      %v3456 = vsel %vm1568, %v3454, %v3455
      %v3457 = vrot.slane %v3455, 4
      %v3458 = vrot.slane %v3347, 5
      %v3459 = vsel %vm1568, %v3457, %v3458
      %v3460 = vrot.slane %v3348, 5
      %v3461 = vrot.slane %v3460, 4
      %v3462 = vrot.slane %v3349, 5
      %v3463 = vsel %vm1568, %v3461, %v3462
      %v3464 = vrot.slane %v3462, 4
      %v3465 = vrot.slane %v3350, 5
      %v3466 = vsel %vm1568, %v3464, %v3465
      %v3467 = vrot.slane %v3351, 5
      %v3468 = vrot.slane %v3467, 4
      %v3469 = vrot.slane %v3352, 5
      %v3470 = vsel %vm1568, %v3468, %v3469
      %v3471 = vrot.slane %v3469, 4
      %v3472 = vrot.slane %v3353, 5
      %v3473 = vsel %vm1568, %v3471, %v3472
      %v3474 = vrot.slane %v3354, 5
      %v3475 = vrot.slane %v3474, 4
      %v3476 = vrot.slane %v3355, 5
      %v3477 = vsel %vm1568, %v3475, %v3476
      %v3478 = vrot.slane %v3476, 4
      %v3479 = vrot.slane %v3356, 5
      %v3480 = vsel %vm1568, %v3478, %v3479
      %v3481 = vrot.slane %v3357, 5
      %v3482 = vrot.slane %v3481, 4
      %v3483 = vrot.slane %v3358, 5
      %v3484 = vsel %vm1568, %v3482, %v3483
      %v3485 = vrot.slane %v3483, 4
      %v3486 = vrot.slane %v3359, 5
      %v3487 = vsel %vm1568, %v3485, %v3486
      %v3488 = vrot.slane %v3360, 5
      %v3489 = vrot.slane %v3488, 4
      %v3490 = vrot.slane %v3361, 5
      %v3491 = vsel %vm1568, %v3489, %v3490
      %v3492 = vrot.slane %v3490, 4
      %v3493 = vrot.slane %v3362, 5
      %v3494 = vsel %vm1568, %v3492, %v3493
      %v3495 = vrot.slane %v3363, 5
      %v3496 = vrot.slane %v3495, 4
      %v3497 = vrot.slane %v3364, 5
      %v3498 = vsel %vm1568, %v3496, %v3497
      %v3499 = vrot.slane %v3497, 4
      %v3500 = vrot.slane %v3365, 5
      %v3501 = vsel %vm1568, %v3499, %v3500
      %v3502 = vrot.slane %v3366, 5
      %v3503 = vrot.slane %v3502, 4
      %v3504 = vrot.slane %v3367, 5
      %v3505 = vsel %vm1568, %v3503, %v3504
      %v3506 = vrot.slane %v3504, 4
      %v3507 = vrot.slane %v3368, 5
      %v3508 = vsel %vm1568, %v3506, %v3507
      %v3509 = vrot.slane %v3369, 5
      %v3510 = vrot.slane %v3509, 4
      %v3511 = vrot.slane %v3370, 5
      %v3512 = vsel %vm1568, %v3510, %v3511
      %v3513 = vrot.slane %v3511, 4
      %v3514 = vrot.slane %v3371, 5
      %v3515 = vsel %vm1568, %v3513, %v3514
      %v3516 = vrot.slane %v3372, 5
      %v3517 = vrot.slane %v3516, 4
      %v3518 = vrot.slane %v3373, 5
      %v3519 = vsel %vm1568, %v3517, %v3518
      %v3520 = vrot.slane %v3518, 4
      %v3521 = vrot.slane %v3374, 5
      %v3522 = vsel %vm1568, %v3520, %v3521
      %v3523 = vrot.slane %v3375, 5
      %v3524 = vrot.slane %v3523, 4
      %v3525 = vrot.slane %v3376, 5
      %v3526 = vsel %vm1568, %v3524, %v3525
      %v3527 = vrot.slane %v3525, 4
      %v3528 = vrot.slane %v3377, 5
      %v3529 = vsel %vm1568, %v3527, %v3528
      %v3530 = vrot.slane %v3378, 5
      %v3531 = vrot.slane %v3530, 4
      %v3532 = vrot.slane %v3379, 5
      %v3533 = vsel %vm1568, %v3531, %v3532
      %v3534 = vrot.slane %v3532, 4
      %v3535 = vrot.slane %v3380, 5
      %v3536 = vsel %vm1568, %v3534, %v3535
      %v3537 = vrot.slane %v3381, 5
      %v3538 = vrot.slane %v3537, 4
      %v3539 = vrot.slane %v3382, 5
      %v3540 = vsel %vm1568, %v3538, %v3539
      %v3541 = vrot.slane %v3539, 4
      %v3542 = vrot.slane %v3383, 5
      %v3543 = vsel %vm1568, %v3541, %v3542
      %s3544 = scalar_lea.vmem %s248, 320
      %v3545 = vld [vmem:[%s3544] sm:$0xf]
      %v3546 = vld [vmem:[%s3544 + $0x4] sm:$0xf]
      %v3547 = vld [vmem:[%s3544 + $0x8] sm:$0xf]
      %v3548 = vld [vmem:[%s3544 + $0xc] sm:$0xf]
      %v3549 = vld [vmem:[%s3544 + $0x10] sm:$0xf]
      %v3550 = vld [vmem:[%s3544 + $0x14] sm:$0xf]
      %v3551 = vld [vmem:[%s3544 + $0x18] sm:$0xf]
      %v3552 = vld [vmem:[%s3544 + $0x1c] sm:$0xf]
      %v3553 = vld [vmem:[%s3544 + $0x20] sm:$0xf]
      %v3554 = vld [vmem:[%s3544 + $0x24] sm:$0xf]
      %v3555 = vld [vmem:[%s3544 + $0x28] sm:$0xf]
      %v3556 = vld [vmem:[%s3544 + $0x2c] sm:$0xf]
      %v3557 = vld [vmem:[%s3544 + $0x30] sm:$0xf]
      %v3558 = vld [vmem:[%s3544 + $0x34] sm:$0xf]
      %v3559 = vld [vmem:[%s3544 + $0x38] sm:$0xf]
      %v3560 = vld [vmem:[%s3544 + $0x3c] sm:$0xf]
      %v3561 = vunpack.c.l.b16 %v3435
      %v3562 = vunpack.c.l.b16 %v3438
      %v3563 = vunpack.c.l.b16 %v3442
      %v3564 = vunpack.c.l.b16 %v3445
      %v3565 = vunpack.c.l.b16 %v3449
      %v3566 = vunpack.c.l.b16 %v3452
      %v3567 = vunpack.c.l.b16 %v3456
      %v3568 = vunpack.c.l.b16 %v3459
      %v3569 = vunpack.c.l.b16 %v3463
      %v3570 = vunpack.c.l.b16 %v3466
      %v3571 = vunpack.c.l.b16 %v3470
      %v3572 = vunpack.c.l.b16 %v3473
      %v3573 = vunpack.c.l.b16 %v3477
      %v3574 = vunpack.c.l.b16 %v3480
      %v3575 = vunpack.c.l.b16 %v3484
      %v3576 = vunpack.c.l.b16 %v3487
      %v3577 = vunpack.c.l.b16 %v3491
      %v3578 = vunpack.c.l.b16 %v3494
      %v3579 = vunpack.c.l.b16 %v3498
      %v3580 = vunpack.c.l.b16 %v3501
      %v3581 = vunpack.c.l.b16 %v3505
      %v3582 = vunpack.c.l.b16 %v3508
      %v3583 = vunpack.c.l.b16 %v3512
      %v3584 = vunpack.c.l.b16 %v3515
      %v3585 = vunpack.c.l.b16 %v3519
      %v3586 = vunpack.c.l.b16 %v3522
      %v3587 = vunpack.c.l.b16 %v3526
      %v3588 = vunpack.c.l.b16 %v3529
      %v3589 = vunpack.c.l.b16 %v3533
      %v3590 = vunpack.c.l.b16 %v3536
      %v3591 = vunpack.c.l.b16 %v3540
      %v3592 = vunpack.c.l.b16 %v3543
      %v3593 = vpack.c.b16 %v3562, %v3561
      %v3594 = vpack.c.b16 %v3564, %v3563
      %v3595 = vpack.c.b16 %v3566, %v3565
      %v3596 = vpack.c.b16 %v3568, %v3567
      %v3597 = vpack.c.b16 %v3570, %v3569
      %v3598 = vpack.c.b16 %v3572, %v3571
      %v3599 = vpack.c.b16 %v3574, %v3573
      %v3600 = vpack.c.b16 %v3576, %v3575
      %v3601 = vpack.c.b16 %v3578, %v3577
      %v3602 = vpack.c.b16 %v3580, %v3579
      %v3603 = vpack.c.b16 %v3582, %v3581
      %v3604 = vpack.c.b16 %v3584, %v3583
      %v3605 = vpack.c.b16 %v3586, %v3585
      %v3606 = vpack.c.b16 %v3588, %v3587
      %v3607 = vpack.c.b16 %v3590, %v3589
      %v3608 = vpack.c.b16 %v3592, %v3591
      %v3641 = vunpack.c.l.b16 %v3545
      %v3642 = vunpack.c.l.b16 %v3546
      %v3643 = vunpack.c.l.b16 %v3547
      %v3644 = vunpack.c.l.b16 %v3548
      %v3645 = vunpack.c.l.b16 %v3549
      %v3646 = vunpack.c.l.b16 %v3550
      %v3647 = vunpack.c.l.b16 %v3551
      %v3648 = vunpack.c.l.b16 %v3552
      %v3649 = vunpack.c.l.b16 %v3553
      %v3650 = vunpack.c.l.b16 %v3554
      %v3651 = vunpack.c.l.b16 %v3555
      %v3652 = vunpack.c.l.b16 %v3556
      %v3653 = vunpack.c.l.b16 %v3557
      %v3654 = vunpack.c.l.b16 %v3558
      %v3655 = vunpack.c.l.b16 %v3559
      %v3656 = vunpack.c.l.b16 %v3560
      %v3657 = vpack.c.b16 %v3642, %v3641
      %v3658 = vpack.c.b16 %v3644, %v3643
      %v3659 = vpack.c.b16 %v3646, %v3645
      %v3660 = vpack.c.b16 %v3648, %v3647
      %v3661 = vpack.c.b16 %v3650, %v3649
      %v3662 = vpack.c.b16 %v3652, %v3651
      %v3663 = vpack.c.b16 %v3654, %v3653
      %v3664 = vpack.c.b16 %v3656, %v3655
      %3673 = vmatprep.subr.bf16.mxu0 0
      %3674 = vmatpush1.bf16.msra.mxu0 %v3657
      %3675 = vmatprep.subr.bf16.mxu0 0
      %3676 = vmatpush1.bf16.msra.mxu0 %v3658
      %3677 = vmatprep.subr.bf16.mxu0 0
      %3678 = vmatpush1.bf16.msra.mxu0 %v3659
      %3679 = vmatprep.subr.bf16.mxu0 0
      %3680 = vmatpush1.bf16.msra.mxu0 %v3660
      %3681 = vmatprep.subr.bf16.mxu0 0
      %3682 = vmatpush1.bf16.msra.mxu0 %v3661
      %3683 = vmatprep.subr.bf16.mxu0 0
      %3684 = vmatpush1.bf16.msra.mxu0 %v3662
      %3685 = vmatprep.subr.bf16.mxu0 0
      %3686 = vmatpush1.bf16.msra.mxu0 %v3663
      %3687 = vmatprep.subr.bf16.mxu0 0
      %3688 = vmatpush1.bf16.msra.mxu0 %v3664
      %3689 = vmatprep.subr.bf16.mxu0 0
      %3690 = vmatpush1.bf16.msra.mxu0 0
      %3691 = vmatprep.subr.bf16.mxu0 0
      %3692 = vmatpush1.bf16.msra.mxu0 0
      %3693 = vmatprep.subr.bf16.mxu0 0
      %3694 = vmatpush1.bf16.msra.mxu0 0
      %3695 = vmatprep.subr.bf16.mxu0 0
      %3696 = vmatpush1.bf16.msra.mxu0 0
      %3697 = vmatprep.subr.bf16.mxu0 0
      %3698 = vmatpush1.bf16.msra.mxu0 0
      %3699 = vmatprep.subr.bf16.mxu0 0
      %3700 = vmatpush1.bf16.msra.mxu0 0
      %3701 = vmatprep.subr.bf16.mxu0 0
      %3702 = vmatpush1.bf16.msra.mxu0 0
      %3703 = vmatprep.subr.bf16.mxu0 0
      %3704 = vmatpush1.bf16.msra.mxu0 0
      %3705 = vmatprep.mubr.bf16.mxu0 0
      %3706 = vmatmul.mubr.bf16.gmra.mrb[0].mxu0 %v3593
      %v3707 = vpop.f32.mrb[0].mxu0
      %v3708 = vadd.f32 0.0, %v3707
      %v3709 = vpop.f32.mrb[0].mxu0
      %v3710 = vpop.f32.mrb[0].mxu0
      %v3711 = vadd.f32 0.0, %v3710
      %v3712 = vpop.f32.mrb[0].mxu0
      %3713 = vmatprep.mubr.bf16.mxu0 0
      %3714 = vmatmul.mubr.bf16.gmra.mrb[0].mxu0 %v3594
      %v3715 = vpop.f32.mrb[0].mxu0
      %v3716 = vadd.f32 0.0, %v3715
      %v3717 = vpop.f32.mrb[0].mxu0
      %v3718 = vpop.f32.mrb[0].mxu0
      %v3719 = vadd.f32 0.0, %v3718
      %v3720 = vpop.f32.mrb[0].mxu0
      %3721 = vmatprep.mubr.bf16.mxu0 0
      %3722 = vmatmul.mubr.bf16.gmra.mrb[0].mxu0 %v3595
      %v3723 = vpop.f32.mrb[0].mxu0
      %v3724 = vadd.f32 0.0, %v3723
      %v3725 = vpop.f32.mrb[0].mxu0
      %v3726 = vpop.f32.mrb[0].mxu0
      %v3727 = vadd.f32 0.0, %v3726
      %v3728 = vpop.f32.mrb[0].mxu0
      %3729 = vmatprep.mubr.bf16.mxu0 0
      %3730 = vmatmul.mubr.bf16.gmra.mrb[0].mxu0 %v3596
      %v3731 = vpop.f32.mrb[0].mxu0
      %v3732 = vadd.f32 0.0, %v3731
      %v3733 = vpop.f32.mrb[0].mxu0
      %v3734 = vpop.f32.mrb[0].mxu0
      %v3735 = vadd.f32 0.0, %v3734
      %v3736 = vpop.f32.mrb[0].mxu0
      %3737 = vmatprep.mubr.bf16.mxu0 0
      %3738 = vmatmul.mubr.bf16.gmra.mrb[0].mxu0 %v3597
      %v3739 = vpop.f32.mrb[0].mxu0
      %v3740 = vadd.f32 0.0, %v3739
      %v3741 = vpop.f32.mrb[0].mxu0
      %v3742 = vpop.f32.mrb[0].mxu0
      %v3743 = vadd.f32 0.0, %v3742
      %v3744 = vpop.f32.mrb[0].mxu0
      %3745 = vmatprep.mubr.bf16.mxu0 0
      %3746 = vmatmul.mubr.bf16.gmra.mrb[0].mxu0 %v3598
      %v3747 = vpop.f32.mrb[0].mxu0
      %v3748 = vadd.f32 0.0, %v3747
      %v3749 = vpop.f32.mrb[0].mxu0
      %v3750 = vpop.f32.mrb[0].mxu0
      %v3751 = vadd.f32 0.0, %v3750
      %v3752 = vpop.f32.mrb[0].mxu0
      %3753 = vmatprep.mubr.bf16.mxu0 0
      %3754 = vmatmul.mubr.bf16.gmra.mrb[0].mxu0 %v3599
      %v3755 = vpop.f32.mrb[0].mxu0
      %v3756 = vadd.f32 0.0, %v3755
      %v3757 = vpop.f32.mrb[0].mxu0
      %v3758 = vpop.f32.mrb[0].mxu0
      %v3759 = vadd.f32 0.0, %v3758
      %v3760 = vpop.f32.mrb[0].mxu0
      %3761 = vmatprep.mubr.bf16.mxu0 0
      %3762 = vmatmul.mubr.bf16.gmra.mrb[0].mxu0 %v3600
      %v3763 = vpop.f32.mrb[0].mxu0
      %v3764 = vadd.f32 0.0, %v3763
      %v3765 = vpop.f32.mrb[0].mxu0
      %v3766 = vpop.f32.mrb[0].mxu0
      %v3767 = vadd.f32 0.0, %v3766
      %v3768 = vpop.f32.mrb[0].mxu0
      %3769 = vmatprep.mubr.bf16.mxu0 0
      %3770 = vmatmul.mubr.bf16.gmra.mrb[0].mxu0 %v3601
      %v3771 = vpop.f32.mrb[0].mxu0
      %v3772 = vadd.f32 0.0, %v3771
      %v3773 = vpop.f32.mrb[0].mxu0
      %v3774 = vpop.f32.mrb[0].mxu0
      %v3775 = vadd.f32 0.0, %v3774
      %v3776 = vpop.f32.mrb[0].mxu0
      %3777 = vmatprep.mubr.bf16.mxu0 0
      %3778 = vmatmul.mubr.bf16.gmra.mrb[0].mxu0 %v3602
      %v3779 = vpop.f32.mrb[0].mxu0
      %v3780 = vadd.f32 0.0, %v3779
      %v3781 = vpop.f32.mrb[0].mxu0
      %v3782 = vpop.f32.mrb[0].mxu0
      %v3783 = vadd.f32 0.0, %v3782
      %v3784 = vpop.f32.mrb[0].mxu0
      %3785 = vmatprep.mubr.bf16.mxu0 0
      %3786 = vmatmul.mubr.bf16.gmra.mrb[0].mxu0 %v3603
      %v3787 = vpop.f32.mrb[0].mxu0
      %v3788 = vadd.f32 0.0, %v3787
      %v3789 = vpop.f32.mrb[0].mxu0
      %v3790 = vpop.f32.mrb[0].mxu0
      %v3791 = vadd.f32 0.0, %v3790
      %v3792 = vpop.f32.mrb[0].mxu0
      %3793 = vmatprep.mubr.bf16.mxu0 0
      %3794 = vmatmul.mubr.bf16.gmra.mrb[0].mxu0 %v3604
      %v3795 = vpop.f32.mrb[0].mxu0
      %v3796 = vadd.f32 0.0, %v3795
      %v3797 = vpop.f32.mrb[0].mxu0
      %v3798 = vpop.f32.mrb[0].mxu0
      %v3799 = vadd.f32 0.0, %v3798
      %v3800 = vpop.f32.mrb[0].mxu0
      %3801 = vmatprep.mubr.bf16.mxu0 0
      %3802 = vmatmul.mubr.bf16.gmra.mrb[0].mxu0 %v3605
      %v3803 = vpop.f32.mrb[0].mxu0
      %v3804 = vadd.f32 0.0, %v3803
      %v3805 = vpop.f32.mrb[0].mxu0
      %v3806 = vpop.f32.mrb[0].mxu0
      %v3807 = vadd.f32 0.0, %v3806
      %v3808 = vpop.f32.mrb[0].mxu0
      %3809 = vmatprep.mubr.bf16.mxu0 0
      %3810 = vmatmul.mubr.bf16.gmra.mrb[0].mxu0 %v3606
      %v3811 = vpop.f32.mrb[0].mxu0
      %v3812 = vadd.f32 0.0, %v3811
      %v3813 = vpop.f32.mrb[0].mxu0
      %v3814 = vpop.f32.mrb[0].mxu0
      %v3815 = vadd.f32 0.0, %v3814
      %v3816 = vpop.f32.mrb[0].mxu0
      %3817 = vmatprep.mubr.bf16.mxu0 0
      %3818 = vmatmul.mubr.bf16.gmra.mrb[0].mxu0 %v3607
      %v3819 = vpop.f32.mrb[0].mxu0
      %v3820 = vadd.f32 0.0, %v3819
      %v3821 = vpop.f32.mrb[0].mxu0
      %v3822 = vpop.f32.mrb[0].mxu0
      %v3823 = vadd.f32 0.0, %v3822
      %v3824 = vpop.f32.mrb[0].mxu0
      %3825 = vmatprep.mubr.bf16.mxu0 0
      %3826 = vmatmul.mubr.bf16.gmra.mrb[0].mxu0 %v3608
      %v3827 = vpop.f32.mrb[0].mxu0
      %v3828 = vadd.f32 0.0, %v3827
      %v3829 = vpop.f32.mrb[0].mxu0
      %v3830 = vpop.f32.mrb[0].mxu0
      %v3831 = vadd.f32 0.0, %v3830
      %v3832 = vpop.f32.mrb[0].mxu0
      %3833 = vdwg.mxu0
      %v3834 = vld [vmem:[#allocation2] sm:$0xff]
      %v3835 = vld [vmem:[#allocation2 + $0x8] sm:$0xff]
      %v3836 = vld [vmem:[#allocation2 + $0x10] sm:$0xff]
      %v3837 = vld [vmem:[#allocation2 + $0x18] sm:$0xff]
      %v3838 = vld [vmem:[#allocation2 + $0x20] sm:$0xff]
      %v3839 = vld [vmem:[#allocation2 + $0x28] sm:$0xff]
      %v3840 = vld [vmem:[#allocation2 + $0x30] sm:$0xff]
      %v3841 = vld [vmem:[#allocation2 + $0x38] sm:$0xff]
      %v3842 = vld [vmem:[#allocation2 + $0x40] sm:$0xff]
      %v3843 = vld [vmem:[#allocation2 + $0x48] sm:$0xff]
      %v3844 = vld [vmem:[#allocation2 + $0x50] sm:$0xff]
      %v3845 = vld [vmem:[#allocation2 + $0x58] sm:$0xff]
      %v3846 = vld [vmem:[#allocation2 + $0x60] sm:$0xff]
      %v3847 = vld [vmem:[#allocation2 + $0x68] sm:$0xff]
      %v3848 = vld [vmem:[#allocation2 + $0x70] sm:$0xff]
      %v3849 = vld [vmem:[#allocation2 + $0x78] sm:$0xff]
      %v3850 = vld [vmem:[#allocation2 + $0x80] sm:$0xff]
      %v3851 = vld [vmem:[#allocation2 + $0x88] sm:$0xff]
      %v3852 = vld [vmem:[#allocation2 + $0x90] sm:$0xff]
      %v3853 = vld [vmem:[#allocation2 + $0x98] sm:$0xff]
      %v3854 = vld [vmem:[#allocation2 + $0xa0] sm:$0xff]
      %v3855 = vld [vmem:[#allocation2 + $0xa8] sm:$0xff]
      %v3856 = vld [vmem:[#allocation2 + $0xb0] sm:$0xff]
      %v3857 = vld [vmem:[#allocation2 + $0xb8] sm:$0xff]
      %v3858 = vld [vmem:[#allocation2 + $0xc0] sm:$0xff]
      %v3859 = vld [vmem:[#allocation2 + $0xc8] sm:$0xff]
      %v3860 = vld [vmem:[#allocation2 + $0xd0] sm:$0xff]
      %v3861 = vld [vmem:[#allocation2 + $0xd8] sm:$0xff]
      %v3862 = vld [vmem:[#allocation2 + $0xe0] sm:$0xff]
      %v3863 = vld [vmem:[#allocation2 + $0xe8] sm:$0xff]
      %v3864 = vld [vmem:[#allocation2 + $0xf0] sm:$0xff]
      %v3865 = vld [vmem:[#allocation2 + $0xf8] sm:$0xff]
      %v3866 = vadd.f32 %v3834, %v3708
      %v3867 = vadd.f32 %v3835, %v3711
      %v3868 = vadd.f32 %v3836, %v3716
      %v3869 = vadd.f32 %v3837, %v3719
      %v3870 = vadd.f32 %v3838, %v3724
      %v3871 = vadd.f32 %v3839, %v3727
      %v3872 = vadd.f32 %v3840, %v3732
      %v3873 = vadd.f32 %v3841, %v3735
      %v3874 = vadd.f32 %v3842, %v3740
      %v3875 = vadd.f32 %v3843, %v3743
      %v3876 = vadd.f32 %v3844, %v3748
      %v3877 = vadd.f32 %v3845, %v3751
      %v3878 = vadd.f32 %v3846, %v3756
      %v3879 = vadd.f32 %v3847, %v3759
      %v3880 = vadd.f32 %v3848, %v3764
      %v3881 = vadd.f32 %v3849, %v3767
      %v3882 = vadd.f32 %v3850, %v3772
      %v3883 = vadd.f32 %v3851, %v3775
      %v3884 = vadd.f32 %v3852, %v3780
      %v3885 = vadd.f32 %v3853, %v3783
      %v3886 = vadd.f32 %v3854, %v3788
      %v3887 = vadd.f32 %v3855, %v3791
      %v3888 = vadd.f32 %v3856, %v3796
      %v3889 = vadd.f32 %v3857, %v3799
      %v3890 = vadd.f32 %v3858, %v3804
      %v3891 = vadd.f32 %v3859, %v3807
      %v3892 = vadd.f32 %v3860, %v3812
      %v3893 = vadd.f32 %v3861, %v3815
      %v3894 = vadd.f32 %v3862, %v3820
      %v3895 = vadd.f32 %v3863, %v3823
      %v3896 = vadd.f32 %v3864, %v3828
      %v3897 = vadd.f32 %v3865, %v3831
      %3898 = vst [vmem:[#allocation2] sm:$0xff] %v3866
      %3899 = vst [vmem:[#allocation2 + $0x8] sm:$0xff] %v3867
      %3900 = vst [vmem:[#allocation2 + $0x10] sm:$0xff] %v3868
      %3901 = vst [vmem:[#allocation2 + $0x18] sm:$0xff] %v3869
      %3902 = vst [vmem:[#allocation2 + $0x20] sm:$0xff] %v3870
      %3903 = vst [vmem:[#allocation2 + $0x28] sm:$0xff] %v3871
      %3904 = vst [vmem:[#allocation2 + $0x30] sm:$0xff] %v3872
      %3905 = vst [vmem:[#allocation2 + $0x38] sm:$0xff] %v3873
      %3906 = vst [vmem:[#allocation2 + $0x40] sm:$0xff] %v3874
      %3907 = vst [vmem:[#allocation2 + $0x48] sm:$0xff] %v3875
      %3908 = vst [vmem:[#allocation2 + $0x50] sm:$0xff] %v3876
      %3909 = vst [vmem:[#allocation2 + $0x58] sm:$0xff] %v3877
      %3910 = vst [vmem:[#allocation2 + $0x60] sm:$0xff] %v3878
      %3911 = vst [vmem:[#allocation2 + $0x68] sm:$0xff] %v3879
      %3912 = vst [vmem:[#allocation2 + $0x70] sm:$0xff] %v3880
      %3913 = vst [vmem:[#allocation2 + $0x78] sm:$0xff] %v3881
      %3914 = vst [vmem:[#allocation2 + $0x80] sm:$0xff] %v3882
      %3915 = vst [vmem:[#allocation2 + $0x88] sm:$0xff] %v3883
      %3916 = vst [vmem:[#allocation2 + $0x90] sm:$0xff] %v3884
      %3917 = vst [vmem:[#allocation2 + $0x98] sm:$0xff] %v3885
      %3918 = vst [vmem:[#allocation2 + $0xa0] sm:$0xff] %v3886
      %3919 = vst [vmem:[#allocation2 + $0xa8] sm:$0xff] %v3887
      %3920 = vst [vmem:[#allocation2 + $0xb0] sm:$0xff] %v3888
      %3921 = vst [vmem:[#allocation2 + $0xb8] sm:$0xff] %v3889
      %3922 = vst [vmem:[#allocation2 + $0xc0] sm:$0xff] %v3890
      %3923 = vst [vmem:[#allocation2 + $0xc8] sm:$0xff] %v3891
      %3924 = vst [vmem:[#allocation2 + $0xd0] sm:$0xff] %v3892
      %3925 = vst [vmem:[#allocation2 + $0xd8] sm:$0xff] %v3893
      %3926 = vst [vmem:[#allocation2 + $0xe0] sm:$0xff] %v3894
      %3927 = vst [vmem:[#allocation2 + $0xe8] sm:$0xff] %v3895
      %3928 = vst [vmem:[#allocation2 + $0xf0] sm:$0xff] %v3896
      %3929 = vst [vmem:[#allocation2 + $0xf8] sm:$0xff] %v3897
      %s3930 = scalar_lea.vmem %s244, 24
      %v3931 = vld [vmem:[%s3930] sm:$0xf]
      %v3932 = vld [vmem:[%s3930 + $0x4] sm:$0xf]
      %v3933 = vld [vmem:[%s3930 + $0xc] sm:$0xf]
      %v3934 = vld [vmem:[%s3930 + $0x10] sm:$0xf]
      %v3935 = vld [vmem:[%s3930 + $0x18] sm:$0xf]
      %v3936 = vld [vmem:[%s3930 + $0x1c] sm:$0xf]
      %v3937 = vld [vmem:[%s3930 + $0x24] sm:$0xf]
      %v3938 = vld [vmem:[%s3930 + $0x28] sm:$0xf]
      %v3939 = vld [vmem:[%s3930 + $0x30] sm:$0xf]
      %v3940 = vld [vmem:[%s3930 + $0x34] sm:$0xf]
      %v3941 = vld [vmem:[%s3930 + $0x3c] sm:$0xf]
      %v3942 = vld [vmem:[%s3930 + $0x40] sm:$0xf]
      %v3943 = vld [vmem:[%s3930 + $0x48] sm:$0xf]
      %v3944 = vld [vmem:[%s3930 + $0x4c] sm:$0xf]
      %v3945 = vld [vmem:[%s3930 + $0x54] sm:$0xf]
      %v3946 = vld [vmem:[%s3930 + $0x58] sm:$0xf]
      %v3947 = vld [vmem:[%s3930 + $0x60] sm:$0xf]
      %v3948 = vld [vmem:[%s3930 + $0x64] sm:$0xf]
      %v3949 = vld [vmem:[%s3930 + $0x6c] sm:$0xf]
      %v3950 = vld [vmem:[%s3930 + $0x70] sm:$0xf]
      %v3951 = vld [vmem:[%s3930 + $0x78] sm:$0xf]
      %v3952 = vld [vmem:[%s3930 + $0x7c] sm:$0xf]
      %v3953 = vld [vmem:[%s3930 + $0x84] sm:$0xf]
      %v3954 = vld [vmem:[%s3930 + $0x88] sm:$0xf]
      %v3955 = vld [vmem:[%s3930 + $0x90] sm:$0xf]
      %v3956 = vld [vmem:[%s3930 + $0x94] sm:$0xf]
      %v3957 = vld [vmem:[%s3930 + $0x9c] sm:$0xf]
      %v3958 = vld [vmem:[%s3930 + $0xa0] sm:$0xf]
      %v3959 = vld [vmem:[%s3930 + $0xa8] sm:$0xf]
      %v3960 = vld [vmem:[%s3930 + $0xac] sm:$0xf]
      %v3961 = vld [vmem:[%s3930 + $0xb4] sm:$0xf]
      %v3962 = vld [vmem:[%s3930 + $0xb8] sm:$0xf]
      %s3963 = scalar_lea.vmem %s248, 384
      %v3964 = vld [vmem:[%s3963] sm:$0xf]
      %v3965 = vld [vmem:[%s3963 + $0x4] sm:$0xf]
      %v3966 = vld [vmem:[%s3963 + $0x8] sm:$0xf]
      %v3967 = vld [vmem:[%s3963 + $0xc] sm:$0xf]
      %v3968 = vld [vmem:[%s3963 + $0x10] sm:$0xf]
      %v3969 = vld [vmem:[%s3963 + $0x14] sm:$0xf]
      %v3970 = vld [vmem:[%s3963 + $0x18] sm:$0xf]
      %v3971 = vld [vmem:[%s3963 + $0x1c] sm:$0xf]
      %v3972 = vld [vmem:[%s3963 + $0x20] sm:$0xf]
      %v3973 = vld [vmem:[%s3963 + $0x24] sm:$0xf]
      %v3974 = vld [vmem:[%s3963 + $0x28] sm:$0xf]
      %v3975 = vld [vmem:[%s3963 + $0x2c] sm:$0xf]
      %v3976 = vld [vmem:[%s3963 + $0x30] sm:$0xf]
      %v3977 = vld [vmem:[%s3963 + $0x34] sm:$0xf]
      %v3978 = vld [vmem:[%s3963 + $0x38] sm:$0xf]
      %v3979 = vld [vmem:[%s3963 + $0x3c] sm:$0xf]
      %v4012 = vunpack.c.l.b16 %v3931
      %v4013 = vunpack.c.l.b16 %v3932
      %v4014 = vunpack.c.l.b16 %v3933
      %v4015 = vunpack.c.l.b16 %v3934
      %v4016 = vunpack.c.l.b16 %v3935
      %v4017 = vunpack.c.l.b16 %v3936
      %v4018 = vunpack.c.l.b16 %v3937
      %v4019 = vunpack.c.l.b16 %v3938
      %v4020 = vunpack.c.l.b16 %v3939
      %v4021 = vunpack.c.l.b16 %v3940
      %v4022 = vunpack.c.l.b16 %v3941
      %v4023 = vunpack.c.l.b16 %v3942
      %v4024 = vunpack.c.l.b16 %v3943
      %v4025 = vunpack.c.l.b16 %v3944
      %v4026 = vunpack.c.l.b16 %v3945
      %v4027 = vunpack.c.l.b16 %v3946
      %v4028 = vunpack.c.l.b16 %v3947
      %v4029 = vunpack.c.l.b16 %v3948
      %v4030 = vunpack.c.l.b16 %v3949
      %v4031 = vunpack.c.l.b16 %v3950
      %v4032 = vunpack.c.l.b16 %v3951
      %v4033 = vunpack.c.l.b16 %v3952
      %v4034 = vunpack.c.l.b16 %v3953
      %v4035 = vunpack.c.l.b16 %v3954
      %v4036 = vunpack.c.l.b16 %v3955
      %v4037 = vunpack.c.l.b16 %v3956
      %v4038 = vunpack.c.l.b16 %v3957
      %v4039 = vunpack.c.l.b16 %v3958
      %v4040 = vunpack.c.l.b16 %v3959
      %v4041 = vunpack.c.l.b16 %v3960
      %v4042 = vunpack.c.l.b16 %v3961
      %v4043 = vunpack.c.l.b16 %v3962
      %v4044 = vpack.c.b16 %v4013, %v4012
      %v4045 = vpack.c.b16 %v4015, %v4014
      %v4046 = vpack.c.b16 %v4017, %v4016
      %v4047 = vpack.c.b16 %v4019, %v4018
      %v4048 = vpack.c.b16 %v4021, %v4020
      %v4049 = vpack.c.b16 %v4023, %v4022
      %v4050 = vpack.c.b16 %v4025, %v4024
      %v4051 = vpack.c.b16 %v4027, %v4026
      %v4052 = vpack.c.b16 %v4029, %v4028
      %v4053 = vpack.c.b16 %v4031, %v4030
      %v4054 = vpack.c.b16 %v4033, %v4032
      %v4055 = vpack.c.b16 %v4035, %v4034
      %v4056 = vpack.c.b16 %v4037, %v4036
      %v4057 = vpack.c.b16 %v4039, %v4038
      %v4058 = vpack.c.b16 %v4041, %v4040
      %v4059 = vpack.c.b16 %v4043, %v4042
      %v4092 = vunpack.c.l.b16 %v3964
      %v4093 = vunpack.c.l.b16 %v3965
      %v4094 = vunpack.c.l.b16 %v3966
      %v4095 = vunpack.c.l.b16 %v3967
      %v4096 = vunpack.c.l.b16 %v3968
      %v4097 = vunpack.c.l.b16 %v3969
      %v4098 = vunpack.c.l.b16 %v3970
      %v4099 = vunpack.c.l.b16 %v3971
      %v4100 = vunpack.c.l.b16 %v3972
      %v4101 = vunpack.c.l.b16 %v3973
      %v4102 = vunpack.c.l.b16 %v3974
      %v4103 = vunpack.c.l.b16 %v3975
      %v4104 = vunpack.c.l.b16 %v3976
      %v4105 = vunpack.c.l.b16 %v3977
      %v4106 = vunpack.c.l.b16 %v3978
      %v4107 = vunpack.c.l.b16 %v3979
      %v4108 = vpack.c.b16 %v4093, %v4092
      %v4109 = vpack.c.b16 %v4095, %v4094
      %v4110 = vpack.c.b16 %v4097, %v4096
      %v4111 = vpack.c.b16 %v4099, %v4098
      %v4112 = vpack.c.b16 %v4101, %v4100
      %v4113 = vpack.c.b16 %v4103, %v4102
      %v4114 = vpack.c.b16 %v4105, %v4104
      %v4115 = vpack.c.b16 %v4107, %v4106
      %4124 = vmatprep.subr.bf16.mxu0 0
      %4125 = vmatpush1.bf16.msra.mxu0 %v4108
      %4126 = vmatprep.subr.bf16.mxu0 0
      %4127 = vmatpush1.bf16.msra.mxu0 %v4109
      %4128 = vmatprep.subr.bf16.mxu0 0
      %4129 = vmatpush1.bf16.msra.mxu0 %v4110
      %4130 = vmatprep.subr.bf16.mxu0 0
      %4131 = vmatpush1.bf16.msra.mxu0 %v4111
      %4132 = vmatprep.subr.bf16.mxu0 0
      %4133 = vmatpush1.bf16.msra.mxu0 %v4112
      %4134 = vmatprep.subr.bf16.mxu0 0
      %4135 = vmatpush1.bf16.msra.mxu0 %v4113
      %4136 = vmatprep.subr.bf16.mxu0 0
      %4137 = vmatpush1.bf16.msra.mxu0 %v4114
      %4138 = vmatprep.subr.bf16.mxu0 0
      %4139 = vmatpush1.bf16.msra.mxu0 %v4115
      %4140 = vmatprep.subr.bf16.mxu0 0
      %4141 = vmatpush1.bf16.msra.mxu0 0
      %4142 = vmatprep.subr.bf16.mxu0 0
      %4143 = vmatpush1.bf16.msra.mxu0 0
      %4144 = vmatprep.subr.bf16.mxu0 0
      %4145 = vmatpush1.bf16.msra.mxu0 0
      %4146 = vmatprep.subr.bf16.mxu0 0
      %4147 = vmatpush1.bf16.msra.mxu0 0
      %4148 = vmatprep.subr.bf16.mxu0 0
      %4149 = vmatpush1.bf16.msra.mxu0 0
      %4150 = vmatprep.subr.bf16.mxu0 0
      %4151 = vmatpush1.bf16.msra.mxu0 0
      %4152 = vmatprep.subr.bf16.mxu0 0
      %4153 = vmatpush1.bf16.msra.mxu0 0
      %4154 = vmatprep.subr.bf16.mxu0 0
      %4155 = vmatpush1.bf16.msra.mxu0 0
      %4156 = vmatprep.mubr.bf16.mxu0 0
      %4157 = vmatmul.mubr.bf16.gmra.mrb[0].mxu0 %v4044
      %v4158 = vpop.f32.mrb[0].mxu0
      %v4159 = vadd.f32 0.0, %v4158
      %v4160 = vpop.f32.mrb[0].mxu0
      %v4161 = vpop.f32.mrb[0].mxu0
      %v4162 = vadd.f32 0.0, %v4161
      %v4163 = vpop.f32.mrb[0].mxu0
      %4164 = vmatprep.mubr.bf16.mxu0 0
      %4165 = vmatmul.mubr.bf16.gmra.mrb[0].mxu0 %v4045
      %v4166 = vpop.f32.mrb[0].mxu0
      %v4167 = vadd.f32 0.0, %v4166
      %v4168 = vpop.f32.mrb[0].mxu0
      %v4169 = vpop.f32.mrb[0].mxu0
      %v4170 = vadd.f32 0.0, %v4169
      %v4171 = vpop.f32.mrb[0].mxu0
      %4172 = vmatprep.mubr.bf16.mxu0 0
      %4173 = vmatmul.mubr.bf16.gmra.mrb[0].mxu0 %v4046
      %v4174 = vpop.f32.mrb[0].mxu0
      %v4175 = vadd.f32 0.0, %v4174
      %v4176 = vpop.f32.mrb[0].mxu0
      %v4177 = vpop.f32.mrb[0].mxu0
      %v4178 = vadd.f32 0.0, %v4177
      %v4179 = vpop.f32.mrb[0].mxu0
      %4180 = vmatprep.mubr.bf16.mxu0 0
      %4181 = vmatmul.mubr.bf16.gmra.mrb[0].mxu0 %v4047
      %v4182 = vpop.f32.mrb[0].mxu0
      %v4183 = vadd.f32 0.0, %v4182
      %v4184 = vpop.f32.mrb[0].mxu0
      %v4185 = vpop.f32.mrb[0].mxu0
      %v4186 = vadd.f32 0.0, %v4185
      %v4187 = vpop.f32.mrb[0].mxu0
      %4188 = vmatprep.mubr.bf16.mxu0 0
      %4189 = vmatmul.mubr.bf16.gmra.mrb[0].mxu0 %v4048
      %v4190 = vpop.f32.mrb[0].mxu0
      %v4191 = vadd.f32 0.0, %v4190
      %v4192 = vpop.f32.mrb[0].mxu0
      %v4193 = vpop.f32.mrb[0].mxu0
      %v4194 = vadd.f32 0.0, %v4193
      %v4195 = vpop.f32.mrb[0].mxu0
      %4196 = vmatprep.mubr.bf16.mxu0 0
      %4197 = vmatmul.mubr.bf16.gmra.mrb[0].mxu0 %v4049
      %v4198 = vpop.f32.mrb[0].mxu0
      %v4199 = vadd.f32 0.0, %v4198
      %v4200 = vpop.f32.mrb[0].mxu0
      %v4201 = vpop.f32.mrb[0].mxu0
      %v4202 = vadd.f32 0.0, %v4201
      %v4203 = vpop.f32.mrb[0].mxu0
      %4204 = vmatprep.mubr.bf16.mxu0 0
      %4205 = vmatmul.mubr.bf16.gmra.mrb[0].mxu0 %v4050
      %v4206 = vpop.f32.mrb[0].mxu0
      %v4207 = vadd.f32 0.0, %v4206
      %v4208 = vpop.f32.mrb[0].mxu0
      %v4209 = vpop.f32.mrb[0].mxu0
      %v4210 = vadd.f32 0.0, %v4209
      %v4211 = vpop.f32.mrb[0].mxu0
      %4212 = vmatprep.mubr.bf16.mxu0 0
      %4213 = vmatmul.mubr.bf16.gmra.mrb[0].mxu0 %v4051
      %v4214 = vpop.f32.mrb[0].mxu0
      %v4215 = vadd.f32 0.0, %v4214
      %v4216 = vpop.f32.mrb[0].mxu0
      %v4217 = vpop.f32.mrb[0].mxu0
      %v4218 = vadd.f32 0.0, %v4217
      %v4219 = vpop.f32.mrb[0].mxu0
      %4220 = vmatprep.mubr.bf16.mxu0 0
      %4221 = vmatmul.mubr.bf16.gmra.mrb[0].mxu0 %v4052
      %v4222 = vpop.f32.mrb[0].mxu0
      %v4223 = vadd.f32 0.0, %v4222
      %v4224 = vpop.f32.mrb[0].mxu0
      %v4225 = vpop.f32.mrb[0].mxu0
      %v4226 = vadd.f32 0.0, %v4225
      %v4227 = vpop.f32.mrb[0].mxu0
      %4228 = vmatprep.mubr.bf16.mxu0 0
      %4229 = vmatmul.mubr.bf16.gmra.mrb[0].mxu0 %v4053
      %v4230 = vpop.f32.mrb[0].mxu0
      %v4231 = vadd.f32 0.0, %v4230
      %v4232 = vpop.f32.mrb[0].mxu0
      %v4233 = vpop.f32.mrb[0].mxu0
      %v4234 = vadd.f32 0.0, %v4233
      %v4235 = vpop.f32.mrb[0].mxu0
      %4236 = vmatprep.mubr.bf16.mxu0 0
      %4237 = vmatmul.mubr.bf16.gmra.mrb[0].mxu0 %v4054
      %v4238 = vpop.f32.mrb[0].mxu0
      %v4239 = vadd.f32 0.0, %v4238
      %v4240 = vpop.f32.mrb[0].mxu0
      %v4241 = vpop.f32.mrb[0].mxu0
      %v4242 = vadd.f32 0.0, %v4241
      %v4243 = vpop.f32.mrb[0].mxu0
      %4244 = vmatprep.mubr.bf16.mxu0 0
      %4245 = vmatmul.mubr.bf16.gmra.mrb[0].mxu0 %v4055
      %v4246 = vpop.f32.mrb[0].mxu0
      %v4247 = vadd.f32 0.0, %v4246
      %v4248 = vpop.f32.mrb[0].mxu0
      %v4249 = vpop.f32.mrb[0].mxu0
      %v4250 = vadd.f32 0.0, %v4249
      %v4251 = vpop.f32.mrb[0].mxu0
      %4252 = vmatprep.mubr.bf16.mxu0 0
      %4253 = vmatmul.mubr.bf16.gmra.mrb[0].mxu0 %v4056
      %v4254 = vpop.f32.mrb[0].mxu0
      %v4255 = vadd.f32 0.0, %v4254
      %v4256 = vpop.f32.mrb[0].mxu0
      %v4257 = vpop.f32.mrb[0].mxu0
      %v4258 = vadd.f32 0.0, %v4257
      %v4259 = vpop.f32.mrb[0].mxu0
      %4260 = vmatprep.mubr.bf16.mxu0 0
      %4261 = vmatmul.mubr.bf16.gmra.mrb[0].mxu0 %v4057
      %v4262 = vpop.f32.mrb[0].mxu0
      %v4263 = vadd.f32 0.0, %v4262
      %v4264 = vpop.f32.mrb[0].mxu0
      %v4265 = vpop.f32.mrb[0].mxu0
      %v4266 = vadd.f32 0.0, %v4265
      %v4267 = vpop.f32.mrb[0].mxu0
      %4268 = vmatprep.mubr.bf16.mxu0 0
      %4269 = vmatmul.mubr.bf16.gmra.mrb[0].mxu0 %v4058
      %v4270 = vpop.f32.mrb[0].mxu0
      %v4271 = vadd.f32 0.0, %v4270
      %v4272 = vpop.f32.mrb[0].mxu0
      %v4273 = vpop.f32.mrb[0].mxu0
      %v4274 = vadd.f32 0.0, %v4273
      %v4275 = vpop.f32.mrb[0].mxu0
      %4276 = vmatprep.mubr.bf16.mxu0 0
      %4277 = vmatmul.mubr.bf16.gmra.mrb[0].mxu0 %v4059
      %v4278 = vpop.f32.mrb[0].mxu0
      %v4279 = vadd.f32 0.0, %v4278
      %v4280 = vpop.f32.mrb[0].mxu0
      %v4281 = vpop.f32.mrb[0].mxu0
      %v4282 = vadd.f32 0.0, %v4281
      %v4283 = vpop.f32.mrb[0].mxu0
      %4284 = vdwg.mxu0
      %v4285 = vld [vmem:[#allocation2] sm:$0xff]
      %v4286 = vld [vmem:[#allocation2 + $0x8] sm:$0xff]
      %v4287 = vld [vmem:[#allocation2 + $0x10] sm:$0xff]
      %v4288 = vld [vmem:[#allocation2 + $0x18] sm:$0xff]
      %v4289 = vld [vmem:[#allocation2 + $0x20] sm:$0xff]
      %v4290 = vld [vmem:[#allocation2 + $0x28] sm:$0xff]
      %v4291 = vld [vmem:[#allocation2 + $0x30] sm:$0xff]
      %v4292 = vld [vmem:[#allocation2 + $0x38] sm:$0xff]
      %v4293 = vld [vmem:[#allocation2 + $0x40] sm:$0xff]
      %v4294 = vld [vmem:[#allocation2 + $0x48] sm:$0xff]
      %v4295 = vld [vmem:[#allocation2 + $0x50] sm:$0xff]
      %v4296 = vld [vmem:[#allocation2 + $0x58] sm:$0xff]
      %v4297 = vld [vmem:[#allocation2 + $0x60] sm:$0xff]
      %v4298 = vld [vmem:[#allocation2 + $0x68] sm:$0xff]
      %v4299 = vld [vmem:[#allocation2 + $0x70] sm:$0xff]
      %v4300 = vld [vmem:[#allocation2 + $0x78] sm:$0xff]
      %v4301 = vld [vmem:[#allocation2 + $0x80] sm:$0xff]
      %v4302 = vld [vmem:[#allocation2 + $0x88] sm:$0xff]
      %v4303 = vld [vmem:[#allocation2 + $0x90] sm:$0xff]
      %v4304 = vld [vmem:[#allocation2 + $0x98] sm:$0xff]
      %v4305 = vld [vmem:[#allocation2 + $0xa0] sm:$0xff]
      %v4306 = vld [vmem:[#allocation2 + $0xa8] sm:$0xff]
      %v4307 = vld [vmem:[#allocation2 + $0xb0] sm:$0xff]
      %v4308 = vld [vmem:[#allocation2 + $0xb8] sm:$0xff]
      %v4309 = vld [vmem:[#allocation2 + $0xc0] sm:$0xff]
      %v4310 = vld [vmem:[#allocation2 + $0xc8] sm:$0xff]
      %v4311 = vld [vmem:[#allocation2 + $0xd0] sm:$0xff]
      %v4312 = vld [vmem:[#allocation2 + $0xd8] sm:$0xff]
      %v4313 = vld [vmem:[#allocation2 + $0xe0] sm:$0xff]
      %v4314 = vld [vmem:[#allocation2 + $0xe8] sm:$0xff]
      %v4315 = vld [vmem:[#allocation2 + $0xf0] sm:$0xff]
      %v4316 = vld [vmem:[#allocation2 + $0xf8] sm:$0xff]
      %v4317 = vadd.f32 %v4285, %v4159
      %v4318 = vadd.f32 %v4286, %v4162
      %v4319 = vadd.f32 %v4287, %v4167
      %v4320 = vadd.f32 %v4288, %v4170
      %v4321 = vadd.f32 %v4289, %v4175
      %v4322 = vadd.f32 %v4290, %v4178
      %v4323 = vadd.f32 %v4291, %v4183
      %v4324 = vadd.f32 %v4292, %v4186
      %v4325 = vadd.f32 %v4293, %v4191
      %v4326 = vadd.f32 %v4294, %v4194
      %v4327 = vadd.f32 %v4295, %v4199
      %v4328 = vadd.f32 %v4296, %v4202
      %v4329 = vadd.f32 %v4297, %v4207
      %v4330 = vadd.f32 %v4298, %v4210
      %v4331 = vadd.f32 %v4299, %v4215
      %v4332 = vadd.f32 %v4300, %v4218
      %v4333 = vadd.f32 %v4301, %v4223
      %v4334 = vadd.f32 %v4302, %v4226
      %v4335 = vadd.f32 %v4303, %v4231
      %v4336 = vadd.f32 %v4304, %v4234
      %v4337 = vadd.f32 %v4305, %v4239
      %v4338 = vadd.f32 %v4306, %v4242
      %v4339 = vadd.f32 %v4307, %v4247
      %v4340 = vadd.f32 %v4308, %v4250
      %v4341 = vadd.f32 %v4309, %v4255
      %v4342 = vadd.f32 %v4310, %v4258
      %v4343 = vadd.f32 %v4311, %v4263
      %v4344 = vadd.f32 %v4312, %v4266
      %v4345 = vadd.f32 %v4313, %v4271
      %v4346 = vadd.f32 %v4314, %v4274
      %v4347 = vadd.f32 %v4315, %v4279
      %v4348 = vadd.f32 %v4316, %v4282
      %4349 = vst [vmem:[#allocation2] sm:$0xff] %v4317
      %4350 = vst [vmem:[#allocation2 + $0x8] sm:$0xff] %v4318
      %4351 = vst [vmem:[#allocation2 + $0x10] sm:$0xff] %v4319
      %4352 = vst [vmem:[#allocation2 + $0x18] sm:$0xff] %v4320
      %4353 = vst [vmem:[#allocation2 + $0x20] sm:$0xff] %v4321
      %4354 = vst [vmem:[#allocation2 + $0x28] sm:$0xff] %v4322
      %4355 = vst [vmem:[#allocation2 + $0x30] sm:$0xff] %v4323
      %4356 = vst [vmem:[#allocation2 + $0x38] sm:$0xff] %v4324
      %4357 = vst [vmem:[#allocation2 + $0x40] sm:$0xff] %v4325
      %4358 = vst [vmem:[#allocation2 + $0x48] sm:$0xff] %v4326
      %4359 = vst [vmem:[#allocation2 + $0x50] sm:$0xff] %v4327
      %4360 = vst [vmem:[#allocation2 + $0x58] sm:$0xff] %v4328
      %4361 = vst [vmem:[#allocation2 + $0x60] sm:$0xff] %v4329
      %4362 = vst [vmem:[#allocation2 + $0x68] sm:$0xff] %v4330
      %4363 = vst [vmem:[#allocation2 + $0x70] sm:$0xff] %v4331
      %4364 = vst [vmem:[#allocation2 + $0x78] sm:$0xff] %v4332
      %4365 = vst [vmem:[#allocation2 + $0x80] sm:$0xff] %v4333
      %4366 = vst [vmem:[#allocation2 + $0x88] sm:$0xff] %v4334
      %4367 = vst [vmem:[#allocation2 + $0x90] sm:$0xff] %v4335
      %4368 = vst [vmem:[#allocation2 + $0x98] sm:$0xff] %v4336
      %4369 = vst [vmem:[#allocation2 + $0xa0] sm:$0xff] %v4337
      %4370 = vst [vmem:[#allocation2 + $0xa8] sm:$0xff] %v4338
      %4371 = vst [vmem:[#allocation2 + $0xb0] sm:$0xff] %v4339
      %4372 = vst [vmem:[#allocation2 + $0xb8] sm:$0xff] %v4340
      %4373 = vst [vmem:[#allocation2 + $0xc0] sm:$0xff] %v4341
      %4374 = vst [vmem:[#allocation2 + $0xc8] sm:$0xff] %v4342
      %4375 = vst [vmem:[#allocation2 + $0xd0] sm:$0xff] %v4343
      %4376 = vst [vmem:[#allocation2 + $0xd8] sm:$0xff] %v4344
      %4377 = vst [vmem:[#allocation2 + $0xe0] sm:$0xff] %v4345
      %4378 = vst [vmem:[#allocation2 + $0xe8] sm:$0xff] %v4346
      %4379 = vst [vmem:[#allocation2 + $0xf0] sm:$0xff] %v4347
      %4380 = vst [vmem:[#allocation2 + $0xf8] sm:$0xff] %v4348
      %v4381 = vld [vmem:[%s3930] sm:$0xf]
      %v4382 = vld [vmem:[%s3930 + $0x4] sm:$0xf]
      %v4383 = vld [vmem:[%s3930 + $0x8] sm:$0x1]
      %v4384 = vld [vmem:[%s3930 + $0xc] sm:$0xf]
      %v4385 = vld [vmem:[%s3930 + $0x10] sm:$0xf]
      %v4386 = vld [vmem:[%s3930 + $0x14] sm:$0x1]
      %v4387 = vld [vmem:[%s3930 + $0x18] sm:$0xf]
      %v4388 = vld [vmem:[%s3930 + $0x1c] sm:$0xf]
      %v4389 = vld [vmem:[%s3930 + $0x20] sm:$0x1]
      %v4390 = vld [vmem:[%s3930 + $0x24] sm:$0xf]
      %v4391 = vld [vmem:[%s3930 + $0x28] sm:$0xf]
      %v4392 = vld [vmem:[%s3930 + $0x2c] sm:$0x1]
      %v4393 = vld [vmem:[%s3930 + $0x30] sm:$0xf]
      %v4394 = vld [vmem:[%s3930 + $0x34] sm:$0xf]
      %v4395 = vld [vmem:[%s3930 + $0x38] sm:$0x1]
      %v4396 = vld [vmem:[%s3930 + $0x3c] sm:$0xf]
      %v4397 = vld [vmem:[%s3930 + $0x40] sm:$0xf]
      %v4398 = vld [vmem:[%s3930 + $0x44] sm:$0x1]
      %v4399 = vld [vmem:[%s3930 + $0x48] sm:$0xf]
      %v4400 = vld [vmem:[%s3930 + $0x4c] sm:$0xf]
      %v4401 = vld [vmem:[%s3930 + $0x50] sm:$0x1]
      %v4402 = vld [vmem:[%s3930 + $0x54] sm:$0xf]
      %v4403 = vld [vmem:[%s3930 + $0x58] sm:$0xf]
      %v4404 = vld [vmem:[%s3930 + $0x5c] sm:$0x1]
      %v4405 = vld [vmem:[%s3930 + $0x60] sm:$0xf]
      %v4406 = vld [vmem:[%s3930 + $0x64] sm:$0xf]
      %v4407 = vld [vmem:[%s3930 + $0x68] sm:$0x1]
      %v4408 = vld [vmem:[%s3930 + $0x6c] sm:$0xf]
      %v4409 = vld [vmem:[%s3930 + $0x70] sm:$0xf]
      %v4410 = vld [vmem:[%s3930 + $0x74] sm:$0x1]
      %v4411 = vld [vmem:[%s3930 + $0x78] sm:$0xf]
      %v4412 = vld [vmem:[%s3930 + $0x7c] sm:$0xf]
      %v4413 = vld [vmem:[%s3930 + $0x80] sm:$0x1]
      %v4414 = vld [vmem:[%s3930 + $0x84] sm:$0xf]
      %v4415 = vld [vmem:[%s3930 + $0x88] sm:$0xf]
      %v4416 = vld [vmem:[%s3930 + $0x8c] sm:$0x1]
      %v4417 = vld [vmem:[%s3930 + $0x90] sm:$0xf]
      %v4418 = vld [vmem:[%s3930 + $0x94] sm:$0xf]
      %v4419 = vld [vmem:[%s3930 + $0x98] sm:$0x1]
      %v4420 = vld [vmem:[%s3930 + $0x9c] sm:$0xf]
      %v4421 = vld [vmem:[%s3930 + $0xa0] sm:$0xf]
      %v4422 = vld [vmem:[%s3930 + $0xa4] sm:$0x1]
      %v4423 = vld [vmem:[%s3930 + $0xa8] sm:$0xf]
      %v4424 = vld [vmem:[%s3930 + $0xac] sm:$0xf]
      %v4425 = vld [vmem:[%s3930 + $0xb0] sm:$0x1]
      %v4426 = vld [vmem:[%s3930 + $0xb4] sm:$0xf]
      %v4427 = vld [vmem:[%s3930 + $0xb8] sm:$0xf]
      %v4428 = vld [vmem:[%s3930 + $0xbc] sm:$0x1]
      %v4430 = vshrl.u32 %v4381, 16
      %v4432 = vrot.slane %v4430, 4
      %v4433 = vshll.u32 %v4381, 16
      %v4435 = vrot.slane %v4433, 5
      %v4436 = vor.u32 %v4432, %v4435
      %v4437 = vrot.slane %v4436, 4
      %v4439 = vshll.u32 %v4382, 16
      %v4441 = vrot.slane %v4439, 5
      %v4442 = vsel %vm699, %v4437, %v4441
      %v4443 = vshrl.u32 %v4382, 16
      %v4445 = vrot.slane %v4443, 4
      %v4446 = vor.u32 %v4445, %v4441
      %v4447 = vrot.slane %v4446, 4
      %v4449 = vshll.u32 %v4383, 16
      %v4451 = vrot.slane %v4449, 5
      %v4452 = vsel %vm699, %v4447, %v4451
      %v4454 = vshrl.u32 %v4384, 16
      %v4456 = vrot.slane %v4454, 4
      %v4457 = vshll.u32 %v4384, 16
      %v4459 = vrot.slane %v4457, 5
      %v4460 = vor.u32 %v4456, %v4459
      %v4461 = vrot.slane %v4460, 4
      %v4463 = vshll.u32 %v4385, 16
      %v4465 = vrot.slane %v4463, 5
      %v4466 = vsel %vm699, %v4461, %v4465
      %v4467 = vshrl.u32 %v4385, 16
      %v4469 = vrot.slane %v4467, 4
      %v4470 = vor.u32 %v4469, %v4465
      %v4471 = vrot.slane %v4470, 4
      %v4473 = vshll.u32 %v4386, 16
      %v4475 = vrot.slane %v4473, 5
      %v4476 = vsel %vm699, %v4471, %v4475
      %v4478 = vshrl.u32 %v4387, 16
      %v4480 = vrot.slane %v4478, 4
      %v4481 = vshll.u32 %v4387, 16
      %v4483 = vrot.slane %v4481, 5
      %v4484 = vor.u32 %v4480, %v4483
      %v4485 = vrot.slane %v4484, 4
      %v4487 = vshll.u32 %v4388, 16
      %v4489 = vrot.slane %v4487, 5
      %v4490 = vsel %vm699, %v4485, %v4489
      %v4491 = vshrl.u32 %v4388, 16
      %v4493 = vrot.slane %v4491, 4
      %v4494 = vor.u32 %v4493, %v4489
      %v4495 = vrot.slane %v4494, 4
      %v4497 = vshll.u32 %v4389, 16
      %v4499 = vrot.slane %v4497, 5
      %v4500 = vsel %vm699, %v4495, %v4499
      %v4502 = vshrl.u32 %v4390, 16
      %v4504 = vrot.slane %v4502, 4
      %v4505 = vshll.u32 %v4390, 16
      %v4507 = vrot.slane %v4505, 5
      %v4508 = vor.u32 %v4504, %v4507
      %v4509 = vrot.slane %v4508, 4
      %v4511 = vshll.u32 %v4391, 16
      %v4513 = vrot.slane %v4511, 5
      %v4514 = vsel %vm699, %v4509, %v4513
      %v4515 = vshrl.u32 %v4391, 16
      %v4517 = vrot.slane %v4515, 4
      %v4518 = vor.u32 %v4517, %v4513
      %v4519 = vrot.slane %v4518, 4
      %v4521 = vshll.u32 %v4392, 16
      %v4523 = vrot.slane %v4521, 5
      %v4524 = vsel %vm699, %v4519, %v4523
      %v4526 = vshrl.u32 %v4393, 16
      %v4528 = vrot.slane %v4526, 4
      %v4529 = vshll.u32 %v4393, 16
      %v4531 = vrot.slane %v4529, 5
      %v4532 = vor.u32 %v4528, %v4531
      %v4533 = vrot.slane %v4532, 4
      %v4535 = vshll.u32 %v4394, 16
      %v4537 = vrot.slane %v4535, 5
      %v4538 = vsel %vm699, %v4533, %v4537
      %v4539 = vshrl.u32 %v4394, 16
      %v4541 = vrot.slane %v4539, 4
      %v4542 = vor.u32 %v4541, %v4537
      %v4543 = vrot.slane %v4542, 4
      %v4545 = vshll.u32 %v4395, 16
      %v4547 = vrot.slane %v4545, 5
      %v4548 = vsel %vm699, %v4543, %v4547
      %v4550 = vshrl.u32 %v4396, 16
      %v4552 = vrot.slane %v4550, 4
      %v4553 = vshll.u32 %v4396, 16
      %v4555 = vrot.slane %v4553, 5
      %v4556 = vor.u32 %v4552, %v4555
      %v4557 = vrot.slane %v4556, 4
      %v4559 = vshll.u32 %v4397, 16
      %v4561 = vrot.slane %v4559, 5
      %v4562 = vsel %vm699, %v4557, %v4561
      %v4563 = vshrl.u32 %v4397, 16
      %v4565 = vrot.slane %v4563, 4
      %v4566 = vor.u32 %v4565, %v4561
      %v4567 = vrot.slane %v4566, 4
      %v4569 = vshll.u32 %v4398, 16
      %v4571 = vrot.slane %v4569, 5
      %v4572 = vsel %vm699, %v4567, %v4571
      %v4574 = vshrl.u32 %v4399, 16
      %v4576 = vrot.slane %v4574, 4
      %v4577 = vshll.u32 %v4399, 16
      %v4579 = vrot.slane %v4577, 5
      %v4580 = vor.u32 %v4576, %v4579
      %v4581 = vrot.slane %v4580, 4
      %v4583 = vshll.u32 %v4400, 16
      %v4585 = vrot.slane %v4583, 5
      %v4586 = vsel %vm699, %v4581, %v4585
      %v4587 = vshrl.u32 %v4400, 16
      %v4589 = vrot.slane %v4587, 4
      %v4590 = vor.u32 %v4589, %v4585
      %v4591 = vrot.slane %v4590, 4
      %v4593 = vshll.u32 %v4401, 16
      %v4595 = vrot.slane %v4593, 5
      %v4596 = vsel %vm699, %v4591, %v4595
      %v4598 = vshrl.u32 %v4402, 16
      %v4600 = vrot.slane %v4598, 4
      %v4601 = vshll.u32 %v4402, 16
      %v4603 = vrot.slane %v4601, 5
      %v4604 = vor.u32 %v4600, %v4603
      %v4605 = vrot.slane %v4604, 4
      %v4607 = vshll.u32 %v4403, 16
      %v4609 = vrot.slane %v4607, 5
      %v4610 = vsel %vm699, %v4605, %v4609
      %v4611 = vshrl.u32 %v4403, 16
      %v4613 = vrot.slane %v4611, 4
      %v4614 = vor.u32 %v4613, %v4609
      %v4615 = vrot.slane %v4614, 4
      %v4617 = vshll.u32 %v4404, 16
      %v4619 = vrot.slane %v4617, 5
      %v4620 = vsel %vm699, %v4615, %v4619
      %v4622 = vshrl.u32 %v4405, 16
      %v4624 = vrot.slane %v4622, 4
      %v4625 = vshll.u32 %v4405, 16
      %v4627 = vrot.slane %v4625, 5
      %v4628 = vor.u32 %v4624, %v4627
      %v4629 = vrot.slane %v4628, 4
      %v4631 = vshll.u32 %v4406, 16
      %v4633 = vrot.slane %v4631, 5
      %v4634 = vsel %vm699, %v4629, %v4633
      %v4635 = vshrl.u32 %v4406, 16
      %v4637 = vrot.slane %v4635, 4
      %v4638 = vor.u32 %v4637, %v4633
      %v4639 = vrot.slane %v4638, 4
      %v4641 = vshll.u32 %v4407, 16
      %v4643 = vrot.slane %v4641, 5
      %v4644 = vsel %vm699, %v4639, %v4643
      %v4646 = vshrl.u32 %v4408, 16
      %v4648 = vrot.slane %v4646, 4
      %v4649 = vshll.u32 %v4408, 16
      %v4651 = vrot.slane %v4649, 5
      %v4652 = vor.u32 %v4648, %v4651
      %v4653 = vrot.slane %v4652, 4
      %v4655 = vshll.u32 %v4409, 16
      %v4657 = vrot.slane %v4655, 5
      %v4658 = vsel %vm699, %v4653, %v4657
      %v4659 = vshrl.u32 %v4409, 16
      %v4661 = vrot.slane %v4659, 4
      %v4662 = vor.u32 %v4661, %v4657
      %v4663 = vrot.slane %v4662, 4
      %v4665 = vshll.u32 %v4410, 16
      %v4667 = vrot.slane %v4665, 5
      %v4668 = vsel %vm699, %v4663, %v4667
      %v4670 = vshrl.u32 %v4411, 16
      %v4672 = vrot.slane %v4670, 4
      %v4673 = vshll.u32 %v4411, 16
      %v4675 = vrot.slane %v4673, 5
      %v4676 = vor.u32 %v4672, %v4675
      %v4677 = vrot.slane %v4676, 4
      %v4679 = vshll.u32 %v4412, 16
      %v4681 = vrot.slane %v4679, 5
      %v4682 = vsel %vm699, %v4677, %v4681
      %v4683 = vshrl.u32 %v4412, 16
      %v4685 = vrot.slane %v4683, 4
      %v4686 = vor.u32 %v4685, %v4681
      %v4687 = vrot.slane %v4686, 4
      %v4689 = vshll.u32 %v4413, 16
      %v4691 = vrot.slane %v4689, 5
      %v4692 = vsel %vm699, %v4687, %v4691
      %v4694 = vshrl.u32 %v4414, 16
      %v4696 = vrot.slane %v4694, 4
      %v4697 = vshll.u32 %v4414, 16
      %v4699 = vrot.slane %v4697, 5
      %v4700 = vor.u32 %v4696, %v4699
      %v4701 = vrot.slane %v4700, 4
      %v4703 = vshll.u32 %v4415, 16
      %v4705 = vrot.slane %v4703, 5
      %v4706 = vsel %vm699, %v4701, %v4705
      %v4707 = vshrl.u32 %v4415, 16
      %v4709 = vrot.slane %v4707, 4
      %v4710 = vor.u32 %v4709, %v4705
      %v4711 = vrot.slane %v4710, 4
      %v4713 = vshll.u32 %v4416, 16
      %v4715 = vrot.slane %v4713, 5
      %v4716 = vsel %vm699, %v4711, %v4715
      %v4718 = vshrl.u32 %v4417, 16
      %v4720 = vrot.slane %v4718, 4
      %v4721 = vshll.u32 %v4417, 16
      %v4723 = vrot.slane %v4721, 5
      %v4724 = vor.u32 %v4720, %v4723
      %v4725 = vrot.slane %v4724, 4
      %v4727 = vshll.u32 %v4418, 16
      %v4729 = vrot.slane %v4727, 5
      %v4730 = vsel %vm699, %v4725, %v4729
      %v4731 = vshrl.u32 %v4418, 16
      %v4733 = vrot.slane %v4731, 4
      %v4734 = vor.u32 %v4733, %v4729
      %v4735 = vrot.slane %v4734, 4
      %v4737 = vshll.u32 %v4419, 16
      %v4739 = vrot.slane %v4737, 5
      %v4740 = vsel %vm699, %v4735, %v4739
      %v4742 = vshrl.u32 %v4420, 16
      %v4744 = vrot.slane %v4742, 4
      %v4745 = vshll.u32 %v4420, 16
      %v4747 = vrot.slane %v4745, 5
      %v4748 = vor.u32 %v4744, %v4747
      %v4749 = vrot.slane %v4748, 4
      %v4751 = vshll.u32 %v4421, 16
      %v4753 = vrot.slane %v4751, 5
      %v4754 = vsel %vm699, %v4749, %v4753
      %v4755 = vshrl.u32 %v4421, 16
      %v4757 = vrot.slane %v4755, 4
      %v4758 = vor.u32 %v4757, %v4753
      %v4759 = vrot.slane %v4758, 4
      %v4761 = vshll.u32 %v4422, 16
      %v4763 = vrot.slane %v4761, 5
      %v4764 = vsel %vm699, %v4759, %v4763
      %v4766 = vshrl.u32 %v4423, 16
      %v4768 = vrot.slane %v4766, 4
      %v4769 = vshll.u32 %v4423, 16
      %v4771 = vrot.slane %v4769, 5
      %v4772 = vor.u32 %v4768, %v4771
      %v4773 = vrot.slane %v4772, 4
      %v4775 = vshll.u32 %v4424, 16
      %v4777 = vrot.slane %v4775, 5
      %v4778 = vsel %vm699, %v4773, %v4777
      %v4779 = vshrl.u32 %v4424, 16
      %v4781 = vrot.slane %v4779, 4
      %v4782 = vor.u32 %v4781, %v4777
      %v4783 = vrot.slane %v4782, 4
      %v4785 = vshll.u32 %v4425, 16
      %v4787 = vrot.slane %v4785, 5
      %v4788 = vsel %vm699, %v4783, %v4787
      %v4790 = vshrl.u32 %v4426, 16
      %v4792 = vrot.slane %v4790, 4
      %v4793 = vshll.u32 %v4426, 16
      %v4795 = vrot.slane %v4793, 5
      %v4796 = vor.u32 %v4792, %v4795
      %v4797 = vrot.slane %v4796, 4
      %v4799 = vshll.u32 %v4427, 16
      %v4801 = vrot.slane %v4799, 5
      %v4802 = vsel %vm699, %v4797, %v4801
      %v4803 = vshrl.u32 %v4427, 16
      %v4805 = vrot.slane %v4803, 4
      %v4806 = vor.u32 %v4805, %v4801
      %v4807 = vrot.slane %v4806, 4
      %v4809 = vshll.u32 %v4428, 16
      %v4811 = vrot.slane %v4809, 5
      %v4812 = vsel %vm699, %v4807, %v4811
      %s4813 = scalar_lea.vmem %s248, 448
      %v4814 = vld [vmem:[%s4813] sm:$0xf]
      %v4815 = vld [vmem:[%s4813 + $0x4] sm:$0xf]
      %v4816 = vld [vmem:[%s4813 + $0x8] sm:$0xf]
      %v4817 = vld [vmem:[%s4813 + $0xc] sm:$0xf]
      %v4818 = vld [vmem:[%s4813 + $0x10] sm:$0xf]
      %v4819 = vld [vmem:[%s4813 + $0x14] sm:$0xf]
      %v4820 = vld [vmem:[%s4813 + $0x18] sm:$0xf]
      %v4821 = vld [vmem:[%s4813 + $0x1c] sm:$0xf]
      %v4822 = vld [vmem:[%s4813 + $0x20] sm:$0xf]
      %v4823 = vld [vmem:[%s4813 + $0x24] sm:$0xf]
      %v4824 = vld [vmem:[%s4813 + $0x28] sm:$0xf]
      %v4825 = vld [vmem:[%s4813 + $0x2c] sm:$0xf]
      %v4826 = vld [vmem:[%s4813 + $0x30] sm:$0xf]
      %v4827 = vld [vmem:[%s4813 + $0x34] sm:$0xf]
      %v4828 = vld [vmem:[%s4813 + $0x38] sm:$0xf]
      %v4829 = vld [vmem:[%s4813 + $0x3c] sm:$0xf]
      %v4830 = vunpack.c.l.b16 %v4442
      %v4831 = vunpack.c.l.b16 %v4452
      %v4832 = vunpack.c.l.b16 %v4466
      %v4833 = vunpack.c.l.b16 %v4476
      %v4834 = vunpack.c.l.b16 %v4490
      %v4835 = vunpack.c.l.b16 %v4500
      %v4836 = vunpack.c.l.b16 %v4514
      %v4837 = vunpack.c.l.b16 %v4524
      %v4838 = vunpack.c.l.b16 %v4538
      %v4839 = vunpack.c.l.b16 %v4548
      %v4840 = vunpack.c.l.b16 %v4562
      %v4841 = vunpack.c.l.b16 %v4572
      %v4842 = vunpack.c.l.b16 %v4586
      %v4843 = vunpack.c.l.b16 %v4596
      %v4844 = vunpack.c.l.b16 %v4610
      %v4845 = vunpack.c.l.b16 %v4620
      %v4846 = vunpack.c.l.b16 %v4634
      %v4847 = vunpack.c.l.b16 %v4644
      %v4848 = vunpack.c.l.b16 %v4658
      %v4849 = vunpack.c.l.b16 %v4668
      %v4850 = vunpack.c.l.b16 %v4682
      %v4851 = vunpack.c.l.b16 %v4692
      %v4852 = vunpack.c.l.b16 %v4706
      %v4853 = vunpack.c.l.b16 %v4716
      %v4854 = vunpack.c.l.b16 %v4730
      %v4855 = vunpack.c.l.b16 %v4740
      %v4856 = vunpack.c.l.b16 %v4754
      %v4857 = vunpack.c.l.b16 %v4764
      %v4858 = vunpack.c.l.b16 %v4778
      %v4859 = vunpack.c.l.b16 %v4788
      %v4860 = vunpack.c.l.b16 %v4802
      %v4861 = vunpack.c.l.b16 %v4812
      %v4862 = vpack.c.b16 %v4831, %v4830
      %v4863 = vpack.c.b16 %v4833, %v4832
      %v4864 = vpack.c.b16 %v4835, %v4834
      %v4865 = vpack.c.b16 %v4837, %v4836
      %v4866 = vpack.c.b16 %v4839, %v4838
      %v4867 = vpack.c.b16 %v4841, %v4840
      %v4868 = vpack.c.b16 %v4843, %v4842
      %v4869 = vpack.c.b16 %v4845, %v4844
      %v4870 = vpack.c.b16 %v4847, %v4846
      %v4871 = vpack.c.b16 %v4849, %v4848
      %v4872 = vpack.c.b16 %v4851, %v4850
      %v4873 = vpack.c.b16 %v4853, %v4852
      %v4874 = vpack.c.b16 %v4855, %v4854
      %v4875 = vpack.c.b16 %v4857, %v4856
      %v4876 = vpack.c.b16 %v4859, %v4858
      %v4877 = vpack.c.b16 %v4861, %v4860
      %v4910 = vunpack.c.l.b16 %v4814
      %v4911 = vunpack.c.l.b16 %v4815
      %v4912 = vunpack.c.l.b16 %v4816
      %v4913 = vunpack.c.l.b16 %v4817
      %v4914 = vunpack.c.l.b16 %v4818
      %v4915 = vunpack.c.l.b16 %v4819
      %v4916 = vunpack.c.l.b16 %v4820
      %v4917 = vunpack.c.l.b16 %v4821
      %v4918 = vunpack.c.l.b16 %v4822
      %v4919 = vunpack.c.l.b16 %v4823
      %v4920 = vunpack.c.l.b16 %v4824
      %v4921 = vunpack.c.l.b16 %v4825
      %v4922 = vunpack.c.l.b16 %v4826
      %v4923 = vunpack.c.l.b16 %v4827
      %v4924 = vunpack.c.l.b16 %v4828
      %v4925 = vunpack.c.l.b16 %v4829
      %v4926 = vpack.c.b16 %v4911, %v4910
      %v4927 = vpack.c.b16 %v4913, %v4912
      %v4928 = vpack.c.b16 %v4915, %v4914
      %v4929 = vpack.c.b16 %v4917, %v4916
      %v4930 = vpack.c.b16 %v4919, %v4918
      %v4931 = vpack.c.b16 %v4921, %v4920
      %v4932 = vpack.c.b16 %v4923, %v4922
      %v4933 = vpack.c.b16 %v4925, %v4924
      %4942 = vmatprep.subr.bf16.mxu0 0
      %4943 = vmatpush1.bf16.msra.mxu0 %v4926
      %4944 = vmatprep.subr.bf16.mxu0 0
      %4945 = vmatpush1.bf16.msra.mxu0 %v4927
      %4946 = vmatprep.subr.bf16.mxu0 0
      %4947 = vmatpush1.bf16.msra.mxu0 %v4928
      %4948 = vmatprep.subr.bf16.mxu0 0
      %4949 = vmatpush1.bf16.msra.mxu0 %v4929
      %4950 = vmatprep.subr.bf16.mxu0 0
      %4951 = vmatpush1.bf16.msra.mxu0 %v4930
      %4952 = vmatprep.subr.bf16.mxu0 0
      %4953 = vmatpush1.bf16.msra.mxu0 %v4931
      %4954 = vmatprep.subr.bf16.mxu0 0
      %4955 = vmatpush1.bf16.msra.mxu0 %v4932
      %4956 = vmatprep.subr.bf16.mxu0 0
      %4957 = vmatpush1.bf16.msra.mxu0 %v4933
      %4958 = vmatprep.subr.bf16.mxu0 0
      %4959 = vmatpush1.bf16.msra.mxu0 0
      %4960 = vmatprep.subr.bf16.mxu0 0
      %4961 = vmatpush1.bf16.msra.mxu0 0
      %4962 = vmatprep.subr.bf16.mxu0 0
      %4963 = vmatpush1.bf16.msra.mxu0 0
      %4964 = vmatprep.subr.bf16.mxu0 0
      %4965 = vmatpush1.bf16.msra.mxu0 0
      %4966 = vmatprep.subr.bf16.mxu0 0
      %4967 = vmatpush1.bf16.msra.mxu0 0
      %4968 = vmatprep.subr.bf16.mxu0 0
      %4969 = vmatpush1.bf16.msra.mxu0 0
      %4970 = vmatprep.subr.bf16.mxu0 0
      %4971 = vmatpush1.bf16.msra.mxu0 0
      %4972 = vmatprep.subr.bf16.mxu0 0
      %4973 = vmatpush1.bf16.msra.mxu0 0
      %4974 = vmatprep.mubr.bf16.mxu0 0
      %4975 = vmatmul.mubr.bf16.gmra.mrb[0].mxu0 %v4862
      %v4976 = vpop.f32.mrb[0].mxu0
      %v4977 = vadd.f32 0.0, %v4976
      %v4978 = vpop.f32.mrb[0].mxu0
      %v4979 = vpop.f32.mrb[0].mxu0
      %v4980 = vadd.f32 0.0, %v4979
      %v4981 = vpop.f32.mrb[0].mxu0
      %4982 = vmatprep.mubr.bf16.mxu0 0
      %4983 = vmatmul.mubr.bf16.gmra.mrb[0].mxu0 %v4863
      %v4984 = vpop.f32.mrb[0].mxu0
      %v4985 = vadd.f32 0.0, %v4984
      %v4986 = vpop.f32.mrb[0].mxu0
      %v4987 = vpop.f32.mrb[0].mxu0
      %v4988 = vadd.f32 0.0, %v4987
      %v4989 = vpop.f32.mrb[0].mxu0
      %4990 = vmatprep.mubr.bf16.mxu0 0
      %4991 = vmatmul.mubr.bf16.gmra.mrb[0].mxu0 %v4864
      %v4992 = vpop.f32.mrb[0].mxu0
      %v4993 = vadd.f32 0.0, %v4992
      %v4994 = vpop.f32.mrb[0].mxu0
      %v4995 = vpop.f32.mrb[0].mxu0
      %v4996 = vadd.f32 0.0, %v4995
      %v4997 = vpop.f32.mrb[0].mxu0
      %4998 = vmatprep.mubr.bf16.mxu0 0
      %4999 = vmatmul.mubr.bf16.gmra.mrb[0].mxu0 %v4865
      %v5000 = vpop.f32.mrb[0].mxu0
      %v5001 = vadd.f32 0.0, %v5000
      %v5002 = vpop.f32.mrb[0].mxu0
      %v5003 = vpop.f32.mrb[0].mxu0
      %v5004 = vadd.f32 0.0, %v5003
      %v5005 = vpop.f32.mrb[0].mxu0
      %5006 = vmatprep.mubr.bf16.mxu0 0
      %5007 = vmatmul.mubr.bf16.gmra.mrb[0].mxu0 %v4866
      %v5008 = vpop.f32.mrb[0].mxu0
      %v5009 = vadd.f32 0.0, %v5008
      %v5010 = vpop.f32.mrb[0].mxu0
      %v5011 = vpop.f32.mrb[0].mxu0
      %v5012 = vadd.f32 0.0, %v5011
      %v5013 = vpop.f32.mrb[0].mxu0
      %5014 = vmatprep.mubr.bf16.mxu0 0
      %5015 = vmatmul.mubr.bf16.gmra.mrb[0].mxu0 %v4867
      %v5016 = vpop.f32.mrb[0].mxu0
      %v5017 = vadd.f32 0.0, %v5016
      %v5018 = vpop.f32.mrb[0].mxu0
      %v5019 = vpop.f32.mrb[0].mxu0
      %v5020 = vadd.f32 0.0, %v5019
      %v5021 = vpop.f32.mrb[0].mxu0
      %5022 = vmatprep.mubr.bf16.mxu0 0
      %5023 = vmatmul.mubr.bf16.gmra.mrb[0].mxu0 %v4868
      %v5024 = vpop.f32.mrb[0].mxu0
      %v5025 = vadd.f32 0.0, %v5024
      %v5026 = vpop.f32.mrb[0].mxu0
      %v5027 = vpop.f32.mrb[0].mxu0
      %v5028 = vadd.f32 0.0, %v5027
      %v5029 = vpop.f32.mrb[0].mxu0
      %5030 = vmatprep.mubr.bf16.mxu0 0
      %5031 = vmatmul.mubr.bf16.gmra.mrb[0].mxu0 %v4869
      %v5032 = vpop.f32.mrb[0].mxu0
      %v5033 = vadd.f32 0.0, %v5032
      %v5034 = vpop.f32.mrb[0].mxu0
      %v5035 = vpop.f32.mrb[0].mxu0
      %v5036 = vadd.f32 0.0, %v5035
      %v5037 = vpop.f32.mrb[0].mxu0
      %5038 = vmatprep.mubr.bf16.mxu0 0
      %5039 = vmatmul.mubr.bf16.gmra.mrb[0].mxu0 %v4870
      %v5040 = vpop.f32.mrb[0].mxu0
      %v5041 = vadd.f32 0.0, %v5040
      %v5042 = vpop.f32.mrb[0].mxu0
      %v5043 = vpop.f32.mrb[0].mxu0
      %v5044 = vadd.f32 0.0, %v5043
      %v5045 = vpop.f32.mrb[0].mxu0
      %5046 = vmatprep.mubr.bf16.mxu0 0
      %5047 = vmatmul.mubr.bf16.gmra.mrb[0].mxu0 %v4871
      %v5048 = vpop.f32.mrb[0].mxu0
      %v5049 = vadd.f32 0.0, %v5048
      %v5050 = vpop.f32.mrb[0].mxu0
      %v5051 = vpop.f32.mrb[0].mxu0
      %v5052 = vadd.f32 0.0, %v5051
      %v5053 = vpop.f32.mrb[0].mxu0
      %5054 = vmatprep.mubr.bf16.mxu0 0
      %5055 = vmatmul.mubr.bf16.gmra.mrb[0].mxu0 %v4872
      %v5056 = vpop.f32.mrb[0].mxu0
      %v5057 = vadd.f32 0.0, %v5056
      %v5058 = vpop.f32.mrb[0].mxu0
      %v5059 = vpop.f32.mrb[0].mxu0
      %v5060 = vadd.f32 0.0, %v5059
      %v5061 = vpop.f32.mrb[0].mxu0
      %5062 = vmatprep.mubr.bf16.mxu0 0
      %5063 = vmatmul.mubr.bf16.gmra.mrb[0].mxu0 %v4873
      %v5064 = vpop.f32.mrb[0].mxu0
      %v5065 = vadd.f32 0.0, %v5064
      %v5066 = vpop.f32.mrb[0].mxu0
      %v5067 = vpop.f32.mrb[0].mxu0
      %v5068 = vadd.f32 0.0, %v5067
      %v5069 = vpop.f32.mrb[0].mxu0
      %5070 = vmatprep.mubr.bf16.mxu0 0
      %5071 = vmatmul.mubr.bf16.gmra.mrb[0].mxu0 %v4874
      %v5072 = vpop.f32.mrb[0].mxu0
      %v5073 = vadd.f32 0.0, %v5072
      %v5074 = vpop.f32.mrb[0].mxu0
      %v5075 = vpop.f32.mrb[0].mxu0
      %v5076 = vadd.f32 0.0, %v5075
      %v5077 = vpop.f32.mrb[0].mxu0
      %5078 = vmatprep.mubr.bf16.mxu0 0
      %5079 = vmatmul.mubr.bf16.gmra.mrb[0].mxu0 %v4875
      %v5080 = vpop.f32.mrb[0].mxu0
      %v5081 = vadd.f32 0.0, %v5080
      %v5082 = vpop.f32.mrb[0].mxu0
      %v5083 = vpop.f32.mrb[0].mxu0
      %v5084 = vadd.f32 0.0, %v5083
      %v5085 = vpop.f32.mrb[0].mxu0
      %5086 = vmatprep.mubr.bf16.mxu0 0
      %5087 = vmatmul.mubr.bf16.gmra.mrb[0].mxu0 %v4876
      %v5088 = vpop.f32.mrb[0].mxu0
      %v5089 = vadd.f32 0.0, %v5088
      %v5090 = vpop.f32.mrb[0].mxu0
      %v5091 = vpop.f32.mrb[0].mxu0
      %v5092 = vadd.f32 0.0, %v5091
      %v5093 = vpop.f32.mrb[0].mxu0
      %5094 = vmatprep.mubr.bf16.mxu0 0
      %5095 = vmatmul.mubr.bf16.gmra.mrb[0].mxu0 %v4877
      %v5096 = vpop.f32.mrb[0].mxu0
      %v5097 = vadd.f32 0.0, %v5096
      %v5098 = vpop.f32.mrb[0].mxu0
      %v5099 = vpop.f32.mrb[0].mxu0
      %v5100 = vadd.f32 0.0, %v5099
      %v5101 = vpop.f32.mrb[0].mxu0
      %5102 = vdwg.mxu0
      %v5103 = vld [vmem:[#allocation2] sm:$0xff]
      %v5104 = vld [vmem:[#allocation2 + $0x8] sm:$0xff]
      %v5105 = vld [vmem:[#allocation2 + $0x10] sm:$0xff]
      %v5106 = vld [vmem:[#allocation2 + $0x18] sm:$0xff]
      %v5107 = vld [vmem:[#allocation2 + $0x20] sm:$0xff]
      %v5108 = vld [vmem:[#allocation2 + $0x28] sm:$0xff]
      %v5109 = vld [vmem:[#allocation2 + $0x30] sm:$0xff]
      %v5110 = vld [vmem:[#allocation2 + $0x38] sm:$0xff]
      %v5111 = vld [vmem:[#allocation2 + $0x40] sm:$0xff]
      %v5112 = vld [vmem:[#allocation2 + $0x48] sm:$0xff]
      %v5113 = vld [vmem:[#allocation2 + $0x50] sm:$0xff]
      %v5114 = vld [vmem:[#allocation2 + $0x58] sm:$0xff]
      %v5115 = vld [vmem:[#allocation2 + $0x60] sm:$0xff]
      %v5116 = vld [vmem:[#allocation2 + $0x68] sm:$0xff]
      %v5117 = vld [vmem:[#allocation2 + $0x70] sm:$0xff]
      %v5118 = vld [vmem:[#allocation2 + $0x78] sm:$0xff]
      %v5119 = vld [vmem:[#allocation2 + $0x80] sm:$0xff]
      %v5120 = vld [vmem:[#allocation2 + $0x88] sm:$0xff]
      %v5121 = vld [vmem:[#allocation2 + $0x90] sm:$0xff]
      %v5122 = vld [vmem:[#allocation2 + $0x98] sm:$0xff]
      %v5123 = vld [vmem:[#allocation2 + $0xa0] sm:$0xff]
      %v5124 = vld [vmem:[#allocation2 + $0xa8] sm:$0xff]
      %v5125 = vld [vmem:[#allocation2 + $0xb0] sm:$0xff]
      %v5126 = vld [vmem:[#allocation2 + $0xb8] sm:$0xff]
      %v5127 = vld [vmem:[#allocation2 + $0xc0] sm:$0xff]
      %v5128 = vld [vmem:[#allocation2 + $0xc8] sm:$0xff]
      %v5129 = vld [vmem:[#allocation2 + $0xd0] sm:$0xff]
      %v5130 = vld [vmem:[#allocation2 + $0xd8] sm:$0xff]
      %v5131 = vld [vmem:[#allocation2 + $0xe0] sm:$0xff]
      %v5132 = vld [vmem:[#allocation2 + $0xe8] sm:$0xff]
      %v5133 = vld [vmem:[#allocation2 + $0xf0] sm:$0xff]
      %v5134 = vld [vmem:[#allocation2 + $0xf8] sm:$0xff]
      %v5135 = vadd.f32 %v5103, %v4977
      %v5136 = vadd.f32 %v5104, %v4980
      %v5137 = vadd.f32 %v5105, %v4985
      %v5138 = vadd.f32 %v5106, %v4988
      %v5139 = vadd.f32 %v5107, %v4993
      %v5140 = vadd.f32 %v5108, %v4996
      %v5141 = vadd.f32 %v5109, %v5001
      %v5142 = vadd.f32 %v5110, %v5004
      %v5143 = vadd.f32 %v5111, %v5009
      %v5144 = vadd.f32 %v5112, %v5012
      %v5145 = vadd.f32 %v5113, %v5017
      %v5146 = vadd.f32 %v5114, %v5020
      %v5147 = vadd.f32 %v5115, %v5025
      %v5148 = vadd.f32 %v5116, %v5028
      %v5149 = vadd.f32 %v5117, %v5033
      %v5150 = vadd.f32 %v5118, %v5036
      %v5151 = vadd.f32 %v5119, %v5041
      %v5152 = vadd.f32 %v5120, %v5044
      %v5153 = vadd.f32 %v5121, %v5049
      %v5154 = vadd.f32 %v5122, %v5052
      %v5155 = vadd.f32 %v5123, %v5057
      %v5156 = vadd.f32 %v5124, %v5060
      %v5157 = vadd.f32 %v5125, %v5065
      %v5158 = vadd.f32 %v5126, %v5068
      %v5159 = vadd.f32 %v5127, %v5073
      %v5160 = vadd.f32 %v5128, %v5076
      %v5161 = vadd.f32 %v5129, %v5081
      %v5162 = vadd.f32 %v5130, %v5084
      %v5163 = vadd.f32 %v5131, %v5089
      %v5164 = vadd.f32 %v5132, %v5092
      %v5165 = vadd.f32 %v5133, %v5097
      %v5166 = vadd.f32 %v5134, %v5100
      %5167 = vst [vmem:[#allocation2] sm:$0xff] %v5135
      %5168 = vst [vmem:[#allocation2 + $0x8] sm:$0xff] %v5136
      %5169 = vst [vmem:[#allocation2 + $0x10] sm:$0xff] %v5137
      %5170 = vst [vmem:[#allocation2 + $0x18] sm:$0xff] %v5138
      %5171 = vst [vmem:[#allocation2 + $0x20] sm:$0xff] %v5139
      %5172 = vst [vmem:[#allocation2 + $0x28] sm:$0xff] %v5140
      %5173 = vst [vmem:[#allocation2 + $0x30] sm:$0xff] %v5141
      %5174 = vst [vmem:[#allocation2 + $0x38] sm:$0xff] %v5142
      %5175 = vst [vmem:[#allocation2 + $0x40] sm:$0xff] %v5143
      %5176 = vst [vmem:[#allocation2 + $0x48] sm:$0xff] %v5144
      %5177 = vst [vmem:[#allocation2 + $0x50] sm:$0xff] %v5145
      %5178 = vst [vmem:[#allocation2 + $0x58] sm:$0xff] %v5146
      %5179 = vst [vmem:[#allocation2 + $0x60] sm:$0xff] %v5147
      %5180 = vst [vmem:[#allocation2 + $0x68] sm:$0xff] %v5148
      %5181 = vst [vmem:[#allocation2 + $0x70] sm:$0xff] %v5149
      %5182 = vst [vmem:[#allocation2 + $0x78] sm:$0xff] %v5150
      %5183 = vst [vmem:[#allocation2 + $0x80] sm:$0xff] %v5151
      %5184 = vst [vmem:[#allocation2 + $0x88] sm:$0xff] %v5152
      %5185 = vst [vmem:[#allocation2 + $0x90] sm:$0xff] %v5153
      %5186 = vst [vmem:[#allocation2 + $0x98] sm:$0xff] %v5154
      %5187 = vst [vmem:[#allocation2 + $0xa0] sm:$0xff] %v5155
      %5188 = vst [vmem:[#allocation2 + $0xa8] sm:$0xff] %v5156
      %5189 = vst [vmem:[#allocation2 + $0xb0] sm:$0xff] %v5157
      %5190 = vst [vmem:[#allocation2 + $0xb8] sm:$0xff] %v5158
      %5191 = vst [vmem:[#allocation2 + $0xc0] sm:$0xff] %v5159
      %5192 = vst [vmem:[#allocation2 + $0xc8] sm:$0xff] %v5160
      %5193 = vst [vmem:[#allocation2 + $0xd0] sm:$0xff] %v5161
      %5194 = vst [vmem:[#allocation2 + $0xd8] sm:$0xff] %v5162
      %5195 = vst [vmem:[#allocation2 + $0xe0] sm:$0xff] %v5163
      %5196 = vst [vmem:[#allocation2 + $0xe8] sm:$0xff] %v5164
      %5197 = vst [vmem:[#allocation2 + $0xf0] sm:$0xff] %v5165
      %5198 = vst [vmem:[#allocation2 + $0xf8] sm:$0xff] %v5166
      %v5199 = vld [vmem:[%s3930] sm:$0xe]
      %v5200 = vld [vmem:[%s3930 + $0x4] sm:$0xf]
      %v5201 = vld [vmem:[%s3930 + $0x8] sm:$0x1]
      %v5202 = vld [vmem:[%s3930 + $0xc] sm:$0xe]
      %v5203 = vld [vmem:[%s3930 + $0x10] sm:$0xf]
      %v5204 = vld [vmem:[%s3930 + $0x14] sm:$0x1]
      %v5205 = vld [vmem:[%s3930 + $0x18] sm:$0xe]
      %v5206 = vld [vmem:[%s3930 + $0x1c] sm:$0xf]
      %v5207 = vld [vmem:[%s3930 + $0x20] sm:$0x1]
      %v5208 = vld [vmem:[%s3930 + $0x24] sm:$0xe]
      %v5209 = vld [vmem:[%s3930 + $0x28] sm:$0xf]
      %v5210 = vld [vmem:[%s3930 + $0x2c] sm:$0x1]
      %v5211 = vld [vmem:[%s3930 + $0x30] sm:$0xe]
      %v5212 = vld [vmem:[%s3930 + $0x34] sm:$0xf]
      %v5213 = vld [vmem:[%s3930 + $0x38] sm:$0x1]
      %v5214 = vld [vmem:[%s3930 + $0x3c] sm:$0xe]
      %v5215 = vld [vmem:[%s3930 + $0x40] sm:$0xf]
      %v5216 = vld [vmem:[%s3930 + $0x44] sm:$0x1]
      %v5217 = vld [vmem:[%s3930 + $0x48] sm:$0xe]
      %v5218 = vld [vmem:[%s3930 + $0x4c] sm:$0xf]
      %v5219 = vld [vmem:[%s3930 + $0x50] sm:$0x1]
      %v5220 = vld [vmem:[%s3930 + $0x54] sm:$0xe]
      %v5221 = vld [vmem:[%s3930 + $0x58] sm:$0xf]
      %v5222 = vld [vmem:[%s3930 + $0x5c] sm:$0x1]
      %v5223 = vld [vmem:[%s3930 + $0x60] sm:$0xe]
      %v5224 = vld [vmem:[%s3930 + $0x64] sm:$0xf]
      %v5225 = vld [vmem:[%s3930 + $0x68] sm:$0x1]
      %v5226 = vld [vmem:[%s3930 + $0x6c] sm:$0xe]
      %v5227 = vld [vmem:[%s3930 + $0x70] sm:$0xf]
      %v5228 = vld [vmem:[%s3930 + $0x74] sm:$0x1]
      %v5229 = vld [vmem:[%s3930 + $0x78] sm:$0xe]
      %v5230 = vld [vmem:[%s3930 + $0x7c] sm:$0xf]
      %v5231 = vld [vmem:[%s3930 + $0x80] sm:$0x1]
      %v5232 = vld [vmem:[%s3930 + $0x84] sm:$0xe]
      %v5233 = vld [vmem:[%s3930 + $0x88] sm:$0xf]
      %v5234 = vld [vmem:[%s3930 + $0x8c] sm:$0x1]
      %v5235 = vld [vmem:[%s3930 + $0x90] sm:$0xe]
      %v5236 = vld [vmem:[%s3930 + $0x94] sm:$0xf]
      %v5237 = vld [vmem:[%s3930 + $0x98] sm:$0x1]
      %v5238 = vld [vmem:[%s3930 + $0x9c] sm:$0xe]
      %v5239 = vld [vmem:[%s3930 + $0xa0] sm:$0xf]
      %v5240 = vld [vmem:[%s3930 + $0xa4] sm:$0x1]
      %v5241 = vld [vmem:[%s3930 + $0xa8] sm:$0xe]
      %v5242 = vld [vmem:[%s3930 + $0xac] sm:$0xf]
      %v5243 = vld [vmem:[%s3930 + $0xb0] sm:$0x1]
      %v5244 = vld [vmem:[%s3930 + $0xb4] sm:$0xe]
      %v5245 = vld [vmem:[%s3930 + $0xb8] sm:$0xf]
      %v5246 = vld [vmem:[%s3930 + $0xbc] sm:$0x1]
      %v5295 = vrot.slane %v5199, 5
      %v5296 = vrot.slane %v5295, 4
      %v5297 = vrot.slane %v5200, 5
      %v5298 = vsel %vm1568, %v5296, %v5297
      %v5299 = vrot.slane %v5297, 4
      %v5300 = vrot.slane %v5201, 5
      %v5301 = vsel %vm1568, %v5299, %v5300
      %v5302 = vrot.slane %v5202, 5
      %v5303 = vrot.slane %v5302, 4
      %v5304 = vrot.slane %v5203, 5
      %v5305 = vsel %vm1568, %v5303, %v5304
      %v5306 = vrot.slane %v5304, 4
      %v5307 = vrot.slane %v5204, 5
      %v5308 = vsel %vm1568, %v5306, %v5307
      %v5309 = vrot.slane %v5205, 5
      %v5310 = vrot.slane %v5309, 4
      %v5311 = vrot.slane %v5206, 5
      %v5312 = vsel %vm1568, %v5310, %v5311
      %v5313 = vrot.slane %v5311, 4
      %v5314 = vrot.slane %v5207, 5
      %v5315 = vsel %vm1568, %v5313, %v5314
      %v5316 = vrot.slane %v5208, 5
      %v5317 = vrot.slane %v5316, 4
      %v5318 = vrot.slane %v5209, 5
      %v5319 = vsel %vm1568, %v5317, %v5318
      %v5320 = vrot.slane %v5318, 4
      %v5321 = vrot.slane %v5210, 5
      %v5322 = vsel %vm1568, %v5320, %v5321
      %v5323 = vrot.slane %v5211, 5
      %v5324 = vrot.slane %v5323, 4
      %v5325 = vrot.slane %v5212, 5
      %v5326 = vsel %vm1568, %v5324, %v5325
      %v5327 = vrot.slane %v5325, 4
      %v5328 = vrot.slane %v5213, 5
      %v5329 = vsel %vm1568, %v5327, %v5328
      %v5330 = vrot.slane %v5214, 5
      %v5331 = vrot.slane %v5330, 4
      %v5332 = vrot.slane %v5215, 5
      %v5333 = vsel %vm1568, %v5331, %v5332
      %v5334 = vrot.slane %v5332, 4
      %v5335 = vrot.slane %v5216, 5
      %v5336 = vsel %vm1568, %v5334, %v5335
      %v5337 = vrot.slane %v5217, 5
      %v5338 = vrot.slane %v5337, 4
      %v5339 = vrot.slane %v5218, 5
      %v5340 = vsel %vm1568, %v5338, %v5339
      %v5341 = vrot.slane %v5339, 4
      %v5342 = vrot.slane %v5219, 5
      %v5343 = vsel %vm1568, %v5341, %v5342
      %v5344 = vrot.slane %v5220, 5
      %v5345 = vrot.slane %v5344, 4
      %v5346 = vrot.slane %v5221, 5
      %v5347 = vsel %vm1568, %v5345, %v5346
      %v5348 = vrot.slane %v5346, 4
      %v5349 = vrot.slane %v5222, 5
      %v5350 = vsel %vm1568, %v5348, %v5349
      %v5351 = vrot.slane %v5223, 5
      %v5352 = vrot.slane %v5351, 4
      %v5353 = vrot.slane %v5224, 5
      %v5354 = vsel %vm1568, %v5352, %v5353
      %v5355 = vrot.slane %v5353, 4
      %v5356 = vrot.slane %v5225, 5
      %v5357 = vsel %vm1568, %v5355, %v5356
      %v5358 = vrot.slane %v5226, 5
      %v5359 = vrot.slane %v5358, 4
      %v5360 = vrot.slane %v5227, 5
      %v5361 = vsel %vm1568, %v5359, %v5360
      %v5362 = vrot.slane %v5360, 4
      %v5363 = vrot.slane %v5228, 5
      %v5364 = vsel %vm1568, %v5362, %v5363
      %v5365 = vrot.slane %v5229, 5
      %v5366 = vrot.slane %v5365, 4
      %v5367 = vrot.slane %v5230, 5
      %v5368 = vsel %vm1568, %v5366, %v5367
      %v5369 = vrot.slane %v5367, 4
      %v5370 = vrot.slane %v5231, 5
      %v5371 = vsel %vm1568, %v5369, %v5370
      %v5372 = vrot.slane %v5232, 5
      %v5373 = vrot.slane %v5372, 4
      %v5374 = vrot.slane %v5233, 5
      %v5375 = vsel %vm1568, %v5373, %v5374
      %v5376 = vrot.slane %v5374, 4
      %v5377 = vrot.slane %v5234, 5
      %v5378 = vsel %vm1568, %v5376, %v5377
      %v5379 = vrot.slane %v5235, 5
      %v5380 = vrot.slane %v5379, 4
      %v5381 = vrot.slane %v5236, 5
      %v5382 = vsel %vm1568, %v5380, %v5381
      %v5383 = vrot.slane %v5381, 4
      %v5384 = vrot.slane %v5237, 5
      %v5385 = vsel %vm1568, %v5383, %v5384
      %v5386 = vrot.slane %v5238, 5
      %v5387 = vrot.slane %v5386, 4
      %v5388 = vrot.slane %v5239, 5
      %v5389 = vsel %vm1568, %v5387, %v5388
      %v5390 = vrot.slane %v5388, 4
      %v5391 = vrot.slane %v5240, 5
      %v5392 = vsel %vm1568, %v5390, %v5391
      %v5393 = vrot.slane %v5241, 5
      %v5394 = vrot.slane %v5393, 4
      %v5395 = vrot.slane %v5242, 5
      %v5396 = vsel %vm1568, %v5394, %v5395
      %v5397 = vrot.slane %v5395, 4
      %v5398 = vrot.slane %v5243, 5
      %v5399 = vsel %vm1568, %v5397, %v5398
      %v5400 = vrot.slane %v5244, 5
      %v5401 = vrot.slane %v5400, 4
      %v5402 = vrot.slane %v5245, 5
      %v5403 = vsel %vm1568, %v5401, %v5402
      %v5404 = vrot.slane %v5402, 4
      %v5405 = vrot.slane %v5246, 5
      %v5406 = vsel %vm1568, %v5404, %v5405
      %s5407 = scalar_lea.vmem %s248, 512
      %v5408 = vld [vmem:[%s5407] sm:$0xf]
      %v5409 = vld [vmem:[%s5407 + $0x4] sm:$0xf]
      %v5410 = vld [vmem:[%s5407 + $0x8] sm:$0xf]
      %v5411 = vld [vmem:[%s5407 + $0xc] sm:$0xf]
      %v5412 = vld [vmem:[%s5407 + $0x10] sm:$0xf]
      %v5413 = vld [vmem:[%s5407 + $0x14] sm:$0xf]
      %v5414 = vld [vmem:[%s5407 + $0x18] sm:$0xf]
      %v5415 = vld [vmem:[%s5407 + $0x1c] sm:$0xf]
      %v5416 = vld [vmem:[%s5407 + $0x20] sm:$0xf]
      %v5417 = vld [vmem:[%s5407 + $0x24] sm:$0xf]
      %v5418 = vld [vmem:[%s5407 + $0x28] sm:$0xf]
      %v5419 = vld [vmem:[%s5407 + $0x2c] sm:$0xf]
      %v5420 = vld [vmem:[%s5407 + $0x30] sm:$0xf]
      %v5421 = vld [vmem:[%s5407 + $0x34] sm:$0xf]
      %v5422 = vld [vmem:[%s5407 + $0x38] sm:$0xf]
      %v5423 = vld [vmem:[%s5407 + $0x3c] sm:$0xf]
      %v5424 = vunpack.c.l.b16 %v5298
      %v5425 = vunpack.c.l.b16 %v5301
      %v5426 = vunpack.c.l.b16 %v5305
      %v5427 = vunpack.c.l.b16 %v5308
      %v5428 = vunpack.c.l.b16 %v5312
      %v5429 = vunpack.c.l.b16 %v5315
      %v5430 = vunpack.c.l.b16 %v5319
      %v5431 = vunpack.c.l.b16 %v5322
      %v5432 = vunpack.c.l.b16 %v5326
      %v5433 = vunpack.c.l.b16 %v5329
      %v5434 = vunpack.c.l.b16 %v5333
      %v5435 = vunpack.c.l.b16 %v5336
      %v5436 = vunpack.c.l.b16 %v5340
      %v5437 = vunpack.c.l.b16 %v5343
      %v5438 = vunpack.c.l.b16 %v5347
      %v5439 = vunpack.c.l.b16 %v5350
      %v5440 = vunpack.c.l.b16 %v5354
      %v5441 = vunpack.c.l.b16 %v5357
      %v5442 = vunpack.c.l.b16 %v5361
      %v5443 = vunpack.c.l.b16 %v5364
      %v5444 = vunpack.c.l.b16 %v5368
      %v5445 = vunpack.c.l.b16 %v5371
      %v5446 = vunpack.c.l.b16 %v5375
      %v5447 = vunpack.c.l.b16 %v5378
      %v5448 = vunpack.c.l.b16 %v5382
      %v5449 = vunpack.c.l.b16 %v5385
      %v5450 = vunpack.c.l.b16 %v5389
      %v5451 = vunpack.c.l.b16 %v5392
      %v5452 = vunpack.c.l.b16 %v5396
      %v5453 = vunpack.c.l.b16 %v5399
      %v5454 = vunpack.c.l.b16 %v5403
      %v5455 = vunpack.c.l.b16 %v5406
      %v5456 = vpack.c.b16 %v5425, %v5424
      %v5457 = vpack.c.b16 %v5427, %v5426
      %v5458 = vpack.c.b16 %v5429, %v5428
      %v5459 = vpack.c.b16 %v5431, %v5430
      %v5460 = vpack.c.b16 %v5433, %v5432
      %v5461 = vpack.c.b16 %v5435, %v5434
      %v5462 = vpack.c.b16 %v5437, %v5436
      %v5463 = vpack.c.b16 %v5439, %v5438
      %v5464 = vpack.c.b16 %v5441, %v5440
      %v5465 = vpack.c.b16 %v5443, %v5442
      %v5466 = vpack.c.b16 %v5445, %v5444
      %v5467 = vpack.c.b16 %v5447, %v5446
      %v5468 = vpack.c.b16 %v5449, %v5448
      %v5469 = vpack.c.b16 %v5451, %v5450
      %v5470 = vpack.c.b16 %v5453, %v5452
      %v5471 = vpack.c.b16 %v5455, %v5454
      %v5504 = vunpack.c.l.b16 %v5408
      %v5505 = vunpack.c.l.b16 %v5409
      %v5506 = vunpack.c.l.b16 %v5410
      %v5507 = vunpack.c.l.b16 %v5411
      %v5508 = vunpack.c.l.b16 %v5412
      %v5509 = vunpack.c.l.b16 %v5413
      %v5510 = vunpack.c.l.b16 %v5414
      %v5511 = vunpack.c.l.b16 %v5415
      %v5512 = vunpack.c.l.b16 %v5416
      %v5513 = vunpack.c.l.b16 %v5417
      %v5514 = vunpack.c.l.b16 %v5418
      %v5515 = vunpack.c.l.b16 %v5419
      %v5516 = vunpack.c.l.b16 %v5420
      %v5517 = vunpack.c.l.b16 %v5421
      %v5518 = vunpack.c.l.b16 %v5422
      %v5519 = vunpack.c.l.b16 %v5423
      %v5520 = vpack.c.b16 %v5505, %v5504
      %v5521 = vpack.c.b16 %v5507, %v5506
      %v5522 = vpack.c.b16 %v5509, %v5508
      %v5523 = vpack.c.b16 %v5511, %v5510
      %v5524 = vpack.c.b16 %v5513, %v5512
      %v5525 = vpack.c.b16 %v5515, %v5514
      %v5526 = vpack.c.b16 %v5517, %v5516
      %v5527 = vpack.c.b16 %v5519, %v5518
      %5536 = vmatprep.subr.bf16.mxu0 0
      %5537 = vmatpush1.bf16.msra.mxu0 %v5520
      %5538 = vmatprep.subr.bf16.mxu0 0
      %5539 = vmatpush1.bf16.msra.mxu0 %v5521
      %5540 = vmatprep.subr.bf16.mxu0 0
      %5541 = vmatpush1.bf16.msra.mxu0 %v5522
      %5542 = vmatprep.subr.bf16.mxu0 0
      %5543 = vmatpush1.bf16.msra.mxu0 %v5523
      %5544 = vmatprep.subr.bf16.mxu0 0
      %5545 = vmatpush1.bf16.msra.mxu0 %v5524
      %5546 = vmatprep.subr.bf16.mxu0 0
      %5547 = vmatpush1.bf16.msra.mxu0 %v5525
      %5548 = vmatprep.subr.bf16.mxu0 0
      %5549 = vmatpush1.bf16.msra.mxu0 %v5526
      %5550 = vmatprep.subr.bf16.mxu0 0
      %5551 = vmatpush1.bf16.msra.mxu0 %v5527
      %5552 = vmatprep.subr.bf16.mxu0 0
      %5553 = vmatpush1.bf16.msra.mxu0 0
      %5554 = vmatprep.subr.bf16.mxu0 0
      %5555 = vmatpush1.bf16.msra.mxu0 0
      %5556 = vmatprep.subr.bf16.mxu0 0
      %5557 = vmatpush1.bf16.msra.mxu0 0
      %5558 = vmatprep.subr.bf16.mxu0 0
      %5559 = vmatpush1.bf16.msra.mxu0 0
      %5560 = vmatprep.subr.bf16.mxu0 0
      %5561 = vmatpush1.bf16.msra.mxu0 0
      %5562 = vmatprep.subr.bf16.mxu0 0
      %5563 = vmatpush1.bf16.msra.mxu0 0
      %5564 = vmatprep.subr.bf16.mxu0 0
      %5565 = vmatpush1.bf16.msra.mxu0 0
      %5566 = vmatprep.subr.bf16.mxu0 0
      %5567 = vmatpush1.bf16.msra.mxu0 0
      %5568 = vmatprep.mubr.bf16.mxu0 0
      %5569 = vmatmul.mubr.bf16.gmra.mrb[0].mxu0 %v5456
      %v5570 = vpop.f32.mrb[0].mxu0
      %v5571 = vadd.f32 0.0, %v5570
      %v5572 = vpop.f32.mrb[0].mxu0
      %v5573 = vpop.f32.mrb[0].mxu0
      %v5574 = vadd.f32 0.0, %v5573
      %v5575 = vpop.f32.mrb[0].mxu0
      %5576 = vmatprep.mubr.bf16.mxu0 0
      %5577 = vmatmul.mubr.bf16.gmra.mrb[0].mxu0 %v5457
      %v5578 = vpop.f32.mrb[0].mxu0
      %v5579 = vadd.f32 0.0, %v5578
      %v5580 = vpop.f32.mrb[0].mxu0
      %v5581 = vpop.f32.mrb[0].mxu0
      %v5582 = vadd.f32 0.0, %v5581
      %v5583 = vpop.f32.mrb[0].mxu0
      %5584 = vmatprep.mubr.bf16.mxu0 0
      %5585 = vmatmul.mubr.bf16.gmra.mrb[0].mxu0 %v5458
      %v5586 = vpop.f32.mrb[0].mxu0
      %v5587 = vadd.f32 0.0, %v5586
      %v5588 = vpop.f32.mrb[0].mxu0
      %v5589 = vpop.f32.mrb[0].mxu0
      %v5590 = vadd.f32 0.0, %v5589
      %v5591 = vpop.f32.mrb[0].mxu0
      %5592 = vmatprep.mubr.bf16.mxu0 0
      %5593 = vmatmul.mubr.bf16.gmra.mrb[0].mxu0 %v5459
      %v5594 = vpop.f32.mrb[0].mxu0
      %v5595 = vadd.f32 0.0, %v5594
      %v5596 = vpop.f32.mrb[0].mxu0
      %v5597 = vpop.f32.mrb[0].mxu0
      %v5598 = vadd.f32 0.0, %v5597
      %v5599 = vpop.f32.mrb[0].mxu0
      %5600 = vmatprep.mubr.bf16.mxu0 0
      %5601 = vmatmul.mubr.bf16.gmra.mrb[0].mxu0 %v5460
      %v5602 = vpop.f32.mrb[0].mxu0
      %v5603 = vadd.f32 0.0, %v5602
      %v5604 = vpop.f32.mrb[0].mxu0
      %v5605 = vpop.f32.mrb[0].mxu0
      %v5606 = vadd.f32 0.0, %v5605
      %v5607 = vpop.f32.mrb[0].mxu0
      %5608 = vmatprep.mubr.bf16.mxu0 0
      %5609 = vmatmul.mubr.bf16.gmra.mrb[0].mxu0 %v5461
      %v5610 = vpop.f32.mrb[0].mxu0
      %v5611 = vadd.f32 0.0, %v5610
      %v5612 = vpop.f32.mrb[0].mxu0
      %v5613 = vpop.f32.mrb[0].mxu0
      %v5614 = vadd.f32 0.0, %v5613
      %v5615 = vpop.f32.mrb[0].mxu0
      %5616 = vmatprep.mubr.bf16.mxu0 0
      %5617 = vmatmul.mubr.bf16.gmra.mrb[0].mxu0 %v5462
      %v5618 = vpop.f32.mrb[0].mxu0
      %v5619 = vadd.f32 0.0, %v5618
      %v5620 = vpop.f32.mrb[0].mxu0
      %v5621 = vpop.f32.mrb[0].mxu0
      %v5622 = vadd.f32 0.0, %v5621
      %v5623 = vpop.f32.mrb[0].mxu0
      %5624 = vmatprep.mubr.bf16.mxu0 0
      %5625 = vmatmul.mubr.bf16.gmra.mrb[0].mxu0 %v5463
      %v5626 = vpop.f32.mrb[0].mxu0
      %v5627 = vadd.f32 0.0, %v5626
      %v5628 = vpop.f32.mrb[0].mxu0
      %v5629 = vpop.f32.mrb[0].mxu0
      %v5630 = vadd.f32 0.0, %v5629
      %v5631 = vpop.f32.mrb[0].mxu0
      %5632 = vmatprep.mubr.bf16.mxu0 0
      %5633 = vmatmul.mubr.bf16.gmra.mrb[0].mxu0 %v5464
      %v5634 = vpop.f32.mrb[0].mxu0
      %v5635 = vadd.f32 0.0, %v5634
      %v5636 = vpop.f32.mrb[0].mxu0
      %v5637 = vpop.f32.mrb[0].mxu0
      %v5638 = vadd.f32 0.0, %v5637
      %v5639 = vpop.f32.mrb[0].mxu0
      %5640 = vmatprep.mubr.bf16.mxu0 0
      %5641 = vmatmul.mubr.bf16.gmra.mrb[0].mxu0 %v5465
      %v5642 = vpop.f32.mrb[0].mxu0
      %v5643 = vadd.f32 0.0, %v5642
      %v5644 = vpop.f32.mrb[0].mxu0
      %v5645 = vpop.f32.mrb[0].mxu0
      %v5646 = vadd.f32 0.0, %v5645
      %v5647 = vpop.f32.mrb[0].mxu0
      %5648 = vmatprep.mubr.bf16.mxu0 0
      %5649 = vmatmul.mubr.bf16.gmra.mrb[0].mxu0 %v5466
      %v5650 = vpop.f32.mrb[0].mxu0
      %v5651 = vadd.f32 0.0, %v5650
      %v5652 = vpop.f32.mrb[0].mxu0
      %v5653 = vpop.f32.mrb[0].mxu0
      %v5654 = vadd.f32 0.0, %v5653
      %v5655 = vpop.f32.mrb[0].mxu0
      %5656 = vmatprep.mubr.bf16.mxu0 0
      %5657 = vmatmul.mubr.bf16.gmra.mrb[0].mxu0 %v5467
      %v5658 = vpop.f32.mrb[0].mxu0
      %v5659 = vadd.f32 0.0, %v5658
      %v5660 = vpop.f32.mrb[0].mxu0
      %v5661 = vpop.f32.mrb[0].mxu0
      %v5662 = vadd.f32 0.0, %v5661
      %v5663 = vpop.f32.mrb[0].mxu0
      %5664 = vmatprep.mubr.bf16.mxu0 0
      %5665 = vmatmul.mubr.bf16.gmra.mrb[0].mxu0 %v5468
      %v5666 = vpop.f32.mrb[0].mxu0
      %v5667 = vadd.f32 0.0, %v5666
      %v5668 = vpop.f32.mrb[0].mxu0
      %v5669 = vpop.f32.mrb[0].mxu0
      %v5670 = vadd.f32 0.0, %v5669
      %v5671 = vpop.f32.mrb[0].mxu0
      %5672 = vmatprep.mubr.bf16.mxu0 0
      %5673 = vmatmul.mubr.bf16.gmra.mrb[0].mxu0 %v5469
      %v5674 = vpop.f32.mrb[0].mxu0
      %v5675 = vadd.f32 0.0, %v5674
      %v5676 = vpop.f32.mrb[0].mxu0
      %v5677 = vpop.f32.mrb[0].mxu0
      %v5678 = vadd.f32 0.0, %v5677
      %v5679 = vpop.f32.mrb[0].mxu0
      %5680 = vmatprep.mubr.bf16.mxu0 0
      %5681 = vmatmul.mubr.bf16.gmra.mrb[0].mxu0 %v5470
      %v5682 = vpop.f32.mrb[0].mxu0
      %v5683 = vadd.f32 0.0, %v5682
      %v5684 = vpop.f32.mrb[0].mxu0
      %v5685 = vpop.f32.mrb[0].mxu0
      %v5686 = vadd.f32 0.0, %v5685
      %v5687 = vpop.f32.mrb[0].mxu0
      %5688 = vmatprep.mubr.bf16.mxu0 0
      %5689 = vmatmul.mubr.bf16.gmra.mrb[0].mxu0 %v5471
      %v5690 = vpop.f32.mrb[0].mxu0
      %v5691 = vadd.f32 0.0, %v5690
      %v5692 = vpop.f32.mrb[0].mxu0
      %v5693 = vpop.f32.mrb[0].mxu0
      %v5694 = vadd.f32 0.0, %v5693
      %v5695 = vpop.f32.mrb[0].mxu0
      %5696 = vdwg.mxu0
      %v5697 = vld [vmem:[#allocation2] sm:$0xff]
      %v5698 = vld [vmem:[#allocation2 + $0x8] sm:$0xff]
      %v5699 = vld [vmem:[#allocation2 + $0x10] sm:$0xff]
      %v5700 = vld [vmem:[#allocation2 + $0x18] sm:$0xff]
      %v5701 = vld [vmem:[#allocation2 + $0x20] sm:$0xff]
      %v5702 = vld [vmem:[#allocation2 + $0x28] sm:$0xff]
      %v5703 = vld [vmem:[#allocation2 + $0x30] sm:$0xff]
      %v5704 = vld [vmem:[#allocation2 + $0x38] sm:$0xff]
      %v5705 = vld [vmem:[#allocation2 + $0x40] sm:$0xff]
      %v5706 = vld [vmem:[#allocation2 + $0x48] sm:$0xff]
      %v5707 = vld [vmem:[#allocation2 + $0x50] sm:$0xff]
      %v5708 = vld [vmem:[#allocation2 + $0x58] sm:$0xff]
      %v5709 = vld [vmem:[#allocation2 + $0x60] sm:$0xff]
      %v5710 = vld [vmem:[#allocation2 + $0x68] sm:$0xff]
      %v5711 = vld [vmem:[#allocation2 + $0x70] sm:$0xff]
      %v5712 = vld [vmem:[#allocation2 + $0x78] sm:$0xff]
      %v5713 = vld [vmem:[#allocation2 + $0x80] sm:$0xff]
      %v5714 = vld [vmem:[#allocation2 + $0x88] sm:$0xff]
      %v5715 = vld [vmem:[#allocation2 + $0x90] sm:$0xff]
      %v5716 = vld [vmem:[#allocation2 + $0x98] sm:$0xff]
      %v5717 = vld [vmem:[#allocation2 + $0xa0] sm:$0xff]
      %v5718 = vld [vmem:[#allocation2 + $0xa8] sm:$0xff]
      %v5719 = vld [vmem:[#allocation2 + $0xb0] sm:$0xff]
      %v5720 = vld [vmem:[#allocation2 + $0xb8] sm:$0xff]
      %v5721 = vld [vmem:[#allocation2 + $0xc0] sm:$0xff]
      %v5722 = vld [vmem:[#allocation2 + $0xc8] sm:$0xff]
      %v5723 = vld [vmem:[#allocation2 + $0xd0] sm:$0xff]
      %v5724 = vld [vmem:[#allocation2 + $0xd8] sm:$0xff]
      %v5725 = vld [vmem:[#allocation2 + $0xe0] sm:$0xff]
      %v5726 = vld [vmem:[#allocation2 + $0xe8] sm:$0xff]
      %v5727 = vld [vmem:[#allocation2 + $0xf0] sm:$0xff]
      %v5728 = vld [vmem:[#allocation2 + $0xf8] sm:$0xff]
      %v5729 = vadd.f32 %v5697, %v5571
      %v5730 = vadd.f32 %v5698, %v5574
      %v5731 = vadd.f32 %v5699, %v5579
      %v5732 = vadd.f32 %v5700, %v5582
      %v5733 = vadd.f32 %v5701, %v5587
      %v5734 = vadd.f32 %v5702, %v5590
      %v5735 = vadd.f32 %v5703, %v5595
      %v5736 = vadd.f32 %v5704, %v5598
      %v5737 = vadd.f32 %v5705, %v5603
      %v5738 = vadd.f32 %v5706, %v5606
      %v5739 = vadd.f32 %v5707, %v5611
      %v5740 = vadd.f32 %v5708, %v5614
      %v5741 = vadd.f32 %v5709, %v5619
      %v5742 = vadd.f32 %v5710, %v5622
      %v5743 = vadd.f32 %v5711, %v5627
      %v5744 = vadd.f32 %v5712, %v5630
      %v5745 = vadd.f32 %v5713, %v5635
      %v5746 = vadd.f32 %v5714, %v5638
      %v5747 = vadd.f32 %v5715, %v5643
      %v5748 = vadd.f32 %v5716, %v5646
      %v5749 = vadd.f32 %v5717, %v5651
      %v5750 = vadd.f32 %v5718, %v5654
      %v5751 = vadd.f32 %v5719, %v5659
      %v5752 = vadd.f32 %v5720, %v5662
      %v5753 = vadd.f32 %v5721, %v5667
      %v5754 = vadd.f32 %v5722, %v5670
      %v5755 = vadd.f32 %v5723, %v5675
      %v5756 = vadd.f32 %v5724, %v5678
      %v5757 = vadd.f32 %v5725, %v5683
      %v5758 = vadd.f32 %v5726, %v5686
      %v5759 = vadd.f32 %v5727, %v5691
      %v5760 = vadd.f32 %v5728, %v5694
      %5761 = vst [vmem:[#allocation2] sm:$0xff] %v5729
      %5762 = vst [vmem:[#allocation2 + $0x8] sm:$0xff] %v5730
      %5763 = vst [vmem:[#allocation2 + $0x10] sm:$0xff] %v5731
      %5764 = vst [vmem:[#allocation2 + $0x18] sm:$0xff] %v5732
      %5765 = vst [vmem:[#allocation2 + $0x20] sm:$0xff] %v5733
      %5766 = vst [vmem:[#allocation2 + $0x28] sm:$0xff] %v5734
      %5767 = vst [vmem:[#allocation2 + $0x30] sm:$0xff] %v5735
      %5768 = vst [vmem:[#allocation2 + $0x38] sm:$0xff] %v5736
      %5769 = vst [vmem:[#allocation2 + $0x40] sm:$0xff] %v5737
      %5770 = vst [vmem:[#allocation2 + $0x48] sm:$0xff] %v5738
      %5771 = vst [vmem:[#allocation2 + $0x50] sm:$0xff] %v5739
      %5772 = vst [vmem:[#allocation2 + $0x58] sm:$0xff] %v5740
      %5773 = vst [vmem:[#allocation2 + $0x60] sm:$0xff] %v5741
      %5774 = vst [vmem:[#allocation2 + $0x68] sm:$0xff] %v5742
      %5775 = vst [vmem:[#allocation2 + $0x70] sm:$0xff] %v5743
      %5776 = vst [vmem:[#allocation2 + $0x78] sm:$0xff] %v5744
      %5777 = vst [vmem:[#allocation2 + $0x80] sm:$0xff] %v5745
      %5778 = vst [vmem:[#allocation2 + $0x88] sm:$0xff] %v5746
      %5779 = vst [vmem:[#allocation2 + $0x90] sm:$0xff] %v5747
      %5780 = vst [vmem:[#allocation2 + $0x98] sm:$0xff] %v5748
      %5781 = vst [vmem:[#allocation2 + $0xa0] sm:$0xff] %v5749
      %5782 = vst [vmem:[#allocation2 + $0xa8] sm:$0xff] %v5750
      %5783 = vst [vmem:[#allocation2 + $0xb0] sm:$0xff] %v5751
      %5784 = vst [vmem:[#allocation2 + $0xb8] sm:$0xff] %v5752
      %5785 = vst [vmem:[#allocation2 + $0xc0] sm:$0xff] %v5753
      %5786 = vst [vmem:[#allocation2 + $0xc8] sm:$0xff] %v5754
      %5787 = vst [vmem:[#allocation2 + $0xd0] sm:$0xff] %v5755
      %5788 = vst [vmem:[#allocation2 + $0xd8] sm:$0xff] %v5756
      %5789 = vst [vmem:[#allocation2 + $0xe0] sm:$0xff] %v5757
      %5790 = vst [vmem:[#allocation2 + $0xe8] sm:$0xff] %v5758
      %5791 = vst [vmem:[#allocation2 + $0xf0] sm:$0xff] %v5759
      %5792 = vst [vmem:[#allocation2 + $0xf8] sm:$0xff] %v5760
      %v5793 = vld [vmem:[#allocation2] sm:$0xff]
      %v5794 = vld [vmem:[#allocation2 + $0x8] sm:$0xff]
      %v5795 = vld [vmem:[#allocation2 + $0x10] sm:$0xff]
      %v5796 = vld [vmem:[#allocation2 + $0x18] sm:$0xff]
      %v5797 = vld [vmem:[#allocation2 + $0x20] sm:$0xff]
      %v5798 = vld [vmem:[#allocation2 + $0x28] sm:$0xff]
      %v5799 = vld [vmem:[#allocation2 + $0x30] sm:$0xff]
      %v5800 = vld [vmem:[#allocation2 + $0x38] sm:$0xff]
      %v5801 = vld [vmem:[#allocation2 + $0x40] sm:$0xff]
      %v5802 = vld [vmem:[#allocation2 + $0x48] sm:$0xff]
      %v5803 = vld [vmem:[#allocation2 + $0x50] sm:$0xff]
      %v5804 = vld [vmem:[#allocation2 + $0x58] sm:$0xff]
      %v5805 = vld [vmem:[#allocation2 + $0x60] sm:$0xff]
      %v5806 = vld [vmem:[#allocation2 + $0x68] sm:$0xff]
      %v5807 = vld [vmem:[#allocation2 + $0x70] sm:$0xff]
      %v5808 = vld [vmem:[#allocation2 + $0x78] sm:$0xff]
      %v5809 = vld [vmem:[#allocation2 + $0x80] sm:$0xff]
      %v5810 = vld [vmem:[#allocation2 + $0x88] sm:$0xff]
      %v5811 = vld [vmem:[#allocation2 + $0x90] sm:$0xff]
      %v5812 = vld [vmem:[#allocation2 + $0x98] sm:$0xff]
      %v5813 = vld [vmem:[#allocation2 + $0xa0] sm:$0xff]
      %v5814 = vld [vmem:[#allocation2 + $0xa8] sm:$0xff]
      %v5815 = vld [vmem:[#allocation2 + $0xb0] sm:$0xff]
      %v5816 = vld [vmem:[#allocation2 + $0xb8] sm:$0xff]
      %v5817 = vld [vmem:[#allocation2 + $0xc0] sm:$0xff]
      %v5818 = vld [vmem:[#allocation2 + $0xc8] sm:$0xff]
      %v5819 = vld [vmem:[#allocation2 + $0xd0] sm:$0xff]
      %v5820 = vld [vmem:[#allocation2 + $0xd8] sm:$0xff]
      %v5821 = vld [vmem:[#allocation2 + $0xe0] sm:$0xff]
      %v5822 = vld [vmem:[#allocation2 + $0xe8] sm:$0xff]
      %v5823 = vld [vmem:[#allocation2 + $0xf0] sm:$0xff]
      %v5824 = vld [vmem:[#allocation2 + $0xf8] sm:$0xff]
      %v5825 = vld [vmem:[%s251] sm:$0x1]
      %v5827 = vlaneseq
      %v5828 = vshrl.u32 %v5827, 7
      %v5829 = vsub.s32 0, %v5828
      %v5830 = vrot.slane %v5825, %v5829
      %v5832 = vmul.f32 %v5793, %v5830
      %v5833 = vmul.f32 %v5794, %v5830
      %v5834 = vmul.f32 %v5795, %v5830
      %v5835 = vmul.f32 %v5796, %v5830
      %v5836 = vmul.f32 %v5797, %v5830
      %v5837 = vmul.f32 %v5798, %v5830
      %v5838 = vmul.f32 %v5799, %v5830
      %v5839 = vmul.f32 %v5800, %v5830
      %v5840 = vmul.f32 %v5801, %v5830
      %v5841 = vmul.f32 %v5802, %v5830
      %v5842 = vmul.f32 %v5803, %v5830
      %v5843 = vmul.f32 %v5804, %v5830
      %v5844 = vmul.f32 %v5805, %v5830
      %v5845 = vmul.f32 %v5806, %v5830
      %v5846 = vmul.f32 %v5807, %v5830
      %v5847 = vmul.f32 %v5808, %v5830
      %v5848 = vmul.f32 %v5809, %v5830
      %v5849 = vmul.f32 %v5810, %v5830
      %v5850 = vmul.f32 %v5811, %v5830
      %v5851 = vmul.f32 %v5812, %v5830
      %v5852 = vmul.f32 %v5813, %v5830
      %v5853 = vmul.f32 %v5814, %v5830
      %v5854 = vmul.f32 %v5815, %v5830
      %v5855 = vmul.f32 %v5816, %v5830
      %v5856 = vmul.f32 %v5817, %v5830
      %v5857 = vmul.f32 %v5818, %v5830
      %v5858 = vmul.f32 %v5819, %v5830
      %v5859 = vmul.f32 %v5820, %v5830
      %v5860 = vmul.f32 %v5821, %v5830
      %v5861 = vmul.f32 %v5822, %v5830
      %v5862 = vmul.f32 %v5823, %v5830
      %v5863 = vmul.f32 %v5824, %v5830
      %v5864 = vld [vmem:[%s254] sm:$0x1]
      %v5866 = vlaneseq
      %v5867 = vshrl.u32 %v5866, 7
      %v5868 = vsub.s32 0, %v5867
      %v5869 = vrot.slane %v5864, %v5868
      %v5871 = vadd.f32 %v5832, %v5869
      %v5872 = vadd.f32 %v5833, %v5869
      %v5873 = vadd.f32 %v5834, %v5869
      %v5874 = vadd.f32 %v5835, %v5869
      %v5875 = vadd.f32 %v5836, %v5869
      %v5876 = vadd.f32 %v5837, %v5869
      %v5877 = vadd.f32 %v5838, %v5869
      %v5878 = vadd.f32 %v5839, %v5869
      %v5879 = vadd.f32 %v5840, %v5869
      %v5880 = vadd.f32 %v5841, %v5869
      %v5881 = vadd.f32 %v5842, %v5869
      %v5882 = vadd.f32 %v5843, %v5869
      %v5883 = vadd.f32 %v5844, %v5869
      %v5884 = vadd.f32 %v5845, %v5869
      %v5885 = vadd.f32 %v5846, %v5869
      %v5886 = vadd.f32 %v5847, %v5869
      %v5887 = vadd.f32 %v5848, %v5869
      %v5888 = vadd.f32 %v5849, %v5869
      %v5889 = vadd.f32 %v5850, %v5869
      %v5890 = vadd.f32 %v5851, %v5869
      %v5891 = vadd.f32 %v5852, %v5869
      %v5892 = vadd.f32 %v5853, %v5869
      %v5893 = vadd.f32 %v5854, %v5869
      %v5894 = vadd.f32 %v5855, %v5869
      %v5895 = vadd.f32 %v5856, %v5869
      %v5896 = vadd.f32 %v5857, %v5869
      %v5897 = vadd.f32 %v5858, %v5869
      %v5898 = vadd.f32 %v5859, %v5869
      %v5899 = vadd.f32 %v5860, %v5869
      %v5900 = vadd.f32 %v5861, %v5869
      %v5901 = vadd.f32 %v5862, %v5869
      %v5902 = vadd.f32 %v5863, %v5869
      %vm5903 = vcmp.gt.f32.partialorder %v5871, 0.0
      %vm5904 = vcmp.gt.f32.partialorder %v5872, 0.0
      %vm5905 = vcmp.gt.f32.partialorder %v5873, 0.0
      %vm5906 = vcmp.gt.f32.partialorder %v5874, 0.0
      %vm5907 = vcmp.gt.f32.partialorder %v5875, 0.0
      %vm5908 = vcmp.gt.f32.partialorder %v5876, 0.0
      %vm5909 = vcmp.gt.f32.partialorder %v5877, 0.0
      %vm5910 = vcmp.gt.f32.partialorder %v5878, 0.0
      %vm5911 = vcmp.gt.f32.partialorder %v5879, 0.0
      %vm5912 = vcmp.gt.f32.partialorder %v5880, 0.0
      %vm5913 = vcmp.gt.f32.partialorder %v5881, 0.0
      %vm5914 = vcmp.gt.f32.partialorder %v5882, 0.0
      %vm5915 = vcmp.gt.f32.partialorder %v5883, 0.0
      %vm5916 = vcmp.gt.f32.partialorder %v5884, 0.0
      %vm5917 = vcmp.gt.f32.partialorder %v5885, 0.0
      %vm5918 = vcmp.gt.f32.partialorder %v5886, 0.0
      %vm5919 = vcmp.gt.f32.partialorder %v5887, 0.0
      %vm5920 = vcmp.gt.f32.partialorder %v5888, 0.0
      %vm5921 = vcmp.gt.f32.partialorder %v5889, 0.0
      %vm5922 = vcmp.gt.f32.partialorder %v5890, 0.0
      %vm5923 = vcmp.gt.f32.partialorder %v5891, 0.0
      %vm5924 = vcmp.gt.f32.partialorder %v5892, 0.0
      %vm5925 = vcmp.gt.f32.partialorder %v5893, 0.0
      %vm5926 = vcmp.gt.f32.partialorder %v5894, 0.0
      %vm5927 = vcmp.gt.f32.partialorder %v5895, 0.0
      %vm5928 = vcmp.gt.f32.partialorder %v5896, 0.0
      %vm5929 = vcmp.gt.f32.partialorder %v5897, 0.0
      %vm5930 = vcmp.gt.f32.partialorder %v5898, 0.0
      %vm5931 = vcmp.gt.f32.partialorder %v5899, 0.0
      %vm5932 = vcmp.gt.f32.partialorder %v5900, 0.0
      %vm5933 = vcmp.gt.f32.partialorder %v5901, 0.0
      %vm5934 = vcmp.gt.f32.partialorder %v5902, 0.0
      %v5935 = vmul.f32 %v5871, 0.1
      %v5936 = vmul.f32 %v5872, 0.1
      %v5937 = vmul.f32 %v5873, 0.1
      %v5938 = vmul.f32 %v5874, 0.1
      %v5939 = vmul.f32 %v5875, 0.1
      %v5940 = vmul.f32 %v5876, 0.1
      %v5941 = vmul.f32 %v5877, 0.1
      %v5942 = vmul.f32 %v5878, 0.1
      %v5943 = vmul.f32 %v5879, 0.1
      %v5944 = vmul.f32 %v5880, 0.1
      %v5945 = vmul.f32 %v5881, 0.1
      %v5946 = vmul.f32 %v5882, 0.1
      %v5947 = vmul.f32 %v5883, 0.1
      %v5948 = vmul.f32 %v5884, 0.1
      %v5949 = vmul.f32 %v5885, 0.1
      %v5950 = vmul.f32 %v5886, 0.1
      %v5951 = vmul.f32 %v5887, 0.1
      %v5952 = vmul.f32 %v5888, 0.1
      %v5953 = vmul.f32 %v5889, 0.1
      %v5954 = vmul.f32 %v5890, 0.1
      %v5955 = vmul.f32 %v5891, 0.1
      %v5956 = vmul.f32 %v5892, 0.1
      %v5957 = vmul.f32 %v5893, 0.1
      %v5958 = vmul.f32 %v5894, 0.1
      %v5959 = vmul.f32 %v5895, 0.1
      %v5960 = vmul.f32 %v5896, 0.1
      %v5961 = vmul.f32 %v5897, 0.1
      %v5962 = vmul.f32 %v5898, 0.1
      %v5963 = vmul.f32 %v5899, 0.1
      %v5964 = vmul.f32 %v5900, 0.1
      %v5965 = vmul.f32 %v5901, 0.1
      %v5966 = vmul.f32 %v5902, 0.1
      %v5967 = vsel %vm5903, %v5871, %v5935
      %v5968 = vsel %vm5904, %v5872, %v5936
      %v5969 = vsel %vm5905, %v5873, %v5937
      %v5970 = vsel %vm5906, %v5874, %v5938
      %v5971 = vsel %vm5907, %v5875, %v5939
      %v5972 = vsel %vm5908, %v5876, %v5940
      %v5973 = vsel %vm5909, %v5877, %v5941
      %v5974 = vsel %vm5910, %v5878, %v5942
      %v5975 = vsel %vm5911, %v5879, %v5943
      %v5976 = vsel %vm5912, %v5880, %v5944
      %v5977 = vsel %vm5913, %v5881, %v5945
      %v5978 = vsel %vm5914, %v5882, %v5946
      %v5979 = vsel %vm5915, %v5883, %v5947
      %v5980 = vsel %vm5916, %v5884, %v5948
      %v5981 = vsel %vm5917, %v5885, %v5949
      %v5982 = vsel %vm5918, %v5886, %v5950
      %v5983 = vsel %vm5919, %v5887, %v5951
      %v5984 = vsel %vm5920, %v5888, %v5952
      %v5985 = vsel %vm5921, %v5889, %v5953
      %v5986 = vsel %vm5922, %v5890, %v5954
      %v5987 = vsel %vm5923, %v5891, %v5955
      %v5988 = vsel %vm5924, %v5892, %v5956
      %v5989 = vsel %vm5925, %v5893, %v5957
      %v5990 = vsel %vm5926, %v5894, %v5958
      %v5991 = vsel %vm5927, %v5895, %v5959
      %v5992 = vsel %vm5928, %v5896, %v5960
      %v5993 = vsel %vm5929, %v5897, %v5961
      %v5994 = vsel %vm5930, %v5898, %v5962
      %v5995 = vsel %vm5931, %v5899, %v5963
      %v5996 = vsel %vm5932, %v5900, %v5964
      %v5997 = vsel %vm5933, %v5901, %v5965
      %v5998 = vsel %vm5934, %v5902, %v5966
      %v5999 = vpack.c.bf16 %v5968, %v5967
      %v6000 = vpack.c.bf16 %v5970, %v5969
      %v6001 = vpack.c.bf16 %v5972, %v5971
      %v6002 = vpack.c.bf16 %v5974, %v5973
      %v6003 = vpack.c.bf16 %v5976, %v5975
      %v6004 = vpack.c.bf16 %v5978, %v5977
      %v6005 = vpack.c.bf16 %v5980, %v5979
      %v6006 = vpack.c.bf16 %v5982, %v5981
      %v6007 = vpack.c.bf16 %v5984, %v5983
      %v6008 = vpack.c.bf16 %v5986, %v5985
      %v6009 = vpack.c.bf16 %v5988, %v5987
      %v6010 = vpack.c.bf16 %v5990, %v5989
      %v6011 = vpack.c.bf16 %v5992, %v5991
      %v6012 = vpack.c.bf16 %v5994, %v5993
      %v6013 = vpack.c.bf16 %v5996, %v5995
      %v6014 = vpack.c.bf16 %v5998, %v5997
      %v6031 = vunpack.c.l.b16 %v5999
      %v6032 = vunpack.c.h.b16 %v5999
      %v6033 = vunpack.c.l.b16 %v6000
      %v6034 = vunpack.c.h.b16 %v6000
      %v6035 = vunpack.c.l.b16 %v6001
      %v6036 = vunpack.c.h.b16 %v6001
      %v6037 = vunpack.c.l.b16 %v6002
      %v6038 = vunpack.c.h.b16 %v6002
      %v6039 = vunpack.c.l.b16 %v6003
      %v6040 = vunpack.c.h.b16 %v6003
      %v6041 = vunpack.c.l.b16 %v6004
      %v6042 = vunpack.c.h.b16 %v6004
      %v6043 = vunpack.c.l.b16 %v6005
      %v6044 = vunpack.c.h.b16 %v6005
      %v6045 = vunpack.c.l.b16 %v6006
      %v6046 = vunpack.c.h.b16 %v6006
      %v6047 = vunpack.c.l.b16 %v6007
      %v6048 = vunpack.c.h.b16 %v6007
      %v6049 = vunpack.c.l.b16 %v6008
      %v6050 = vunpack.c.h.b16 %v6008
      %v6051 = vunpack.c.l.b16 %v6009
      %v6052 = vunpack.c.h.b16 %v6009
      %v6053 = vunpack.c.l.b16 %v6010
      %v6054 = vunpack.c.h.b16 %v6010
      %v6055 = vunpack.c.l.b16 %v6011
      %v6056 = vunpack.c.h.b16 %v6011
      %v6057 = vunpack.c.l.b16 %v6012
      %v6058 = vunpack.c.h.b16 %v6012
      %v6059 = vunpack.c.l.b16 %v6013
      %v6060 = vunpack.c.h.b16 %v6013
      %v6061 = vunpack.c.l.b16 %v6014
      %v6062 = vunpack.c.h.b16 %v6014
      %v6063 = vpack.c.b16 %v6031, %v6031
      %v6064 = vpack.c.b16 %v6032, %v6032
      %v6065 = vpack.c.b16 %v6033, %v6033
      %v6066 = vpack.c.b16 %v6034, %v6034
      %v6067 = vpack.c.b16 %v6035, %v6035
      %v6068 = vpack.c.b16 %v6036, %v6036
      %v6069 = vpack.c.b16 %v6037, %v6037
      %v6070 = vpack.c.b16 %v6038, %v6038
      %v6071 = vpack.c.b16 %v6039, %v6039
      %v6072 = vpack.c.b16 %v6040, %v6040
      %v6073 = vpack.c.b16 %v6041, %v6041
      %v6074 = vpack.c.b16 %v6042, %v6042
      %v6075 = vpack.c.b16 %v6043, %v6043
      %v6076 = vpack.c.b16 %v6044, %v6044
      %v6077 = vpack.c.b16 %v6045, %v6045
      %v6078 = vpack.c.b16 %v6046, %v6046
      %v6079 = vpack.c.b16 %v6047, %v6047
      %v6080 = vpack.c.b16 %v6048, %v6048
      %v6081 = vpack.c.b16 %v6049, %v6049
      %v6082 = vpack.c.b16 %v6050, %v6050
      %v6083 = vpack.c.b16 %v6051, %v6051
      %v6084 = vpack.c.b16 %v6052, %v6052
      %v6085 = vpack.c.b16 %v6053, %v6053
      %v6086 = vpack.c.b16 %v6054, %v6054
      %v6087 = vpack.c.b16 %v6055, %v6055
      %v6088 = vpack.c.b16 %v6056, %v6056
      %v6089 = vpack.c.b16 %v6057, %v6057
      %v6090 = vpack.c.b16 %v6058, %v6058
      %v6091 = vpack.c.b16 %v6059, %v6059
      %v6092 = vpack.c.b16 %v6060, %v6060
      %v6093 = vpack.c.b16 %v6061, %v6061
      %v6094 = vpack.c.b16 %v6062, %v6062
      %6127 = vst [vmem:[%s262] sm:$0xf] %v6063
      %6128 = vst [vmem:[%s262 + $0x4] sm:$0xf] %v6064
      %6129 = vst [vmem:[%s262 + $0x8] sm:$0xf] %v6065
      %6130 = vst [vmem:[%s262 + $0xc] sm:$0xf] %v6066
      %6131 = vst [vmem:[%s262 + $0x10] sm:$0xf] %v6067
      %6132 = vst [vmem:[%s262 + $0x14] sm:$0xf] %v6068
      %6133 = vst [vmem:[%s262 + $0x18] sm:$0xf] %v6069
      %6134 = vst [vmem:[%s262 + $0x1c] sm:$0xf] %v6070
      %6135 = vst [vmem:[%s262 + $0x20] sm:$0xf] %v6071
      %6136 = vst [vmem:[%s262 + $0x24] sm:$0xf] %v6072
      %6137 = vst [vmem:[%s262 + $0x28] sm:$0xf] %v6073
      %6138 = vst [vmem:[%s262 + $0x2c] sm:$0xf] %v6074
      %6139 = vst [vmem:[%s262 + $0x30] sm:$0xf] %v6075
      %6140 = vst [vmem:[%s262 + $0x34] sm:$0xf] %v6076
      %6141 = vst [vmem:[%s262 + $0x38] sm:$0xf] %v6077
      %6142 = vst [vmem:[%s262 + $0x3c] sm:$0xf] %v6078
      %6143 = vst [vmem:[%s262 + $0x40] sm:$0xf] %v6079
      %6144 = vst [vmem:[%s262 + $0x44] sm:$0xf] %v6080
      %6145 = vst [vmem:[%s262 + $0x48] sm:$0xf] %v6081
      %6146 = vst [vmem:[%s262 + $0x4c] sm:$0xf] %v6082
      %6147 = vst [vmem:[%s262 + $0x50] sm:$0xf] %v6083
      %6148 = vst [vmem:[%s262 + $0x54] sm:$0xf] %v6084
      %6149 = vst [vmem:[%s262 + $0x58] sm:$0xf] %v6085
      %6150 = vst [vmem:[%s262 + $0x5c] sm:$0xf] %v6086
      %6151 = vst [vmem:[%s262 + $0x60] sm:$0xf] %v6087
      %6152 = vst [vmem:[%s262 + $0x64] sm:$0xf] %v6088
      %6153 = vst [vmem:[%s262 + $0x68] sm:$0xf] %v6089
      %6154 = vst [vmem:[%s262 + $0x6c] sm:$0xf] %v6090
      %6155 = vst [vmem:[%s262 + $0x70] sm:$0xf] %v6091
      %6156 = vst [vmem:[%s262 + $0x74] sm:$0xf] %v6092
      %6157 = vst [vmem:[%s262 + $0x78] sm:$0xf] %v6093
      %6158 = vst [vmem:[%s262 + $0x7c] sm:$0xf] %v6094
      %p6159 = scmp.lt.s32.totalorder %s20, 1
      %s6160 = scalar_select %p6159, %s20, 1
      %p6161 = scmp.lt.s32.totalorder %s19, 0
      %s6162 = scalar_select %p6161, %s19, 0
      %s6163 = smul.addr %s6160, 32
      %s6164 = sadd.s32 %s6162, %s6163
      %s6165 = smul.addr %s6164, 4
      %s6166 = scalar_lea.vmem %s4, %s6165
      // Predicated region
      $region37: #{forward.5} parent=35 // pred_check
        %p6167 = pneg %p151
      $region38: #{forward.5} parent=35 // pred_check_branch
        %6169 = sbr.rel (%p6167) target = $region40
      $region39: #{forward.5} parent=35 // pred_region
        _
      $region40: #{forward.5} parent=35 // pred_fallthru
        _
    $region36: #{forward.5} parent=5 // pred_fallthru
      _
    %p6170 = scmp.le.s32.totalorder 2, %s10
    // Predicated region
    $region41: #{forward.5} parent=5 // pred_check
      %p6171 = pneg %p6170
    $region42: #{forward.5} parent=5 // pred_check_branch
      %6173 = sbr.rel (%p6171) target = $region44
    $region43: #{forward.5} parent=5 // pred_region
      %s6174 = ssub.s32 %s10, 2
      // Predicated region
      $region45: #{forward.5} parent=43 // pred_check
        %p6175 = pneg %p157
      $region46: #{forward.5} parent=43 // pred_check_branch
        %6177 = sbr.rel (%p6175) target = $region48
      $region47: #{forward.5} parent=43 // pred_region
        %p6178 = scmp.lt.s32.totalorder %s22, 1
        %s6179 = scalar_select %p6178, %s22, 1
        %p6180 = scmp.lt.s32.totalorder %s21, 0
        %s6181 = scalar_select %p6180, %s21, 0
        %s6182 = smul.addr %s6179, 32
        %s6183 = sadd.s32 %s6181, %s6182
        %s6184 = smul.addr %s6183, 4
        %s6185 = scalar_lea.vmem %s4, %s6184
      $region48: #{forward.5} parent=43 // pred_fallthru
        _
    $region44: #{forward.5} parent=5 // pred_fallthru
      _
  $region6: #{forward.5} parent=0 // loop_footer
    %s14 = sadd.s32 1, %s10
  $region7: #{forward.5} parent=0 // loop_footer_branch
    %9 = sbr.rel target = $region3
  $region8: #{forward.5} parent=0 // loop_exit
    _

</llo_original>
